<compile_context>
chip_gen: v7x
topology: tpu7x:2x2x1
jax: 0.10.0
libtpu: 0.0.40
codegen_flags: <defaults>
</compile_context>

<pallas_src>
import jax
import jax.numpy as jnp
from jax.experimental import pallas as pl
from jax.experimental.pallas import tpu as pltpu


# ---------------------------------------------------------------------------
# Fused Pallas kernel: all BiGRU layers + attention + (folded-BN) MLP head.
# ---------------------------------------------------------------------------
def _make_fused_kernel(num_layers, T, B, H):
    def kernel(*args):
        # ---- unpack refs: inputs..., output, scratch... -------------------
        x_ref, mask_ref = args[0], args[1]
        layer_refs = [args[2 + 6 * l: 2 + 6 * (l + 1)] for l in range(num_layers)]
        hbase = 2 + 6 * num_layers
        (w_att_f_ref, w_att_b_ref, b_att_ref,
         w1f_ref, w1b_ref, b1_ref, w2_ref, b2_ref) = args[hbase:hbase + 8]
        o_ref = args[hbase + 8]
        scratch = args[hbase + 9:]          # per layer: (out_fwd, out_bwd) VMEM

        mask = mask_ref[...]                # (T, B, 1) validity mask
        x_flat = x_ref[...]                 # (T*B, EMB)  pre-flattened input

        prev_f = None
        prev_b = None
        for l in range(num_layers):
            wih_ref, bih_ref, whhf_ref, whhb_ref, bhnf_ref, bhnb_ref = layer_refs[l]
            wih = wih_ref[...]              # (din, 6H)  [fwd gates | bwd gates]
            bih = bih_ref[...]              # (1, 6H)    r/z gates: bih+bhh pre-added

            # Hoisted input projection for BOTH directions: one matmul per layer,
            # off the serial recurrence chain.
            if l == 0:
                gi = jnp.dot(x_flat, wih, preferred_element_type=jnp.float32) + bih
            else:
                gi = (jnp.dot(prev_f.reshape(T * B, H), wih[0:H, :],
                              preferred_element_type=jnp.float32)
                      + jnp.dot(prev_b.reshape(T * B, H), wih[H:2 * H, :],
                                preferred_element_type=jnp.float32)
                      + bih)
            gi = gi.reshape(T, B, 6 * H)

            whh_f = whhf_ref[...]           # (H, 3H)
            whh_b = whhb_ref[...]
            bhn_f = bhnf_ref[...]           # (1, H)  recurrent bias of n-gate
            bhn_b = bhnb_ref[...]
            of_ref = scratch[2 * l]         # (T, B, H)
            ob_ref = scratch[2 * l + 1]

            h_f = jnp.zeros((B, H), jnp.float32)
            h_b = jnp.zeros((B, H), jnp.float32)
            # Interleaved fwd/bwd recurrence, fully unrolled (T is small & static):
            # two independent dependency chains overlap on MXU/EUP/VPU.
            for t in range(T):
                tb = T - 1 - t
                m_f = mask[t]               # (B, 1)
                m_b = mask[tb]
                gi_f = gi[t]                # (B, 6H): fwd gates in [:3H]
                gi_b = gi[tb]               #          bwd gates in [3H:]
                gh_f = jnp.dot(h_f, whh_f, preferred_element_type=jnp.float32)
                gh_b = jnp.dot(h_b, whh_b, preferred_element_type=jnp.float32)

                # forward direction (PyTorch gate order r, z, n)
                r_f = jax.nn.sigmoid(gi_f[:, 0:H] + gh_f[:, 0:H])
                z_f = jax.nn.sigmoid(gi_f[:, H:2 * H] + gh_f[:, H:2 * H])
                n_f = jnp.tanh(gi_f[:, 2 * H:3 * H] + r_f * (gh_f[:, 2 * H:3 * H] + bhn_f))
                hf_new = (1.0 - z_f) * n_f + z_f * h_f
                h_f = m_f * hf_new + (1.0 - m_f) * h_f     # freeze past length
                of_ref[t] = m_f * h_f                      # zero padded outputs

                # backward direction (reads time tb)
                r_b = jax.nn.sigmoid(gi_b[:, 3 * H:4 * H] + gh_b[:, 0:H])
                z_b = jax.nn.sigmoid(gi_b[:, 4 * H:5 * H] + gh_b[:, H:2 * H])
                n_b = jnp.tanh(gi_b[:, 5 * H:6 * H] + r_b * (gh_b[:, 2 * H:3 * H] + bhn_b))
                hb_new = (1.0 - z_b) * n_b + z_b * h_b
                h_b = m_b * hb_new + (1.0 - m_b) * h_b
                ob_ref[tb] = m_b * h_b

            prev_f = of_ref[...]            # (T, B, H)
            prev_b = ob_ref[...]

        # ---- Attention head ------------------------------------------------
        out_f = prev_f
        out_b = prev_b
        w_att_f = w_att_f_ref[...]          # (1, H)
        w_att_b = w_att_b_ref[...]
        b_att = b_att_ref[0, 0]             # SMEM scalar
        scores = (jnp.sum(out_f * w_att_f[None, :, :], axis=-1, keepdims=True)
                  + jnp.sum(out_b * w_att_b[None, :, :], axis=-1, keepdims=True)
                  + b_att)                  # (T, B, 1)
        # NOTE: softmax over dim=1 (the BATCH axis) — exactly as the PyTorch module.
        mx = jnp.max(scores, axis=1, keepdims=True)
        e = jnp.exp(scores - mx)
        alpha = e * pl.reciprocal(jnp.sum(e, axis=1, keepdims=True), approx=True)
        h_f_att = jnp.sum(out_f * alpha, axis=0)           # (B, H)  sum over time
        h_b_att = jnp.sum(out_b * alpha, axis=0)

        # BatchNorm1d (eval) is folded into w1/b1 by the wrapper; Dropout = identity.
        z1 = (jnp.dot(h_f_att, w1f_ref[...], preferred_element_type=jnp.float32)
              + jnp.dot(h_b_att, w1b_ref[...], preferred_element_type=jnp.float32)
              + b1_ref[...])
        e1 = jnp.where(z1 > 0.0, z1, jnp.exp(z1) - 1.0)    # ELU(alpha=1)
        z2 = jnp.dot(e1, w2_ref[...], preferred_element_type=jnp.float32) + b2_ref[...]

        mx2 = jnp.max(z2, axis=1, keepdims=True)
        lse = mx2 + jnp.log(jnp.sum(jnp.exp(z2 - mx2), axis=1, keepdims=True))
        o_ref[...] = z2 - lse                              # log_softmax over labels

    return kernel


# ---------------------------------------------------------------------------
# JAX wrapper: trace-time parameter folding + one fused pallas_call.
# ---------------------------------------------------------------------------
def finetune_forward(x, mask, gru_params, w_att, b_att, gamma, beta, mean, var,
                     w1, b1, w2, b2):
    T, B, EMB = x.shape
    num_layers = len(gru_params)
    H = gru_params[0][0][1].shape[0]        # whh is (H, 3H)
    L = w2.shape[1]

    # ---- per-layer GRU weight prep (concat directions, pre-add r/z biases) --
    flat_args = [x.reshape(T * B, EMB), mask]
    for pf, pb in gru_params:
        wih_f, whh_f, bih_f, bhh_f = pf
        wih_b, whh_b, bih_b, bhh_b = pb
        wih = jnp.concatenate([wih_f, wih_b], axis=1)                     # (din, 6H)
        b_f = jnp.concatenate([bih_f[:, :2 * H] + bhh_f[:, :2 * H],
                               bih_f[:, 2 * H:]], axis=1)                 # (1, 3H)
        b_b = jnp.concatenate([bih_b[:, :2 * H] + bhh_b[:, :2 * H],
                               bih_b[:, 2 * H:]], axis=1)
        bih = jnp.concatenate([b_f, b_b], axis=1)                         # (1, 6H)
        flat_args += [wih, bih, whh_f, whh_b, bhh_f[:, 2 * H:], bhh_b[:, 2 * H:]]

    # ---- fold BatchNorm1d (running stats, eval mode) into the first Linear --
    eps = 1e-5
    scale = gamma / jnp.sqrt(var + eps)                                   # (1, 2H)
    shift = beta - mean * scale
    w1_fold = w1 * scale.reshape(-1, 1)                                   # (2H, HID1)
    b1_fold = b1 + shift @ w1                                             # (1, HID1)

    flat_args += [w_att[:, :H], w_att[:, H:], b_att.reshape(1, 1),
                  w1_fold[:H, :], w1_fold[H:, :], b1_fold, w2, b2]

    n_inputs = len(flat_args)
    vmem = lambda: pl.BlockSpec(memory_space=pltpu.MemorySpace.VMEM)
    in_specs = [vmem() for _ in range(n_inputs)]
    in_specs[2 + 6 * num_layers + 2] = pl.BlockSpec(
        memory_space=pltpu.MemorySpace.SMEM)                              # b_att scalar

    scratch = []
    for _ in range(num_layers):
        scratch += [pltpu.VMEM((T, B, H), jnp.float32),
                    pltpu.VMEM((T, B, H), jnp.float32)]

    kernel = _make_fused_kernel(num_layers, T, B, H)
    # TODO(synk): on v7x the fwd/bwd directions could be split across the two
    # TensorCores (grid=(2,), "parallel") gated on pltpu.get_tpu_info().
    return pl.pallas_call(
        kernel,
        out_shape=jax.ShapeDtypeStruct((B, L), jnp.float32),
        in_specs=in_specs,
        out_specs=vmem(),
        scratch_shapes=scratch,
    )(*flat_args)


# ---------------------------------------------------------------------------
# Pure-JAX reference (for correctness check)
# ---------------------------------------------------------------------------
def _gru_cell_ref(x_t, h, wih, whh, bih, bhh):
    H = whh.shape[0]
    gi = x_t @ wih + bih
    gh = h @ whh + bhh
    r = jax.nn.sigmoid(gi[:, :H] + gh[:, :H])
    z = jax.nn.sigmoid(gi[:, H:2 * H] + gh[:, H:2 * H])
    n = jnp.tanh(gi[:, 2 * H:] + r * gh[:, 2 * H:])
    return (1.0 - z) * n + z * h


def _bigru_layer_ref(x, mask, pf, pb):
    T, B, _ = x.shape
    H = pf[1].shape[0]
    h = jnp.zeros((B, H), jnp.float32)
    outs_f = []
    for t in range(T):
        hn = _gru_cell_ref(x[t], h, *pf)
        h = mask[t] * hn + (1.0 - mask[t]) * h
        outs_f.append(mask[t] * h)
    hb = jnp.zeros((B, H), jnp.float32)
    outs_b = [None] * T
    for t in range(T - 1, -1, -1):
        hn = _gru_cell_ref(x[t], hb, *pb)
        hb = mask[t] * hn + (1.0 - mask[t]) * hb
        outs_b[t] = mask[t] * hb
    return jnp.concatenate([jnp.stack(outs_f), jnp.stack(outs_b)], axis=-1)


def _head_ref(out, w_att, b_att, gamma, beta, mean, var, w1, b1, w2, b2):
    scores = jnp.sum(out * w_att[None, :, :], axis=-1, keepdims=True) + b_att
    alpha = jax.nn.softmax(scores, axis=1)
    h = jnp.sum(out * alpha, axis=0)
    y = (h - mean) / jnp.sqrt(var + 1e-5) * gamma + beta
    z1 = y @ w1 + b1
    e1 = jnp.where(z1 > 0.0, z1, jnp.exp(z1) - 1.0)
    z2 = e1 @ w2 + b2
    return jax.nn.log_softmax(z2, axis=1)


# ---------------------------------------------------------------------------
if __name__ == "__main__":
    # hyper-parameters (small, consistent with the module's __init__)
    VOCAB, EMB, HID, NUM_LAYERS = 50, 16, 32, 2
    HID1, LABELS = 16, 5
    T, B = 8, 4

    key = jax.random.PRNGKey(0)
    keys = jax.random.split(key, 16)

    # padded token ids (T, B) + sorted lengths (pack_padded_sequence convention)
    lengths = jnp.array([8, 6, 5, 3], dtype=jnp.int32)
    tok = jax.random.randint(keys[0], (T, B), 1, VOCAB)
    valid = jnp.arange(T)[:, None] < lengths[None, :]
    tokens = jnp.where(valid, tok, 0)
    mask = valid.astype(jnp.float32)[:, :, None]          # (T, B, 1)

    # deterministic parameter init (synthetic, not a checkpoint)
    emb_w = 0.1 * jax.random.normal(keys[1], (VOCAB, EMB), jnp.float32)

    def init_gru_dir(k, din, h):
        ks = jax.random.split(k, 4)
        s = 1.0 / float(h) ** 0.5
        return (jax.random.uniform(ks[0], (din, 3 * h), jnp.float32, -s, s),
                jax.random.uniform(ks[1], (h, 3 * h), jnp.float32, -s, s),
                jax.random.uniform(ks[2], (1, 3 * h), jnp.float32, -s, s),
                jax.random.uniform(ks[3], (1, 3 * h), jnp.float32, -s, s))

    gru_params = []
    for l in range(NUM_LAYERS):
        din = EMB if l == 0 else 2 * HID
        pf = init_gru_dir(keys[2 + 2 * l], din, HID)
        pb = init_gru_dir(keys[3 + 2 * l], din, HID)
        gru_params.append((pf, pb))

    D = 2 * HID
    w_att = 0.2 * jax.random.normal(keys[8], (1, D), jnp.float32)
    b_att = 0.1 * jax.random.normal(keys[9], (1, 1, 1), jnp.float32)
    gamma = 1.0 + 0.1 * jax.random.normal(keys[10], (1, D), jnp.float32)
    beta = 0.1 * jax.random.normal(keys[11], (1, D), jnp.float32)
    run_mean = 0.1 * jax.random.normal(keys[12], (1, D), jnp.float32)
    run_var = jnp.abs(1.0 + 0.1 * jax.random.normal(keys[13], (1, D), jnp.float32))
    w1 = 0.2 * jax.random.normal(keys[14], (D, HID1), jnp.float32)
    b1 = jnp.full((1, HID1), 0.05, jnp.float32)
    w2 = 0.2 * jax.random.normal(keys[15], (HID1, LABELS), jnp.float32)
    b2 = jnp.full((1, LABELS), -0.05, jnp.float32)

    # forward pass: embedding lookup (glue, plain JAX gather) then ONE fused kernel.
    # GRU inter-layer dropout / Dropout(0.3) are identity in eval mode.
    x = jnp.take(emb_w, tokens, axis=0)                   # (T, B, EMB)
    logp = finetune_forward(x, mask, gru_params, w_att, b_att, gamma, beta,
                            run_mean, run_var, w1, b1, w2, b2)
    logp = jax.block_until_ready(logp)

    # pure-JAX reference check
    out_ref = x
    for pf, pb in gru_params:
        out_ref = _bigru_layer_ref(out_ref, mask, pf, pb)
    ref = _head_ref(out_ref, w_att, b_att, gamma, beta, run_mean, run_var,
                    w1, b1, w2, b2)

    assert logp.shape == (B, LABELS)
    assert bool(jnp.all(jnp.isfinite(logp)))
    assert bool(jnp.allclose(logp, ref, atol=1e-2, rtol=1e-2)), (
        f"max abs diff {float(jnp.max(jnp.abs(logp - ref)))}")
    print("KERNEL_OK")
</pallas_src>

<mosaic_0001>
module attributes {stable_mosaic.version = 11 : i64} {
  func.func @kernel(%arg0: memref<32x16xf32, #tpu.memory_space<vmem>>, %arg1: memref<8x4x1xf32, #tpu.memory_space<vmem>>, %arg2: memref<16x192xf32, #tpu.memory_space<vmem>>, %arg3: memref<1x192xf32, #tpu.memory_space<vmem>>, %arg4: memref<32x96xf32, #tpu.memory_space<vmem>>, %arg5: memref<32x96xf32, #tpu.memory_space<vmem>>, %arg6: memref<1x32xf32, #tpu.memory_space<vmem>>, %arg7: memref<1x32xf32, #tpu.memory_space<vmem>>, %arg8: memref<64x192xf32, #tpu.memory_space<vmem>>, %arg9: memref<1x192xf32, #tpu.memory_space<vmem>>, %arg10: memref<32x96xf32, #tpu.memory_space<vmem>>, %arg11: memref<32x96xf32, #tpu.memory_space<vmem>>, %arg12: memref<1x32xf32, #tpu.memory_space<vmem>>, %arg13: memref<1x32xf32, #tpu.memory_space<vmem>>, %arg14: memref<1x32xf32, #tpu.memory_space<vmem>>, %arg15: memref<1x32xf32, #tpu.memory_space<vmem>>, %arg16: memref<1x1xf32, #tpu.memory_space<smem>>, %arg17: memref<32x16xf32, #tpu.memory_space<vmem>>, %arg18: memref<32x16xf32, #tpu.memory_space<vmem>>, %arg19: memref<1x16xf32, #tpu.memory_space<vmem>>, %arg20: memref<16x5xf32, #tpu.memory_space<vmem>>, %arg21: memref<1x5xf32, #tpu.memory_space<vmem>>, %arg22: memref<4x5xf32, #tpu.memory_space<vmem>>, %arg23: memref<8x4x32xf32, #tpu.memory_space<vmem>>, %arg24: memref<8x4x32xf32, #tpu.memory_space<vmem>>, %arg25: memref<8x4x32xf32, #tpu.memory_space<vmem>>, %arg26: memref<8x4x32xf32, #tpu.memory_space<vmem>>) attributes {dimension_semantics = [], scalar_prefetch = 0 : i64, scratch_operands = 4 : i64, tpu.core_type = #tpu.core_type<tc>} {
    %c0 = arith.constant 0 : index
    %c0_0 = arith.constant 0 : index
    %c0_1 = arith.constant 0 : index
    %0 = vector.load %arg1[%c0, %c0_0, %c0_1] : memref<8x4x1xf32, #tpu.memory_space<vmem>>, vector<8x4x1xf32>
    %c0_2 = arith.constant 0 : index
    %c0_3 = arith.constant 0 : index
    %1 = vector.load %arg0[%c0_2, %c0_3] : memref<32x16xf32, #tpu.memory_space<vmem>>, vector<32x16xf32>
    %c0_4 = arith.constant 0 : index
    %c0_5 = arith.constant 0 : index
    %2 = vector.load %arg2[%c0_4, %c0_5] : memref<16x192xf32, #tpu.memory_space<vmem>>, vector<16x192xf32>
    %c0_6 = arith.constant 0 : index
    %c0_7 = arith.constant 0 : index
    %3 = vector.load %arg3[%c0_6, %c0_7] : memref<1x192xf32, #tpu.memory_space<vmem>>, vector<1x192xf32>
    %cst = arith.constant dense<0.000000e+00> : vector<32x192xf32>
    %4 = tpu.matmul %1, %2, %cst {dimension_numbers = #tpu.dot_dimension_numbers<[1], [0], [0], [1], [0, 0, 1, 1], [], []>} : vector<32x16xf32>, vector<16x192xf32>, vector<32x192xf32> -> vector<32x192xf32>
    %5 = vector.broadcast %3 : vector<1x192xf32> to vector<32x192xf32>
    %6 = arith.addf %4, %5 : vector<32x192xf32>
    %7 = vector.shape_cast %6 : vector<32x192xf32> to vector<8x4x192xf32>
    %c0_8 = arith.constant 0 : index
    %c0_9 = arith.constant 0 : index
    %8 = vector.load %arg4[%c0_8, %c0_9] : memref<32x96xf32, #tpu.memory_space<vmem>>, vector<32x96xf32>
    %c0_10 = arith.constant 0 : index
    %c0_11 = arith.constant 0 : index
    %9 = vector.load %arg5[%c0_10, %c0_11] : memref<32x96xf32, #tpu.memory_space<vmem>>, vector<32x96xf32>
    %c0_12 = arith.constant 0 : index
    %c0_13 = arith.constant 0 : index
    %10 = vector.load %arg6[%c0_12, %c0_13] : memref<1x32xf32, #tpu.memory_space<vmem>>, vector<1x32xf32>
    %c0_14 = arith.constant 0 : index
    %c0_15 = arith.constant 0 : index
    %11 = vector.load %arg7[%c0_14, %c0_15] : memref<1x32xf32, #tpu.memory_space<vmem>>, vector<1x32xf32>
    %cst_16 = arith.constant 0.000000e+00 : f32
    %12 = vector.broadcast %cst_16 : f32 to vector<4x32xf32>
    %cst_17 = arith.constant 0.000000e+00 : f32
    %13 = vector.broadcast %cst_17 : f32 to vector<4x32xf32>
    %14 = vector.extract_strided_slice %0 {offsets = [0, 0, 0], sizes = [1, 4, 1], strides = [1, 1, 1]} : vector<8x4x1xf32> to vector<1x4x1xf32>
    %15 = vector.shape_cast %14 : vector<1x4x1xf32> to vector<4x1xf32>
    %16 = vector.extract_strided_slice %0 {offsets = [7, 0, 0], sizes = [1, 4, 1], strides = [1, 1, 1]} : vector<8x4x1xf32> to vector<1x4x1xf32>
    %17 = vector.shape_cast %16 : vector<1x4x1xf32> to vector<4x1xf32>
    %18 = vector.extract_strided_slice %7 {offsets = [0, 0, 0], sizes = [1, 4, 192], strides = [1, 1, 1]} : vector<8x4x192xf32> to vector<1x4x192xf32>
    %19 = vector.shape_cast %18 : vector<1x4x192xf32> to vector<4x192xf32>
    %20 = vector.extract_strided_slice %7 {offsets = [7, 0, 0], sizes = [1, 4, 192], strides = [1, 1, 1]} : vector<8x4x192xf32> to vector<1x4x192xf32>
    %21 = vector.shape_cast %20 : vector<1x4x192xf32> to vector<4x192xf32>
    %cst_18 = arith.constant dense<0.000000e+00> : vector<4x96xf32>
    %22 = tpu.matmul %12, %8, %cst_18 {dimension_numbers = #tpu.dot_dimension_numbers<[1], [0], [0], [1], [0, 0, 1, 1], [], []>} : vector<4x32xf32>, vector<32x96xf32>, vector<4x96xf32> -> vector<4x96xf32>
    %cst_19 = arith.constant dense<0.000000e+00> : vector<4x96xf32>
    %23 = tpu.matmul %13, %9, %cst_19 {dimension_numbers = #tpu.dot_dimension_numbers<[1], [0], [0], [1], [0, 0, 1, 1], [], []>} : vector<4x32xf32>, vector<32x96xf32>, vector<4x96xf32> -> vector<4x96xf32>
    %24 = vector.extract_strided_slice %19 {offsets = [0, 0], sizes = [4, 32], strides = [1, 1]} : vector<4x192xf32> to vector<4x32xf32>
    %25 = vector.extract_strided_slice %22 {offsets = [0, 0], sizes = [4, 32], strides = [1, 1]} : vector<4x96xf32> to vector<4x32xf32>
    %26 = arith.addf %24, %25 : vector<4x32xf32>
    %27 = arith.negf %26 : vector<4x32xf32>
    %28 = math.exp %27 : vector<4x32xf32>
    %cst_20 = arith.constant 1.000000e+00 : f32
    %29 = vector.broadcast %cst_20 : f32 to vector<4x32xf32>
    %30 = arith.addf %29, %28 : vector<4x32xf32>
    %31 = arith.divf %29, %30 : vector<4x32xf32>
    %32 = vector.extract_strided_slice %19 {offsets = [0, 32], sizes = [4, 32], strides = [1, 1]} : vector<4x192xf32> to vector<4x32xf32>
    %33 = vector.extract_strided_slice %22 {offsets = [0, 32], sizes = [4, 32], strides = [1, 1]} : vector<4x96xf32> to vector<4x32xf32>
    %34 = arith.addf %32, %33 : vector<4x32xf32>
    %35 = arith.negf %34 : vector<4x32xf32>
    %36 = math.exp %35 : vector<4x32xf32>
    %cst_21 = arith.constant 1.000000e+00 : f32
    %37 = vector.broadcast %cst_21 : f32 to vector<4x32xf32>
    %38 = arith.addf %37, %36 : vector<4x32xf32>
    %39 = arith.divf %37, %38 : vector<4x32xf32>
    %40 = vector.extract_strided_slice %19 {offsets = [0, 64], sizes = [4, 32], strides = [1, 1]} : vector<4x192xf32> to vector<4x32xf32>
    %41 = vector.extract_strided_slice %22 {offsets = [0, 64], sizes = [4, 32], strides = [1, 1]} : vector<4x96xf32> to vector<4x32xf32>
    %42 = vector.broadcast %10 : vector<1x32xf32> to vector<4x32xf32>
    %43 = arith.addf %41, %42 : vector<4x32xf32>
    %44 = arith.mulf %31, %43 : vector<4x32xf32>
    %45 = arith.addf %40, %44 : vector<4x32xf32>
    %46 = math.tanh %45 : vector<4x32xf32>
    %cst_22 = arith.constant 1.000000e+00 : f32
    %47 = vector.broadcast %cst_22 : f32 to vector<4x32xf32>
    %48 = arith.subf %47, %39 : vector<4x32xf32>
    %49 = arith.mulf %48, %46 : vector<4x32xf32>
    %50 = arith.mulf %39, %12 : vector<4x32xf32>
    %51 = arith.addf %49, %50 : vector<4x32xf32>
    %52 = vector.broadcast %15 : vector<4x1xf32> to vector<4x32xf32>
    %53 = arith.mulf %52, %51 : vector<4x32xf32>
    %cst_23 = arith.constant 1.000000e+00 : f32
    %54 = vector.broadcast %cst_23 : f32 to vector<4x1xf32>
    %55 = arith.subf %54, %15 : vector<4x1xf32>
    %56 = vector.broadcast %55 : vector<4x1xf32> to vector<4x32xf32>
    %57 = arith.mulf %56, %12 : vector<4x32xf32>
    %58 = arith.addf %53, %57 : vector<4x32xf32>
    %59 = vector.broadcast %15 : vector<4x1xf32> to vector<4x32xf32>
    %60 = arith.mulf %59, %58 : vector<4x32xf32>
    %c0_24 = arith.constant 0 : index
    %c0_25 = arith.constant 0 : index
    %c0_26 = arith.constant 0 : index
    %61 = vector.load %arg23[%c0_24, %c0_25, %c0_26] : memref<8x4x32xf32, #tpu.memory_space<vmem>>, vector<1x4x32xf32>
    %62 = vector.shape_cast %61 : vector<1x4x32xf32> to vector<4x32xf32>
    %63 = vector.shape_cast %60 : vector<4x32xf32> to vector<1x4x32xf32>
    tpu.vector_store %arg23[%c0_24, %c0_25, %c0_26], %63 {strides = array<i32>} : memref<8x4x32xf32, #tpu.memory_space<vmem>>, vector<1x4x32xf32>,
    %64 = vector.extract_strided_slice %21 {offsets = [0, 96], sizes = [4, 32], strides = [1, 1]} : vector<4x192xf32> to vector<4x32xf32>
    %65 = vector.extract_strided_slice %23 {offsets = [0, 0], sizes = [4, 32], strides = [1, 1]} : vector<4x96xf32> to vector<4x32xf32>
    %66 = arith.addf %64, %65 : vector<4x32xf32>
    %67 = arith.negf %66 : vector<4x32xf32>
    %68 = math.exp %67 : vector<4x32xf32>
    %cst_27 = arith.constant 1.000000e+00 : f32
    %69 = vector.broadcast %cst_27 : f32 to vector<4x32xf32>
    %70 = arith.addf %69, %68 : vector<4x32xf32>
    %71 = arith.divf %69, %70 : vector<4x32xf32>
    %72 = vector.extract_strided_slice %21 {offsets = [0, 128], sizes = [4, 32], strides = [1, 1]} : vector<4x192xf32> to vector<4x32xf32>
    %73 = vector.extract_strided_slice %23 {offsets = [0, 32], sizes = [4, 32], strides = [1, 1]} : vector<4x96xf32> to vector<4x32xf32>
    %74 = arith.addf %72, %73 : vector<4x32xf32>
    %75 = arith.negf %74 : vector<4x32xf32>
    %76 = math.exp %75 : vector<4x32xf32>
    %cst_28 = arith.constant 1.000000e+00 : f32
    %77 = vector.broadcast %cst_28 : f32 to vector<4x32xf32>
    %78 = arith.addf %77, %76 : vector<4x32xf32>
    %79 = arith.divf %77, %78 : vector<4x32xf32>
    %80 = vector.extract_strided_slice %21 {offsets = [0, 160], sizes = [4, 32], strides = [1, 1]} : vector<4x192xf32> to vector<4x32xf32>
    %81 = vector.extract_strided_slice %23 {offsets = [0, 64], sizes = [4, 32], strides = [1, 1]} : vector<4x96xf32> to vector<4x32xf32>
    %82 = vector.broadcast %11 : vector<1x32xf32> to vector<4x32xf32>
    %83 = arith.addf %81, %82 : vector<4x32xf32>
    %84 = arith.mulf %71, %83 : vector<4x32xf32>
    %85 = arith.addf %80, %84 : vector<4x32xf32>
    %86 = math.tanh %85 : vector<4x32xf32>
    %cst_29 = arith.constant 1.000000e+00 : f32
    %87 = vector.broadcast %cst_29 : f32 to vector<4x32xf32>
    %88 = arith.subf %87, %79 : vector<4x32xf32>
    %89 = arith.mulf %88, %86 : vector<4x32xf32>
    %90 = arith.mulf %79, %13 : vector<4x32xf32>
    %91 = arith.addf %89, %90 : vector<4x32xf32>
    %92 = vector.broadcast %17 : vector<4x1xf32> to vector<4x32xf32>
    %93 = arith.mulf %92, %91 : vector<4x32xf32>
    %cst_30 = arith.constant 1.000000e+00 : f32
    %94 = vector.broadcast %cst_30 : f32 to vector<4x1xf32>
    %95 = arith.subf %94, %17 : vector<4x1xf32>
    %96 = vector.broadcast %95 : vector<4x1xf32> to vector<4x32xf32>
    %97 = arith.mulf %96, %13 : vector<4x32xf32>
    %98 = arith.addf %93, %97 : vector<4x32xf32>
    %99 = vector.broadcast %17 : vector<4x1xf32> to vector<4x32xf32>
    %100 = arith.mulf %99, %98 : vector<4x32xf32>
    %c7 = arith.constant 7 : index
    %c0_31 = arith.constant 0 : index
    %c0_32 = arith.constant 0 : index
    %101 = vector.load %arg24[%c7, %c0_31, %c0_32] : memref<8x4x32xf32, #tpu.memory_space<vmem>>, vector<1x4x32xf32>
    %102 = vector.shape_cast %101 : vector<1x4x32xf32> to vector<4x32xf32>
    %103 = vector.shape_cast %100 : vector<4x32xf32> to vector<1x4x32xf32>
    tpu.vector_store %arg24[%c7, %c0_31, %c0_32], %103 {strides = array<i32>} : memref<8x4x32xf32, #tpu.memory_space<vmem>>, vector<1x4x32xf32>,
    %104 = vector.extract_strided_slice %0 {offsets = [1, 0, 0], sizes = [1, 4, 1], strides = [1, 1, 1]} : vector<8x4x1xf32> to vector<1x4x1xf32>
    %105 = vector.shape_cast %104 : vector<1x4x1xf32> to vector<4x1xf32>
    %106 = vector.extract_strided_slice %0 {offsets = [6, 0, 0], sizes = [1, 4, 1], strides = [1, 1, 1]} : vector<8x4x1xf32> to vector<1x4x1xf32>
    %107 = vector.shape_cast %106 : vector<1x4x1xf32> to vector<4x1xf32>
    %108 = vector.extract_strided_slice %7 {offsets = [1, 0, 0], sizes = [1, 4, 192], strides = [1, 1, 1]} : vector<8x4x192xf32> to vector<1x4x192xf32>
    %109 = vector.shape_cast %108 : vector<1x4x192xf32> to vector<4x192xf32>
    %110 = vector.extract_strided_slice %7 {offsets = [6, 0, 0], sizes = [1, 4, 192], strides = [1, 1, 1]} : vector<8x4x192xf32> to vector<1x4x192xf32>
    %111 = vector.shape_cast %110 : vector<1x4x192xf32> to vector<4x192xf32>
    %cst_33 = arith.constant dense<0.000000e+00> : vector<4x96xf32>
    %112 = tpu.matmul %58, %8, %cst_33 {dimension_numbers = #tpu.dot_dimension_numbers<[1], [0], [0], [1], [0, 0, 1, 1], [], []>} : vector<4x32xf32>, vector<32x96xf32>, vector<4x96xf32> -> vector<4x96xf32>
    %cst_34 = arith.constant dense<0.000000e+00> : vector<4x96xf32>
    %113 = tpu.matmul %98, %9, %cst_34 {dimension_numbers = #tpu.dot_dimension_numbers<[1], [0], [0], [1], [0, 0, 1, 1], [], []>} : vector<4x32xf32>, vector<32x96xf32>, vector<4x96xf32> -> vector<4x96xf32>
    %114 = vector.extract_strided_slice %109 {offsets = [0, 0], sizes = [4, 32], strides = [1, 1]} : vector<4x192xf32> to vector<4x32xf32>
    %115 = vector.extract_strided_slice %112 {offsets = [0, 0], sizes = [4, 32], strides = [1, 1]} : vector<4x96xf32> to vector<4x32xf32>
    %116 = arith.addf %114, %115 : vector<4x32xf32>
    %117 = arith.negf %116 : vector<4x32xf32>
    %118 = math.exp %117 : vector<4x32xf32>
    %cst_35 = arith.constant 1.000000e+00 : f32
    %119 = vector.broadcast %cst_35 : f32 to vector<4x32xf32>
    %120 = arith.addf %119, %118 : vector<4x32xf32>
    %121 = arith.divf %119, %120 : vector<4x32xf32>
    %122 = vector.extract_strided_slice %109 {offsets = [0, 32], sizes = [4, 32], strides = [1, 1]} : vector<4x192xf32> to vector<4x32xf32>
    %123 = vector.extract_strided_slice %112 {offsets = [0, 32], sizes = [4, 32], strides = [1, 1]} : vector<4x96xf32> to vector<4x32xf32>
    %124 = arith.addf %122, %123 : vector<4x32xf32>
    %125 = arith.negf %124 : vector<4x32xf32>
    %126 = math.exp %125 : vector<4x32xf32>
    %cst_36 = arith.constant 1.000000e+00 : f32
    %127 = vector.broadcast %cst_36 : f32 to vector<4x32xf32>
    %128 = arith.addf %127, %126 : vector<4x32xf32>
    %129 = arith.divf %127, %128 : vector<4x32xf32>
    %130 = vector.extract_strided_slice %109 {offsets = [0, 64], sizes = [4, 32], strides = [1, 1]} : vector<4x192xf32> to vector<4x32xf32>
    %131 = vector.extract_strided_slice %112 {offsets = [0, 64], sizes = [4, 32], strides = [1, 1]} : vector<4x96xf32> to vector<4x32xf32>
    %132 = vector.broadcast %10 : vector<1x32xf32> to vector<4x32xf32>
    %133 = arith.addf %131, %132 : vector<4x32xf32>
    %134 = arith.mulf %121, %133 : vector<4x32xf32>
    %135 = arith.addf %130, %134 : vector<4x32xf32>
    %136 = math.tanh %135 : vector<4x32xf32>
    %cst_37 = arith.constant 1.000000e+00 : f32
    %137 = vector.broadcast %cst_37 : f32 to vector<4x32xf32>
    %138 = arith.subf %137, %129 : vector<4x32xf32>
    %139 = arith.mulf %138, %136 : vector<4x32xf32>
    %140 = arith.mulf %129, %58 : vector<4x32xf32>
    %141 = arith.addf %139, %140 : vector<4x32xf32>
    %142 = vector.broadcast %105 : vector<4x1xf32> to vector<4x32xf32>
    %143 = arith.mulf %142, %141 : vector<4x32xf32>
    %cst_38 = arith.constant 1.000000e+00 : f32
    %144 = vector.broadcast %cst_38 : f32 to vector<4x1xf32>
    %145 = arith.subf %144, %105 : vector<4x1xf32>
    %146 = vector.broadcast %145 : vector<4x1xf32> to vector<4x32xf32>
    %147 = arith.mulf %146, %58 : vector<4x32xf32>
    %148 = arith.addf %143, %147 : vector<4x32xf32>
    %149 = vector.broadcast %105 : vector<4x1xf32> to vector<4x32xf32>
    %150 = arith.mulf %149, %148 : vector<4x32xf32>
    %c1 = arith.constant 1 : index
    %c0_39 = arith.constant 0 : index
    %c0_40 = arith.constant 0 : index
    %151 = vector.load %arg23[%c1, %c0_39, %c0_40] : memref<8x4x32xf32, #tpu.memory_space<vmem>>, vector<1x4x32xf32>
    %152 = vector.shape_cast %151 : vector<1x4x32xf32> to vector<4x32xf32>
    %153 = vector.shape_cast %150 : vector<4x32xf32> to vector<1x4x32xf32>
    tpu.vector_store %arg23[%c1, %c0_39, %c0_40], %153 {strides = array<i32>} : memref<8x4x32xf32, #tpu.memory_space<vmem>>, vector<1x4x32xf32>,
    %154 = vector.extract_strided_slice %111 {offsets = [0, 96], sizes = [4, 32], strides = [1, 1]} : vector<4x192xf32> to vector<4x32xf32>
    %155 = vector.extract_strided_slice %113 {offsets = [0, 0], sizes = [4, 32], strides = [1, 1]} : vector<4x96xf32> to vector<4x32xf32>
    %156 = arith.addf %154, %155 : vector<4x32xf32>
    %157 = arith.negf %156 : vector<4x32xf32>
    %158 = math.exp %157 : vector<4x32xf32>
    %cst_41 = arith.constant 1.000000e+00 : f32
    %159 = vector.broadcast %cst_41 : f32 to vector<4x32xf32>
    %160 = arith.addf %159, %158 : vector<4x32xf32>
    %161 = arith.divf %159, %160 : vector<4x32xf32>
    %162 = vector.extract_strided_slice %111 {offsets = [0, 128], sizes = [4, 32], strides = [1, 1]} : vector<4x192xf32> to vector<4x32xf32>
    %163 = vector.extract_strided_slice %113 {offsets = [0, 32], sizes = [4, 32], strides = [1, 1]} : vector<4x96xf32> to vector<4x32xf32>
    %164 = arith.addf %162, %163 : vector<4x32xf32>
    %165 = arith.negf %164 : vector<4x32xf32>
    %166 = math.exp %165 : vector<4x32xf32>
    %cst_42 = arith.constant 1.000000e+00 : f32
    %167 = vector.broadcast %cst_42 : f32 to vector<4x32xf32>
    %168 = arith.addf %167, %166 : vector<4x32xf32>
    %169 = arith.divf %167, %168 : vector<4x32xf32>
    %170 = vector.extract_strided_slice %111 {offsets = [0, 160], sizes = [4, 32], strides = [1, 1]} : vector<4x192xf32> to vector<4x32xf32>
    %171 = vector.extract_strided_slice %113 {offsets = [0, 64], sizes = [4, 32], strides = [1, 1]} : vector<4x96xf32> to vector<4x32xf32>
    %172 = vector.broadcast %11 : vector<1x32xf32> to vector<4x32xf32>
    %173 = arith.addf %171, %172 : vector<4x32xf32>
    %174 = arith.mulf %161, %173 : vector<4x32xf32>
    %175 = arith.addf %170, %174 : vector<4x32xf32>
    %176 = math.tanh %175 : vector<4x32xf32>
    %cst_43 = arith.constant 1.000000e+00 : f32
    %177 = vector.broadcast %cst_43 : f32 to vector<4x32xf32>
    %178 = arith.subf %177, %169 : vector<4x32xf32>
    %179 = arith.mulf %178, %176 : vector<4x32xf32>
    %180 = arith.mulf %169, %98 : vector<4x32xf32>
    %181 = arith.addf %179, %180 : vector<4x32xf32>
    %182 = vector.broadcast %107 : vector<4x1xf32> to vector<4x32xf32>
    %183 = arith.mulf %182, %181 : vector<4x32xf32>
    %cst_44 = arith.constant 1.000000e+00 : f32
    %184 = vector.broadcast %cst_44 : f32 to vector<4x1xf32>
    %185 = arith.subf %184, %107 : vector<4x1xf32>
    %186 = vector.broadcast %185 : vector<4x1xf32> to vector<4x32xf32>
    %187 = arith.mulf %186, %98 : vector<4x32xf32>
    %188 = arith.addf %183, %187 : vector<4x32xf32>
    %189 = vector.broadcast %107 : vector<4x1xf32> to vector<4x32xf32>
    %190 = arith.mulf %189, %188 : vector<4x32xf32>
    %c6 = arith.constant 6 : index
    %c0_45 = arith.constant 0 : index
    %c0_46 = arith.constant 0 : index
    %191 = vector.load %arg24[%c6, %c0_45, %c0_46] : memref<8x4x32xf32, #tpu.memory_space<vmem>>, vector<1x4x32xf32>
    %192 = vector.shape_cast %191 : vector<1x4x32xf32> to vector<4x32xf32>
    %193 = vector.shape_cast %190 : vector<4x32xf32> to vector<1x4x32xf32>
    tpu.vector_store %arg24[%c6, %c0_45, %c0_46], %193 {strides = array<i32>} : memref<8x4x32xf32, #tpu.memory_space<vmem>>, vector<1x4x32xf32>,
    %194 = vector.extract_strided_slice %0 {offsets = [2, 0, 0], sizes = [1, 4, 1], strides = [1, 1, 1]} : vector<8x4x1xf32> to vector<1x4x1xf32>
    %195 = vector.shape_cast %194 : vector<1x4x1xf32> to vector<4x1xf32>
    %196 = vector.extract_strided_slice %0 {offsets = [5, 0, 0], sizes = [1, 4, 1], strides = [1, 1, 1]} : vector<8x4x1xf32> to vector<1x4x1xf32>
    %197 = vector.shape_cast %196 : vector<1x4x1xf32> to vector<4x1xf32>
    %198 = vector.extract_strided_slice %7 {offsets = [2, 0, 0], sizes = [1, 4, 192], strides = [1, 1, 1]} : vector<8x4x192xf32> to vector<1x4x192xf32>
    %199 = vector.shape_cast %198 : vector<1x4x192xf32> to vector<4x192xf32>
    %200 = vector.extract_strided_slice %7 {offsets = [5, 0, 0], sizes = [1, 4, 192], strides = [1, 1, 1]} : vector<8x4x192xf32> to vector<1x4x192xf32>
    %201 = vector.shape_cast %200 : vector<1x4x192xf32> to vector<4x192xf32>
    %cst_47 = arith.constant dense<0.000000e+00> : vector<4x96xf32>
    %202 = tpu.matmul %148, %8, %cst_47 {dimension_numbers = #tpu.dot_dimension_numbers<[1], [0], [0], [1], [0, 0, 1, 1], [], []>} : vector<4x32xf32>, vector<32x96xf32>, vector<4x96xf32> -> vector<4x96xf32>
    %cst_48 = arith.constant dense<0.000000e+00> : vector<4x96xf32>
    %203 = tpu.matmul %188, %9, %cst_48 {dimension_numbers = #tpu.dot_dimension_numbers<[1], [0], [0], [1], [0, 0, 1, 1], [], []>} : vector<4x32xf32>, vector<32x96xf32>, vector<4x96xf32> -> vector<4x96xf32>
    %204 = vector.extract_strided_slice %199 {offsets = [0, 0], sizes = [4, 32], strides = [1, 1]} : vector<4x192xf32> to vector<4x32xf32>
    %205 = vector.extract_strided_slice %202 {offsets = [0, 0], sizes = [4, 32], strides = [1, 1]} : vector<4x96xf32> to vector<4x32xf32>
    %206 = arith.addf %204, %205 : vector<4x32xf32>
    %207 = arith.negf %206 : vector<4x32xf32>
    %208 = math.exp %207 : vector<4x32xf32>
    %cst_49 = arith.constant 1.000000e+00 : f32
    %209 = vector.broadcast %cst_49 : f32 to vector<4x32xf32>
    %210 = arith.addf %209, %208 : vector<4x32xf32>
    %211 = arith.divf %209, %210 : vector<4x32xf32>
    %212 = vector.extract_strided_slice %199 {offsets = [0, 32], sizes = [4, 32], strides = [1, 1]} : vector<4x192xf32> to vector<4x32xf32>
    %213 = vector.extract_strided_slice %202 {offsets = [0, 32], sizes = [4, 32], strides = [1, 1]} : vector<4x96xf32> to vector<4x32xf32>
    %214 = arith.addf %212, %213 : vector<4x32xf32>
    %215 = arith.negf %214 : vector<4x32xf32>
    %216 = math.exp %215 : vector<4x32xf32>
    %cst_50 = arith.constant 1.000000e+00 : f32
    %217 = vector.broadcast %cst_50 : f32 to vector<4x32xf32>
    %218 = arith.addf %217, %216 : vector<4x32xf32>
    %219 = arith.divf %217, %218 : vector<4x32xf32>
    %220 = vector.extract_strided_slice %199 {offsets = [0, 64], sizes = [4, 32], strides = [1, 1]} : vector<4x192xf32> to vector<4x32xf32>
    %221 = vector.extract_strided_slice %202 {offsets = [0, 64], sizes = [4, 32], strides = [1, 1]} : vector<4x96xf32> to vector<4x32xf32>
    %222 = vector.broadcast %10 : vector<1x32xf32> to vector<4x32xf32>
    %223 = arith.addf %221, %222 : vector<4x32xf32>
    %224 = arith.mulf %211, %223 : vector<4x32xf32>
    %225 = arith.addf %220, %224 : vector<4x32xf32>
    %226 = math.tanh %225 : vector<4x32xf32>
    %cst_51 = arith.constant 1.000000e+00 : f32
    %227 = vector.broadcast %cst_51 : f32 to vector<4x32xf32>
    %228 = arith.subf %227, %219 : vector<4x32xf32>
    %229 = arith.mulf %228, %226 : vector<4x32xf32>
    %230 = arith.mulf %219, %148 : vector<4x32xf32>
    %231 = arith.addf %229, %230 : vector<4x32xf32>
    %232 = vector.broadcast %195 : vector<4x1xf32> to vector<4x32xf32>
    %233 = arith.mulf %232, %231 : vector<4x32xf32>
    %cst_52 = arith.constant 1.000000e+00 : f32
    %234 = vector.broadcast %cst_52 : f32 to vector<4x1xf32>
    %235 = arith.subf %234, %195 : vector<4x1xf32>
    %236 = vector.broadcast %235 : vector<4x1xf32> to vector<4x32xf32>
    %237 = arith.mulf %236, %148 : vector<4x32xf32>
    %238 = arith.addf %233, %237 : vector<4x32xf32>
    %239 = vector.broadcast %195 : vector<4x1xf32> to vector<4x32xf32>
    %240 = arith.mulf %239, %238 : vector<4x32xf32>
    %c2 = arith.constant 2 : index
    %c0_53 = arith.constant 0 : index
    %c0_54 = arith.constant 0 : index
    %241 = vector.load %arg23[%c2, %c0_53, %c0_54] : memref<8x4x32xf32, #tpu.memory_space<vmem>>, vector<1x4x32xf32>
    %242 = vector.shape_cast %241 : vector<1x4x32xf32> to vector<4x32xf32>
    %243 = vector.shape_cast %240 : vector<4x32xf32> to vector<1x4x32xf32>
    tpu.vector_store %arg23[%c2, %c0_53, %c0_54], %243 {strides = array<i32>} : memref<8x4x32xf32, #tpu.memory_space<vmem>>, vector<1x4x32xf32>,
    %244 = vector.extract_strided_slice %201 {offsets = [0, 96], sizes = [4, 32], strides = [1, 1]} : vector<4x192xf32> to vector<4x32xf32>
    %245 = vector.extract_strided_slice %203 {offsets = [0, 0], sizes = [4, 32], strides = [1, 1]} : vector<4x96xf32> to vector<4x32xf32>
    %246 = arith.addf %244, %245 : vector<4x32xf32>
    %247 = arith.negf %246 : vector<4x32xf32>
    %248 = math.exp %247 : vector<4x32xf32>
    %cst_55 = arith.constant 1.000000e+00 : f32
    %249 = vector.broadcast %cst_55 : f32 to vector<4x32xf32>
    %250 = arith.addf %249, %248 : vector<4x32xf32>
    %251 = arith.divf %249, %250 : vector<4x32xf32>
    %252 = vector.extract_strided_slice %201 {offsets = [0, 128], sizes = [4, 32], strides = [1, 1]} : vector<4x192xf32> to vector<4x32xf32>
    %253 = vector.extract_strided_slice %203 {offsets = [0, 32], sizes = [4, 32], strides = [1, 1]} : vector<4x96xf32> to vector<4x32xf32>
    %254 = arith.addf %252, %253 : vector<4x32xf32>
    %255 = arith.negf %254 : vector<4x32xf32>
    %256 = math.exp %255 : vector<4x32xf32>
    %cst_56 = arith.constant 1.000000e+00 : f32
    %257 = vector.broadcast %cst_56 : f32 to vector<4x32xf32>
    %258 = arith.addf %257, %256 : vector<4x32xf32>
    %259 = arith.divf %257, %258 : vector<4x32xf32>
    %260 = vector.extract_strided_slice %201 {offsets = [0, 160], sizes = [4, 32], strides = [1, 1]} : vector<4x192xf32> to vector<4x32xf32>
    %261 = vector.extract_strided_slice %203 {offsets = [0, 64], sizes = [4, 32], strides = [1, 1]} : vector<4x96xf32> to vector<4x32xf32>
    %262 = vector.broadcast %11 : vector<1x32xf32> to vector<4x32xf32>
    %263 = arith.addf %261, %262 : vector<4x32xf32>
    %264 = arith.mulf %251, %263 : vector<4x32xf32>
    %265 = arith.addf %260, %264 : vector<4x32xf32>
    %266 = math.tanh %265 : vector<4x32xf32>
    %cst_57 = arith.constant 1.000000e+00 : f32
    %267 = vector.broadcast %cst_57 : f32 to vector<4x32xf32>
    %268 = arith.subf %267, %259 : vector<4x32xf32>
    %269 = arith.mulf %268, %266 : vector<4x32xf32>
    %270 = arith.mulf %259, %188 : vector<4x32xf32>
    %271 = arith.addf %269, %270 : vector<4x32xf32>
    %272 = vector.broadcast %197 : vector<4x1xf32> to vector<4x32xf32>
    %273 = arith.mulf %272, %271 : vector<4x32xf32>
    %cst_58 = arith.constant 1.000000e+00 : f32
    %274 = vector.broadcast %cst_58 : f32 to vector<4x1xf32>
    %275 = arith.subf %274, %197 : vector<4x1xf32>
    %276 = vector.broadcast %275 : vector<4x1xf32> to vector<4x32xf32>
    %277 = arith.mulf %276, %188 : vector<4x32xf32>
    %278 = arith.addf %273, %277 : vector<4x32xf32>
    %279 = vector.broadcast %197 : vector<4x1xf32> to vector<4x32xf32>
    %280 = arith.mulf %279, %278 : vector<4x32xf32>
    %c5 = arith.constant 5 : index
    %c0_59 = arith.constant 0 : index
    %c0_60 = arith.constant 0 : index
    %281 = vector.load %arg24[%c5, %c0_59, %c0_60] : memref<8x4x32xf32, #tpu.memory_space<vmem>>, vector<1x4x32xf32>
    %282 = vector.shape_cast %281 : vector<1x4x32xf32> to vector<4x32xf32>
    %283 = vector.shape_cast %280 : vector<4x32xf32> to vector<1x4x32xf32>
    tpu.vector_store %arg24[%c5, %c0_59, %c0_60], %283 {strides = array<i32>} : memref<8x4x32xf32, #tpu.memory_space<vmem>>, vector<1x4x32xf32>,
    %284 = vector.extract_strided_slice %0 {offsets = [3, 0, 0], sizes = [1, 4, 1], strides = [1, 1, 1]} : vector<8x4x1xf32> to vector<1x4x1xf32>
    %285 = vector.shape_cast %284 : vector<1x4x1xf32> to vector<4x1xf32>
    %286 = vector.extract_strided_slice %0 {offsets = [4, 0, 0], sizes = [1, 4, 1], strides = [1, 1, 1]} : vector<8x4x1xf32> to vector<1x4x1xf32>
    %287 = vector.shape_cast %286 : vector<1x4x1xf32> to vector<4x1xf32>
    %288 = vector.extract_strided_slice %7 {offsets = [3, 0, 0], sizes = [1, 4, 192], strides = [1, 1, 1]} : vector<8x4x192xf32> to vector<1x4x192xf32>
    %289 = vector.shape_cast %288 : vector<1x4x192xf32> to vector<4x192xf32>
    %290 = vector.extract_strided_slice %7 {offsets = [4, 0, 0], sizes = [1, 4, 192], strides = [1, 1, 1]} : vector<8x4x192xf32> to vector<1x4x192xf32>
    %291 = vector.shape_cast %290 : vector<1x4x192xf32> to vector<4x192xf32>
    %cst_61 = arith.constant dense<0.000000e+00> : vector<4x96xf32>
    %292 = tpu.matmul %238, %8, %cst_61 {dimension_numbers = #tpu.dot_dimension_numbers<[1], [0], [0], [1], [0, 0, 1, 1], [], []>} : vector<4x32xf32>, vector<32x96xf32>, vector<4x96xf32> -> vector<4x96xf32>
    %cst_62 = arith.constant dense<0.000000e+00> : vector<4x96xf32>
    %293 = tpu.matmul %278, %9, %cst_62 {dimension_numbers = #tpu.dot_dimension_numbers<[1], [0], [0], [1], [0, 0, 1, 1], [], []>} : vector<4x32xf32>, vector<32x96xf32>, vector<4x96xf32> -> vector<4x96xf32>
    %294 = vector.extract_strided_slice %289 {offsets = [0, 0], sizes = [4, 32], strides = [1, 1]} : vector<4x192xf32> to vector<4x32xf32>
    %295 = vector.extract_strided_slice %292 {offsets = [0, 0], sizes = [4, 32], strides = [1, 1]} : vector<4x96xf32> to vector<4x32xf32>
    %296 = arith.addf %294, %295 : vector<4x32xf32>
    %297 = arith.negf %296 : vector<4x32xf32>
    %298 = math.exp %297 : vector<4x32xf32>
    %cst_63 = arith.constant 1.000000e+00 : f32
    %299 = vector.broadcast %cst_63 : f32 to vector<4x32xf32>
    %300 = arith.addf %299, %298 : vector<4x32xf32>
    %301 = arith.divf %299, %300 : vector<4x32xf32>
    %302 = vector.extract_strided_slice %289 {offsets = [0, 32], sizes = [4, 32], strides = [1, 1]} : vector<4x192xf32> to vector<4x32xf32>
    %303 = vector.extract_strided_slice %292 {offsets = [0, 32], sizes = [4, 32], strides = [1, 1]} : vector<4x96xf32> to vector<4x32xf32>
    %304 = arith.addf %302, %303 : vector<4x32xf32>
    %305 = arith.negf %304 : vector<4x32xf32>
    %306 = math.exp %305 : vector<4x32xf32>
    %cst_64 = arith.constant 1.000000e+00 : f32
    %307 = vector.broadcast %cst_64 : f32 to vector<4x32xf32>
    %308 = arith.addf %307, %306 : vector<4x32xf32>
    %309 = arith.divf %307, %308 : vector<4x32xf32>
    %310 = vector.extract_strided_slice %289 {offsets = [0, 64], sizes = [4, 32], strides = [1, 1]} : vector<4x192xf32> to vector<4x32xf32>
    %311 = vector.extract_strided_slice %292 {offsets = [0, 64], sizes = [4, 32], strides = [1, 1]} : vector<4x96xf32> to vector<4x32xf32>
    %312 = vector.broadcast %10 : vector<1x32xf32> to vector<4x32xf32>
    %313 = arith.addf %311, %312 : vector<4x32xf32>
    %314 = arith.mulf %301, %313 : vector<4x32xf32>
    %315 = arith.addf %310, %314 : vector<4x32xf32>
    %316 = math.tanh %315 : vector<4x32xf32>
    %cst_65 = arith.constant 1.000000e+00 : f32
    %317 = vector.broadcast %cst_65 : f32 to vector<4x32xf32>
    %318 = arith.subf %317, %309 : vector<4x32xf32>
    %319 = arith.mulf %318, %316 : vector<4x32xf32>
    %320 = arith.mulf %309, %238 : vector<4x32xf32>
    %321 = arith.addf %319, %320 : vector<4x32xf32>
    %322 = vector.broadcast %285 : vector<4x1xf32> to vector<4x32xf32>
    %323 = arith.mulf %322, %321 : vector<4x32xf32>
    %cst_66 = arith.constant 1.000000e+00 : f32
    %324 = vector.broadcast %cst_66 : f32 to vector<4x1xf32>
    %325 = arith.subf %324, %285 : vector<4x1xf32>
    %326 = vector.broadcast %325 : vector<4x1xf32> to vector<4x32xf32>
    %327 = arith.mulf %326, %238 : vector<4x32xf32>
    %328 = arith.addf %323, %327 : vector<4x32xf32>
    %329 = vector.broadcast %285 : vector<4x1xf32> to vector<4x32xf32>
    %330 = arith.mulf %329, %328 : vector<4x32xf32>
    %c3 = arith.constant 3 : index
    %c0_67 = arith.constant 0 : index
    %c0_68 = arith.constant 0 : index
    %331 = vector.load %arg23[%c3, %c0_67, %c0_68] : memref<8x4x32xf32, #tpu.memory_space<vmem>>, vector<1x4x32xf32>
    %332 = vector.shape_cast %331 : vector<1x4x32xf32> to vector<4x32xf32>
    %333 = vector.shape_cast %330 : vector<4x32xf32> to vector<1x4x32xf32>
    tpu.vector_store %arg23[%c3, %c0_67, %c0_68], %333 {strides = array<i32>} : memref<8x4x32xf32, #tpu.memory_space<vmem>>, vector<1x4x32xf32>,
    %334 = vector.extract_strided_slice %291 {offsets = [0, 96], sizes = [4, 32], strides = [1, 1]} : vector<4x192xf32> to vector<4x32xf32>
    %335 = vector.extract_strided_slice %293 {offsets = [0, 0], sizes = [4, 32], strides = [1, 1]} : vector<4x96xf32> to vector<4x32xf32>
    %336 = arith.addf %334, %335 : vector<4x32xf32>
    %337 = arith.negf %336 : vector<4x32xf32>
    %338 = math.exp %337 : vector<4x32xf32>
    %cst_69 = arith.constant 1.000000e+00 : f32
    %339 = vector.broadcast %cst_69 : f32 to vector<4x32xf32>
    %340 = arith.addf %339, %338 : vector<4x32xf32>
    %341 = arith.divf %339, %340 : vector<4x32xf32>
    %342 = vector.extract_strided_slice %291 {offsets = [0, 128], sizes = [4, 32], strides = [1, 1]} : vector<4x192xf32> to vector<4x32xf32>
    %343 = vector.extract_strided_slice %293 {offsets = [0, 32], sizes = [4, 32], strides = [1, 1]} : vector<4x96xf32> to vector<4x32xf32>
    %344 = arith.addf %342, %343 : vector<4x32xf32>
    %345 = arith.negf %344 : vector<4x32xf32>
    %346 = math.exp %345 : vector<4x32xf32>
    %cst_70 = arith.constant 1.000000e+00 : f32
    %347 = vector.broadcast %cst_70 : f32 to vector<4x32xf32>
    %348 = arith.addf %347, %346 : vector<4x32xf32>
    %349 = arith.divf %347, %348 : vector<4x32xf32>
    %350 = vector.extract_strided_slice %291 {offsets = [0, 160], sizes = [4, 32], strides = [1, 1]} : vector<4x192xf32> to vector<4x32xf32>
    %351 = vector.extract_strided_slice %293 {offsets = [0, 64], sizes = [4, 32], strides = [1, 1]} : vector<4x96xf32> to vector<4x32xf32>
    %352 = vector.broadcast %11 : vector<1x32xf32> to vector<4x32xf32>
    %353 = arith.addf %351, %352 : vector<4x32xf32>
    %354 = arith.mulf %341, %353 : vector<4x32xf32>
    %355 = arith.addf %350, %354 : vector<4x32xf32>
    %356 = math.tanh %355 : vector<4x32xf32>
    %cst_71 = arith.constant 1.000000e+00 : f32
    %357 = vector.broadcast %cst_71 : f32 to vector<4x32xf32>
    %358 = arith.subf %357, %349 : vector<4x32xf32>
    %359 = arith.mulf %358, %356 : vector<4x32xf32>
    %360 = arith.mulf %349, %278 : vector<4x32xf32>
    %361 = arith.addf %359, %360 : vector<4x32xf32>
    %362 = vector.broadcast %287 : vector<4x1xf32> to vector<4x32xf32>
    %363 = arith.mulf %362, %361 : vector<4x32xf32>
    %cst_72 = arith.constant 1.000000e+00 : f32
    %364 = vector.broadcast %cst_72 : f32 to vector<4x1xf32>
    %365 = arith.subf %364, %287 : vector<4x1xf32>
    %366 = vector.broadcast %365 : vector<4x1xf32> to vector<4x32xf32>
    %367 = arith.mulf %366, %278 : vector<4x32xf32>
    %368 = arith.addf %363, %367 : vector<4x32xf32>
    %369 = vector.broadcast %287 : vector<4x1xf32> to vector<4x32xf32>
    %370 = arith.mulf %369, %368 : vector<4x32xf32>
    %c4 = arith.constant 4 : index
    %c0_73 = arith.constant 0 : index
    %c0_74 = arith.constant 0 : index
    %371 = vector.load %arg24[%c4, %c0_73, %c0_74] : memref<8x4x32xf32, #tpu.memory_space<vmem>>, vector<1x4x32xf32>
    %372 = vector.shape_cast %371 : vector<1x4x32xf32> to vector<4x32xf32>
    %373 = vector.shape_cast %370 : vector<4x32xf32> to vector<1x4x32xf32>
    tpu.vector_store %arg24[%c4, %c0_73, %c0_74], %373 {strides = array<i32>} : memref<8x4x32xf32, #tpu.memory_space<vmem>>, vector<1x4x32xf32>,
    %374 = vector.extract_strided_slice %0 {offsets = [4, 0, 0], sizes = [1, 4, 1], strides = [1, 1, 1]} : vector<8x4x1xf32> to vector<1x4x1xf32>
    %375 = vector.shape_cast %374 : vector<1x4x1xf32> to vector<4x1xf32>
    %376 = vector.extract_strided_slice %0 {offsets = [3, 0, 0], sizes = [1, 4, 1], strides = [1, 1, 1]} : vector<8x4x1xf32> to vector<1x4x1xf32>
    %377 = vector.shape_cast %376 : vector<1x4x1xf32> to vector<4x1xf32>
    %378 = vector.extract_strided_slice %7 {offsets = [4, 0, 0], sizes = [1, 4, 192], strides = [1, 1, 1]} : vector<8x4x192xf32> to vector<1x4x192xf32>
    %379 = vector.shape_cast %378 : vector<1x4x192xf32> to vector<4x192xf32>
    %380 = vector.extract_strided_slice %7 {offsets = [3, 0, 0], sizes = [1, 4, 192], strides = [1, 1, 1]} : vector<8x4x192xf32> to vector<1x4x192xf32>
    %381 = vector.shape_cast %380 : vector<1x4x192xf32> to vector<4x192xf32>
    %cst_75 = arith.constant dense<0.000000e+00> : vector<4x96xf32>
    %382 = tpu.matmul %328, %8, %cst_75 {dimension_numbers = #tpu.dot_dimension_numbers<[1], [0], [0], [1], [0, 0, 1, 1], [], []>} : vector<4x32xf32>, vector<32x96xf32>, vector<4x96xf32> -> vector<4x96xf32>
    %cst_76 = arith.constant dense<0.000000e+00> : vector<4x96xf32>
    %383 = tpu.matmul %368, %9, %cst_76 {dimension_numbers = #tpu.dot_dimension_numbers<[1], [0], [0], [1], [0, 0, 1, 1], [], []>} : vector<4x32xf32>, vector<32x96xf32>, vector<4x96xf32> -> vector<4x96xf32>
    %384 = vector.extract_strided_slice %379 {offsets = [0, 0], sizes = [4, 32], strides = [1, 1]} : vector<4x192xf32> to vector<4x32xf32>
    %385 = vector.extract_strided_slice %382 {offsets = [0, 0], sizes = [4, 32], strides = [1, 1]} : vector<4x96xf32> to vector<4x32xf32>
    %386 = arith.addf %384, %385 : vector<4x32xf32>
    %387 = arith.negf %386 : vector<4x32xf32>
    %388 = math.exp %387 : vector<4x32xf32>
    %cst_77 = arith.constant 1.000000e+00 : f32
    %389 = vector.broadcast %cst_77 : f32 to vector<4x32xf32>
    %390 = arith.addf %389, %388 : vector<4x32xf32>
    %391 = arith.divf %389, %390 : vector<4x32xf32>
    %392 = vector.extract_strided_slice %379 {offsets = [0, 32], sizes = [4, 32], strides = [1, 1]} : vector<4x192xf32> to vector<4x32xf32>
    %393 = vector.extract_strided_slice %382 {offsets = [0, 32], sizes = [4, 32], strides = [1, 1]} : vector<4x96xf32> to vector<4x32xf32>
    %394 = arith.addf %392, %393 : vector<4x32xf32>
    %395 = arith.negf %394 : vector<4x32xf32>
    %396 = math.exp %395 : vector<4x32xf32>
    %cst_78 = arith.constant 1.000000e+00 : f32
    %397 = vector.broadcast %cst_78 : f32 to vector<4x32xf32>
    %398 = arith.addf %397, %396 : vector<4x32xf32>
    %399 = arith.divf %397, %398 : vector<4x32xf32>
    %400 = vector.extract_strided_slice %379 {offsets = [0, 64], sizes = [4, 32], strides = [1, 1]} : vector<4x192xf32> to vector<4x32xf32>
    %401 = vector.extract_strided_slice %382 {offsets = [0, 64], sizes = [4, 32], strides = [1, 1]} : vector<4x96xf32> to vector<4x32xf32>
    %402 = vector.broadcast %10 : vector<1x32xf32> to vector<4x32xf32>
    %403 = arith.addf %401, %402 : vector<4x32xf32>
    %404 = arith.mulf %391, %403 : vector<4x32xf32>
    %405 = arith.addf %400, %404 : vector<4x32xf32>
    %406 = math.tanh %405 : vector<4x32xf32>
    %cst_79 = arith.constant 1.000000e+00 : f32
    %407 = vector.broadcast %cst_79 : f32 to vector<4x32xf32>
    %408 = arith.subf %407, %399 : vector<4x32xf32>
    %409 = arith.mulf %408, %406 : vector<4x32xf32>
    %410 = arith.mulf %399, %328 : vector<4x32xf32>
    %411 = arith.addf %409, %410 : vector<4x32xf32>
    %412 = vector.broadcast %375 : vector<4x1xf32> to vector<4x32xf32>
    %413 = arith.mulf %412, %411 : vector<4x32xf32>
    %cst_80 = arith.constant 1.000000e+00 : f32
    %414 = vector.broadcast %cst_80 : f32 to vector<4x1xf32>
    %415 = arith.subf %414, %375 : vector<4x1xf32>
    %416 = vector.broadcast %415 : vector<4x1xf32> to vector<4x32xf32>
    %417 = arith.mulf %416, %328 : vector<4x32xf32>
    %418 = arith.addf %413, %417 : vector<4x32xf32>
    %419 = vector.broadcast %375 : vector<4x1xf32> to vector<4x32xf32>
    %420 = arith.mulf %419, %418 : vector<4x32xf32>
    %c4_81 = arith.constant 4 : index
    %c0_82 = arith.constant 0 : index
    %c0_83 = arith.constant 0 : index
    %421 = vector.load %arg23[%c4_81, %c0_82, %c0_83] : memref<8x4x32xf32, #tpu.memory_space<vmem>>, vector<1x4x32xf32>
    %422 = vector.shape_cast %421 : vector<1x4x32xf32> to vector<4x32xf32>
    %423 = vector.shape_cast %420 : vector<4x32xf32> to vector<1x4x32xf32>
    tpu.vector_store %arg23[%c4_81, %c0_82, %c0_83], %423 {strides = array<i32>} : memref<8x4x32xf32, #tpu.memory_space<vmem>>, vector<1x4x32xf32>,
    %424 = vector.extract_strided_slice %381 {offsets = [0, 96], sizes = [4, 32], strides = [1, 1]} : vector<4x192xf32> to vector<4x32xf32>
    %425 = vector.extract_strided_slice %383 {offsets = [0, 0], sizes = [4, 32], strides = [1, 1]} : vector<4x96xf32> to vector<4x32xf32>
    %426 = arith.addf %424, %425 : vector<4x32xf32>
    %427 = arith.negf %426 : vector<4x32xf32>
    %428 = math.exp %427 : vector<4x32xf32>
    %cst_84 = arith.constant 1.000000e+00 : f32
    %429 = vector.broadcast %cst_84 : f32 to vector<4x32xf32>
    %430 = arith.addf %429, %428 : vector<4x32xf32>
    %431 = arith.divf %429, %430 : vector<4x32xf32>
    %432 = vector.extract_strided_slice %381 {offsets = [0, 128], sizes = [4, 32], strides = [1, 1]} : vector<4x192xf32> to vector<4x32xf32>
    %433 = vector.extract_strided_slice %383 {offsets = [0, 32], sizes = [4, 32], strides = [1, 1]} : vector<4x96xf32> to vector<4x32xf32>
    %434 = arith.addf %432, %433 : vector<4x32xf32>
    %435 = arith.negf %434 : vector<4x32xf32>
    %436 = math.exp %435 : vector<4x32xf32>
    %cst_85 = arith.constant 1.000000e+00 : f32
    %437 = vector.broadcast %cst_85 : f32 to vector<4x32xf32>
    %438 = arith.addf %437, %436 : vector<4x32xf32>
    %439 = arith.divf %437, %438 : vector<4x32xf32>
    %440 = vector.extract_strided_slice %381 {offsets = [0, 160], sizes = [4, 32], strides = [1, 1]} : vector<4x192xf32> to vector<4x32xf32>
    %441 = vector.extract_strided_slice %383 {offsets = [0, 64], sizes = [4, 32], strides = [1, 1]} : vector<4x96xf32> to vector<4x32xf32>
    %442 = vector.broadcast %11 : vector<1x32xf32> to vector<4x32xf32>
    %443 = arith.addf %441, %442 : vector<4x32xf32>
    %444 = arith.mulf %431, %443 : vector<4x32xf32>
    %445 = arith.addf %440, %444 : vector<4x32xf32>
    %446 = math.tanh %445 : vector<4x32xf32>
    %cst_86 = arith.constant 1.000000e+00 : f32
    %447 = vector.broadcast %cst_86 : f32 to vector<4x32xf32>
    %448 = arith.subf %447, %439 : vector<4x32xf32>
    %449 = arith.mulf %448, %446 : vector<4x32xf32>
    %450 = arith.mulf %439, %368 : vector<4x32xf32>
    %451 = arith.addf %449, %450 : vector<4x32xf32>
    %452 = vector.broadcast %377 : vector<4x1xf32> to vector<4x32xf32>
    %453 = arith.mulf %452, %451 : vector<4x32xf32>
    %cst_87 = arith.constant 1.000000e+00 : f32
    %454 = vector.broadcast %cst_87 : f32 to vector<4x1xf32>
    %455 = arith.subf %454, %377 : vector<4x1xf32>
    %456 = vector.broadcast %455 : vector<4x1xf32> to vector<4x32xf32>
    %457 = arith.mulf %456, %368 : vector<4x32xf32>
    %458 = arith.addf %453, %457 : vector<4x32xf32>
    %459 = vector.broadcast %377 : vector<4x1xf32> to vector<4x32xf32>
    %460 = arith.mulf %459, %458 : vector<4x32xf32>
    %c3_88 = arith.constant 3 : index
    %c0_89 = arith.constant 0 : index
    %c0_90 = arith.constant 0 : index
    %461 = vector.load %arg24[%c3_88, %c0_89, %c0_90] : memref<8x4x32xf32, #tpu.memory_space<vmem>>, vector<1x4x32xf32>
    %462 = vector.shape_cast %461 : vector<1x4x32xf32> to vector<4x32xf32>
    %463 = vector.shape_cast %460 : vector<4x32xf32> to vector<1x4x32xf32>
    tpu.vector_store %arg24[%c3_88, %c0_89, %c0_90], %463 {strides = array<i32>} : memref<8x4x32xf32, #tpu.memory_space<vmem>>, vector<1x4x32xf32>,
    %464 = vector.extract_strided_slice %0 {offsets = [5, 0, 0], sizes = [1, 4, 1], strides = [1, 1, 1]} : vector<8x4x1xf32> to vector<1x4x1xf32>
    %465 = vector.shape_cast %464 : vector<1x4x1xf32> to vector<4x1xf32>
    %466 = vector.extract_strided_slice %0 {offsets = [2, 0, 0], sizes = [1, 4, 1], strides = [1, 1, 1]} : vector<8x4x1xf32> to vector<1x4x1xf32>
    %467 = vector.shape_cast %466 : vector<1x4x1xf32> to vector<4x1xf32>
    %468 = vector.extract_strided_slice %7 {offsets = [5, 0, 0], sizes = [1, 4, 192], strides = [1, 1, 1]} : vector<8x4x192xf32> to vector<1x4x192xf32>
    %469 = vector.shape_cast %468 : vector<1x4x192xf32> to vector<4x192xf32>
    %470 = vector.extract_strided_slice %7 {offsets = [2, 0, 0], sizes = [1, 4, 192], strides = [1, 1, 1]} : vector<8x4x192xf32> to vector<1x4x192xf32>
    %471 = vector.shape_cast %470 : vector<1x4x192xf32> to vector<4x192xf32>
    %cst_91 = arith.constant dense<0.000000e+00> : vector<4x96xf32>
    %472 = tpu.matmul %418, %8, %cst_91 {dimension_numbers = #tpu.dot_dimension_numbers<[1], [0], [0], [1], [0, 0, 1, 1], [], []>} : vector<4x32xf32>, vector<32x96xf32>, vector<4x96xf32> -> vector<4x96xf32>
    %cst_92 = arith.constant dense<0.000000e+00> : vector<4x96xf32>
    %473 = tpu.matmul %458, %9, %cst_92 {dimension_numbers = #tpu.dot_dimension_numbers<[1], [0], [0], [1], [0, 0, 1, 1], [], []>} : vector<4x32xf32>, vector<32x96xf32>, vector<4x96xf32> -> vector<4x96xf32>
    %474 = vector.extract_strided_slice %469 {offsets = [0, 0], sizes = [4, 32], strides = [1, 1]} : vector<4x192xf32> to vector<4x32xf32>
    %475 = vector.extract_strided_slice %472 {offsets = [0, 0], sizes = [4, 32], strides = [1, 1]} : vector<4x96xf32> to vector<4x32xf32>
    %476 = arith.addf %474, %475 : vector<4x32xf32>
    %477 = arith.negf %476 : vector<4x32xf32>
    %478 = math.exp %477 : vector<4x32xf32>
    %cst_93 = arith.constant 1.000000e+00 : f32
    %479 = vector.broadcast %cst_93 : f32 to vector<4x32xf32>
    %480 = arith.addf %479, %478 : vector<4x32xf32>
    %481 = arith.divf %479, %480 : vector<4x32xf32>
    %482 = vector.extract_strided_slice %469 {offsets = [0, 32], sizes = [4, 32], strides = [1, 1]} : vector<4x192xf32> to vector<4x32xf32>
    %483 = vector.extract_strided_slice %472 {offsets = [0, 32], sizes = [4, 32], strides = [1, 1]} : vector<4x96xf32> to vector<4x32xf32>
    %484 = arith.addf %482, %483 : vector<4x32xf32>
    %485 = arith.negf %484 : vector<4x32xf32>
    %486 = math.exp %485 : vector<4x32xf32>
    %cst_94 = arith.constant 1.000000e+00 : f32
    %487 = vector.broadcast %cst_94 : f32 to vector<4x32xf32>
    %488 = arith.addf %487, %486 : vector<4x32xf32>
    %489 = arith.divf %487, %488 : vector<4x32xf32>
    %490 = vector.extract_strided_slice %469 {offsets = [0, 64], sizes = [4, 32], strides = [1, 1]} : vector<4x192xf32> to vector<4x32xf32>
    %491 = vector.extract_strided_slice %472 {offsets = [0, 64], sizes = [4, 32], strides = [1, 1]} : vector<4x96xf32> to vector<4x32xf32>
    %492 = vector.broadcast %10 : vector<1x32xf32> to vector<4x32xf32>
    %493 = arith.addf %491, %492 : vector<4x32xf32>
    %494 = arith.mulf %481, %493 : vector<4x32xf32>
    %495 = arith.addf %490, %494 : vector<4x32xf32>
    %496 = math.tanh %495 : vector<4x32xf32>
    %cst_95 = arith.constant 1.000000e+00 : f32
    %497 = vector.broadcast %cst_95 : f32 to vector<4x32xf32>
    %498 = arith.subf %497, %489 : vector<4x32xf32>
    %499 = arith.mulf %498, %496 : vector<4x32xf32>
    %500 = arith.mulf %489, %418 : vector<4x32xf32>
    %501 = arith.addf %499, %500 : vector<4x32xf32>
    %502 = vector.broadcast %465 : vector<4x1xf32> to vector<4x32xf32>
    %503 = arith.mulf %502, %501 : vector<4x32xf32>
    %cst_96 = arith.constant 1.000000e+00 : f32
    %504 = vector.broadcast %cst_96 : f32 to vector<4x1xf32>
    %505 = arith.subf %504, %465 : vector<4x1xf32>
    %506 = vector.broadcast %505 : vector<4x1xf32> to vector<4x32xf32>
    %507 = arith.mulf %506, %418 : vector<4x32xf32>
    %508 = arith.addf %503, %507 : vector<4x32xf32>
    %509 = vector.broadcast %465 : vector<4x1xf32> to vector<4x32xf32>
    %510 = arith.mulf %509, %508 : vector<4x32xf32>
    %c5_97 = arith.constant 5 : index
    %c0_98 = arith.constant 0 : index
    %c0_99 = arith.constant 0 : index
    %511 = vector.load %arg23[%c5_97, %c0_98, %c0_99] : memref<8x4x32xf32, #tpu.memory_space<vmem>>, vector<1x4x32xf32>
    %512 = vector.shape_cast %511 : vector<1x4x32xf32> to vector<4x32xf32>
    %513 = vector.shape_cast %510 : vector<4x32xf32> to vector<1x4x32xf32>
    tpu.vector_store %arg23[%c5_97, %c0_98, %c0_99], %513 {strides = array<i32>} : memref<8x4x32xf32, #tpu.memory_space<vmem>>, vector<1x4x32xf32>,
    %514 = vector.extract_strided_slice %471 {offsets = [0, 96], sizes = [4, 32], strides = [1, 1]} : vector<4x192xf32> to vector<4x32xf32>
    %515 = vector.extract_strided_slice %473 {offsets = [0, 0], sizes = [4, 32], strides = [1, 1]} : vector<4x96xf32> to vector<4x32xf32>
    %516 = arith.addf %514, %515 : vector<4x32xf32>
    %517 = arith.negf %516 : vector<4x32xf32>
    %518 = math.exp %517 : vector<4x32xf32>
    %cst_100 = arith.constant 1.000000e+00 : f32
    %519 = vector.broadcast %cst_100 : f32 to vector<4x32xf32>
    %520 = arith.addf %519, %518 : vector<4x32xf32>
    %521 = arith.divf %519, %520 : vector<4x32xf32>
    %522 = vector.extract_strided_slice %471 {offsets = [0, 128], sizes = [4, 32], strides = [1, 1]} : vector<4x192xf32> to vector<4x32xf32>
    %523 = vector.extract_strided_slice %473 {offsets = [0, 32], sizes = [4, 32], strides = [1, 1]} : vector<4x96xf32> to vector<4x32xf32>
    %524 = arith.addf %522, %523 : vector<4x32xf32>
    %525 = arith.negf %524 : vector<4x32xf32>
    %526 = math.exp %525 : vector<4x32xf32>
    %cst_101 = arith.constant 1.000000e+00 : f32
    %527 = vector.broadcast %cst_101 : f32 to vector<4x32xf32>
    %528 = arith.addf %527, %526 : vector<4x32xf32>
    %529 = arith.divf %527, %528 : vector<4x32xf32>
    %530 = vector.extract_strided_slice %471 {offsets = [0, 160], sizes = [4, 32], strides = [1, 1]} : vector<4x192xf32> to vector<4x32xf32>
    %531 = vector.extract_strided_slice %473 {offsets = [0, 64], sizes = [4, 32], strides = [1, 1]} : vector<4x96xf32> to vector<4x32xf32>
    %532 = vector.broadcast %11 : vector<1x32xf32> to vector<4x32xf32>
    %533 = arith.addf %531, %532 : vector<4x32xf32>
    %534 = arith.mulf %521, %533 : vector<4x32xf32>
    %535 = arith.addf %530, %534 : vector<4x32xf32>
    %536 = math.tanh %535 : vector<4x32xf32>
    %cst_102 = arith.constant 1.000000e+00 : f32
    %537 = vector.broadcast %cst_102 : f32 to vector<4x32xf32>
    %538 = arith.subf %537, %529 : vector<4x32xf32>
    %539 = arith.mulf %538, %536 : vector<4x32xf32>
    %540 = arith.mulf %529, %458 : vector<4x32xf32>
    %541 = arith.addf %539, %540 : vector<4x32xf32>
    %542 = vector.broadcast %467 : vector<4x1xf32> to vector<4x32xf32>
    %543 = arith.mulf %542, %541 : vector<4x32xf32>
    %cst_103 = arith.constant 1.000000e+00 : f32
    %544 = vector.broadcast %cst_103 : f32 to vector<4x1xf32>
    %545 = arith.subf %544, %467 : vector<4x1xf32>
    %546 = vector.broadcast %545 : vector<4x1xf32> to vector<4x32xf32>
    %547 = arith.mulf %546, %458 : vector<4x32xf32>
    %548 = arith.addf %543, %547 : vector<4x32xf32>
    %549 = vector.broadcast %467 : vector<4x1xf32> to vector<4x32xf32>
    %550 = arith.mulf %549, %548 : vector<4x32xf32>
    %c2_104 = arith.constant 2 : index
    %c0_105 = arith.constant 0 : index
    %c0_106 = arith.constant 0 : index
    %551 = vector.load %arg24[%c2_104, %c0_105, %c0_106] : memref<8x4x32xf32, #tpu.memory_space<vmem>>, vector<1x4x32xf32>
    %552 = vector.shape_cast %551 : vector<1x4x32xf32> to vector<4x32xf32>
    %553 = vector.shape_cast %550 : vector<4x32xf32> to vector<1x4x32xf32>
    tpu.vector_store %arg24[%c2_104, %c0_105, %c0_106], %553 {strides = array<i32>} : memref<8x4x32xf32, #tpu.memory_space<vmem>>, vector<1x4x32xf32>,
    %554 = vector.extract_strided_slice %0 {offsets = [6, 0, 0], sizes = [1, 4, 1], strides = [1, 1, 1]} : vector<8x4x1xf32> to vector<1x4x1xf32>
    %555 = vector.shape_cast %554 : vector<1x4x1xf32> to vector<4x1xf32>
    %556 = vector.extract_strided_slice %0 {offsets = [1, 0, 0], sizes = [1, 4, 1], strides = [1, 1, 1]} : vector<8x4x1xf32> to vector<1x4x1xf32>
    %557 = vector.shape_cast %556 : vector<1x4x1xf32> to vector<4x1xf32>
    %558 = vector.extract_strided_slice %7 {offsets = [6, 0, 0], sizes = [1, 4, 192], strides = [1, 1, 1]} : vector<8x4x192xf32> to vector<1x4x192xf32>
    %559 = vector.shape_cast %558 : vector<1x4x192xf32> to vector<4x192xf32>
    %560 = vector.extract_strided_slice %7 {offsets = [1, 0, 0], sizes = [1, 4, 192], strides = [1, 1, 1]} : vector<8x4x192xf32> to vector<1x4x192xf32>
    %561 = vector.shape_cast %560 : vector<1x4x192xf32> to vector<4x192xf32>
    %cst_107 = arith.constant dense<0.000000e+00> : vector<4x96xf32>
    %562 = tpu.matmul %508, %8, %cst_107 {dimension_numbers = #tpu.dot_dimension_numbers<[1], [0], [0], [1], [0, 0, 1, 1], [], []>} : vector<4x32xf32>, vector<32x96xf32>, vector<4x96xf32> -> vector<4x96xf32>
    %cst_108 = arith.constant dense<0.000000e+00> : vector<4x96xf32>
    %563 = tpu.matmul %548, %9, %cst_108 {dimension_numbers = #tpu.dot_dimension_numbers<[1], [0], [0], [1], [0, 0, 1, 1], [], []>} : vector<4x32xf32>, vector<32x96xf32>, vector<4x96xf32> -> vector<4x96xf32>
    %564 = vector.extract_strided_slice %559 {offsets = [0, 0], sizes = [4, 32], strides = [1, 1]} : vector<4x192xf32> to vector<4x32xf32>
    %565 = vector.extract_strided_slice %562 {offsets = [0, 0], sizes = [4, 32], strides = [1, 1]} : vector<4x96xf32> to vector<4x32xf32>
    %566 = arith.addf %564, %565 : vector<4x32xf32>
    %567 = arith.negf %566 : vector<4x32xf32>
    %568 = math.exp %567 : vector<4x32xf32>
    %cst_109 = arith.constant 1.000000e+00 : f32
    %569 = vector.broadcast %cst_109 : f32 to vector<4x32xf32>
    %570 = arith.addf %569, %568 : vector<4x32xf32>
    %571 = arith.divf %569, %570 : vector<4x32xf32>
    %572 = vector.extract_strided_slice %559 {offsets = [0, 32], sizes = [4, 32], strides = [1, 1]} : vector<4x192xf32> to vector<4x32xf32>
    %573 = vector.extract_strided_slice %562 {offsets = [0, 32], sizes = [4, 32], strides = [1, 1]} : vector<4x96xf32> to vector<4x32xf32>
    %574 = arith.addf %572, %573 : vector<4x32xf32>
    %575 = arith.negf %574 : vector<4x32xf32>
    %576 = math.exp %575 : vector<4x32xf32>
    %cst_110 = arith.constant 1.000000e+00 : f32
    %577 = vector.broadcast %cst_110 : f32 to vector<4x32xf32>
    %578 = arith.addf %577, %576 : vector<4x32xf32>
    %579 = arith.divf %577, %578 : vector<4x32xf32>
    %580 = vector.extract_strided_slice %559 {offsets = [0, 64], sizes = [4, 32], strides = [1, 1]} : vector<4x192xf32> to vector<4x32xf32>
    %581 = vector.extract_strided_slice %562 {offsets = [0, 64], sizes = [4, 32], strides = [1, 1]} : vector<4x96xf32> to vector<4x32xf32>
    %582 = vector.broadcast %10 : vector<1x32xf32> to vector<4x32xf32>
    %583 = arith.addf %581, %582 : vector<4x32xf32>
    %584 = arith.mulf %571, %583 : vector<4x32xf32>
    %585 = arith.addf %580, %584 : vector<4x32xf32>
    %586 = math.tanh %585 : vector<4x32xf32>
    %cst_111 = arith.constant 1.000000e+00 : f32
    %587 = vector.broadcast %cst_111 : f32 to vector<4x32xf32>
    %588 = arith.subf %587, %579 : vector<4x32xf32>
    %589 = arith.mulf %588, %586 : vector<4x32xf32>
    %590 = arith.mulf %579, %508 : vector<4x32xf32>
    %591 = arith.addf %589, %590 : vector<4x32xf32>
    %592 = vector.broadcast %555 : vector<4x1xf32> to vector<4x32xf32>
    %593 = arith.mulf %592, %591 : vector<4x32xf32>
    %cst_112 = arith.constant 1.000000e+00 : f32
    %594 = vector.broadcast %cst_112 : f32 to vector<4x1xf32>
    %595 = arith.subf %594, %555 : vector<4x1xf32>
    %596 = vector.broadcast %595 : vector<4x1xf32> to vector<4x32xf32>
    %597 = arith.mulf %596, %508 : vector<4x32xf32>
    %598 = arith.addf %593, %597 : vector<4x32xf32>
    %599 = vector.broadcast %555 : vector<4x1xf32> to vector<4x32xf32>
    %600 = arith.mulf %599, %598 : vector<4x32xf32>
    %c6_113 = arith.constant 6 : index
    %c0_114 = arith.constant 0 : index
    %c0_115 = arith.constant 0 : index
    %601 = vector.load %arg23[%c6_113, %c0_114, %c0_115] : memref<8x4x32xf32, #tpu.memory_space<vmem>>, vector<1x4x32xf32>
    %602 = vector.shape_cast %601 : vector<1x4x32xf32> to vector<4x32xf32>
    %603 = vector.shape_cast %600 : vector<4x32xf32> to vector<1x4x32xf32>
    tpu.vector_store %arg23[%c6_113, %c0_114, %c0_115], %603 {strides = array<i32>} : memref<8x4x32xf32, #tpu.memory_space<vmem>>, vector<1x4x32xf32>,
    %604 = vector.extract_strided_slice %561 {offsets = [0, 96], sizes = [4, 32], strides = [1, 1]} : vector<4x192xf32> to vector<4x32xf32>
    %605 = vector.extract_strided_slice %563 {offsets = [0, 0], sizes = [4, 32], strides = [1, 1]} : vector<4x96xf32> to vector<4x32xf32>
    %606 = arith.addf %604, %605 : vector<4x32xf32>
    %607 = arith.negf %606 : vector<4x32xf32>
    %608 = math.exp %607 : vector<4x32xf32>
    %cst_116 = arith.constant 1.000000e+00 : f32
    %609 = vector.broadcast %cst_116 : f32 to vector<4x32xf32>
    %610 = arith.addf %609, %608 : vector<4x32xf32>
    %611 = arith.divf %609, %610 : vector<4x32xf32>
    %612 = vector.extract_strided_slice %561 {offsets = [0, 128], sizes = [4, 32], strides = [1, 1]} : vector<4x192xf32> to vector<4x32xf32>
    %613 = vector.extract_strided_slice %563 {offsets = [0, 32], sizes = [4, 32], strides = [1, 1]} : vector<4x96xf32> to vector<4x32xf32>
    %614 = arith.addf %612, %613 : vector<4x32xf32>
    %615 = arith.negf %614 : vector<4x32xf32>
    %616 = math.exp %615 : vector<4x32xf32>
    %cst_117 = arith.constant 1.000000e+00 : f32
    %617 = vector.broadcast %cst_117 : f32 to vector<4x32xf32>
    %618 = arith.addf %617, %616 : vector<4x32xf32>
    %619 = arith.divf %617, %618 : vector<4x32xf32>
    %620 = vector.extract_strided_slice %561 {offsets = [0, 160], sizes = [4, 32], strides = [1, 1]} : vector<4x192xf32> to vector<4x32xf32>
    %621 = vector.extract_strided_slice %563 {offsets = [0, 64], sizes = [4, 32], strides = [1, 1]} : vector<4x96xf32> to vector<4x32xf32>
    %622 = vector.broadcast %11 : vector<1x32xf32> to vector<4x32xf32>
    %623 = arith.addf %621, %622 : vector<4x32xf32>
    %624 = arith.mulf %611, %623 : vector<4x32xf32>
    %625 = arith.addf %620, %624 : vector<4x32xf32>
    %626 = math.tanh %625 : vector<4x32xf32>
    %cst_118 = arith.constant 1.000000e+00 : f32
    %627 = vector.broadcast %cst_118 : f32 to vector<4x32xf32>
    %628 = arith.subf %627, %619 : vector<4x32xf32>
    %629 = arith.mulf %628, %626 : vector<4x32xf32>
    %630 = arith.mulf %619, %548 : vector<4x32xf32>
    %631 = arith.addf %629, %630 : vector<4x32xf32>
    %632 = vector.broadcast %557 : vector<4x1xf32> to vector<4x32xf32>
    %633 = arith.mulf %632, %631 : vector<4x32xf32>
    %cst_119 = arith.constant 1.000000e+00 : f32
    %634 = vector.broadcast %cst_119 : f32 to vector<4x1xf32>
    %635 = arith.subf %634, %557 : vector<4x1xf32>
    %636 = vector.broadcast %635 : vector<4x1xf32> to vector<4x32xf32>
    %637 = arith.mulf %636, %548 : vector<4x32xf32>
    %638 = arith.addf %633, %637 : vector<4x32xf32>
    %639 = vector.broadcast %557 : vector<4x1xf32> to vector<4x32xf32>
    %640 = arith.mulf %639, %638 : vector<4x32xf32>
    %c1_120 = arith.constant 1 : index
    %c0_121 = arith.constant 0 : index
    %c0_122 = arith.constant 0 : index
    %641 = vector.load %arg24[%c1_120, %c0_121, %c0_122] : memref<8x4x32xf32, #tpu.memory_space<vmem>>, vector<1x4x32xf32>
    %642 = vector.shape_cast %641 : vector<1x4x32xf32> to vector<4x32xf32>
    %643 = vector.shape_cast %640 : vector<4x32xf32> to vector<1x4x32xf32>
    tpu.vector_store %arg24[%c1_120, %c0_121, %c0_122], %643 {strides = array<i32>} : memref<8x4x32xf32, #tpu.memory_space<vmem>>, vector<1x4x32xf32>,
    %644 = vector.extract_strided_slice %0 {offsets = [7, 0, 0], sizes = [1, 4, 1], strides = [1, 1, 1]} : vector<8x4x1xf32> to vector<1x4x1xf32>
    %645 = vector.shape_cast %644 : vector<1x4x1xf32> to vector<4x1xf32>
    %646 = vector.extract_strided_slice %0 {offsets = [0, 0, 0], sizes = [1, 4, 1], strides = [1, 1, 1]} : vector<8x4x1xf32> to vector<1x4x1xf32>
    %647 = vector.shape_cast %646 : vector<1x4x1xf32> to vector<4x1xf32>
    %648 = vector.extract_strided_slice %7 {offsets = [7, 0, 0], sizes = [1, 4, 192], strides = [1, 1, 1]} : vector<8x4x192xf32> to vector<1x4x192xf32>
    %649 = vector.shape_cast %648 : vector<1x4x192xf32> to vector<4x192xf32>
    %650 = vector.extract_strided_slice %7 {offsets = [0, 0, 0], sizes = [1, 4, 192], strides = [1, 1, 1]} : vector<8x4x192xf32> to vector<1x4x192xf32>
    %651 = vector.shape_cast %650 : vector<1x4x192xf32> to vector<4x192xf32>
    %cst_123 = arith.constant dense<0.000000e+00> : vector<4x96xf32>
    %652 = tpu.matmul %598, %8, %cst_123 {dimension_numbers = #tpu.dot_dimension_numbers<[1], [0], [0], [1], [0, 0, 1, 1], [], []>} : vector<4x32xf32>, vector<32x96xf32>, vector<4x96xf32> -> vector<4x96xf32>
    %cst_124 = arith.constant dense<0.000000e+00> : vector<4x96xf32>
    %653 = tpu.matmul %638, %9, %cst_124 {dimension_numbers = #tpu.dot_dimension_numbers<[1], [0], [0], [1], [0, 0, 1, 1], [], []>} : vector<4x32xf32>, vector<32x96xf32>, vector<4x96xf32> -> vector<4x96xf32>
    %654 = vector.extract_strided_slice %649 {offsets = [0, 0], sizes = [4, 32], strides = [1, 1]} : vector<4x192xf32> to vector<4x32xf32>
    %655 = vector.extract_strided_slice %652 {offsets = [0, 0], sizes = [4, 32], strides = [1, 1]} : vector<4x96xf32> to vector<4x32xf32>
    %656 = arith.addf %654, %655 : vector<4x32xf32>
    %657 = arith.negf %656 : vector<4x32xf32>
    %658 = math.exp %657 : vector<4x32xf32>
    %cst_125 = arith.constant 1.000000e+00 : f32
    %659 = vector.broadcast %cst_125 : f32 to vector<4x32xf32>
    %660 = arith.addf %659, %658 : vector<4x32xf32>
    %661 = arith.divf %659, %660 : vector<4x32xf32>
    %662 = vector.extract_strided_slice %649 {offsets = [0, 32], sizes = [4, 32], strides = [1, 1]} : vector<4x192xf32> to vector<4x32xf32>
    %663 = vector.extract_strided_slice %652 {offsets = [0, 32], sizes = [4, 32], strides = [1, 1]} : vector<4x96xf32> to vector<4x32xf32>
    %664 = arith.addf %662, %663 : vector<4x32xf32>
    %665 = arith.negf %664 : vector<4x32xf32>
    %666 = math.exp %665 : vector<4x32xf32>
    %cst_126 = arith.constant 1.000000e+00 : f32
    %667 = vector.broadcast %cst_126 : f32 to vector<4x32xf32>
    %668 = arith.addf %667, %666 : vector<4x32xf32>
    %669 = arith.divf %667, %668 : vector<4x32xf32>
    %670 = vector.extract_strided_slice %649 {offsets = [0, 64], sizes = [4, 32], strides = [1, 1]} : vector<4x192xf32> to vector<4x32xf32>
    %671 = vector.extract_strided_slice %652 {offsets = [0, 64], sizes = [4, 32], strides = [1, 1]} : vector<4x96xf32> to vector<4x32xf32>
    %672 = vector.broadcast %10 : vector<1x32xf32> to vector<4x32xf32>
    %673 = arith.addf %671, %672 : vector<4x32xf32>
    %674 = arith.mulf %661, %673 : vector<4x32xf32>
    %675 = arith.addf %670, %674 : vector<4x32xf32>
    %676 = math.tanh %675 : vector<4x32xf32>
    %cst_127 = arith.constant 1.000000e+00 : f32
    %677 = vector.broadcast %cst_127 : f32 to vector<4x32xf32>
    %678 = arith.subf %677, %669 : vector<4x32xf32>
    %679 = arith.mulf %678, %676 : vector<4x32xf32>
    %680 = arith.mulf %669, %598 : vector<4x32xf32>
    %681 = arith.addf %679, %680 : vector<4x32xf32>
    %682 = vector.broadcast %645 : vector<4x1xf32> to vector<4x32xf32>
    %683 = arith.mulf %682, %681 : vector<4x32xf32>
    %cst_128 = arith.constant 1.000000e+00 : f32
    %684 = vector.broadcast %cst_128 : f32 to vector<4x1xf32>
    %685 = arith.subf %684, %645 : vector<4x1xf32>
    %686 = vector.broadcast %685 : vector<4x1xf32> to vector<4x32xf32>
    %687 = arith.mulf %686, %598 : vector<4x32xf32>
    %688 = arith.addf %683, %687 : vector<4x32xf32>
    %689 = vector.broadcast %645 : vector<4x1xf32> to vector<4x32xf32>
    %690 = arith.mulf %689, %688 : vector<4x32xf32>
    %c7_129 = arith.constant 7 : index
    %c0_130 = arith.constant 0 : index
    %c0_131 = arith.constant 0 : index
    %691 = vector.load %arg23[%c7_129, %c0_130, %c0_131] : memref<8x4x32xf32, #tpu.memory_space<vmem>>, vector<1x4x32xf32>
    %692 = vector.shape_cast %691 : vector<1x4x32xf32> to vector<4x32xf32>
    %693 = vector.shape_cast %690 : vector<4x32xf32> to vector<1x4x32xf32>
    tpu.vector_store %arg23[%c7_129, %c0_130, %c0_131], %693 {strides = array<i32>} : memref<8x4x32xf32, #tpu.memory_space<vmem>>, vector<1x4x32xf32>,
    %694 = vector.extract_strided_slice %651 {offsets = [0, 96], sizes = [4, 32], strides = [1, 1]} : vector<4x192xf32> to vector<4x32xf32>
    %695 = vector.extract_strided_slice %653 {offsets = [0, 0], sizes = [4, 32], strides = [1, 1]} : vector<4x96xf32> to vector<4x32xf32>
    %696 = arith.addf %694, %695 : vector<4x32xf32>
    %697 = arith.negf %696 : vector<4x32xf32>
    %698 = math.exp %697 : vector<4x32xf32>
    %cst_132 = arith.constant 1.000000e+00 : f32
    %699 = vector.broadcast %cst_132 : f32 to vector<4x32xf32>
    %700 = arith.addf %699, %698 : vector<4x32xf32>
    %701 = arith.divf %699, %700 : vector<4x32xf32>
    %702 = vector.extract_strided_slice %651 {offsets = [0, 128], sizes = [4, 32], strides = [1, 1]} : vector<4x192xf32> to vector<4x32xf32>
    %703 = vector.extract_strided_slice %653 {offsets = [0, 32], sizes = [4, 32], strides = [1, 1]} : vector<4x96xf32> to vector<4x32xf32>
    %704 = arith.addf %702, %703 : vector<4x32xf32>
    %705 = arith.negf %704 : vector<4x32xf32>
    %706 = math.exp %705 : vector<4x32xf32>
    %cst_133 = arith.constant 1.000000e+00 : f32
    %707 = vector.broadcast %cst_133 : f32 to vector<4x32xf32>
    %708 = arith.addf %707, %706 : vector<4x32xf32>
    %709 = arith.divf %707, %708 : vector<4x32xf32>
    %710 = vector.extract_strided_slice %651 {offsets = [0, 160], sizes = [4, 32], strides = [1, 1]} : vector<4x192xf32> to vector<4x32xf32>
    %711 = vector.extract_strided_slice %653 {offsets = [0, 64], sizes = [4, 32], strides = [1, 1]} : vector<4x96xf32> to vector<4x32xf32>
    %712 = vector.broadcast %11 : vector<1x32xf32> to vector<4x32xf32>
    %713 = arith.addf %711, %712 : vector<4x32xf32>
    %714 = arith.mulf %701, %713 : vector<4x32xf32>
    %715 = arith.addf %710, %714 : vector<4x32xf32>
    %716 = math.tanh %715 : vector<4x32xf32>
    %cst_134 = arith.constant 1.000000e+00 : f32
    %717 = vector.broadcast %cst_134 : f32 to vector<4x32xf32>
    %718 = arith.subf %717, %709 : vector<4x32xf32>
    %719 = arith.mulf %718, %716 : vector<4x32xf32>
    %720 = arith.mulf %709, %638 : vector<4x32xf32>
    %721 = arith.addf %719, %720 : vector<4x32xf32>
    %722 = vector.broadcast %647 : vector<4x1xf32> to vector<4x32xf32>
    %723 = arith.mulf %722, %721 : vector<4x32xf32>
    %cst_135 = arith.constant 1.000000e+00 : f32
    %724 = vector.broadcast %cst_135 : f32 to vector<4x1xf32>
    %725 = arith.subf %724, %647 : vector<4x1xf32>
    %726 = vector.broadcast %725 : vector<4x1xf32> to vector<4x32xf32>
    %727 = arith.mulf %726, %638 : vector<4x32xf32>
    %728 = arith.addf %723, %727 : vector<4x32xf32>
    %729 = vector.broadcast %647 : vector<4x1xf32> to vector<4x32xf32>
    %730 = arith.mulf %729, %728 : vector<4x32xf32>
    %c0_136 = arith.constant 0 : index
    %c0_137 = arith.constant 0 : index
    %c0_138 = arith.constant 0 : index
    %731 = vector.load %arg24[%c0_136, %c0_137, %c0_138] : memref<8x4x32xf32, #tpu.memory_space<vmem>>, vector<1x4x32xf32>
    %732 = vector.shape_cast %731 : vector<1x4x32xf32> to vector<4x32xf32>
    %733 = vector.shape_cast %730 : vector<4x32xf32> to vector<1x4x32xf32>
    tpu.vector_store %arg24[%c0_136, %c0_137, %c0_138], %733 {strides = array<i32>} : memref<8x4x32xf32, #tpu.memory_space<vmem>>, vector<1x4x32xf32>,
    %c0_139 = arith.constant 0 : index
    %c0_140 = arith.constant 0 : index
    %c0_141 = arith.constant 0 : index
    %734 = vector.load %arg23[%c0_139, %c0_140, %c0_141] : memref<8x4x32xf32, #tpu.memory_space<vmem>>, vector<8x4x32xf32>
    %c0_142 = arith.constant 0 : index
    %c0_143 = arith.constant 0 : index
    %c0_144 = arith.constant 0 : index
    %735 = vector.load %arg24[%c0_142, %c0_143, %c0_144] : memref<8x4x32xf32, #tpu.memory_space<vmem>>, vector<8x4x32xf32>
    %c0_145 = arith.constant 0 : index
    %c0_146 = arith.constant 0 : index
    %736 = vector.load %arg8[%c0_145, %c0_146] : memref<64x192xf32, #tpu.memory_space<vmem>>, vector<64x192xf32>
    %c0_147 = arith.constant 0 : index
    %c0_148 = arith.constant 0 : index
    %737 = vector.load %arg9[%c0_147, %c0_148] : memref<1x192xf32, #tpu.memory_space<vmem>>, vector<1x192xf32>
    %738 = vector.shape_cast %734 : vector<8x4x32xf32> to vector<32x32xf32>
    %739 = vector.extract_strided_slice %736 {offsets = [0, 0], sizes = [32, 192], strides = [1, 1]} : vector<64x192xf32> to vector<32x192xf32>
    %cst_149 = arith.constant dense<0.000000e+00> : vector<32x192xf32>
    %740 = tpu.matmul %738, %739, %cst_149 {dimension_numbers = #tpu.dot_dimension_numbers<[1], [0], [0], [1], [0, 0, 1, 1], [], []>} : vector<32x32xf32>, vector<32x192xf32>, vector<32x192xf32> -> vector<32x192xf32>
    %741 = vector.shape_cast %735 : vector<8x4x32xf32> to vector<32x32xf32>
    %742 = vector.extract_strided_slice %736 {offsets = [32, 0], sizes = [32, 192], strides = [1, 1]} : vector<64x192xf32> to vector<32x192xf32>
    %cst_150 = arith.constant dense<0.000000e+00> : vector<32x192xf32>
    %743 = tpu.matmul %741, %742, %cst_150 {dimension_numbers = #tpu.dot_dimension_numbers<[1], [0], [0], [1], [0, 0, 1, 1], [], []>} : vector<32x32xf32>, vector<32x192xf32>, vector<32x192xf32> -> vector<32x192xf32>
    %744 = arith.addf %740, %743 : vector<32x192xf32>
    %745 = vector.broadcast %737 : vector<1x192xf32> to vector<32x192xf32>
    %746 = arith.addf %744, %745 : vector<32x192xf32>
    %747 = vector.shape_cast %746 : vector<32x192xf32> to vector<8x4x192xf32>
    %c0_151 = arith.constant 0 : index
    %c0_152 = arith.constant 0 : index
    %748 = vector.load %arg10[%c0_151, %c0_152] : memref<32x96xf32, #tpu.memory_space<vmem>>, vector<32x96xf32>
    %c0_153 = arith.constant 0 : index
    %c0_154 = arith.constant 0 : index
    %749 = vector.load %arg11[%c0_153, %c0_154] : memref<32x96xf32, #tpu.memory_space<vmem>>, vector<32x96xf32>
    %c0_155 = arith.constant 0 : index
    %c0_156 = arith.constant 0 : index
    %750 = vector.load %arg12[%c0_155, %c0_156] : memref<1x32xf32, #tpu.memory_space<vmem>>, vector<1x32xf32>
    %c0_157 = arith.constant 0 : index
    %c0_158 = arith.constant 0 : index
    %751 = vector.load %arg13[%c0_157, %c0_158] : memref<1x32xf32, #tpu.memory_space<vmem>>, vector<1x32xf32>
    %cst_159 = arith.constant 0.000000e+00 : f32
    %752 = vector.broadcast %cst_159 : f32 to vector<4x32xf32>
    %cst_160 = arith.constant 0.000000e+00 : f32
    %753 = vector.broadcast %cst_160 : f32 to vector<4x32xf32>
    %754 = vector.extract_strided_slice %0 {offsets = [0, 0, 0], sizes = [1, 4, 1], strides = [1, 1, 1]} : vector<8x4x1xf32> to vector<1x4x1xf32>
    %755 = vector.shape_cast %754 : vector<1x4x1xf32> to vector<4x1xf32>
    %756 = vector.extract_strided_slice %0 {offsets = [7, 0, 0], sizes = [1, 4, 1], strides = [1, 1, 1]} : vector<8x4x1xf32> to vector<1x4x1xf32>
    %757 = vector.shape_cast %756 : vector<1x4x1xf32> to vector<4x1xf32>
    %758 = vector.extract_strided_slice %747 {offsets = [0, 0, 0], sizes = [1, 4, 192], strides = [1, 1, 1]} : vector<8x4x192xf32> to vector<1x4x192xf32>
    %759 = vector.shape_cast %758 : vector<1x4x192xf32> to vector<4x192xf32>
    %760 = vector.extract_strided_slice %747 {offsets = [7, 0, 0], sizes = [1, 4, 192], strides = [1, 1, 1]} : vector<8x4x192xf32> to vector<1x4x192xf32>
    %761 = vector.shape_cast %760 : vector<1x4x192xf32> to vector<4x192xf32>
    %cst_161 = arith.constant dense<0.000000e+00> : vector<4x96xf32>
    %762 = tpu.matmul %752, %748, %cst_161 {dimension_numbers = #tpu.dot_dimension_numbers<[1], [0], [0], [1], [0, 0, 1, 1], [], []>} : vector<4x32xf32>, vector<32x96xf32>, vector<4x96xf32> -> vector<4x96xf32>
    %cst_162 = arith.constant dense<0.000000e+00> : vector<4x96xf32>
    %763 = tpu.matmul %753, %749, %cst_162 {dimension_numbers = #tpu.dot_dimension_numbers<[1], [0], [0], [1], [0, 0, 1, 1], [], []>} : vector<4x32xf32>, vector<32x96xf32>, vector<4x96xf32> -> vector<4x96xf32>
    %764 = vector.extract_strided_slice %759 {offsets = [0, 0], sizes = [4, 32], strides = [1, 1]} : vector<4x192xf32> to vector<4x32xf32>
    %765 = vector.extract_strided_slice %762 {offsets = [0, 0], sizes = [4, 32], strides = [1, 1]} : vector<4x96xf32> to vector<4x32xf32>
    %766 = arith.addf %764, %765 : vector<4x32xf32>
    %767 = arith.negf %766 : vector<4x32xf32>
    %768 = math.exp %767 : vector<4x32xf32>
    %cst_163 = arith.constant 1.000000e+00 : f32
    %769 = vector.broadcast %cst_163 : f32 to vector<4x32xf32>
    %770 = arith.addf %769, %768 : vector<4x32xf32>
    %771 = arith.divf %769, %770 : vector<4x32xf32>
    %772 = vector.extract_strided_slice %759 {offsets = [0, 32], sizes = [4, 32], strides = [1, 1]} : vector<4x192xf32> to vector<4x32xf32>
    %773 = vector.extract_strided_slice %762 {offsets = [0, 32], sizes = [4, 32], strides = [1, 1]} : vector<4x96xf32> to vector<4x32xf32>
    %774 = arith.addf %772, %773 : vector<4x32xf32>
    %775 = arith.negf %774 : vector<4x32xf32>
    %776 = math.exp %775 : vector<4x32xf32>
    %cst_164 = arith.constant 1.000000e+00 : f32
    %777 = vector.broadcast %cst_164 : f32 to vector<4x32xf32>
    %778 = arith.addf %777, %776 : vector<4x32xf32>
    %779 = arith.divf %777, %778 : vector<4x32xf32>
    %780 = vector.extract_strided_slice %759 {offsets = [0, 64], sizes = [4, 32], strides = [1, 1]} : vector<4x192xf32> to vector<4x32xf32>
    %781 = vector.extract_strided_slice %762 {offsets = [0, 64], sizes = [4, 32], strides = [1, 1]} : vector<4x96xf32> to vector<4x32xf32>
    %782 = vector.broadcast %750 : vector<1x32xf32> to vector<4x32xf32>
    %783 = arith.addf %781, %782 : vector<4x32xf32>
    %784 = arith.mulf %771, %783 : vector<4x32xf32>
    %785 = arith.addf %780, %784 : vector<4x32xf32>
    %786 = math.tanh %785 : vector<4x32xf32>
    %cst_165 = arith.constant 1.000000e+00 : f32
    %787 = vector.broadcast %cst_165 : f32 to vector<4x32xf32>
    %788 = arith.subf %787, %779 : vector<4x32xf32>
    %789 = arith.mulf %788, %786 : vector<4x32xf32>
    %790 = arith.mulf %779, %752 : vector<4x32xf32>
    %791 = arith.addf %789, %790 : vector<4x32xf32>
    %792 = vector.broadcast %755 : vector<4x1xf32> to vector<4x32xf32>
    %793 = arith.mulf %792, %791 : vector<4x32xf32>
    %cst_166 = arith.constant 1.000000e+00 : f32
    %794 = vector.broadcast %cst_166 : f32 to vector<4x1xf32>
    %795 = arith.subf %794, %755 : vector<4x1xf32>
    %796 = vector.broadcast %795 : vector<4x1xf32> to vector<4x32xf32>
    %797 = arith.mulf %796, %752 : vector<4x32xf32>
    %798 = arith.addf %793, %797 : vector<4x32xf32>
    %799 = vector.broadcast %755 : vector<4x1xf32> to vector<4x32xf32>
    %800 = arith.mulf %799, %798 : vector<4x32xf32>
    %c0_167 = arith.constant 0 : index
    %c0_168 = arith.constant 0 : index
    %c0_169 = arith.constant 0 : index
    %801 = vector.load %arg25[%c0_167, %c0_168, %c0_169] : memref<8x4x32xf32, #tpu.memory_space<vmem>>, vector<1x4x32xf32>
    %802 = vector.shape_cast %801 : vector<1x4x32xf32> to vector<4x32xf32>
    %803 = vector.shape_cast %800 : vector<4x32xf32> to vector<1x4x32xf32>
    tpu.vector_store %arg25[%c0_167, %c0_168, %c0_169], %803 {strides = array<i32>} : memref<8x4x32xf32, #tpu.memory_space<vmem>>, vector<1x4x32xf32>,
    %804 = vector.extract_strided_slice %761 {offsets = [0, 96], sizes = [4, 32], strides = [1, 1]} : vector<4x192xf32> to vector<4x32xf32>
    %805 = vector.extract_strided_slice %763 {offsets = [0, 0], sizes = [4, 32], strides = [1, 1]} : vector<4x96xf32> to vector<4x32xf32>
    %806 = arith.addf %804, %805 : vector<4x32xf32>
    %807 = arith.negf %806 : vector<4x32xf32>
    %808 = math.exp %807 : vector<4x32xf32>
    %cst_170 = arith.constant 1.000000e+00 : f32
    %809 = vector.broadcast %cst_170 : f32 to vector<4x32xf32>
    %810 = arith.addf %809, %808 : vector<4x32xf32>
    %811 = arith.divf %809, %810 : vector<4x32xf32>
    %812 = vector.extract_strided_slice %761 {offsets = [0, 128], sizes = [4, 32], strides = [1, 1]} : vector<4x192xf32> to vector<4x32xf32>
    %813 = vector.extract_strided_slice %763 {offsets = [0, 32], sizes = [4, 32], strides = [1, 1]} : vector<4x96xf32> to vector<4x32xf32>
    %814 = arith.addf %812, %813 : vector<4x32xf32>
    %815 = arith.negf %814 : vector<4x32xf32>
    %816 = math.exp %815 : vector<4x32xf32>
    %cst_171 = arith.constant 1.000000e+00 : f32
    %817 = vector.broadcast %cst_171 : f32 to vector<4x32xf32>
    %818 = arith.addf %817, %816 : vector<4x32xf32>
    %819 = arith.divf %817, %818 : vector<4x32xf32>
    %820 = vector.extract_strided_slice %761 {offsets = [0, 160], sizes = [4, 32], strides = [1, 1]} : vector<4x192xf32> to vector<4x32xf32>
    %821 = vector.extract_strided_slice %763 {offsets = [0, 64], sizes = [4, 32], strides = [1, 1]} : vector<4x96xf32> to vector<4x32xf32>
    %822 = vector.broadcast %751 : vector<1x32xf32> to vector<4x32xf32>
    %823 = arith.addf %821, %822 : vector<4x32xf32>
    %824 = arith.mulf %811, %823 : vector<4x32xf32>
    %825 = arith.addf %820, %824 : vector<4x32xf32>
    %826 = math.tanh %825 : vector<4x32xf32>
    %cst_172 = arith.constant 1.000000e+00 : f32
    %827 = vector.broadcast %cst_172 : f32 to vector<4x32xf32>
    %828 = arith.subf %827, %819 : vector<4x32xf32>
    %829 = arith.mulf %828, %826 : vector<4x32xf32>
    %830 = arith.mulf %819, %753 : vector<4x32xf32>
    %831 = arith.addf %829, %830 : vector<4x32xf32>
    %832 = vector.broadcast %757 : vector<4x1xf32> to vector<4x32xf32>
    %833 = arith.mulf %832, %831 : vector<4x32xf32>
    %cst_173 = arith.constant 1.000000e+00 : f32
    %834 = vector.broadcast %cst_173 : f32 to vector<4x1xf32>
    %835 = arith.subf %834, %757 : vector<4x1xf32>
    %836 = vector.broadcast %835 : vector<4x1xf32> to vector<4x32xf32>
    %837 = arith.mulf %836, %753 : vector<4x32xf32>
    %838 = arith.addf %833, %837 : vector<4x32xf32>
    %839 = vector.broadcast %757 : vector<4x1xf32> to vector<4x32xf32>
    %840 = arith.mulf %839, %838 : vector<4x32xf32>
    %c7_174 = arith.constant 7 : index
    %c0_175 = arith.constant 0 : index
    %c0_176 = arith.constant 0 : index
    %841 = vector.load %arg26[%c7_174, %c0_175, %c0_176] : memref<8x4x32xf32, #tpu.memory_space<vmem>>, vector<1x4x32xf32>
    %842 = vector.shape_cast %841 : vector<1x4x32xf32> to vector<4x32xf32>
    %843 = vector.shape_cast %840 : vector<4x32xf32> to vector<1x4x32xf32>
    tpu.vector_store %arg26[%c7_174, %c0_175, %c0_176], %843 {strides = array<i32>} : memref<8x4x32xf32, #tpu.memory_space<vmem>>, vector<1x4x32xf32>,
    %844 = vector.extract_strided_slice %0 {offsets = [1, 0, 0], sizes = [1, 4, 1], strides = [1, 1, 1]} : vector<8x4x1xf32> to vector<1x4x1xf32>
    %845 = vector.shape_cast %844 : vector<1x4x1xf32> to vector<4x1xf32>
    %846 = vector.extract_strided_slice %0 {offsets = [6, 0, 0], sizes = [1, 4, 1], strides = [1, 1, 1]} : vector<8x4x1xf32> to vector<1x4x1xf32>
    %847 = vector.shape_cast %846 : vector<1x4x1xf32> to vector<4x1xf32>
    %848 = vector.extract_strided_slice %747 {offsets = [1, 0, 0], sizes = [1, 4, 192], strides = [1, 1, 1]} : vector<8x4x192xf32> to vector<1x4x192xf32>
    %849 = vector.shape_cast %848 : vector<1x4x192xf32> to vector<4x192xf32>
    %850 = vector.extract_strided_slice %747 {offsets = [6, 0, 0], sizes = [1, 4, 192], strides = [1, 1, 1]} : vector<8x4x192xf32> to vector<1x4x192xf32>
    %851 = vector.shape_cast %850 : vector<1x4x192xf32> to vector<4x192xf32>
    %cst_177 = arith.constant dense<0.000000e+00> : vector<4x96xf32>
    %852 = tpu.matmul %798, %748, %cst_177 {dimension_numbers = #tpu.dot_dimension_numbers<[1], [0], [0], [1], [0, 0, 1, 1], [], []>} : vector<4x32xf32>, vector<32x96xf32>, vector<4x96xf32> -> vector<4x96xf32>
    %cst_178 = arith.constant dense<0.000000e+00> : vector<4x96xf32>
    %853 = tpu.matmul %838, %749, %cst_178 {dimension_numbers = #tpu.dot_dimension_numbers<[1], [0], [0], [1], [0, 0, 1, 1], [], []>} : vector<4x32xf32>, vector<32x96xf32>, vector<4x96xf32> -> vector<4x96xf32>
    %854 = vector.extract_strided_slice %849 {offsets = [0, 0], sizes = [4, 32], strides = [1, 1]} : vector<4x192xf32> to vector<4x32xf32>
    %855 = vector.extract_strided_slice %852 {offsets = [0, 0], sizes = [4, 32], strides = [1, 1]} : vector<4x96xf32> to vector<4x32xf32>
    %856 = arith.addf %854, %855 : vector<4x32xf32>
    %857 = arith.negf %856 : vector<4x32xf32>
    %858 = math.exp %857 : vector<4x32xf32>
    %cst_179 = arith.constant 1.000000e+00 : f32
    %859 = vector.broadcast %cst_179 : f32 to vector<4x32xf32>
    %860 = arith.addf %859, %858 : vector<4x32xf32>
    %861 = arith.divf %859, %860 : vector<4x32xf32>
    %862 = vector.extract_strided_slice %849 {offsets = [0, 32], sizes = [4, 32], strides = [1, 1]} : vector<4x192xf32> to vector<4x32xf32>
    %863 = vector.extract_strided_slice %852 {offsets = [0, 32], sizes = [4, 32], strides = [1, 1]} : vector<4x96xf32> to vector<4x32xf32>
    %864 = arith.addf %862, %863 : vector<4x32xf32>
    %865 = arith.negf %864 : vector<4x32xf32>
    %866 = math.exp %865 : vector<4x32xf32>
    %cst_180 = arith.constant 1.000000e+00 : f32
    %867 = vector.broadcast %cst_180 : f32 to vector<4x32xf32>
    %868 = arith.addf %867, %866 : vector<4x32xf32>
    %869 = arith.divf %867, %868 : vector<4x32xf32>
    %870 = vector.extract_strided_slice %849 {offsets = [0, 64], sizes = [4, 32], strides = [1, 1]} : vector<4x192xf32> to vector<4x32xf32>
    %871 = vector.extract_strided_slice %852 {offsets = [0, 64], sizes = [4, 32], strides = [1, 1]} : vector<4x96xf32> to vector<4x32xf32>
    %872 = vector.broadcast %750 : vector<1x32xf32> to vector<4x32xf32>
    %873 = arith.addf %871, %872 : vector<4x32xf32>
    %874 = arith.mulf %861, %873 : vector<4x32xf32>
    %875 = arith.addf %870, %874 : vector<4x32xf32>
    %876 = math.tanh %875 : vector<4x32xf32>
    %cst_181 = arith.constant 1.000000e+00 : f32
    %877 = vector.broadcast %cst_181 : f32 to vector<4x32xf32>
    %878 = arith.subf %877, %869 : vector<4x32xf32>
    %879 = arith.mulf %878, %876 : vector<4x32xf32>
    %880 = arith.mulf %869, %798 : vector<4x32xf32>
    %881 = arith.addf %879, %880 : vector<4x32xf32>
    %882 = vector.broadcast %845 : vector<4x1xf32> to vector<4x32xf32>
    %883 = arith.mulf %882, %881 : vector<4x32xf32>
    %cst_182 = arith.constant 1.000000e+00 : f32
    %884 = vector.broadcast %cst_182 : f32 to vector<4x1xf32>
    %885 = arith.subf %884, %845 : vector<4x1xf32>
    %886 = vector.broadcast %885 : vector<4x1xf32> to vector<4x32xf32>
    %887 = arith.mulf %886, %798 : vector<4x32xf32>
    %888 = arith.addf %883, %887 : vector<4x32xf32>
    %889 = vector.broadcast %845 : vector<4x1xf32> to vector<4x32xf32>
    %890 = arith.mulf %889, %888 : vector<4x32xf32>
    %c1_183 = arith.constant 1 : index
    %c0_184 = arith.constant 0 : index
    %c0_185 = arith.constant 0 : index
    %891 = vector.load %arg25[%c1_183, %c0_184, %c0_185] : memref<8x4x32xf32, #tpu.memory_space<vmem>>, vector<1x4x32xf32>
    %892 = vector.shape_cast %891 : vector<1x4x32xf32> to vector<4x32xf32>
    %893 = vector.shape_cast %890 : vector<4x32xf32> to vector<1x4x32xf32>
    tpu.vector_store %arg25[%c1_183, %c0_184, %c0_185], %893 {strides = array<i32>} : memref<8x4x32xf32, #tpu.memory_space<vmem>>, vector<1x4x32xf32>,
    %894 = vector.extract_strided_slice %851 {offsets = [0, 96], sizes = [4, 32], strides = [1, 1]} : vector<4x192xf32> to vector<4x32xf32>
    %895 = vector.extract_strided_slice %853 {offsets = [0, 0], sizes = [4, 32], strides = [1, 1]} : vector<4x96xf32> to vector<4x32xf32>
    %896 = arith.addf %894, %895 : vector<4x32xf32>
    %897 = arith.negf %896 : vector<4x32xf32>
    %898 = math.exp %897 : vector<4x32xf32>
    %cst_186 = arith.constant 1.000000e+00 : f32
    %899 = vector.broadcast %cst_186 : f32 to vector<4x32xf32>
    %900 = arith.addf %899, %898 : vector<4x32xf32>
    %901 = arith.divf %899, %900 : vector<4x32xf32>
    %902 = vector.extract_strided_slice %851 {offsets = [0, 128], sizes = [4, 32], strides = [1, 1]} : vector<4x192xf32> to vector<4x32xf32>
    %903 = vector.extract_strided_slice %853 {offsets = [0, 32], sizes = [4, 32], strides = [1, 1]} : vector<4x96xf32> to vector<4x32xf32>
    %904 = arith.addf %902, %903 : vector<4x32xf32>
    %905 = arith.negf %904 : vector<4x32xf32>
    %906 = math.exp %905 : vector<4x32xf32>
    %cst_187 = arith.constant 1.000000e+00 : f32
    %907 = vector.broadcast %cst_187 : f32 to vector<4x32xf32>
    %908 = arith.addf %907, %906 : vector<4x32xf32>
    %909 = arith.divf %907, %908 : vector<4x32xf32>
    %910 = vector.extract_strided_slice %851 {offsets = [0, 160], sizes = [4, 32], strides = [1, 1]} : vector<4x192xf32> to vector<4x32xf32>
    %911 = vector.extract_strided_slice %853 {offsets = [0, 64], sizes = [4, 32], strides = [1, 1]} : vector<4x96xf32> to vector<4x32xf32>
    %912 = vector.broadcast %751 : vector<1x32xf32> to vector<4x32xf32>
    %913 = arith.addf %911, %912 : vector<4x32xf32>
    %914 = arith.mulf %901, %913 : vector<4x32xf32>
    %915 = arith.addf %910, %914 : vector<4x32xf32>
    %916 = math.tanh %915 : vector<4x32xf32>
    %cst_188 = arith.constant 1.000000e+00 : f32
    %917 = vector.broadcast %cst_188 : f32 to vector<4x32xf32>
    %918 = arith.subf %917, %909 : vector<4x32xf32>
    %919 = arith.mulf %918, %916 : vector<4x32xf32>
    %920 = arith.mulf %909, %838 : vector<4x32xf32>
    %921 = arith.addf %919, %920 : vector<4x32xf32>
    %922 = vector.broadcast %847 : vector<4x1xf32> to vector<4x32xf32>
    %923 = arith.mulf %922, %921 : vector<4x32xf32>
    %cst_189 = arith.constant 1.000000e+00 : f32
    %924 = vector.broadcast %cst_189 : f32 to vector<4x1xf32>
    %925 = arith.subf %924, %847 : vector<4x1xf32>
    %926 = vector.broadcast %925 : vector<4x1xf32> to vector<4x32xf32>
    %927 = arith.mulf %926, %838 : vector<4x32xf32>
    %928 = arith.addf %923, %927 : vector<4x32xf32>
    %929 = vector.broadcast %847 : vector<4x1xf32> to vector<4x32xf32>
    %930 = arith.mulf %929, %928 : vector<4x32xf32>
    %c6_190 = arith.constant 6 : index
    %c0_191 = arith.constant 0 : index
    %c0_192 = arith.constant 0 : index
    %931 = vector.load %arg26[%c6_190, %c0_191, %c0_192] : memref<8x4x32xf32, #tpu.memory_space<vmem>>, vector<1x4x32xf32>
    %932 = vector.shape_cast %931 : vector<1x4x32xf32> to vector<4x32xf32>
    %933 = vector.shape_cast %930 : vector<4x32xf32> to vector<1x4x32xf32>
    tpu.vector_store %arg26[%c6_190, %c0_191, %c0_192], %933 {strides = array<i32>} : memref<8x4x32xf32, #tpu.memory_space<vmem>>, vector<1x4x32xf32>,
    %934 = vector.extract_strided_slice %0 {offsets = [2, 0, 0], sizes = [1, 4, 1], strides = [1, 1, 1]} : vector<8x4x1xf32> to vector<1x4x1xf32>
    %935 = vector.shape_cast %934 : vector<1x4x1xf32> to vector<4x1xf32>
    %936 = vector.extract_strided_slice %0 {offsets = [5, 0, 0], sizes = [1, 4, 1], strides = [1, 1, 1]} : vector<8x4x1xf32> to vector<1x4x1xf32>
    %937 = vector.shape_cast %936 : vector<1x4x1xf32> to vector<4x1xf32>
    %938 = vector.extract_strided_slice %747 {offsets = [2, 0, 0], sizes = [1, 4, 192], strides = [1, 1, 1]} : vector<8x4x192xf32> to vector<1x4x192xf32>
    %939 = vector.shape_cast %938 : vector<1x4x192xf32> to vector<4x192xf32>
    %940 = vector.extract_strided_slice %747 {offsets = [5, 0, 0], sizes = [1, 4, 192], strides = [1, 1, 1]} : vector<8x4x192xf32> to vector<1x4x192xf32>
    %941 = vector.shape_cast %940 : vector<1x4x192xf32> to vector<4x192xf32>
    %cst_193 = arith.constant dense<0.000000e+00> : vector<4x96xf32>
    %942 = tpu.matmul %888, %748, %cst_193 {dimension_numbers = #tpu.dot_dimension_numbers<[1], [0], [0], [1], [0, 0, 1, 1], [], []>} : vector<4x32xf32>, vector<32x96xf32>, vector<4x96xf32> -> vector<4x96xf32>
    %cst_194 = arith.constant dense<0.000000e+00> : vector<4x96xf32>
    %943 = tpu.matmul %928, %749, %cst_194 {dimension_numbers = #tpu.dot_dimension_numbers<[1], [0], [0], [1], [0, 0, 1, 1], [], []>} : vector<4x32xf32>, vector<32x96xf32>, vector<4x96xf32> -> vector<4x96xf32>
    %944 = vector.extract_strided_slice %939 {offsets = [0, 0], sizes = [4, 32], strides = [1, 1]} : vector<4x192xf32> to vector<4x32xf32>
    %945 = vector.extract_strided_slice %942 {offsets = [0, 0], sizes = [4, 32], strides = [1, 1]} : vector<4x96xf32> to vector<4x32xf32>
    %946 = arith.addf %944, %945 : vector<4x32xf32>
    %947 = arith.negf %946 : vector<4x32xf32>
    %948 = math.exp %947 : vector<4x32xf32>
    %cst_195 = arith.constant 1.000000e+00 : f32
    %949 = vector.broadcast %cst_195 : f32 to vector<4x32xf32>
    %950 = arith.addf %949, %948 : vector<4x32xf32>
    %951 = arith.divf %949, %950 : vector<4x32xf32>
    %952 = vector.extract_strided_slice %939 {offsets = [0, 32], sizes = [4, 32], strides = [1, 1]} : vector<4x192xf32> to vector<4x32xf32>
    %953 = vector.extract_strided_slice %942 {offsets = [0, 32], sizes = [4, 32], strides = [1, 1]} : vector<4x96xf32> to vector<4x32xf32>
    %954 = arith.addf %952, %953 : vector<4x32xf32>
    %955 = arith.negf %954 : vector<4x32xf32>
    %956 = math.exp %955 : vector<4x32xf32>
    %cst_196 = arith.constant 1.000000e+00 : f32
    %957 = vector.broadcast %cst_196 : f32 to vector<4x32xf32>
    %958 = arith.addf %957, %956 : vector<4x32xf32>
    %959 = arith.divf %957, %958 : vector<4x32xf32>
    %960 = vector.extract_strided_slice %939 {offsets = [0, 64], sizes = [4, 32], strides = [1, 1]} : vector<4x192xf32> to vector<4x32xf32>
    %961 = vector.extract_strided_slice %942 {offsets = [0, 64], sizes = [4, 32], strides = [1, 1]} : vector<4x96xf32> to vector<4x32xf32>
    %962 = vector.broadcast %750 : vector<1x32xf32> to vector<4x32xf32>
    %963 = arith.addf %961, %962 : vector<4x32xf32>
    %964 = arith.mulf %951, %963 : vector<4x32xf32>
    %965 = arith.addf %960, %964 : vector<4x32xf32>
    %966 = math.tanh %965 : vector<4x32xf32>
    %cst_197 = arith.constant 1.000000e+00 : f32
    %967 = vector.broadcast %cst_197 : f32 to vector<4x32xf32>
    %968 = arith.subf %967, %959 : vector<4x32xf32>
    %969 = arith.mulf %968, %966 : vector<4x32xf32>
    %970 = arith.mulf %959, %888 : vector<4x32xf32>
    %971 = arith.addf %969, %970 : vector<4x32xf32>
    %972 = vector.broadcast %935 : vector<4x1xf32> to vector<4x32xf32>
    %973 = arith.mulf %972, %971 : vector<4x32xf32>
    %cst_198 = arith.constant 1.000000e+00 : f32
    %974 = vector.broadcast %cst_198 : f32 to vector<4x1xf32>
    %975 = arith.subf %974, %935 : vector<4x1xf32>
    %976 = vector.broadcast %975 : vector<4x1xf32> to vector<4x32xf32>
    %977 = arith.mulf %976, %888 : vector<4x32xf32>
    %978 = arith.addf %973, %977 : vector<4x32xf32>
    %979 = vector.broadcast %935 : vector<4x1xf32> to vector<4x32xf32>
    %980 = arith.mulf %979, %978 : vector<4x32xf32>
    %c2_199 = arith.constant 2 : index
    %c0_200 = arith.constant 0 : index
    %c0_201 = arith.constant 0 : index
    %981 = vector.load %arg25[%c2_199, %c0_200, %c0_201] : memref<8x4x32xf32, #tpu.memory_space<vmem>>, vector<1x4x32xf32>
    %982 = vector.shape_cast %981 : vector<1x4x32xf32> to vector<4x32xf32>
    %983 = vector.shape_cast %980 : vector<4x32xf32> to vector<1x4x32xf32>
    tpu.vector_store %arg25[%c2_199, %c0_200, %c0_201], %983 {strides = array<i32>} : memref<8x4x32xf32, #tpu.memory_space<vmem>>, vector<1x4x32xf32>,
    %984 = vector.extract_strided_slice %941 {offsets = [0, 96], sizes = [4, 32], strides = [1, 1]} : vector<4x192xf32> to vector<4x32xf32>
    %985 = vector.extract_strided_slice %943 {offsets = [0, 0], sizes = [4, 32], strides = [1, 1]} : vector<4x96xf32> to vector<4x32xf32>
    %986 = arith.addf %984, %985 : vector<4x32xf32>
    %987 = arith.negf %986 : vector<4x32xf32>
    %988 = math.exp %987 : vector<4x32xf32>
    %cst_202 = arith.constant 1.000000e+00 : f32
    %989 = vector.broadcast %cst_202 : f32 to vector<4x32xf32>
    %990 = arith.addf %989, %988 : vector<4x32xf32>
    %991 = arith.divf %989, %990 : vector<4x32xf32>
    %992 = vector.extract_strided_slice %941 {offsets = [0, 128], sizes = [4, 32], strides = [1, 1]} : vector<4x192xf32> to vector<4x32xf32>
    %993 = vector.extract_strided_slice %943 {offsets = [0, 32], sizes = [4, 32], strides = [1, 1]} : vector<4x96xf32> to vector<4x32xf32>
    %994 = arith.addf %992, %993 : vector<4x32xf32>
    %995 = arith.negf %994 : vector<4x32xf32>
    %996 = math.exp %995 : vector<4x32xf32>
    %cst_203 = arith.constant 1.000000e+00 : f32
    %997 = vector.broadcast %cst_203 : f32 to vector<4x32xf32>
    %998 = arith.addf %997, %996 : vector<4x32xf32>
    %999 = arith.divf %997, %998 : vector<4x32xf32>
    %1000 = vector.extract_strided_slice %941 {offsets = [0, 160], sizes = [4, 32], strides = [1, 1]} : vector<4x192xf32> to vector<4x32xf32>
    %1001 = vector.extract_strided_slice %943 {offsets = [0, 64], sizes = [4, 32], strides = [1, 1]} : vector<4x96xf32> to vector<4x32xf32>
    %1002 = vector.broadcast %751 : vector<1x32xf32> to vector<4x32xf32>
    %1003 = arith.addf %1001, %1002 : vector<4x32xf32>
    %1004 = arith.mulf %991, %1003 : vector<4x32xf32>
    %1005 = arith.addf %1000, %1004 : vector<4x32xf32>
    %1006 = math.tanh %1005 : vector<4x32xf32>
    %cst_204 = arith.constant 1.000000e+00 : f32
    %1007 = vector.broadcast %cst_204 : f32 to vector<4x32xf32>
    %1008 = arith.subf %1007, %999 : vector<4x32xf32>
    %1009 = arith.mulf %1008, %1006 : vector<4x32xf32>
    %1010 = arith.mulf %999, %928 : vector<4x32xf32>
    %1011 = arith.addf %1009, %1010 : vector<4x32xf32>
    %1012 = vector.broadcast %937 : vector<4x1xf32> to vector<4x32xf32>
    %1013 = arith.mulf %1012, %1011 : vector<4x32xf32>
    %cst_205 = arith.constant 1.000000e+00 : f32
    %1014 = vector.broadcast %cst_205 : f32 to vector<4x1xf32>
    %1015 = arith.subf %1014, %937 : vector<4x1xf32>
    %1016 = vector.broadcast %1015 : vector<4x1xf32> to vector<4x32xf32>
    %1017 = arith.mulf %1016, %928 : vector<4x32xf32>
    %1018 = arith.addf %1013, %1017 : vector<4x32xf32>
    %1019 = vector.broadcast %937 : vector<4x1xf32> to vector<4x32xf32>
    %1020 = arith.mulf %1019, %1018 : vector<4x32xf32>
    %c5_206 = arith.constant 5 : index
    %c0_207 = arith.constant 0 : index
    %c0_208 = arith.constant 0 : index
    %1021 = vector.load %arg26[%c5_206, %c0_207, %c0_208] : memref<8x4x32xf32, #tpu.memory_space<vmem>>, vector<1x4x32xf32>
    %1022 = vector.shape_cast %1021 : vector<1x4x32xf32> to vector<4x32xf32>
    %1023 = vector.shape_cast %1020 : vector<4x32xf32> to vector<1x4x32xf32>
    tpu.vector_store %arg26[%c5_206, %c0_207, %c0_208], %1023 {strides = array<i32>} : memref<8x4x32xf32, #tpu.memory_space<vmem>>, vector<1x4x32xf32>,
    %1024 = vector.extract_strided_slice %0 {offsets = [3, 0, 0], sizes = [1, 4, 1], strides = [1, 1, 1]} : vector<8x4x1xf32> to vector<1x4x1xf32>
    %1025 = vector.shape_cast %1024 : vector<1x4x1xf32> to vector<4x1xf32>
    %1026 = vector.extract_strided_slice %0 {offsets = [4, 0, 0], sizes = [1, 4, 1], strides = [1, 1, 1]} : vector<8x4x1xf32> to vector<1x4x1xf32>
    %1027 = vector.shape_cast %1026 : vector<1x4x1xf32> to vector<4x1xf32>
    %1028 = vector.extract_strided_slice %747 {offsets = [3, 0, 0], sizes = [1, 4, 192], strides = [1, 1, 1]} : vector<8x4x192xf32> to vector<1x4x192xf32>
    %1029 = vector.shape_cast %1028 : vector<1x4x192xf32> to vector<4x192xf32>
    %1030 = vector.extract_strided_slice %747 {offsets = [4, 0, 0], sizes = [1, 4, 192], strides = [1, 1, 1]} : vector<8x4x192xf32> to vector<1x4x192xf32>
    %1031 = vector.shape_cast %1030 : vector<1x4x192xf32> to vector<4x192xf32>
    %cst_209 = arith.constant dense<0.000000e+00> : vector<4x96xf32>
    %1032 = tpu.matmul %978, %748, %cst_209 {dimension_numbers = #tpu.dot_dimension_numbers<[1], [0], [0], [1], [0, 0, 1, 1], [], []>} : vector<4x32xf32>, vector<32x96xf32>, vector<4x96xf32> -> vector<4x96xf32>
    %cst_210 = arith.constant dense<0.000000e+00> : vector<4x96xf32>
    %1033 = tpu.matmul %1018, %749, %cst_210 {dimension_numbers = #tpu.dot_dimension_numbers<[1], [0], [0], [1], [0, 0, 1, 1], [], []>} : vector<4x32xf32>, vector<32x96xf32>, vector<4x96xf32> -> vector<4x96xf32>
    %1034 = vector.extract_strided_slice %1029 {offsets = [0, 0], sizes = [4, 32], strides = [1, 1]} : vector<4x192xf32> to vector<4x32xf32>
    %1035 = vector.extract_strided_slice %1032 {offsets = [0, 0], sizes = [4, 32], strides = [1, 1]} : vector<4x96xf32> to vector<4x32xf32>
    %1036 = arith.addf %1034, %1035 : vector<4x32xf32>
    %1037 = arith.negf %1036 : vector<4x32xf32>
    %1038 = math.exp %1037 : vector<4x32xf32>
    %cst_211 = arith.constant 1.000000e+00 : f32
    %1039 = vector.broadcast %cst_211 : f32 to vector<4x32xf32>
    %1040 = arith.addf %1039, %1038 : vector<4x32xf32>
    %1041 = arith.divf %1039, %1040 : vector<4x32xf32>
    %1042 = vector.extract_strided_slice %1029 {offsets = [0, 32], sizes = [4, 32], strides = [1, 1]} : vector<4x192xf32> to vector<4x32xf32>
    %1043 = vector.extract_strided_slice %1032 {offsets = [0, 32], sizes = [4, 32], strides = [1, 1]} : vector<4x96xf32> to vector<4x32xf32>
    %1044 = arith.addf %1042, %1043 : vector<4x32xf32>
    %1045 = arith.negf %1044 : vector<4x32xf32>
    %1046 = math.exp %1045 : vector<4x32xf32>
    %cst_212 = arith.constant 1.000000e+00 : f32
    %1047 = vector.broadcast %cst_212 : f32 to vector<4x32xf32>
    %1048 = arith.addf %1047, %1046 : vector<4x32xf32>
    %1049 = arith.divf %1047, %1048 : vector<4x32xf32>
    %1050 = vector.extract_strided_slice %1029 {offsets = [0, 64], sizes = [4, 32], strides = [1, 1]} : vector<4x192xf32> to vector<4x32xf32>
    %1051 = vector.extract_strided_slice %1032 {offsets = [0, 64], sizes = [4, 32], strides = [1, 1]} : vector<4x96xf32> to vector<4x32xf32>
    %1052 = vector.broadcast %750 : vector<1x32xf32> to vector<4x32xf32>
    %1053 = arith.addf %1051, %1052 : vector<4x32xf32>
    %1054 = arith.mulf %1041, %1053 : vector<4x32xf32>
    %1055 = arith.addf %1050, %1054 : vector<4x32xf32>
    %1056 = math.tanh %1055 : vector<4x32xf32>
    %cst_213 = arith.constant 1.000000e+00 : f32
    %1057 = vector.broadcast %cst_213 : f32 to vector<4x32xf32>
    %1058 = arith.subf %1057, %1049 : vector<4x32xf32>
    %1059 = arith.mulf %1058, %1056 : vector<4x32xf32>
    %1060 = arith.mulf %1049, %978 : vector<4x32xf32>
    %1061 = arith.addf %1059, %1060 : vector<4x32xf32>
    %1062 = vector.broadcast %1025 : vector<4x1xf32> to vector<4x32xf32>
    %1063 = arith.mulf %1062, %1061 : vector<4x32xf32>
    %cst_214 = arith.constant 1.000000e+00 : f32
    %1064 = vector.broadcast %cst_214 : f32 to vector<4x1xf32>
    %1065 = arith.subf %1064, %1025 : vector<4x1xf32>
    %1066 = vector.broadcast %1065 : vector<4x1xf32> to vector<4x32xf32>
    %1067 = arith.mulf %1066, %978 : vector<4x32xf32>
    %1068 = arith.addf %1063, %1067 : vector<4x32xf32>
    %1069 = vector.broadcast %1025 : vector<4x1xf32> to vector<4x32xf32>
    %1070 = arith.mulf %1069, %1068 : vector<4x32xf32>
    %c3_215 = arith.constant 3 : index
    %c0_216 = arith.constant 0 : index
    %c0_217 = arith.constant 0 : index
    %1071 = vector.load %arg25[%c3_215, %c0_216, %c0_217] : memref<8x4x32xf32, #tpu.memory_space<vmem>>, vector<1x4x32xf32>
    %1072 = vector.shape_cast %1071 : vector<1x4x32xf32> to vector<4x32xf32>
    %1073 = vector.shape_cast %1070 : vector<4x32xf32> to vector<1x4x32xf32>
    tpu.vector_store %arg25[%c3_215, %c0_216, %c0_217], %1073 {strides = array<i32>} : memref<8x4x32xf32, #tpu.memory_space<vmem>>, vector<1x4x32xf32>,
    %1074 = vector.extract_strided_slice %1031 {offsets = [0, 96], sizes = [4, 32], strides = [1, 1]} : vector<4x192xf32> to vector<4x32xf32>
    %1075 = vector.extract_strided_slice %1033 {offsets = [0, 0], sizes = [4, 32], strides = [1, 1]} : vector<4x96xf32> to vector<4x32xf32>
    %1076 = arith.addf %1074, %1075 : vector<4x32xf32>
    %1077 = arith.negf %1076 : vector<4x32xf32>
    %1078 = math.exp %1077 : vector<4x32xf32>
    %cst_218 = arith.constant 1.000000e+00 : f32
    %1079 = vector.broadcast %cst_218 : f32 to vector<4x32xf32>
    %1080 = arith.addf %1079, %1078 : vector<4x32xf32>
    %1081 = arith.divf %1079, %1080 : vector<4x32xf32>
    %1082 = vector.extract_strided_slice %1031 {offsets = [0, 128], sizes = [4, 32], strides = [1, 1]} : vector<4x192xf32> to vector<4x32xf32>
    %1083 = vector.extract_strided_slice %1033 {offsets = [0, 32], sizes = [4, 32], strides = [1, 1]} : vector<4x96xf32> to vector<4x32xf32>
    %1084 = arith.addf %1082, %1083 : vector<4x32xf32>
    %1085 = arith.negf %1084 : vector<4x32xf32>
    %1086 = math.exp %1085 : vector<4x32xf32>
    %cst_219 = arith.constant 1.000000e+00 : f32
    %1087 = vector.broadcast %cst_219 : f32 to vector<4x32xf32>
    %1088 = arith.addf %1087, %1086 : vector<4x32xf32>
    %1089 = arith.divf %1087, %1088 : vector<4x32xf32>
    %1090 = vector.extract_strided_slice %1031 {offsets = [0, 160], sizes = [4, 32], strides = [1, 1]} : vector<4x192xf32> to vector<4x32xf32>
    %1091 = vector.extract_strided_slice %1033 {offsets = [0, 64], sizes = [4, 32], strides = [1, 1]} : vector<4x96xf32> to vector<4x32xf32>
    %1092 = vector.broadcast %751 : vector<1x32xf32> to vector<4x32xf32>
    %1093 = arith.addf %1091, %1092 : vector<4x32xf32>
    %1094 = arith.mulf %1081, %1093 : vector<4x32xf32>
    %1095 = arith.addf %1090, %1094 : vector<4x32xf32>
    %1096 = math.tanh %1095 : vector<4x32xf32>
    %cst_220 = arith.constant 1.000000e+00 : f32
    %1097 = vector.broadcast %cst_220 : f32 to vector<4x32xf32>
    %1098 = arith.subf %1097, %1089 : vector<4x32xf32>
    %1099 = arith.mulf %1098, %1096 : vector<4x32xf32>
    %1100 = arith.mulf %1089, %1018 : vector<4x32xf32>
    %1101 = arith.addf %1099, %1100 : vector<4x32xf32>
    %1102 = vector.broadcast %1027 : vector<4x1xf32> to vector<4x32xf32>
    %1103 = arith.mulf %1102, %1101 : vector<4x32xf32>
    %cst_221 = arith.constant 1.000000e+00 : f32
    %1104 = vector.broadcast %cst_221 : f32 to vector<4x1xf32>
    %1105 = arith.subf %1104, %1027 : vector<4x1xf32>
    %1106 = vector.broadcast %1105 : vector<4x1xf32> to vector<4x32xf32>
    %1107 = arith.mulf %1106, %1018 : vector<4x32xf32>
    %1108 = arith.addf %1103, %1107 : vector<4x32xf32>
    %1109 = vector.broadcast %1027 : vector<4x1xf32> to vector<4x32xf32>
    %1110 = arith.mulf %1109, %1108 : vector<4x32xf32>
    %c4_222 = arith.constant 4 : index
    %c0_223 = arith.constant 0 : index
    %c0_224 = arith.constant 0 : index
    %1111 = vector.load %arg26[%c4_222, %c0_223, %c0_224] : memref<8x4x32xf32, #tpu.memory_space<vmem>>, vector<1x4x32xf32>
    %1112 = vector.shape_cast %1111 : vector<1x4x32xf32> to vector<4x32xf32>
    %1113 = vector.shape_cast %1110 : vector<4x32xf32> to vector<1x4x32xf32>
    tpu.vector_store %arg26[%c4_222, %c0_223, %c0_224], %1113 {strides = array<i32>} : memref<8x4x32xf32, #tpu.memory_space<vmem>>, vector<1x4x32xf32>,
    %1114 = vector.extract_strided_slice %0 {offsets = [4, 0, 0], sizes = [1, 4, 1], strides = [1, 1, 1]} : vector<8x4x1xf32> to vector<1x4x1xf32>
    %1115 = vector.shape_cast %1114 : vector<1x4x1xf32> to vector<4x1xf32>
    %1116 = vector.extract_strided_slice %0 {offsets = [3, 0, 0], sizes = [1, 4, 1], strides = [1, 1, 1]} : vector<8x4x1xf32> to vector<1x4x1xf32>
    %1117 = vector.shape_cast %1116 : vector<1x4x1xf32> to vector<4x1xf32>
    %1118 = vector.extract_strided_slice %747 {offsets = [4, 0, 0], sizes = [1, 4, 192], strides = [1, 1, 1]} : vector<8x4x192xf32> to vector<1x4x192xf32>
    %1119 = vector.shape_cast %1118 : vector<1x4x192xf32> to vector<4x192xf32>
    %1120 = vector.extract_strided_slice %747 {offsets = [3, 0, 0], sizes = [1, 4, 192], strides = [1, 1, 1]} : vector<8x4x192xf32> to vector<1x4x192xf32>
    %1121 = vector.shape_cast %1120 : vector<1x4x192xf32> to vector<4x192xf32>
    %cst_225 = arith.constant dense<0.000000e+00> : vector<4x96xf32>
    %1122 = tpu.matmul %1068, %748, %cst_225 {dimension_numbers = #tpu.dot_dimension_numbers<[1], [0], [0], [1], [0, 0, 1, 1], [], []>} : vector<4x32xf32>, vector<32x96xf32>, vector<4x96xf32> -> vector<4x96xf32>
    %cst_226 = arith.constant dense<0.000000e+00> : vector<4x96xf32>
    %1123 = tpu.matmul %1108, %749, %cst_226 {dimension_numbers = #tpu.dot_dimension_numbers<[1], [0], [0], [1], [0, 0, 1, 1], [], []>} : vector<4x32xf32>, vector<32x96xf32>, vector<4x96xf32> -> vector<4x96xf32>
    %1124 = vector.extract_strided_slice %1119 {offsets = [0, 0], sizes = [4, 32], strides = [1, 1]} : vector<4x192xf32> to vector<4x32xf32>
    %1125 = vector.extract_strided_slice %1122 {offsets = [0, 0], sizes = [4, 32], strides = [1, 1]} : vector<4x96xf32> to vector<4x32xf32>
    %1126 = arith.addf %1124, %1125 : vector<4x32xf32>
    %1127 = arith.negf %1126 : vector<4x32xf32>
    %1128 = math.exp %1127 : vector<4x32xf32>
    %cst_227 = arith.constant 1.000000e+00 : f32
    %1129 = vector.broadcast %cst_227 : f32 to vector<4x32xf32>
    %1130 = arith.addf %1129, %1128 : vector<4x32xf32>
    %1131 = arith.divf %1129, %1130 : vector<4x32xf32>
    %1132 = vector.extract_strided_slice %1119 {offsets = [0, 32], sizes = [4, 32], strides = [1, 1]} : vector<4x192xf32> to vector<4x32xf32>
    %1133 = vector.extract_strided_slice %1122 {offsets = [0, 32], sizes = [4, 32], strides = [1, 1]} : vector<4x96xf32> to vector<4x32xf32>
    %1134 = arith.addf %1132, %1133 : vector<4x32xf32>
    %1135 = arith.negf %1134 : vector<4x32xf32>
    %1136 = math.exp %1135 : vector<4x32xf32>
    %cst_228 = arith.constant 1.000000e+00 : f32
    %1137 = vector.broadcast %cst_228 : f32 to vector<4x32xf32>
    %1138 = arith.addf %1137, %1136 : vector<4x32xf32>
    %1139 = arith.divf %1137, %1138 : vector<4x32xf32>
    %1140 = vector.extract_strided_slice %1119 {offsets = [0, 64], sizes = [4, 32], strides = [1, 1]} : vector<4x192xf32> to vector<4x32xf32>
    %1141 = vector.extract_strided_slice %1122 {offsets = [0, 64], sizes = [4, 32], strides = [1, 1]} : vector<4x96xf32> to vector<4x32xf32>
    %1142 = vector.broadcast %750 : vector<1x32xf32> to vector<4x32xf32>
    %1143 = arith.addf %1141, %1142 : vector<4x32xf32>
    %1144 = arith.mulf %1131, %1143 : vector<4x32xf32>
    %1145 = arith.addf %1140, %1144 : vector<4x32xf32>
    %1146 = math.tanh %1145 : vector<4x32xf32>
    %cst_229 = arith.constant 1.000000e+00 : f32
    %1147 = vector.broadcast %cst_229 : f32 to vector<4x32xf32>
    %1148 = arith.subf %1147, %1139 : vector<4x32xf32>
    %1149 = arith.mulf %1148, %1146 : vector<4x32xf32>
    %1150 = arith.mulf %1139, %1068 : vector<4x32xf32>
    %1151 = arith.addf %1149, %1150 : vector<4x32xf32>
    %1152 = vector.broadcast %1115 : vector<4x1xf32> to vector<4x32xf32>
    %1153 = arith.mulf %1152, %1151 : vector<4x32xf32>
    %cst_230 = arith.constant 1.000000e+00 : f32
    %1154 = vector.broadcast %cst_230 : f32 to vector<4x1xf32>
    %1155 = arith.subf %1154, %1115 : vector<4x1xf32>
    %1156 = vector.broadcast %1155 : vector<4x1xf32> to vector<4x32xf32>
    %1157 = arith.mulf %1156, %1068 : vector<4x32xf32>
    %1158 = arith.addf %1153, %1157 : vector<4x32xf32>
    %1159 = vector.broadcast %1115 : vector<4x1xf32> to vector<4x32xf32>
    %1160 = arith.mulf %1159, %1158 : vector<4x32xf32>
    %c4_231 = arith.constant 4 : index
    %c0_232 = arith.constant 0 : index
    %c0_233 = arith.constant 0 : index
    %1161 = vector.load %arg25[%c4_231, %c0_232, %c0_233] : memref<8x4x32xf32, #tpu.memory_space<vmem>>, vector<1x4x32xf32>
    %1162 = vector.shape_cast %1161 : vector<1x4x32xf32> to vector<4x32xf32>
    %1163 = vector.shape_cast %1160 : vector<4x32xf32> to vector<1x4x32xf32>
    tpu.vector_store %arg25[%c4_231, %c0_232, %c0_233], %1163 {strides = array<i32>} : memref<8x4x32xf32, #tpu.memory_space<vmem>>, vector<1x4x32xf32>,
    %1164 = vector.extract_strided_slice %1121 {offsets = [0, 96], sizes = [4, 32], strides = [1, 1]} : vector<4x192xf32> to vector<4x32xf32>
    %1165 = vector.extract_strided_slice %1123 {offsets = [0, 0], sizes = [4, 32], strides = [1, 1]} : vector<4x96xf32> to vector<4x32xf32>
    %1166 = arith.addf %1164, %1165 : vector<4x32xf32>
    %1167 = arith.negf %1166 : vector<4x32xf32>
    %1168 = math.exp %1167 : vector<4x32xf32>
    %cst_234 = arith.constant 1.000000e+00 : f32
    %1169 = vector.broadcast %cst_234 : f32 to vector<4x32xf32>
    %1170 = arith.addf %1169, %1168 : vector<4x32xf32>
    %1171 = arith.divf %1169, %1170 : vector<4x32xf32>
    %1172 = vector.extract_strided_slice %1121 {offsets = [0, 128], sizes = [4, 32], strides = [1, 1]} : vector<4x192xf32> to vector<4x32xf32>
    %1173 = vector.extract_strided_slice %1123 {offsets = [0, 32], sizes = [4, 32], strides = [1, 1]} : vector<4x96xf32> to vector<4x32xf32>
    %1174 = arith.addf %1172, %1173 : vector<4x32xf32>
    %1175 = arith.negf %1174 : vector<4x32xf32>
    %1176 = math.exp %1175 : vector<4x32xf32>
    %cst_235 = arith.constant 1.000000e+00 : f32
    %1177 = vector.broadcast %cst_235 : f32 to vector<4x32xf32>
    %1178 = arith.addf %1177, %1176 : vector<4x32xf32>
    %1179 = arith.divf %1177, %1178 : vector<4x32xf32>
    %1180 = vector.extract_strided_slice %1121 {offsets = [0, 160], sizes = [4, 32], strides = [1, 1]} : vector<4x192xf32> to vector<4x32xf32>
    %1181 = vector.extract_strided_slice %1123 {offsets = [0, 64], sizes = [4, 32], strides = [1, 1]} : vector<4x96xf32> to vector<4x32xf32>
    %1182 = vector.broadcast %751 : vector<1x32xf32> to vector<4x32xf32>
    %1183 = arith.addf %1181, %1182 : vector<4x32xf32>
    %1184 = arith.mulf %1171, %1183 : vector<4x32xf32>
    %1185 = arith.addf %1180, %1184 : vector<4x32xf32>
    %1186 = math.tanh %1185 : vector<4x32xf32>
    %cst_236 = arith.constant 1.000000e+00 : f32
    %1187 = vector.broadcast %cst_236 : f32 to vector<4x32xf32>
    %1188 = arith.subf %1187, %1179 : vector<4x32xf32>
    %1189 = arith.mulf %1188, %1186 : vector<4x32xf32>
    %1190 = arith.mulf %1179, %1108 : vector<4x32xf32>
    %1191 = arith.addf %1189, %1190 : vector<4x32xf32>
    %1192 = vector.broadcast %1117 : vector<4x1xf32> to vector<4x32xf32>
    %1193 = arith.mulf %1192, %1191 : vector<4x32xf32>
    %cst_237 = arith.constant 1.000000e+00 : f32
    %1194 = vector.broadcast %cst_237 : f32 to vector<4x1xf32>
    %1195 = arith.subf %1194, %1117 : vector<4x1xf32>
    %1196 = vector.broadcast %1195 : vector<4x1xf32> to vector<4x32xf32>
    %1197 = arith.mulf %1196, %1108 : vector<4x32xf32>
    %1198 = arith.addf %1193, %1197 : vector<4x32xf32>
    %1199 = vector.broadcast %1117 : vector<4x1xf32> to vector<4x32xf32>
    %1200 = arith.mulf %1199, %1198 : vector<4x32xf32>
    %c3_238 = arith.constant 3 : index
    %c0_239 = arith.constant 0 : index
    %c0_240 = arith.constant 0 : index
    %1201 = vector.load %arg26[%c3_238, %c0_239, %c0_240] : memref<8x4x32xf32, #tpu.memory_space<vmem>>, vector<1x4x32xf32>
    %1202 = vector.shape_cast %1201 : vector<1x4x32xf32> to vector<4x32xf32>
    %1203 = vector.shape_cast %1200 : vector<4x32xf32> to vector<1x4x32xf32>
    tpu.vector_store %arg26[%c3_238, %c0_239, %c0_240], %1203 {strides = array<i32>} : memref<8x4x32xf32, #tpu.memory_space<vmem>>, vector<1x4x32xf32>,
    %1204 = vector.extract_strided_slice %0 {offsets = [5, 0, 0], sizes = [1, 4, 1], strides = [1, 1, 1]} : vector<8x4x1xf32> to vector<1x4x1xf32>
    %1205 = vector.shape_cast %1204 : vector<1x4x1xf32> to vector<4x1xf32>
    %1206 = vector.extract_strided_slice %0 {offsets = [2, 0, 0], sizes = [1, 4, 1], strides = [1, 1, 1]} : vector<8x4x1xf32> to vector<1x4x1xf32>
    %1207 = vector.shape_cast %1206 : vector<1x4x1xf32> to vector<4x1xf32>
    %1208 = vector.extract_strided_slice %747 {offsets = [5, 0, 0], sizes = [1, 4, 192], strides = [1, 1, 1]} : vector<8x4x192xf32> to vector<1x4x192xf32>
    %1209 = vector.shape_cast %1208 : vector<1x4x192xf32> to vector<4x192xf32>
    %1210 = vector.extract_strided_slice %747 {offsets = [2, 0, 0], sizes = [1, 4, 192], strides = [1, 1, 1]} : vector<8x4x192xf32> to vector<1x4x192xf32>
    %1211 = vector.shape_cast %1210 : vector<1x4x192xf32> to vector<4x192xf32>
    %cst_241 = arith.constant dense<0.000000e+00> : vector<4x96xf32>
    %1212 = tpu.matmul %1158, %748, %cst_241 {dimension_numbers = #tpu.dot_dimension_numbers<[1], [0], [0], [1], [0, 0, 1, 1], [], []>} : vector<4x32xf32>, vector<32x96xf32>, vector<4x96xf32> -> vector<4x96xf32>
    %cst_242 = arith.constant dense<0.000000e+00> : vector<4x96xf32>
    %1213 = tpu.matmul %1198, %749, %cst_242 {dimension_numbers = #tpu.dot_dimension_numbers<[1], [0], [0], [1], [0, 0, 1, 1], [], []>} : vector<4x32xf32>, vector<32x96xf32>, vector<4x96xf32> -> vector<4x96xf32>
    %1214 = vector.extract_strided_slice %1209 {offsets = [0, 0], sizes = [4, 32], strides = [1, 1]} : vector<4x192xf32> to vector<4x32xf32>
    %1215 = vector.extract_strided_slice %1212 {offsets = [0, 0], sizes = [4, 32], strides = [1, 1]} : vector<4x96xf32> to vector<4x32xf32>
    %1216 = arith.addf %1214, %1215 : vector<4x32xf32>
    %1217 = arith.negf %1216 : vector<4x32xf32>
    %1218 = math.exp %1217 : vector<4x32xf32>
    %cst_243 = arith.constant 1.000000e+00 : f32
    %1219 = vector.broadcast %cst_243 : f32 to vector<4x32xf32>
    %1220 = arith.addf %1219, %1218 : vector<4x32xf32>
    %1221 = arith.divf %1219, %1220 : vector<4x32xf32>
    %1222 = vector.extract_strided_slice %1209 {offsets = [0, 32], sizes = [4, 32], strides = [1, 1]} : vector<4x192xf32> to vector<4x32xf32>
    %1223 = vector.extract_strided_slice %1212 {offsets = [0, 32], sizes = [4, 32], strides = [1, 1]} : vector<4x96xf32> to vector<4x32xf32>
    %1224 = arith.addf %1222, %1223 : vector<4x32xf32>
    %1225 = arith.negf %1224 : vector<4x32xf32>
    %1226 = math.exp %1225 : vector<4x32xf32>
    %cst_244 = arith.constant 1.000000e+00 : f32
    %1227 = vector.broadcast %cst_244 : f32 to vector<4x32xf32>
    %1228 = arith.addf %1227, %1226 : vector<4x32xf32>
    %1229 = arith.divf %1227, %1228 : vector<4x32xf32>
    %1230 = vector.extract_strided_slice %1209 {offsets = [0, 64], sizes = [4, 32], strides = [1, 1]} : vector<4x192xf32> to vector<4x32xf32>
    %1231 = vector.extract_strided_slice %1212 {offsets = [0, 64], sizes = [4, 32], strides = [1, 1]} : vector<4x96xf32> to vector<4x32xf32>
    %1232 = vector.broadcast %750 : vector<1x32xf32> to vector<4x32xf32>
    %1233 = arith.addf %1231, %1232 : vector<4x32xf32>
    %1234 = arith.mulf %1221, %1233 : vector<4x32xf32>
    %1235 = arith.addf %1230, %1234 : vector<4x32xf32>
    %1236 = math.tanh %1235 : vector<4x32xf32>
    %cst_245 = arith.constant 1.000000e+00 : f32
    %1237 = vector.broadcast %cst_245 : f32 to vector<4x32xf32>
    %1238 = arith.subf %1237, %1229 : vector<4x32xf32>
    %1239 = arith.mulf %1238, %1236 : vector<4x32xf32>
    %1240 = arith.mulf %1229, %1158 : vector<4x32xf32>
    %1241 = arith.addf %1239, %1240 : vector<4x32xf32>
    %1242 = vector.broadcast %1205 : vector<4x1xf32> to vector<4x32xf32>
    %1243 = arith.mulf %1242, %1241 : vector<4x32xf32>
    %cst_246 = arith.constant 1.000000e+00 : f32
    %1244 = vector.broadcast %cst_246 : f32 to vector<4x1xf32>
    %1245 = arith.subf %1244, %1205 : vector<4x1xf32>
    %1246 = vector.broadcast %1245 : vector<4x1xf32> to vector<4x32xf32>
    %1247 = arith.mulf %1246, %1158 : vector<4x32xf32>
    %1248 = arith.addf %1243, %1247 : vector<4x32xf32>
    %1249 = vector.broadcast %1205 : vector<4x1xf32> to vector<4x32xf32>
    %1250 = arith.mulf %1249, %1248 : vector<4x32xf32>
    %c5_247 = arith.constant 5 : index
    %c0_248 = arith.constant 0 : index
    %c0_249 = arith.constant 0 : index
    %1251 = vector.load %arg25[%c5_247, %c0_248, %c0_249] : memref<8x4x32xf32, #tpu.memory_space<vmem>>, vector<1x4x32xf32>
    %1252 = vector.shape_cast %1251 : vector<1x4x32xf32> to vector<4x32xf32>
    %1253 = vector.shape_cast %1250 : vector<4x32xf32> to vector<1x4x32xf32>
    tpu.vector_store %arg25[%c5_247, %c0_248, %c0_249], %1253 {strides = array<i32>} : memref<8x4x32xf32, #tpu.memory_space<vmem>>, vector<1x4x32xf32>,
    %1254 = vector.extract_strided_slice %1211 {offsets = [0, 96], sizes = [4, 32], strides = [1, 1]} : vector<4x192xf32> to vector<4x32xf32>
    %1255 = vector.extract_strided_slice %1213 {offsets = [0, 0], sizes = [4, 32], strides = [1, 1]} : vector<4x96xf32> to vector<4x32xf32>
    %1256 = arith.addf %1254, %1255 : vector<4x32xf32>
    %1257 = arith.negf %1256 : vector<4x32xf32>
    %1258 = math.exp %1257 : vector<4x32xf32>
    %cst_250 = arith.constant 1.000000e+00 : f32
    %1259 = vector.broadcast %cst_250 : f32 to vector<4x32xf32>
    %1260 = arith.addf %1259, %1258 : vector<4x32xf32>
    %1261 = arith.divf %1259, %1260 : vector<4x32xf32>
    %1262 = vector.extract_strided_slice %1211 {offsets = [0, 128], sizes = [4, 32], strides = [1, 1]} : vector<4x192xf32> to vector<4x32xf32>
    %1263 = vector.extract_strided_slice %1213 {offsets = [0, 32], sizes = [4, 32], strides = [1, 1]} : vector<4x96xf32> to vector<4x32xf32>
    %1264 = arith.addf %1262, %1263 : vector<4x32xf32>
    %1265 = arith.negf %1264 : vector<4x32xf32>
    %1266 = math.exp %1265 : vector<4x32xf32>
    %cst_251 = arith.constant 1.000000e+00 : f32
    %1267 = vector.broadcast %cst_251 : f32 to vector<4x32xf32>
    %1268 = arith.addf %1267, %1266 : vector<4x32xf32>
    %1269 = arith.divf %1267, %1268 : vector<4x32xf32>
    %1270 = vector.extract_strided_slice %1211 {offsets = [0, 160], sizes = [4, 32], strides = [1, 1]} : vector<4x192xf32> to vector<4x32xf32>
    %1271 = vector.extract_strided_slice %1213 {offsets = [0, 64], sizes = [4, 32], strides = [1, 1]} : vector<4x96xf32> to vector<4x32xf32>
    %1272 = vector.broadcast %751 : vector<1x32xf32> to vector<4x32xf32>
    %1273 = arith.addf %1271, %1272 : vector<4x32xf32>
    %1274 = arith.mulf %1261, %1273 : vector<4x32xf32>
    %1275 = arith.addf %1270, %1274 : vector<4x32xf32>
    %1276 = math.tanh %1275 : vector<4x32xf32>
    %cst_252 = arith.constant 1.000000e+00 : f32
    %1277 = vector.broadcast %cst_252 : f32 to vector<4x32xf32>
    %1278 = arith.subf %1277, %1269 : vector<4x32xf32>
    %1279 = arith.mulf %1278, %1276 : vector<4x32xf32>
    %1280 = arith.mulf %1269, %1198 : vector<4x32xf32>
    %1281 = arith.addf %1279, %1280 : vector<4x32xf32>
    %1282 = vector.broadcast %1207 : vector<4x1xf32> to vector<4x32xf32>
    %1283 = arith.mulf %1282, %1281 : vector<4x32xf32>
    %cst_253 = arith.constant 1.000000e+00 : f32
    %1284 = vector.broadcast %cst_253 : f32 to vector<4x1xf32>
    %1285 = arith.subf %1284, %1207 : vector<4x1xf32>
    %1286 = vector.broadcast %1285 : vector<4x1xf32> to vector<4x32xf32>
    %1287 = arith.mulf %1286, %1198 : vector<4x32xf32>
    %1288 = arith.addf %1283, %1287 : vector<4x32xf32>
    %1289 = vector.broadcast %1207 : vector<4x1xf32> to vector<4x32xf32>
    %1290 = arith.mulf %1289, %1288 : vector<4x32xf32>
    %c2_254 = arith.constant 2 : index
    %c0_255 = arith.constant 0 : index
    %c0_256 = arith.constant 0 : index
    %1291 = vector.load %arg26[%c2_254, %c0_255, %c0_256] : memref<8x4x32xf32, #tpu.memory_space<vmem>>, vector<1x4x32xf32>
    %1292 = vector.shape_cast %1291 : vector<1x4x32xf32> to vector<4x32xf32>
    %1293 = vector.shape_cast %1290 : vector<4x32xf32> to vector<1x4x32xf32>
    tpu.vector_store %arg26[%c2_254, %c0_255, %c0_256], %1293 {strides = array<i32>} : memref<8x4x32xf32, #tpu.memory_space<vmem>>, vector<1x4x32xf32>,
    %1294 = vector.extract_strided_slice %0 {offsets = [6, 0, 0], sizes = [1, 4, 1], strides = [1, 1, 1]} : vector<8x4x1xf32> to vector<1x4x1xf32>
    %1295 = vector.shape_cast %1294 : vector<1x4x1xf32> to vector<4x1xf32>
    %1296 = vector.extract_strided_slice %0 {offsets = [1, 0, 0], sizes = [1, 4, 1], strides = [1, 1, 1]} : vector<8x4x1xf32> to vector<1x4x1xf32>
    %1297 = vector.shape_cast %1296 : vector<1x4x1xf32> to vector<4x1xf32>
    %1298 = vector.extract_strided_slice %747 {offsets = [6, 0, 0], sizes = [1, 4, 192], strides = [1, 1, 1]} : vector<8x4x192xf32> to vector<1x4x192xf32>
    %1299 = vector.shape_cast %1298 : vector<1x4x192xf32> to vector<4x192xf32>
    %1300 = vector.extract_strided_slice %747 {offsets = [1, 0, 0], sizes = [1, 4, 192], strides = [1, 1, 1]} : vector<8x4x192xf32> to vector<1x4x192xf32>
    %1301 = vector.shape_cast %1300 : vector<1x4x192xf32> to vector<4x192xf32>
    %cst_257 = arith.constant dense<0.000000e+00> : vector<4x96xf32>
    %1302 = tpu.matmul %1248, %748, %cst_257 {dimension_numbers = #tpu.dot_dimension_numbers<[1], [0], [0], [1], [0, 0, 1, 1], [], []>} : vector<4x32xf32>, vector<32x96xf32>, vector<4x96xf32> -> vector<4x96xf32>
    %cst_258 = arith.constant dense<0.000000e+00> : vector<4x96xf32>
    %1303 = tpu.matmul %1288, %749, %cst_258 {dimension_numbers = #tpu.dot_dimension_numbers<[1], [0], [0], [1], [0, 0, 1, 1], [], []>} : vector<4x32xf32>, vector<32x96xf32>, vector<4x96xf32> -> vector<4x96xf32>
    %1304 = vector.extract_strided_slice %1299 {offsets = [0, 0], sizes = [4, 32], strides = [1, 1]} : vector<4x192xf32> to vector<4x32xf32>
    %1305 = vector.extract_strided_slice %1302 {offsets = [0, 0], sizes = [4, 32], strides = [1, 1]} : vector<4x96xf32> to vector<4x32xf32>
    %1306 = arith.addf %1304, %1305 : vector<4x32xf32>
    %1307 = arith.negf %1306 : vector<4x32xf32>
    %1308 = math.exp %1307 : vector<4x32xf32>
    %cst_259 = arith.constant 1.000000e+00 : f32
    %1309 = vector.broadcast %cst_259 : f32 to vector<4x32xf32>
    %1310 = arith.addf %1309, %1308 : vector<4x32xf32>
    %1311 = arith.divf %1309, %1310 : vector<4x32xf32>
    %1312 = vector.extract_strided_slice %1299 {offsets = [0, 32], sizes = [4, 32], strides = [1, 1]} : vector<4x192xf32> to vector<4x32xf32>
    %1313 = vector.extract_strided_slice %1302 {offsets = [0, 32], sizes = [4, 32], strides = [1, 1]} : vector<4x96xf32> to vector<4x32xf32>
    %1314 = arith.addf %1312, %1313 : vector<4x32xf32>
    %1315 = arith.negf %1314 : vector<4x32xf32>
    %1316 = math.exp %1315 : vector<4x32xf32>
    %cst_260 = arith.constant 1.000000e+00 : f32
    %1317 = vector.broadcast %cst_260 : f32 to vector<4x32xf32>
    %1318 = arith.addf %1317, %1316 : vector<4x32xf32>
    %1319 = arith.divf %1317, %1318 : vector<4x32xf32>
    %1320 = vector.extract_strided_slice %1299 {offsets = [0, 64], sizes = [4, 32], strides = [1, 1]} : vector<4x192xf32> to vector<4x32xf32>
    %1321 = vector.extract_strided_slice %1302 {offsets = [0, 64], sizes = [4, 32], strides = [1, 1]} : vector<4x96xf32> to vector<4x32xf32>
    %1322 = vector.broadcast %750 : vector<1x32xf32> to vector<4x32xf32>
    %1323 = arith.addf %1321, %1322 : vector<4x32xf32>
    %1324 = arith.mulf %1311, %1323 : vector<4x32xf32>
    %1325 = arith.addf %1320, %1324 : vector<4x32xf32>
    %1326 = math.tanh %1325 : vector<4x32xf32>
    %cst_261 = arith.constant 1.000000e+00 : f32
    %1327 = vector.broadcast %cst_261 : f32 to vector<4x32xf32>
    %1328 = arith.subf %1327, %1319 : vector<4x32xf32>
    %1329 = arith.mulf %1328, %1326 : vector<4x32xf32>
    %1330 = arith.mulf %1319, %1248 : vector<4x32xf32>
    %1331 = arith.addf %1329, %1330 : vector<4x32xf32>
    %1332 = vector.broadcast %1295 : vector<4x1xf32> to vector<4x32xf32>
    %1333 = arith.mulf %1332, %1331 : vector<4x32xf32>
    %cst_262 = arith.constant 1.000000e+00 : f32
    %1334 = vector.broadcast %cst_262 : f32 to vector<4x1xf32>
    %1335 = arith.subf %1334, %1295 : vector<4x1xf32>
    %1336 = vector.broadcast %1335 : vector<4x1xf32> to vector<4x32xf32>
    %1337 = arith.mulf %1336, %1248 : vector<4x32xf32>
    %1338 = arith.addf %1333, %1337 : vector<4x32xf32>
    %1339 = vector.broadcast %1295 : vector<4x1xf32> to vector<4x32xf32>
    %1340 = arith.mulf %1339, %1338 : vector<4x32xf32>
    %c6_263 = arith.constant 6 : index
    %c0_264 = arith.constant 0 : index
    %c0_265 = arith.constant 0 : index
    %1341 = vector.load %arg25[%c6_263, %c0_264, %c0_265] : memref<8x4x32xf32, #tpu.memory_space<vmem>>, vector<1x4x32xf32>
    %1342 = vector.shape_cast %1341 : vector<1x4x32xf32> to vector<4x32xf32>
    %1343 = vector.shape_cast %1340 : vector<4x32xf32> to vector<1x4x32xf32>
    tpu.vector_store %arg25[%c6_263, %c0_264, %c0_265], %1343 {strides = array<i32>} : memref<8x4x32xf32, #tpu.memory_space<vmem>>, vector<1x4x32xf32>,
    %1344 = vector.extract_strided_slice %1301 {offsets = [0, 96], sizes = [4, 32], strides = [1, 1]} : vector<4x192xf32> to vector<4x32xf32>
    %1345 = vector.extract_strided_slice %1303 {offsets = [0, 0], sizes = [4, 32], strides = [1, 1]} : vector<4x96xf32> to vector<4x32xf32>
    %1346 = arith.addf %1344, %1345 : vector<4x32xf32>
    %1347 = arith.negf %1346 : vector<4x32xf32>
    %1348 = math.exp %1347 : vector<4x32xf32>
    %cst_266 = arith.constant 1.000000e+00 : f32
    %1349 = vector.broadcast %cst_266 : f32 to vector<4x32xf32>
    %1350 = arith.addf %1349, %1348 : vector<4x32xf32>
    %1351 = arith.divf %1349, %1350 : vector<4x32xf32>
    %1352 = vector.extract_strided_slice %1301 {offsets = [0, 128], sizes = [4, 32], strides = [1, 1]} : vector<4x192xf32> to vector<4x32xf32>
    %1353 = vector.extract_strided_slice %1303 {offsets = [0, 32], sizes = [4, 32], strides = [1, 1]} : vector<4x96xf32> to vector<4x32xf32>
    %1354 = arith.addf %1352, %1353 : vector<4x32xf32>
    %1355 = arith.negf %1354 : vector<4x32xf32>
    %1356 = math.exp %1355 : vector<4x32xf32>
    %cst_267 = arith.constant 1.000000e+00 : f32
    %1357 = vector.broadcast %cst_267 : f32 to vector<4x32xf32>
    %1358 = arith.addf %1357, %1356 : vector<4x32xf32>
    %1359 = arith.divf %1357, %1358 : vector<4x32xf32>
    %1360 = vector.extract_strided_slice %1301 {offsets = [0, 160], sizes = [4, 32], strides = [1, 1]} : vector<4x192xf32> to vector<4x32xf32>
    %1361 = vector.extract_strided_slice %1303 {offsets = [0, 64], sizes = [4, 32], strides = [1, 1]} : vector<4x96xf32> to vector<4x32xf32>
    %1362 = vector.broadcast %751 : vector<1x32xf32> to vector<4x32xf32>
    %1363 = arith.addf %1361, %1362 : vector<4x32xf32>
    %1364 = arith.mulf %1351, %1363 : vector<4x32xf32>
    %1365 = arith.addf %1360, %1364 : vector<4x32xf32>
    %1366 = math.tanh %1365 : vector<4x32xf32>
    %cst_268 = arith.constant 1.000000e+00 : f32
    %1367 = vector.broadcast %cst_268 : f32 to vector<4x32xf32>
    %1368 = arith.subf %1367, %1359 : vector<4x32xf32>
    %1369 = arith.mulf %1368, %1366 : vector<4x32xf32>
    %1370 = arith.mulf %1359, %1288 : vector<4x32xf32>
    %1371 = arith.addf %1369, %1370 : vector<4x32xf32>
    %1372 = vector.broadcast %1297 : vector<4x1xf32> to vector<4x32xf32>
    %1373 = arith.mulf %1372, %1371 : vector<4x32xf32>
    %cst_269 = arith.constant 1.000000e+00 : f32
    %1374 = vector.broadcast %cst_269 : f32 to vector<4x1xf32>
    %1375 = arith.subf %1374, %1297 : vector<4x1xf32>
    %1376 = vector.broadcast %1375 : vector<4x1xf32> to vector<4x32xf32>
    %1377 = arith.mulf %1376, %1288 : vector<4x32xf32>
    %1378 = arith.addf %1373, %1377 : vector<4x32xf32>
    %1379 = vector.broadcast %1297 : vector<4x1xf32> to vector<4x32xf32>
    %1380 = arith.mulf %1379, %1378 : vector<4x32xf32>
    %c1_270 = arith.constant 1 : index
    %c0_271 = arith.constant 0 : index
    %c0_272 = arith.constant 0 : index
    %1381 = vector.load %arg26[%c1_270, %c0_271, %c0_272] : memref<8x4x32xf32, #tpu.memory_space<vmem>>, vector<1x4x32xf32>
    %1382 = vector.shape_cast %1381 : vector<1x4x32xf32> to vector<4x32xf32>
    %1383 = vector.shape_cast %1380 : vector<4x32xf32> to vector<1x4x32xf32>
    tpu.vector_store %arg26[%c1_270, %c0_271, %c0_272], %1383 {strides = array<i32>} : memref<8x4x32xf32, #tpu.memory_space<vmem>>, vector<1x4x32xf32>,
    %1384 = vector.extract_strided_slice %0 {offsets = [7, 0, 0], sizes = [1, 4, 1], strides = [1, 1, 1]} : vector<8x4x1xf32> to vector<1x4x1xf32>
    %1385 = vector.shape_cast %1384 : vector<1x4x1xf32> to vector<4x1xf32>
    %1386 = vector.extract_strided_slice %0 {offsets = [0, 0, 0], sizes = [1, 4, 1], strides = [1, 1, 1]} : vector<8x4x1xf32> to vector<1x4x1xf32>
    %1387 = vector.shape_cast %1386 : vector<1x4x1xf32> to vector<4x1xf32>
    %1388 = vector.extract_strided_slice %747 {offsets = [7, 0, 0], sizes = [1, 4, 192], strides = [1, 1, 1]} : vector<8x4x192xf32> to vector<1x4x192xf32>
    %1389 = vector.shape_cast %1388 : vector<1x4x192xf32> to vector<4x192xf32>
    %1390 = vector.extract_strided_slice %747 {offsets = [0, 0, 0], sizes = [1, 4, 192], strides = [1, 1, 1]} : vector<8x4x192xf32> to vector<1x4x192xf32>
    %1391 = vector.shape_cast %1390 : vector<1x4x192xf32> to vector<4x192xf32>
    %cst_273 = arith.constant dense<0.000000e+00> : vector<4x96xf32>
    %1392 = tpu.matmul %1338, %748, %cst_273 {dimension_numbers = #tpu.dot_dimension_numbers<[1], [0], [0], [1], [0, 0, 1, 1], [], []>} : vector<4x32xf32>, vector<32x96xf32>, vector<4x96xf32> -> vector<4x96xf32>
    %cst_274 = arith.constant dense<0.000000e+00> : vector<4x96xf32>
    %1393 = tpu.matmul %1378, %749, %cst_274 {dimension_numbers = #tpu.dot_dimension_numbers<[1], [0], [0], [1], [0, 0, 1, 1], [], []>} : vector<4x32xf32>, vector<32x96xf32>, vector<4x96xf32> -> vector<4x96xf32>
    %1394 = vector.extract_strided_slice %1389 {offsets = [0, 0], sizes = [4, 32], strides = [1, 1]} : vector<4x192xf32> to vector<4x32xf32>
    %1395 = vector.extract_strided_slice %1392 {offsets = [0, 0], sizes = [4, 32], strides = [1, 1]} : vector<4x96xf32> to vector<4x32xf32>
    %1396 = arith.addf %1394, %1395 : vector<4x32xf32>
    %1397 = arith.negf %1396 : vector<4x32xf32>
    %1398 = math.exp %1397 : vector<4x32xf32>
    %cst_275 = arith.constant 1.000000e+00 : f32
    %1399 = vector.broadcast %cst_275 : f32 to vector<4x32xf32>
    %1400 = arith.addf %1399, %1398 : vector<4x32xf32>
    %1401 = arith.divf %1399, %1400 : vector<4x32xf32>
    %1402 = vector.extract_strided_slice %1389 {offsets = [0, 32], sizes = [4, 32], strides = [1, 1]} : vector<4x192xf32> to vector<4x32xf32>
    %1403 = vector.extract_strided_slice %1392 {offsets = [0, 32], sizes = [4, 32], strides = [1, 1]} : vector<4x96xf32> to vector<4x32xf32>
    %1404 = arith.addf %1402, %1403 : vector<4x32xf32>
    %1405 = arith.negf %1404 : vector<4x32xf32>
    %1406 = math.exp %1405 : vector<4x32xf32>
    %cst_276 = arith.constant 1.000000e+00 : f32
    %1407 = vector.broadcast %cst_276 : f32 to vector<4x32xf32>
    %1408 = arith.addf %1407, %1406 : vector<4x32xf32>
    %1409 = arith.divf %1407, %1408 : vector<4x32xf32>
    %1410 = vector.extract_strided_slice %1389 {offsets = [0, 64], sizes = [4, 32], strides = [1, 1]} : vector<4x192xf32> to vector<4x32xf32>
    %1411 = vector.extract_strided_slice %1392 {offsets = [0, 64], sizes = [4, 32], strides = [1, 1]} : vector<4x96xf32> to vector<4x32xf32>
    %1412 = vector.broadcast %750 : vector<1x32xf32> to vector<4x32xf32>
    %1413 = arith.addf %1411, %1412 : vector<4x32xf32>
    %1414 = arith.mulf %1401, %1413 : vector<4x32xf32>
    %1415 = arith.addf %1410, %1414 : vector<4x32xf32>
    %1416 = math.tanh %1415 : vector<4x32xf32>
    %cst_277 = arith.constant 1.000000e+00 : f32
    %1417 = vector.broadcast %cst_277 : f32 to vector<4x32xf32>
    %1418 = arith.subf %1417, %1409 : vector<4x32xf32>
    %1419 = arith.mulf %1418, %1416 : vector<4x32xf32>
    %1420 = arith.mulf %1409, %1338 : vector<4x32xf32>
    %1421 = arith.addf %1419, %1420 : vector<4x32xf32>
    %1422 = vector.broadcast %1385 : vector<4x1xf32> to vector<4x32xf32>
    %1423 = arith.mulf %1422, %1421 : vector<4x32xf32>
    %cst_278 = arith.constant 1.000000e+00 : f32
    %1424 = vector.broadcast %cst_278 : f32 to vector<4x1xf32>
    %1425 = arith.subf %1424, %1385 : vector<4x1xf32>
    %1426 = vector.broadcast %1425 : vector<4x1xf32> to vector<4x32xf32>
    %1427 = arith.mulf %1426, %1338 : vector<4x32xf32>
    %1428 = arith.addf %1423, %1427 : vector<4x32xf32>
    %1429 = vector.broadcast %1385 : vector<4x1xf32> to vector<4x32xf32>
    %1430 = arith.mulf %1429, %1428 : vector<4x32xf32>
    %c7_279 = arith.constant 7 : index
    %c0_280 = arith.constant 0 : index
    %c0_281 = arith.constant 0 : index
    %1431 = vector.load %arg25[%c7_279, %c0_280, %c0_281] : memref<8x4x32xf32, #tpu.memory_space<vmem>>, vector<1x4x32xf32>
    %1432 = vector.shape_cast %1431 : vector<1x4x32xf32> to vector<4x32xf32>
    %1433 = vector.shape_cast %1430 : vector<4x32xf32> to vector<1x4x32xf32>
    tpu.vector_store %arg25[%c7_279, %c0_280, %c0_281], %1433 {strides = array<i32>} : memref<8x4x32xf32, #tpu.memory_space<vmem>>, vector<1x4x32xf32>,
    %1434 = vector.extract_strided_slice %1391 {offsets = [0, 96], sizes = [4, 32], strides = [1, 1]} : vector<4x192xf32> to vector<4x32xf32>
    %1435 = vector.extract_strided_slice %1393 {offsets = [0, 0], sizes = [4, 32], strides = [1, 1]} : vector<4x96xf32> to vector<4x32xf32>
    %1436 = arith.addf %1434, %1435 : vector<4x32xf32>
    %1437 = arith.negf %1436 : vector<4x32xf32>
    %1438 = math.exp %1437 : vector<4x32xf32>
    %cst_282 = arith.constant 1.000000e+00 : f32
    %1439 = vector.broadcast %cst_282 : f32 to vector<4x32xf32>
    %1440 = arith.addf %1439, %1438 : vector<4x32xf32>
    %1441 = arith.divf %1439, %1440 : vector<4x32xf32>
    %1442 = vector.extract_strided_slice %1391 {offsets = [0, 128], sizes = [4, 32], strides = [1, 1]} : vector<4x192xf32> to vector<4x32xf32>
    %1443 = vector.extract_strided_slice %1393 {offsets = [0, 32], sizes = [4, 32], strides = [1, 1]} : vector<4x96xf32> to vector<4x32xf32>
    %1444 = arith.addf %1442, %1443 : vector<4x32xf32>
    %1445 = arith.negf %1444 : vector<4x32xf32>
    %1446 = math.exp %1445 : vector<4x32xf32>
    %cst_283 = arith.constant 1.000000e+00 : f32
    %1447 = vector.broadcast %cst_283 : f32 to vector<4x32xf32>
    %1448 = arith.addf %1447, %1446 : vector<4x32xf32>
    %1449 = arith.divf %1447, %1448 : vector<4x32xf32>
    %1450 = vector.extract_strided_slice %1391 {offsets = [0, 160], sizes = [4, 32], strides = [1, 1]} : vector<4x192xf32> to vector<4x32xf32>
    %1451 = vector.extract_strided_slice %1393 {offsets = [0, 64], sizes = [4, 32], strides = [1, 1]} : vector<4x96xf32> to vector<4x32xf32>
    %1452 = vector.broadcast %751 : vector<1x32xf32> to vector<4x32xf32>
    %1453 = arith.addf %1451, %1452 : vector<4x32xf32>
    %1454 = arith.mulf %1441, %1453 : vector<4x32xf32>
    %1455 = arith.addf %1450, %1454 : vector<4x32xf32>
    %1456 = math.tanh %1455 : vector<4x32xf32>
    %cst_284 = arith.constant 1.000000e+00 : f32
    %1457 = vector.broadcast %cst_284 : f32 to vector<4x32xf32>
    %1458 = arith.subf %1457, %1449 : vector<4x32xf32>
    %1459 = arith.mulf %1458, %1456 : vector<4x32xf32>
    %1460 = arith.mulf %1449, %1378 : vector<4x32xf32>
    %1461 = arith.addf %1459, %1460 : vector<4x32xf32>
    %1462 = vector.broadcast %1387 : vector<4x1xf32> to vector<4x32xf32>
    %1463 = arith.mulf %1462, %1461 : vector<4x32xf32>
    %cst_285 = arith.constant 1.000000e+00 : f32
    %1464 = vector.broadcast %cst_285 : f32 to vector<4x1xf32>
    %1465 = arith.subf %1464, %1387 : vector<4x1xf32>
    %1466 = vector.broadcast %1465 : vector<4x1xf32> to vector<4x32xf32>
    %1467 = arith.mulf %1466, %1378 : vector<4x32xf32>
    %1468 = arith.addf %1463, %1467 : vector<4x32xf32>
    %1469 = vector.broadcast %1387 : vector<4x1xf32> to vector<4x32xf32>
    %1470 = arith.mulf %1469, %1468 : vector<4x32xf32>
    %c0_286 = arith.constant 0 : index
    %c0_287 = arith.constant 0 : index
    %c0_288 = arith.constant 0 : index
    %1471 = vector.load %arg26[%c0_286, %c0_287, %c0_288] : memref<8x4x32xf32, #tpu.memory_space<vmem>>, vector<1x4x32xf32>
    %1472 = vector.shape_cast %1471 : vector<1x4x32xf32> to vector<4x32xf32>
    %1473 = vector.shape_cast %1470 : vector<4x32xf32> to vector<1x4x32xf32>
    tpu.vector_store %arg26[%c0_286, %c0_287, %c0_288], %1473 {strides = array<i32>} : memref<8x4x32xf32, #tpu.memory_space<vmem>>, vector<1x4x32xf32>,
    %c0_289 = arith.constant 0 : index
    %c0_290 = arith.constant 0 : index
    %c0_291 = arith.constant 0 : index
    %1474 = vector.load %arg25[%c0_289, %c0_290, %c0_291] : memref<8x4x32xf32, #tpu.memory_space<vmem>>, vector<8x4x32xf32>
    %c0_292 = arith.constant 0 : index
    %c0_293 = arith.constant 0 : index
    %c0_294 = arith.constant 0 : index
    %1475 = vector.load %arg26[%c0_292, %c0_293, %c0_294] : memref<8x4x32xf32, #tpu.memory_space<vmem>>, vector<8x4x32xf32>
    %c0_295 = arith.constant 0 : index
    %c0_296 = arith.constant 0 : index
    %1476 = vector.load %arg14[%c0_295, %c0_296] : memref<1x32xf32, #tpu.memory_space<vmem>>, vector<1x32xf32>
    %c0_297 = arith.constant 0 : index
    %c0_298 = arith.constant 0 : index
    %1477 = vector.load %arg15[%c0_297, %c0_298] : memref<1x32xf32, #tpu.memory_space<vmem>>, vector<1x32xf32>
    %c0_299 = arith.constant 0 : index
    %c0_300 = arith.constant 0 : index
    %1478 = memref.load %arg16[%c0_299, %c0_300] : memref<1x1xf32, #tpu.memory_space<smem>>
    %1479 = vector.shape_cast %1476 : vector<1x32xf32> to vector<1x1x32xf32>
    %1480 = vector.broadcast %1479 : vector<1x1x32xf32> to vector<8x4x32xf32>
    %1481 = arith.mulf %1474, %1480 : vector<8x4x32xf32>
    %cst_301 = arith.constant dense<0.000000e+00> : vector<8x4xf32>
    %1482 = vector.multi_reduction <add>, %1481, %cst_301 [2] : vector<8x4x32xf32> to vector<8x4xf32>
    %1483 = vector.shape_cast %1482 : vector<8x4xf32> to vector<8x4x1xf32>
    %1484 = vector.shape_cast %1477 : vector<1x32xf32> to vector<1x1x32xf32>
    %1485 = vector.broadcast %1484 : vector<1x1x32xf32> to vector<8x4x32xf32>
    %1486 = arith.mulf %1475, %1485 : vector<8x4x32xf32>
    %cst_302 = arith.constant dense<0.000000e+00> : vector<8x4xf32>
    %1487 = vector.multi_reduction <add>, %1486, %cst_302 [2] : vector<8x4x32xf32> to vector<8x4xf32>
    %1488 = vector.shape_cast %1487 : vector<8x4xf32> to vector<8x4x1xf32>
    %1489 = arith.addf %1483, %1488 : vector<8x4x1xf32>
    %1490 = vector.broadcast %1478 : f32 to vector<8x4x1xf32>
    %1491 = arith.addf %1489, %1490 : vector<8x4x1xf32>
    %cst_303 = arith.constant dense<0xFF800000> : vector<8x1xf32>
    %1492 = vector.multi_reduction <maximumf>, %1491, %cst_303 [1] : vector<8x4x1xf32> to vector<8x1xf32>
    %1493 = vector.shape_cast %1492 : vector<8x1xf32> to vector<8x1x1xf32>
    %1494 = vector.broadcast %1493 : vector<8x1x1xf32> to vector<8x4x1xf32>
    %1495 = arith.subf %1491, %1494 : vector<8x4x1xf32>
    %1496 = math.exp %1495 : vector<8x4x1xf32>
    %cst_304 = arith.constant dense<0.000000e+00> : vector<8x1xf32>
    %1497 = vector.multi_reduction <add>, %1496, %cst_304 [1] : vector<8x4x1xf32> to vector<8x1xf32>
    %1498 = vector.shape_cast %1497 : vector<8x1xf32> to vector<8x1x1xf32>
    %1499 = tpu.reciprocal %1498 {approx = true} : vector<8x1x1xf32> -> vector<8x1x1xf32>
    %1500 = vector.broadcast %1499 : vector<8x1x1xf32> to vector<8x4x1xf32>
    %1501 = arith.mulf %1496, %1500 : vector<8x4x1xf32>
    %1502 = vector.broadcast %1501 : vector<8x4x1xf32> to vector<8x4x32xf32>
    %1503 = arith.mulf %1474, %1502 : vector<8x4x32xf32>
    %cst_305 = arith.constant dense<0.000000e+00> : vector<4x32xf32>
    %1504 = vector.multi_reduction <add>, %1503, %cst_305 [0] : vector<8x4x32xf32> to vector<4x32xf32>
    %1505 = vector.broadcast %1501 : vector<8x4x1xf32> to vector<8x4x32xf32>
    %1506 = arith.mulf %1475, %1505 : vector<8x4x32xf32>
    %cst_306 = arith.constant dense<0.000000e+00> : vector<4x32xf32>
    %1507 = vector.multi_reduction <add>, %1506, %cst_306 [0] : vector<8x4x32xf32> to vector<4x32xf32>
    %c0_307 = arith.constant 0 : index
    %c0_308 = arith.constant 0 : index
    %1508 = vector.load %arg17[%c0_307, %c0_308] : memref<32x16xf32, #tpu.memory_space<vmem>>, vector<32x16xf32>
    %cst_309 = arith.constant dense<0.000000e+00> : vector<4x16xf32>
    %1509 = tpu.matmul %1504, %1508, %cst_309 {dimension_numbers = #tpu.dot_dimension_numbers<[1], [0], [0], [1], [0, 0, 1, 1], [], []>} : vector<4x32xf32>, vector<32x16xf32>, vector<4x16xf32> -> vector<4x16xf32>
    %c0_310 = arith.constant 0 : index
    %c0_311 = arith.constant 0 : index
    %1510 = vector.load %arg18[%c0_310, %c0_311] : memref<32x16xf32, #tpu.memory_space<vmem>>, vector<32x16xf32>
    %cst_312 = arith.constant dense<0.000000e+00> : vector<4x16xf32>
    %1511 = tpu.matmul %1507, %1510, %cst_312 {dimension_numbers = #tpu.dot_dimension_numbers<[1], [0], [0], [1], [0, 0, 1, 1], [], []>} : vector<4x32xf32>, vector<32x16xf32>, vector<4x16xf32> -> vector<4x16xf32>
    %1512 = arith.addf %1509, %1511 : vector<4x16xf32>
    %c0_313 = arith.constant 0 : index
    %c0_314 = arith.constant 0 : index
    %1513 = vector.load %arg19[%c0_313, %c0_314] : memref<1x16xf32, #tpu.memory_space<vmem>>, vector<1x16xf32>
    %1514 = vector.broadcast %1513 : vector<1x16xf32> to vector<4x16xf32>
    %1515 = arith.addf %1512, %1514 : vector<4x16xf32>
    %cst_315 = arith.constant 0.000000e+00 : f32
    %1516 = vector.broadcast %cst_315 : f32 to vector<4x16xf32>
    %1517 = arith.cmpf ogt, %1515, %1516 : vector<4x16xf32>
    %1518 = math.exp %1515 : vector<4x16xf32>
    %cst_316 = arith.constant 1.000000e+00 : f32
    %1519 = vector.broadcast %cst_316 : f32 to vector<4x16xf32>
    %1520 = arith.subf %1518, %1519 : vector<4x16xf32>
    %1521 = arith.select %1517, %1515, %1520 : vector<4x16xi1>, vector<4x16xf32>
    %c0_317 = arith.constant 0 : index
    %c0_318 = arith.constant 0 : index
    %1522 = vector.load %arg20[%c0_317, %c0_318] : memref<16x5xf32, #tpu.memory_space<vmem>>, vector<16x5xf32>
    %cst_319 = arith.constant dense<0.000000e+00> : vector<4x5xf32>
    %1523 = tpu.matmul %1521, %1522, %cst_319 {dimension_numbers = #tpu.dot_dimension_numbers<[1], [0], [0], [1], [0, 0, 1, 1], [], []>} : vector<4x16xf32>, vector<16x5xf32>, vector<4x5xf32> -> vector<4x5xf32>
    %c0_320 = arith.constant 0 : index
    %c0_321 = arith.constant 0 : index
    %1524 = vector.load %arg21[%c0_320, %c0_321] : memref<1x5xf32, #tpu.memory_space<vmem>>, vector<1x5xf32>
    %1525 = vector.broadcast %1524 : vector<1x5xf32> to vector<4x5xf32>
    %1526 = arith.addf %1523, %1525 : vector<4x5xf32>
    %cst_322 = arith.constant dense<0xFF800000> : vector<4xf32>
    %1527 = vector.multi_reduction <maximumf>, %1526, %cst_322 [1] : vector<4x5xf32> to vector<4xf32>
    %1528 = vector.shape_cast %1527 : vector<4xf32> to vector<4x1xf32>
    %1529 = vector.broadcast %1528 : vector<4x1xf32> to vector<4x5xf32>
    %1530 = arith.subf %1526, %1529 : vector<4x5xf32>
    %1531 = math.exp %1530 : vector<4x5xf32>
    %cst_323 = arith.constant dense<0.000000e+00> : vector<4xf32>
    %1532 = vector.multi_reduction <add>, %1531, %cst_323 [1] : vector<4x5xf32> to vector<4xf32>
    %1533 = vector.shape_cast %1532 : vector<4xf32> to vector<4x1xf32>
    %1534 = math.log %1533 : vector<4x1xf32>
    %1535 = arith.addf %1528, %1534 : vector<4x1xf32>
    %1536 = vector.broadcast %1535 : vector<4x1xf32> to vector<4x5xf32>
    %1537 = arith.subf %1526, %1536 : vector<4x5xf32>
    %c0_324 = arith.constant 0 : index
    %c0_325 = arith.constant 0 : index
    %1538 = vector.load %arg22[%c0_324, %c0_325] : memref<4x5xf32, #tpu.memory_space<vmem>>, vector<4x5xf32>
    tpu.vector_store %arg22[%c0_324, %c0_325], %1537 {strides = array<i32>} : memref<4x5xf32, #tpu.memory_space<vmem>>, vector<4x5xf32>,
    return
  }
}

</mosaic_0001>

<llo_original>
// kernel: tpu_custom_call.1
$region0: #{tpu_custom_call.1}
  #allocation0 [shape = 'u32[]', space=smem, size = 0x4, offset = 0x4, fixed_abs, tag = 'smem constant byte address 0x4 - core index']
  #allocation1 [shape = 'u32[144,128]{1,0:T(1,128)}', space=vmem, size = 0x12000, scoped, tag = 'internal scratch']
  #allocation2 [shape = 'f32[8,4,32]{2,1,0:T(4,128)}', space=vmem, size = 0x4000, scoped, tag = 'scratch operand']
  #allocation3 [shape = 'f32[8,4,32]{2,1,0:T(4,128)}', space=vmem, size = 0x4000, scoped, tag = 'scratch operand']
  #allocation4 [shape = 'f32[8,4,32]{2,1,0:T(4,128)}', space=vmem, size = 0x4000, scoped, tag = 'scratch operand']
  #allocation5 [shape = 'f32[8,4,32]{2,1,0:T(4,128)}', space=vmem, size = 0x4000, scoped, tag = 'scratch operand']
  #allocation6 [shape = 'f32[1,1]{1,0:T(1,128)S(6)}', space=smem, size = 0x200, scoped, tag = 'scoped memory for tpu_custom_call.1']
  %s0 = inlined_call_operand.vmem [shape: f32[32,16], index: 0, kind: input, shape index: {}]
  %s1 = inlined_call_operand.vmem [shape: f32[8,4,1], index: 1, kind: input, shape index: {}]
  %s2 = inlined_call_operand.vmem [shape: f32[16,192], index: 2, kind: input, shape index: {}]
  %s3 = inlined_call_operand.hbm [shape: f32[1,192], index: 3, kind: input, shape index: {}]
  %s4 = inlined_call_operand.vmem [shape: f32[32,96], index: 4, kind: input, shape index: {}]
  %s5 = inlined_call_operand.vmem [shape: f32[32,96], index: 5, kind: input, shape index: {}]
  %s6 = inlined_call_operand.hbm [shape: f32[1,32], index: 6, kind: input, shape index: {}]
  %s7 = inlined_call_operand.hbm [shape: f32[1,32], index: 7, kind: input, shape index: {}]
  %s8 = inlined_call_operand.vmem [shape: f32[64,192], index: 8, kind: input, shape index: {}]
  %s9 = inlined_call_operand.hbm [shape: f32[1,192], index: 9, kind: input, shape index: {}]
  %s10 = inlined_call_operand.hbm [shape: f32[32,96], index: 10, kind: input, shape index: {}]
  %s11 = inlined_call_operand.hbm [shape: f32[32,96], index: 11, kind: input, shape index: {}]
  %s12 = inlined_call_operand.hbm [shape: f32[1,32], index: 12, kind: input, shape index: {}]
  %s13 = inlined_call_operand.hbm [shape: f32[1,32], index: 13, kind: input, shape index: {}]
  %s14 = inlined_call_operand.hbm [shape: f32[1,32], index: 14, kind: input, shape index: {}]
  %s15 = inlined_call_operand.hbm [shape: f32[1,32], index: 15, kind: input, shape index: {}]
  %s16 = inlined_call_operand.<no memory space> [shape: f32[1,1], index: 16, kind: input, shape index: {}]
  %s17 = inlined_call_operand.vmem [shape: f32[32,16], index: 17, kind: input, shape index: {}]
  %s18 = inlined_call_operand.vmem [shape: f32[32,16], index: 18, kind: input, shape index: {}]
  %s19 = inlined_call_operand.vmem [shape: f32[1,16], index: 19, kind: input, shape index: {}]
  %s20 = inlined_call_operand.vmem [shape: f32[16,5], index: 20, kind: input, shape index: {}]
  %s21 = inlined_call_operand.vmem [shape: f32[1,5], index: 21, kind: input, shape index: {}]
  %s22 = inlined_call_operand.hbm [shape: f32[4,5], index: 22, kind: output, shape index: {}]
  %s23 = sld [smem:[#allocation0]]
  $region138: #{tpu_custom_call.1} parent=0
    _
  %s25 = ssub.s32 1, %s23
  %s26 = scalar_select 0, %s25, %s23
  %27 = sst [smem:[#allocation6]] %s16
  $region1: #{tpu_custom_call.1} parent=0
    #allocation7 [shape = 'u8[1024]{0}', space=vmem, size = 0x400, scoped, tag = 'input window, operand 3, single buffered']
    #allocation8 [shape = 's32[1]{0}', space=sflag, size = 0x4, scoped, tag = 'scoped memory for tpu_custom_call.1']
    #allocation9 [shape = 's32[1]{0}', space=sflag, size = 0x4, scoped, tag = 'scoped memory for tpu_custom_call.1']
    #allocation10 [shape = 'u8[512]{0}', space=vmem, size = 0x400, scoped, tag = 'input window, operand 6, single buffered']
    #allocation11 [shape = 's32[1]{0}', space=sflag, size = 0x4, scoped, tag = 'scoped memory for tpu_custom_call.1']
    #allocation12 [shape = 'u8[512]{0}', space=vmem, size = 0x400, scoped, tag = 'input window, operand 7, single buffered']
    #allocation13 [shape = 'u8[1024]{0}', space=vmem, size = 0x400, scoped, tag = 'input window, operand 9, single buffered']
    #allocation14 [shape = 's32[1]{0}', space=sflag, size = 0x4, scoped, tag = 'scoped memory for tpu_custom_call.1']
    #allocation15 [shape = 'u8[16384]{0}', space=vmem, size = 0x4000, scoped, tag = 'input window, operand 10, single buffered']
    #allocation16 [shape = 'u8[16384]{0}', space=vmem, size = 0x4000, scoped, tag = 'input window, operand 11, single buffered']
    #allocation17 [shape = 's32[1]{0}', space=sflag, size = 0x4, scoped, tag = 'scoped memory for tpu_custom_call.1']
    #allocation18 [shape = 'u8[512]{0}', space=vmem, size = 0x400, scoped, tag = 'input window, operand 12, single buffered']
    #allocation19 [shape = 'u8[512]{0}', space=vmem, size = 0x400, scoped, tag = 'input window, operand 13, single buffered']
    #allocation20 [shape = 's32[1]{0}', space=sflag, size = 0x4, scoped, tag = 'scoped memory for tpu_custom_call.1']
    #allocation21 [shape = 'u8[512]{0}', space=vmem, size = 0x400, scoped, tag = 'input window, operand 14, single buffered']
    #allocation22 [shape = 'u8[512]{0}', space=vmem, size = 0x400, scoped, tag = 'input window, operand 15, single buffered']
    #allocation23 [shape = 's32[1]{0}', space=sflag, size = 0x4, scoped, tag = 'scoped memory for tpu_custom_call.1']
    #allocation24 [shape = 'u8[2048]{0}', space=vmem, size = 0x800, scoped, tag = 'output window, operand 0, single buffered']
    %28 = vsyncpa [#allocation8], 0
    %29 = vsyncpa [#allocation11], 0
    %30 = vsyncpa [#allocation14], 0
    %31 = vsyncpa [#allocation17], 0
    %32 = vsyncpa [#allocation20], 0
    %33 = vsyncpa [#allocation23], 0
    %34 = vsyncpa [#allocation9], 0
    // Predicated region
    $region2: #{tpu_custom_call.1} parent=1 // pred_check
      _
    $region3: #{tpu_custom_call.1} parent=1 // pred_check_branch
      %36 = sbr.rel (0) target = $region5
    $region4: #{tpu_custom_call.1} parent=1 // pred_region
      _
    $region5: #{tpu_custom_call.1} parent=1 // pred_fallthru
      _
    // Predicated region
    $region6: #{tpu_custom_call.1} parent=1 // pred_check
      _
    $region7: #{tpu_custom_call.1} parent=1 // pred_check_branch
      %38 = sbr.rel (0) target = $region9
    $region8: #{tpu_custom_call.1} parent=1 // pred_region
      _
    $region9: #{tpu_custom_call.1} parent=1 // pred_fallthru
      _
    // Predicated region
    $region10: #{tpu_custom_call.1} parent=1 // pred_check
      _
    $region11: #{tpu_custom_call.1} parent=1 // pred_check_branch
      %40 = sbr.rel (0) target = $region13
    $region12: #{tpu_custom_call.1} parent=1 // pred_region
      _
    $region13: #{tpu_custom_call.1} parent=1 // pred_fallthru
      _
    // Predicated region
    $region14: #{tpu_custom_call.1} parent=1 // pred_check
      _
    $region15: #{tpu_custom_call.1} parent=1 // pred_check_branch
      %42 = sbr.rel (0) target = $region17
    $region16: #{tpu_custom_call.1} parent=1 // pred_region
      %s44 = ssub.s32 32, 32
      %45 = vsyncadd [#allocation8], %s44
      %s47 = sshll.u32 [#allocation7], 4
      %s48 = int_to_ptr.vmem [resolvable:$true] %s47
      %50 = dma.hbm_to_vmem [thread:$0]  %s3, 32, %s48, [#allocation8]
    $region17: #{tpu_custom_call.1} parent=1 // pred_fallthru
      _
    // Predicated region
    $region18: #{tpu_custom_call.1} parent=1 // pred_check
      _
    $region19: #{tpu_custom_call.1} parent=1 // pred_check_branch
      %52 = sbr.rel (0) target = $region21
    $region20: #{tpu_custom_call.1} parent=1 // pred_region
      _
    $region21: #{tpu_custom_call.1} parent=1 // pred_fallthru
      _
    // Predicated region
    $region22: #{tpu_custom_call.1} parent=1 // pred_check
      _
    $region23: #{tpu_custom_call.1} parent=1 // pred_check_branch
      %54 = sbr.rel (0) target = $region25
    $region24: #{tpu_custom_call.1} parent=1 // pred_region
      _
    $region25: #{tpu_custom_call.1} parent=1 // pred_fallthru
      _
    // Predicated region
    $region26: #{tpu_custom_call.1} parent=1 // pred_check
      _
    $region27: #{tpu_custom_call.1} parent=1 // pred_check_branch
      %56 = sbr.rel (0) target = $region29
    $region28: #{tpu_custom_call.1} parent=1 // pred_region
      %s58 = ssub.s32 16, 16
      %59 = vsyncadd [#allocation11], %s58
      %s61 = sshll.u32 [#allocation10], 4
      %s62 = int_to_ptr.vmem [resolvable:$true] %s61
      %64 = dma.hbm_to_vmem [thread:$0]  %s6, 16, %s62, [#allocation11]
    $region29: #{tpu_custom_call.1} parent=1 // pred_fallthru
      _
    // Predicated region
    $region30: #{tpu_custom_call.1} parent=1 // pred_check
      _
    $region31: #{tpu_custom_call.1} parent=1 // pred_check_branch
      %66 = sbr.rel (0) target = $region33
    $region32: #{tpu_custom_call.1} parent=1 // pred_region
      %s68 = ssub.s32 16, 16
      %69 = vsyncadd [#allocation11], %s68
      %s71 = sshll.u32 [#allocation12], 4
      %s72 = int_to_ptr.vmem [resolvable:$true] %s71
      %74 = dma.hbm_to_vmem [thread:$0]  %s7, 16, %s72, [#allocation11]
    $region33: #{tpu_custom_call.1} parent=1 // pred_fallthru
      _
    // Predicated region
    $region34: #{tpu_custom_call.1} parent=1 // pred_check
      _
    $region35: #{tpu_custom_call.1} parent=1 // pred_check_branch
      %76 = sbr.rel (0) target = $region37
    $region36: #{tpu_custom_call.1} parent=1 // pred_region
      _
    $region37: #{tpu_custom_call.1} parent=1 // pred_fallthru
      _
    // Predicated region
    $region38: #{tpu_custom_call.1} parent=1 // pred_check
      _
    $region39: #{tpu_custom_call.1} parent=1 // pred_check_branch
      %78 = sbr.rel (0) target = $region41
    $region40: #{tpu_custom_call.1} parent=1 // pred_region
      %s80 = ssub.s32 32, 32
      %81 = vsyncadd [#allocation14], %s80
      %s83 = sshll.u32 [#allocation13], 4
      %s84 = int_to_ptr.vmem [resolvable:$true] %s83
      %86 = dma.hbm_to_vmem [thread:$0]  %s9, 32, %s84, [#allocation14]
    $region41: #{tpu_custom_call.1} parent=1 // pred_fallthru
      _
    // Predicated region
    $region42: #{tpu_custom_call.1} parent=1 // pred_check
      _
    $region43: #{tpu_custom_call.1} parent=1 // pred_check_branch
      %88 = sbr.rel (0) target = $region45
    $region44: #{tpu_custom_call.1} parent=1 // pred_region
      %s90 = ssub.s32 512, 512
      %91 = vsyncadd [#allocation14], %s90
      %s92 = sshll.u32 [#allocation15], 4
      %s93 = int_to_ptr.vmem [resolvable:$true] %s92
      %98 = dma.hbm_to_vmem [thread:$0]  %s10, 512, %s93, [#allocation14], 128, 128, 8
    $region45: #{tpu_custom_call.1} parent=1 // pred_fallthru
      _
    // Predicated region
    $region46: #{tpu_custom_call.1} parent=1 // pred_check
      _
    $region47: #{tpu_custom_call.1} parent=1 // pred_check_branch
      %100 = sbr.rel (0) target = $region49
    $region48: #{tpu_custom_call.1} parent=1 // pred_region
      %s102 = ssub.s32 512, 512
      %103 = vsyncadd [#allocation17], %s102
      %s104 = sshll.u32 [#allocation16], 4
      %s105 = int_to_ptr.vmem [resolvable:$true] %s104
      %110 = dma.hbm_to_vmem [thread:$0]  %s11, 512, %s105, [#allocation17], 128, 128, 8
    $region49: #{tpu_custom_call.1} parent=1 // pred_fallthru
      _
    // Predicated region
    $region50: #{tpu_custom_call.1} parent=1 // pred_check
      _
    $region51: #{tpu_custom_call.1} parent=1 // pred_check_branch
      %112 = sbr.rel (0) target = $region53
    $region52: #{tpu_custom_call.1} parent=1 // pred_region
      %s114 = ssub.s32 16, 16
      %115 = vsyncadd [#allocation17], %s114
      %s117 = sshll.u32 [#allocation18], 4
      %s118 = int_to_ptr.vmem [resolvable:$true] %s117
      %120 = dma.hbm_to_vmem [thread:$0]  %s12, 16, %s118, [#allocation17]
    $region53: #{tpu_custom_call.1} parent=1 // pred_fallthru
      _
    // Predicated region
    $region54: #{tpu_custom_call.1} parent=1 // pred_check
      _
    $region55: #{tpu_custom_call.1} parent=1 // pred_check_branch
      %122 = sbr.rel (0) target = $region57
    $region56: #{tpu_custom_call.1} parent=1 // pred_region
      %s124 = ssub.s32 16, 16
      %125 = vsyncadd [#allocation20], %s124
      %s127 = sshll.u32 [#allocation19], 4
      %s128 = int_to_ptr.vmem [resolvable:$true] %s127
      %130 = dma.hbm_to_vmem [thread:$0]  %s13, 16, %s128, [#allocation20]
    $region57: #{tpu_custom_call.1} parent=1 // pred_fallthru
      _
    // Predicated region
    $region58: #{tpu_custom_call.1} parent=1 // pred_check
      _
    $region59: #{tpu_custom_call.1} parent=1 // pred_check_branch
      %132 = sbr.rel (0) target = $region61
    $region60: #{tpu_custom_call.1} parent=1 // pred_region
      %s134 = ssub.s32 16, 16
      %135 = vsyncadd [#allocation20], %s134
      %s137 = sshll.u32 [#allocation21], 4
      %s138 = int_to_ptr.vmem [resolvable:$true] %s137
      %140 = dma.hbm_to_vmem [thread:$0]  %s14, 16, %s138, [#allocation20]
    $region61: #{tpu_custom_call.1} parent=1 // pred_fallthru
      _
    // Predicated region
    $region62: #{tpu_custom_call.1} parent=1 // pred_check
      _
    $region63: #{tpu_custom_call.1} parent=1 // pred_check_branch
      %142 = sbr.rel (0) target = $region65
    $region64: #{tpu_custom_call.1} parent=1 // pred_region
      %s144 = ssub.s32 16, 16
      %145 = vsyncadd [#allocation23], %s144
      %s147 = sshll.u32 [#allocation22], 4
      %s148 = int_to_ptr.vmem [resolvable:$true] %s147
      %150 = dma.hbm_to_vmem [thread:$0]  %s15, 16, %s148, [#allocation23]
    $region65: #{tpu_custom_call.1} parent=1 // pred_fallthru
      _
    // Predicated region
    $region66: #{tpu_custom_call.1} parent=1 // pred_check
      _
    $region67: #{tpu_custom_call.1} parent=1 // pred_check_branch
      %152 = sbr.rel (0) target = $region69
    $region68: #{tpu_custom_call.1} parent=1 // pred_region
      _
    $region69: #{tpu_custom_call.1} parent=1 // pred_fallthru
      _
    // Predicated region
    $region70: #{tpu_custom_call.1} parent=1 // pred_check
      _
    $region71: #{tpu_custom_call.1} parent=1 // pred_check_branch
      %154 = sbr.rel (0) target = $region73
    $region72: #{tpu_custom_call.1} parent=1 // pred_region
      _
    $region73: #{tpu_custom_call.1} parent=1 // pred_fallthru
      _
    // Predicated region
    $region74: #{tpu_custom_call.1} parent=1 // pred_check
      _
    $region75: #{tpu_custom_call.1} parent=1 // pred_check_branch
      %156 = sbr.rel (0) target = $region77
    $region76: #{tpu_custom_call.1} parent=1 // pred_region
      _
    $region77: #{tpu_custom_call.1} parent=1 // pred_fallthru
      _
    // Predicated region
    $region78: #{tpu_custom_call.1} parent=1 // pred_check
      _
    $region79: #{tpu_custom_call.1} parent=1 // pred_check_branch
      %158 = sbr.rel (0) target = $region81
    $region80: #{tpu_custom_call.1} parent=1 // pred_region
      _
    $region81: #{tpu_custom_call.1} parent=1 // pred_fallthru
      _
    // Predicated region
    $region82: #{tpu_custom_call.1} parent=1 // pred_check
      _
    $region83: #{tpu_custom_call.1} parent=1 // pred_check_branch
      %160 = sbr.rel (0) target = $region85
    $region84: #{tpu_custom_call.1} parent=1 // pred_region
      _
    $region85: #{tpu_custom_call.1} parent=1 // pred_fallthru
      _
    // Predicated region
    $region86: #{tpu_custom_call.1} parent=1 // pred_check
      _
    $region87: #{tpu_custom_call.1} parent=1 // pred_check_branch
      %162 = sbr.rel (0) target = $region89
    $region88: #{tpu_custom_call.1} parent=1 // pred_region
      _
    $region89: #{tpu_custom_call.1} parent=1 // pred_fallthru
      _
    // Predicated region
    $region90: #{tpu_custom_call.1} parent=1 // pred_check
      _
    $region91: #{tpu_custom_call.1} parent=1 // pred_check_branch
      %164 = sbr.rel (0) target = $region93
    $region92: #{tpu_custom_call.1} parent=1 // pred_region
      %165 = dma.done [#allocation8], 32
    $region93: #{tpu_custom_call.1} parent=1 // pred_fallthru
      _
    // Predicated region
    $region94: #{tpu_custom_call.1} parent=1 // pred_check
      _
    $region95: #{tpu_custom_call.1} parent=1 // pred_check_branch
      %167 = sbr.rel (0) target = $region97
    $region96: #{tpu_custom_call.1} parent=1 // pred_region
      %168 = dma.done [#allocation11], 16
    $region97: #{tpu_custom_call.1} parent=1 // pred_fallthru
      _
    // Predicated region
    $region98: #{tpu_custom_call.1} parent=1 // pred_check
      _
    $region99: #{tpu_custom_call.1} parent=1 // pred_check_branch
      %170 = sbr.rel (0) target = $region101
    $region100: #{tpu_custom_call.1} parent=1 // pred_region
      %171 = dma.done [#allocation11], 16
    $region101: #{tpu_custom_call.1} parent=1 // pred_fallthru
      _
    // Predicated region
    $region102: #{tpu_custom_call.1} parent=1 // pred_check
      _
    $region103: #{tpu_custom_call.1} parent=1 // pred_check_branch
      %173 = sbr.rel (0) target = $region105
    $region104: #{tpu_custom_call.1} parent=1 // pred_region
      %174 = dma.done [#allocation14], 32
    $region105: #{tpu_custom_call.1} parent=1 // pred_fallthru
      _
    // Predicated region
    $region106: #{tpu_custom_call.1} parent=1 // pred_check
      _
    $region107: #{tpu_custom_call.1} parent=1 // pred_check_branch
      %176 = sbr.rel (0) target = $region109
    $region108: #{tpu_custom_call.1} parent=1 // pred_region
      %177 = dma.done [#allocation14], 512
    $region109: #{tpu_custom_call.1} parent=1 // pred_fallthru
      _
    // Predicated region
    $region110: #{tpu_custom_call.1} parent=1 // pred_check
      _
    $region111: #{tpu_custom_call.1} parent=1 // pred_check_branch
      %179 = sbr.rel (0) target = $region113
    $region112: #{tpu_custom_call.1} parent=1 // pred_region
      %180 = dma.done [#allocation17], 512
    $region113: #{tpu_custom_call.1} parent=1 // pred_fallthru
      _
    // Predicated region
    $region114: #{tpu_custom_call.1} parent=1 // pred_check
      _
    $region115: #{tpu_custom_call.1} parent=1 // pred_check_branch
      %182 = sbr.rel (0) target = $region117
    $region116: #{tpu_custom_call.1} parent=1 // pred_region
      %183 = dma.done [#allocation17], 16
    $region117: #{tpu_custom_call.1} parent=1 // pred_fallthru
      _
    // Predicated region
    $region118: #{tpu_custom_call.1} parent=1 // pred_check
      _
    $region119: #{tpu_custom_call.1} parent=1 // pred_check_branch
      %185 = sbr.rel (0) target = $region121
    $region120: #{tpu_custom_call.1} parent=1 // pred_region
      %186 = dma.done [#allocation20], 16
    $region121: #{tpu_custom_call.1} parent=1 // pred_fallthru
      _
    // Predicated region
    $region122: #{tpu_custom_call.1} parent=1 // pred_check
      _
    $region123: #{tpu_custom_call.1} parent=1 // pred_check_branch
      %188 = sbr.rel (0) target = $region125
    $region124: #{tpu_custom_call.1} parent=1 // pred_region
      %189 = dma.done [#allocation20], 16
    $region125: #{tpu_custom_call.1} parent=1 // pred_fallthru
      _
    // Predicated region
    $region126: #{tpu_custom_call.1} parent=1 // pred_check
      _
    $region127: #{tpu_custom_call.1} parent=1 // pred_check_branch
      %191 = sbr.rel (0) target = $region129
    $region128: #{tpu_custom_call.1} parent=1 // pred_region
      %192 = dma.done [#allocation23], 16
    $region129: #{tpu_custom_call.1} parent=1 // pred_fallthru
      _
    %v193 = vld [vmem:[%s1] sm:$0xf]
    %v194 = vld [vmem:[%s1 + $0x4] sm:$0xf]
    %v195 = vld [vmem:[%s1 + $0x8] sm:$0xf]
    %v196 = vld [vmem:[%s1 + $0xc] sm:$0xf]
    %v197 = vld [vmem:[%s1 + $0x10] sm:$0xf]
    %v198 = vld [vmem:[%s1 + $0x14] sm:$0xf]
    %v199 = vld [vmem:[%s1 + $0x18] sm:$0xf]
    %v200 = vld [vmem:[%s1 + $0x1c] sm:$0xf]
    %v201 = vld [vmem:[%s0] sm:$0xff]
    %v202 = vld [vmem:[%s0 + $0x8] sm:$0xff]
    %v203 = vld [vmem:[%s0 + $0x10] sm:$0xff]
    %v204 = vld [vmem:[%s0 + $0x18] sm:$0xff]
    %v205 = vld [vmem:[%s2] sm:$0xff]
    %v206 = vld [vmem:[%s2 + $0x8] sm:$0xff]
    %v207 = vld [vmem:[%s2 + $0x10] sm:$0xff]
    %v208 = vld [vmem:[%s2 + $0x18] sm:$0xff]
    %v209 = vld [vmem:[#allocation7] sm:$0x3]
    %v211 = vlaneseq
    %v212 = vshrl.u32 %v211, 7
    %v213 = vsub.s32 0, %v212
    %v214 = vrot.slane %v209, %v213
    %v215 = vlaneseq
    %v216 = vshrl.u32 %v215, 7
    %v217 = vsub.s32 1, %v216
    %v218 = vrot.slane %v209, %v217
    %vm221 = vcmask 130048
    %v223 = vsel %vm221, %v201, 0
    %v226 = vsel %vm221, %v202, 0
    %v229 = vsel %vm221, %v203, 0
    %v232 = vsel %vm221, %v204, 0
    %234 = vmatprep.subr.mxu0 %v206
    %235 = vmatpush1.msra.mxu0 %v205
    %236 = vmatprep.subr.mxu0 %v208
    %237 = vmatpush1.msra.mxu0 %v207
    %238 = vmatprep.subr.mxu0 0.0
    %239 = vmatpush1.msra.mxu0 0.0
    %240 = vmatprep.subr.mxu0 0.0
    %241 = vmatpush1.msra.mxu0 0.0
    %242 = vmatprep.subr.mxu0 0.0
    %243 = vmatpush1.msra.mxu0 0.0
    %244 = vmatprep.subr.mxu0 0.0
    %245 = vmatpush1.msra.mxu0 0.0
    %246 = vmatprep.subr.mxu0 0.0
    %247 = vmatpush1.msra.mxu0 0.0
    %248 = vmatprep.subr.mxu0 0.0
    %249 = vmatpush1.msra.mxu0 0.0
    %250 = vmatprep.subr.mxu0 0.0
    %251 = vmatpush1.msra.mxu0 0.0
    %252 = vmatprep.subr.mxu0 0.0
    %253 = vmatpush1.msra.mxu0 0.0
    %254 = vmatprep.subr.mxu0 0.0
    %255 = vmatpush1.msra.mxu0 0.0
    %256 = vmatprep.subr.mxu0 0.0
    %257 = vmatpush1.msra.mxu0 0.0
    %258 = vmatprep.subr.mxu0 0.0
    %259 = vmatpush1.msra.mxu0 0.0
    %260 = vmatprep.subr.mxu0 0.0
    %261 = vmatpush1.msra.mxu0 0.0
    %262 = vmatprep.subr.mxu0 0.0
    %263 = vmatpush1.msra.mxu0 0.0
    %264 = vmatprep.subr.mxu0 0.0
    %265 = vmatpush1.msra.mxu0 0.0
    %266 = vmatprep.subr.mxu0 0.0
    %267 = vmatpush1.msra.mxu0 0.0
    %268 = vmatprep.subr.mxu0 0.0
    %269 = vmatpush1.msra.mxu0 0.0
    %270 = vmatprep.subr.mxu0 0.0
    %271 = vmatpush1.msra.mxu0 0.0
    %272 = vmatprep.subr.mxu0 0.0
    %273 = vmatpush1.msra.mxu0 0.0
    %274 = vmatprep.subr.mxu0 0.0
    %275 = vmatpush1.msra.mxu0 0.0
    %276 = vmatprep.subr.mxu0 0.0
    %277 = vmatpush1.msra.mxu0 0.0
    %278 = vmatprep.subr.mxu0 0.0
    %279 = vmatpush1.msra.mxu0 0.0
    %280 = vmatprep.subr.mxu0 0.0
    %281 = vmatpush1.msra.mxu0 0.0
    %282 = vmatprep.subr.mxu0 0.0
    %283 = vmatpush1.msra.mxu0 0.0
    %284 = vmatprep.subr.mxu0 0.0
    %285 = vmatpush1.msra.mxu0 0.0
    %286 = vmatprep.subr.mxu0 0.0
    %287 = vmatpush1.msra.mxu0 0.0
    %288 = vmatprep.subr.mxu0 0.0
    %289 = vmatpush1.msra.mxu0 0.0
    %290 = vmatprep.subr.mxu0 0.0
    %291 = vmatpush1.msra.mxu0 0.0
    %292 = vmatprep.subr.mxu0 0.0
    %293 = vmatpush1.msra.mxu0 0.0
    %294 = vmatprep.subr.mxu0 0.0
    %295 = vmatpush1.msra.mxu0 0.0
    %296 = vmatprep.subr.mxu0 0.0
    %297 = vmatpush1.msra.mxu0 0.0
    %298 = vmatprep.mubr.f32.mxu0 0.0
    %299 = vmatmul.mubr.f32.gmra.mrb[0].mxu0 %v223
    %v300 = vpop.f32.mrb[0].mxu0
    %v301 = vadd.f32 %v214, %v300
    %v302 = vpop.f32.mrb[0].mxu0
    %v303 = vadd.f32 %v218, %v302
    %304 = vmatprep.mubr.f32.mxu0 0.0
    %305 = vmatmul.mubr.f32.gmra.mrb[0].mxu0 %v226
    %v306 = vpop.f32.mrb[0].mxu0
    %v307 = vadd.f32 %v214, %v306
    %v308 = vpop.f32.mrb[0].mxu0
    %v309 = vadd.f32 %v218, %v308
    %310 = vmatprep.mubr.f32.mxu0 0.0
    %311 = vmatmul.mubr.f32.gmra.mrb[0].mxu0 %v229
    %v312 = vpop.f32.mrb[0].mxu0
    %v313 = vadd.f32 %v214, %v312
    %v314 = vpop.f32.mrb[0].mxu0
    %v315 = vadd.f32 %v218, %v314
    %316 = vmatprep.mubr.f32.mxu0 0.0
    %317 = vmatmul.mubr.f32.gmra.mrb[0].mxu0 %v232
    %v318 = vpop.f32.mrb[0].mxu0
    %v319 = vadd.f32 %v214, %v318
    %v320 = vpop.f32.mrb[0].mxu0
    %v321 = vadd.f32 %v218, %v320
    %322 = vdwg.mxu0
    %v331 = vcombine.low %v301, %v303
    %v332 = vcombine.high %v301, %v303
    %v333 = vcombine.low %v307, %v309
    %v334 = vcombine.high %v307, %v309
    %v335 = vcombine.low %v313, %v315
    %v336 = vcombine.high %v313, %v315
    %v337 = vcombine.low %v319, %v321
    %v338 = vcombine.high %v319, %v321
    %v347 = vld [vmem:[%s4] sm:$0xff]
    %v348 = vld [vmem:[%s4 + $0x8] sm:$0xff]
    %v349 = vld [vmem:[%s4 + $0x10] sm:$0xff]
    %v350 = vld [vmem:[%s4 + $0x18] sm:$0xff]
    %v351 = vld [vmem:[%s5] sm:$0xff]
    %v352 = vld [vmem:[%s5 + $0x8] sm:$0xff]
    %v353 = vld [vmem:[%s5 + $0x10] sm:$0xff]
    %v354 = vld [vmem:[%s5 + $0x18] sm:$0xff]
    %v355 = vld [vmem:[#allocation10] sm:$0x1]
    %v356 = vld [vmem:[#allocation12] sm:$0x1]
    %vm357 = vcmask 261120
    %v359 = vsel %vm357, 0.0, 0
    %361 = vmatprep.subr.mxu0 0.0
    %362 = vmatpush1.msra.mxu0 %v347
    %363 = vmatprep.subr.mxu0 0.0
    %364 = vmatpush1.msra.mxu0 %v348
    %365 = vmatprep.subr.mxu0 0.0
    %366 = vmatpush1.msra.mxu0 %v349
    %367 = vmatprep.subr.mxu0 0.0
    %368 = vmatpush1.msra.mxu0 %v350
    %369 = vmatprep.subr.mxu0 0.0
    %370 = vmatpush1.msra.mxu0 0.0
    %371 = vmatprep.subr.mxu0 0.0
    %372 = vmatpush1.msra.mxu0 0.0
    %373 = vmatprep.subr.mxu0 0.0
    %374 = vmatpush1.msra.mxu0 0.0
    %375 = vmatprep.subr.mxu0 0.0
    %376 = vmatpush1.msra.mxu0 0.0
    %377 = vmatprep.subr.mxu0 0.0
    %378 = vmatpush1.msra.mxu0 0.0
    %379 = vmatprep.subr.mxu0 0.0
    %380 = vmatpush1.msra.mxu0 0.0
    %381 = vmatprep.subr.mxu0 0.0
    %382 = vmatpush1.msra.mxu0 0.0
    %383 = vmatprep.subr.mxu0 0.0
    %384 = vmatpush1.msra.mxu0 0.0
    %385 = vmatprep.subr.mxu0 0.0
    %386 = vmatpush1.msra.mxu0 0.0
    %387 = vmatprep.subr.mxu0 0.0
    %388 = vmatpush1.msra.mxu0 0.0
    %389 = vmatprep.subr.mxu0 0.0
    %390 = vmatpush1.msra.mxu0 0.0
    %391 = vmatprep.subr.mxu0 0.0
    %392 = vmatpush1.msra.mxu0 0.0
    %393 = vmatprep.subr.mxu0 0.0
    %394 = vmatpush1.msra.mxu0 0.0
    %395 = vmatprep.subr.mxu0 0.0
    %396 = vmatpush1.msra.mxu0 0.0
    %397 = vmatprep.subr.mxu0 0.0
    %398 = vmatpush1.msra.mxu0 0.0
    %399 = vmatprep.subr.mxu0 0.0
    %400 = vmatpush1.msra.mxu0 0.0
    %401 = vmatprep.subr.mxu0 0.0
    %402 = vmatpush1.msra.mxu0 0.0
    %403 = vmatprep.subr.mxu0 0.0
    %404 = vmatpush1.msra.mxu0 0.0
    %405 = vmatprep.subr.mxu0 0.0
    %406 = vmatpush1.msra.mxu0 0.0
    %407 = vmatprep.subr.mxu0 0.0
    %408 = vmatpush1.msra.mxu0 0.0
    %409 = vmatprep.subr.mxu0 0.0
    %410 = vmatpush1.msra.mxu0 0.0
    %411 = vmatprep.subr.mxu0 0.0
    %412 = vmatpush1.msra.mxu0 0.0
    %413 = vmatprep.subr.mxu0 0.0
    %414 = vmatpush1.msra.mxu0 0.0
    %415 = vmatprep.subr.mxu0 0.0
    %416 = vmatpush1.msra.mxu0 0.0
    %417 = vmatprep.subr.mxu0 0.0
    %418 = vmatpush1.msra.mxu0 0.0
    %419 = vmatprep.subr.mxu0 0.0
    %420 = vmatpush1.msra.mxu0 0.0
    %421 = vmatprep.subr.mxu0 0.0
    %422 = vmatpush1.msra.mxu0 0.0
    %423 = vmatprep.subr.mxu0 0.0
    %424 = vmatpush1.msra.mxu0 0.0
    %425 = vmatprep.mubr.f32.mxu0 0.0
    %426 = vmatmul.mubr.f32.gmra.mrb[0].mxu0 %v359
    %v427 = vpop.f32.mrb[0].mxu0
    %v428 = vadd.f32 0.0, %v427
    %v429 = vpop.f32.mrb[0].mxu0
    %430 = vdwg.mxu0
    %431 = vmatprep.subr.mxu0 0.0
    %432 = vmatpush1.msra.mxu0 %v351
    %433 = vmatprep.subr.mxu0 0.0
    %434 = vmatpush1.msra.mxu0 %v352
    %435 = vmatprep.subr.mxu0 0.0
    %436 = vmatpush1.msra.mxu0 %v353
    %437 = vmatprep.subr.mxu0 0.0
    %438 = vmatpush1.msra.mxu0 %v354
    %439 = vmatprep.subr.mxu0 0.0
    %440 = vmatpush1.msra.mxu0 0.0
    %441 = vmatprep.subr.mxu0 0.0
    %442 = vmatpush1.msra.mxu0 0.0
    %443 = vmatprep.subr.mxu0 0.0
    %444 = vmatpush1.msra.mxu0 0.0
    %445 = vmatprep.subr.mxu0 0.0
    %446 = vmatpush1.msra.mxu0 0.0
    %447 = vmatprep.subr.mxu0 0.0
    %448 = vmatpush1.msra.mxu0 0.0
    %449 = vmatprep.subr.mxu0 0.0
    %450 = vmatpush1.msra.mxu0 0.0
    %451 = vmatprep.subr.mxu0 0.0
    %452 = vmatpush1.msra.mxu0 0.0
    %453 = vmatprep.subr.mxu0 0.0
    %454 = vmatpush1.msra.mxu0 0.0
    %455 = vmatprep.subr.mxu0 0.0
    %456 = vmatpush1.msra.mxu0 0.0
    %457 = vmatprep.subr.mxu0 0.0
    %458 = vmatpush1.msra.mxu0 0.0
    %459 = vmatprep.subr.mxu0 0.0
    %460 = vmatpush1.msra.mxu0 0.0
    %461 = vmatprep.subr.mxu0 0.0
    %462 = vmatpush1.msra.mxu0 0.0
    %463 = vmatprep.subr.mxu0 0.0
    %464 = vmatpush1.msra.mxu0 0.0
    %465 = vmatprep.subr.mxu0 0.0
    %466 = vmatpush1.msra.mxu0 0.0
    %467 = vmatprep.subr.mxu0 0.0
    %468 = vmatpush1.msra.mxu0 0.0
    %469 = vmatprep.subr.mxu0 0.0
    %470 = vmatpush1.msra.mxu0 0.0
    %471 = vmatprep.subr.mxu0 0.0
    %472 = vmatpush1.msra.mxu0 0.0
    %473 = vmatprep.subr.mxu0 0.0
    %474 = vmatpush1.msra.mxu0 0.0
    %475 = vmatprep.subr.mxu0 0.0
    %476 = vmatpush1.msra.mxu0 0.0
    %477 = vmatprep.subr.mxu0 0.0
    %478 = vmatpush1.msra.mxu0 0.0
    %479 = vmatprep.subr.mxu0 0.0
    %480 = vmatpush1.msra.mxu0 0.0
    %481 = vmatprep.subr.mxu0 0.0
    %482 = vmatpush1.msra.mxu0 0.0
    %483 = vmatprep.subr.mxu0 0.0
    %484 = vmatpush1.msra.mxu0 0.0
    %485 = vmatprep.subr.mxu0 0.0
    %486 = vmatpush1.msra.mxu0 0.0
    %487 = vmatprep.subr.mxu0 0.0
    %488 = vmatpush1.msra.mxu0 0.0
    %489 = vmatprep.subr.mxu0 0.0
    %490 = vmatpush1.msra.mxu0 0.0
    %491 = vmatprep.subr.mxu0 0.0
    %492 = vmatpush1.msra.mxu0 0.0
    %493 = vmatprep.subr.mxu0 0.0
    %494 = vmatpush1.msra.mxu0 0.0
    %495 = vmatprep.mubr.f32.mxu0 0.0
    %496 = vmatmul.mubr.f32.gmra.mrb[0].mxu0 %v359
    %v497 = vpop.f32.mrb[0].mxu0
    %v498 = vadd.f32 0.0, %v497
    %v499 = vpop.f32.mrb[0].mxu0
    %500 = vdwg.mxu0
    %v501 = vadd.f32 %v331, %v428
    %v502 = vxor.u32 %v501, 2147483648
    %v503 = vmul.f32 %v502, 1.442695
    %v504 = vpow.pop %v503
    %v505 = vadd.f32 %v504, 1.0
    %v506 = vrcp.pop %v505
    %v507 = vmul.f32 1.0, %v506
    %v509 = vlaneseq
    %v510 = vshrl.u32 %v509, 7
    %v511 = vsub.s32 0, %v510
    %v512 = vrot.slane %v355, %v511
    %513 = vrot.lane.b32.xlu0 %v512, 64
    %v514 = vpop.permute.xlu0 %513
    %v516 = vadd.f32 %v428, %v514
    %518 = vrot.lane.b32.xlu0 %v516, 64
    %v519 = vpop.permute.xlu0 %518
    %v521 = vmul.f32 %v507, %v519
    %523 = vrot.lane.b32.xlu0 %v521, 64
    %v524 = vpop.permute.xlu0 %523
    %v526 = vadd.f32 %v331, %v524
    %v527 = vtanh.pop %v526
    %v528 = vsub.f32 1.0, %v507
    %530 = vrot.lane.b32.xlu0 %v527, 96
    %v531 = vpop.permute.xlu0 %530
    %v533 = vmul.f32 %v528, %v531
    %v534 = vmul.f32 %v507, 0.0
    %v535 = vadd.f32 %v533, %v534
    %537 = vset.pattern.permute.xlu0 0
    %538 = vperm.xlu0 %537, %v193
    %v539 = vpop.permute.xlu0 %538
    %542 = vrot.lane.b32.xlu0 %v535, 96
    %v543 = vpop.permute.xlu0 %542
    %v545 = vmul.f32 %v539, %v543
    %v546 = vsub.f32 1.0, %v193
    %548 = vset.pattern.permute.xlu0 0
    %549 = vperm.xlu0 %548, %v546
    %v550 = vpop.permute.xlu0 %549
    %v552 = vmul.f32 %v550, 0.0
    %v553 = vadd.f32 %v545, %v552
    %v554 = vmul.f32 %v539, %v553
    %vm555 = vcmask 257024
    %556 = vst.msk [vmem:[#allocation2] sm:$0xf] %vm555, %v554
    %558 = vrot.lane.b32.xlu0 %v498, 96
    %v559 = vpop.permute.xlu0 %558
    %v561 = vadd.f32 %v338, %v559
    %v562 = vxor.u32 %v561, 2147483648
    %v563 = vmul.f32 %v562, 1.442695
    %v564 = vpow.pop %v563
    %v565 = vadd.f32 %v564, 1.0
    %v566 = vrcp.pop %v565
    %v567 = vmul.f32 1.0, %v566
    %v568 = vrot.slane %v338, 4
    %v570 = vadd.f32 %v568, %v559
    %v571 = vxor.u32 %v570, 2147483648
    %v572 = vmul.f32 %v571, 1.442695
    %v573 = vpow.pop %v572
    %v574 = vadd.f32 %v573, 1.0
    %v575 = vrcp.pop %v574
    %v576 = vmul.f32 1.0, %v575
    %v578 = vlaneseq
    %v579 = vshrl.u32 %v578, 7
    %v580 = vsub.s32 0, %v579
    %v581 = vrot.slane %v356, %v580
    %582 = vrot.lane.b32.xlu0 %v581, 64
    %v583 = vpop.permute.xlu0 %582
    %v585 = vadd.f32 %v498, %v583
    %587 = vrot.lane.b32.xlu0 %v585, 32
    %v588 = vpop.permute.xlu0 %587
    %v590 = vmul.f32 %v567, %v588
    %591 = vrot.lane.b32.xlu0 %v338, 96
    %v592 = vpop.permute.xlu0 %591
    %v593 = vrot.slane %v592, 4
    %596 = vrot.lane.b32.xlu0 %v590, 32
    %v597 = vpop.permute.xlu0 %596
    %v599 = vadd.f32 %v593, %v597
    %v600 = vtanh.pop %v599
    %v601 = vsub.f32 1.0, %v576
    %v602 = vmul.f32 %v601, %v600
    %v603 = vmul.f32 %v576, 0.0
    %v604 = vadd.f32 %v602, %v603
    %606 = vset.pattern.permute.xlu0 0
    %607 = vperm.xlu0 %606, %v200
    %v608 = vpop.permute.xlu0 %607
    %v610 = vmul.f32 %v608, %v604
    %v611 = vsub.f32 1.0, %v200
    %613 = vset.pattern.permute.xlu0 0
    %614 = vperm.xlu0 %613, %v611
    %v615 = vpop.permute.xlu0 %614
    %v617 = vmul.f32 %v615, 0.0
    %v618 = vadd.f32 %v610, %v617
    %v619 = vmul.f32 %v608, %v618
    %s620 = scalar_lea.vmem [#allocation3], 28
    %621 = vst.msk [vmem:[%s620] sm:$0xf] %vm555, %v619
    %v623 = vsel %vm357, %v553, 0
    %625 = vmatprep.subr.mxu0 0.0
    %626 = vmatpush1.msra.mxu0 %v347
    %627 = vmatprep.subr.mxu0 0.0
    %628 = vmatpush1.msra.mxu0 %v348
    %629 = vmatprep.subr.mxu0 0.0
    %630 = vmatpush1.msra.mxu0 %v349
    %631 = vmatprep.subr.mxu0 0.0
    %632 = vmatpush1.msra.mxu0 %v350
    %633 = vmatprep.subr.mxu0 0.0
    %634 = vmatpush1.msra.mxu0 0.0
    %635 = vmatprep.subr.mxu0 0.0
    %636 = vmatpush1.msra.mxu0 0.0
    %637 = vmatprep.subr.mxu0 0.0
    %638 = vmatpush1.msra.mxu0 0.0
    %639 = vmatprep.subr.mxu0 0.0
    %640 = vmatpush1.msra.mxu0 0.0
    %641 = vmatprep.subr.mxu0 0.0
    %642 = vmatpush1.msra.mxu0 0.0
    %643 = vmatprep.subr.mxu0 0.0
    %644 = vmatpush1.msra.mxu0 0.0
    %645 = vmatprep.subr.mxu0 0.0
    %646 = vmatpush1.msra.mxu0 0.0
    %647 = vmatprep.subr.mxu0 0.0
    %648 = vmatpush1.msra.mxu0 0.0
    %649 = vmatprep.subr.mxu0 0.0
    %650 = vmatpush1.msra.mxu0 0.0
    %651 = vmatprep.subr.mxu0 0.0
    %652 = vmatpush1.msra.mxu0 0.0
    %653 = vmatprep.subr.mxu0 0.0
    %654 = vmatpush1.msra.mxu0 0.0
    %655 = vmatprep.subr.mxu0 0.0
    %656 = vmatpush1.msra.mxu0 0.0
    %657 = vmatprep.subr.mxu0 0.0
    %658 = vmatpush1.msra.mxu0 0.0
    %659 = vmatprep.subr.mxu0 0.0
    %660 = vmatpush1.msra.mxu0 0.0
    %661 = vmatprep.subr.mxu0 0.0
    %662 = vmatpush1.msra.mxu0 0.0
    %663 = vmatprep.subr.mxu0 0.0
    %664 = vmatpush1.msra.mxu0 0.0
    %665 = vmatprep.subr.mxu0 0.0
    %666 = vmatpush1.msra.mxu0 0.0
    %667 = vmatprep.subr.mxu0 0.0
    %668 = vmatpush1.msra.mxu0 0.0
    %669 = vmatprep.subr.mxu0 0.0
    %670 = vmatpush1.msra.mxu0 0.0
    %671 = vmatprep.subr.mxu0 0.0
    %672 = vmatpush1.msra.mxu0 0.0
    %673 = vmatprep.subr.mxu0 0.0
    %674 = vmatpush1.msra.mxu0 0.0
    %675 = vmatprep.subr.mxu0 0.0
    %676 = vmatpush1.msra.mxu0 0.0
    %677 = vmatprep.subr.mxu0 0.0
    %678 = vmatpush1.msra.mxu0 0.0
    %679 = vmatprep.subr.mxu0 0.0
    %680 = vmatpush1.msra.mxu0 0.0
    %681 = vmatprep.subr.mxu0 0.0
    %682 = vmatpush1.msra.mxu0 0.0
    %683 = vmatprep.subr.mxu0 0.0
    %684 = vmatpush1.msra.mxu0 0.0
    %685 = vmatprep.subr.mxu0 0.0
    %686 = vmatpush1.msra.mxu0 0.0
    %687 = vmatprep.subr.mxu0 0.0
    %688 = vmatpush1.msra.mxu0 0.0
    %689 = vmatprep.mubr.f32.mxu0 0.0
    %690 = vmatmul.mubr.f32.gmra.mrb[0].mxu0 %v623
    %v691 = vpop.f32.mrb[0].mxu0
    %v692 = vadd.f32 0.0, %v691
    %v693 = vpop.f32.mrb[0].mxu0
    %694 = vdwg.mxu0
    %v696 = vsel %vm357, %v618, 0
    %698 = vmatprep.subr.mxu0 0.0
    %699 = vmatpush1.msra.mxu0 %v351
    %700 = vmatprep.subr.mxu0 0.0
    %701 = vmatpush1.msra.mxu0 %v352
    %702 = vmatprep.subr.mxu0 0.0
    %703 = vmatpush1.msra.mxu0 %v353
    %704 = vmatprep.subr.mxu0 0.0
    %705 = vmatpush1.msra.mxu0 %v354
    %706 = vmatprep.subr.mxu0 0.0
    %707 = vmatpush1.msra.mxu0 0.0
    %708 = vmatprep.subr.mxu0 0.0
    %709 = vmatpush1.msra.mxu0 0.0
    %710 = vmatprep.subr.mxu0 0.0
    %711 = vmatpush1.msra.mxu0 0.0
    %712 = vmatprep.subr.mxu0 0.0
    %713 = vmatpush1.msra.mxu0 0.0
    %714 = vmatprep.subr.mxu0 0.0
    %715 = vmatpush1.msra.mxu0 0.0
    %716 = vmatprep.subr.mxu0 0.0
    %717 = vmatpush1.msra.mxu0 0.0
    %718 = vmatprep.subr.mxu0 0.0
    %719 = vmatpush1.msra.mxu0 0.0
    %720 = vmatprep.subr.mxu0 0.0
    %721 = vmatpush1.msra.mxu0 0.0
    %722 = vmatprep.subr.mxu0 0.0
    %723 = vmatpush1.msra.mxu0 0.0
    %724 = vmatprep.subr.mxu0 0.0
    %725 = vmatpush1.msra.mxu0 0.0
    %726 = vmatprep.subr.mxu0 0.0
    %727 = vmatpush1.msra.mxu0 0.0
    %728 = vmatprep.subr.mxu0 0.0
    %729 = vmatpush1.msra.mxu0 0.0
    %730 = vmatprep.subr.mxu0 0.0
    %731 = vmatpush1.msra.mxu0 0.0
    %732 = vmatprep.subr.mxu0 0.0
    %733 = vmatpush1.msra.mxu0 0.0
    %734 = vmatprep.subr.mxu0 0.0
    %735 = vmatpush1.msra.mxu0 0.0
    %736 = vmatprep.subr.mxu0 0.0
    %737 = vmatpush1.msra.mxu0 0.0
    %738 = vmatprep.subr.mxu0 0.0
    %739 = vmatpush1.msra.mxu0 0.0
    %740 = vmatprep.subr.mxu0 0.0
    %741 = vmatpush1.msra.mxu0 0.0
    %742 = vmatprep.subr.mxu0 0.0
    %743 = vmatpush1.msra.mxu0 0.0
    %744 = vmatprep.subr.mxu0 0.0
    %745 = vmatpush1.msra.mxu0 0.0
    %746 = vmatprep.subr.mxu0 0.0
    %747 = vmatpush1.msra.mxu0 0.0
    %748 = vmatprep.subr.mxu0 0.0
    %749 = vmatpush1.msra.mxu0 0.0
    %750 = vmatprep.subr.mxu0 0.0
    %751 = vmatpush1.msra.mxu0 0.0
    %752 = vmatprep.subr.mxu0 0.0
    %753 = vmatpush1.msra.mxu0 0.0
    %754 = vmatprep.subr.mxu0 0.0
    %755 = vmatpush1.msra.mxu0 0.0
    %756 = vmatprep.subr.mxu0 0.0
    %757 = vmatpush1.msra.mxu0 0.0
    %758 = vmatprep.subr.mxu0 0.0
    %759 = vmatpush1.msra.mxu0 0.0
    %760 = vmatprep.subr.mxu0 0.0
    %761 = vmatpush1.msra.mxu0 0.0
    %762 = vmatprep.mubr.f32.mxu0 0.0
    %763 = vmatmul.mubr.f32.gmra.mrb[0].mxu0 %v696
    %v764 = vpop.f32.mrb[0].mxu0
    %v765 = vadd.f32 0.0, %v764
    %v766 = vpop.f32.mrb[0].mxu0
    %767 = vdwg.mxu0
    %v768 = vadd.f32 %v332, %v692
    %v769 = vxor.u32 %v768, 2147483648
    %v770 = vmul.f32 %v769, 1.442695
    %v771 = vpow.pop %v770
    %v772 = vadd.f32 %v771, 1.0
    %v773 = vrcp.pop %v772
    %v774 = vmul.f32 1.0, %v773
    %v775 = vadd.f32 %v692, %v514
    %777 = vrot.lane.b32.xlu0 %v775, 64
    %v778 = vpop.permute.xlu0 %777
    %v780 = vmul.f32 %v774, %v778
    %782 = vrot.lane.b32.xlu0 %v780, 64
    %v783 = vpop.permute.xlu0 %782
    %v785 = vadd.f32 %v332, %v783
    %v786 = vtanh.pop %v785
    %v787 = vsub.f32 1.0, %v774
    %789 = vrot.lane.b32.xlu0 %v786, 96
    %v790 = vpop.permute.xlu0 %789
    %v792 = vmul.f32 %v787, %v790
    %793 = vrot.lane.b32.xlu0 %v553, 32
    %v794 = vpop.permute.xlu0 %793
    %v796 = vmul.f32 %v774, %v794
    %v797 = vadd.f32 %v792, %v796
    %799 = vset.pattern.permute.xlu0 0
    %800 = vperm.xlu0 %799, %v194
    %v801 = vpop.permute.xlu0 %800
    %804 = vrot.lane.b32.xlu0 %v797, 96
    %v805 = vpop.permute.xlu0 %804
    %v807 = vmul.f32 %v801, %v805
    %v808 = vsub.f32 1.0, %v194
    %810 = vset.pattern.permute.xlu0 0
    %811 = vperm.xlu0 %810, %v808
    %v812 = vpop.permute.xlu0 %811
    %v814 = vmul.f32 %v812, %v553
    %v815 = vadd.f32 %v807, %v814
    %v816 = vmul.f32 %v801, %v815
    %s817 = scalar_lea.vmem [#allocation2], 4
    %818 = vst.msk [vmem:[%s817] sm:$0xf] %vm555, %v816
    %820 = vrot.lane.b32.xlu0 %v765, 96
    %v821 = vpop.permute.xlu0 %820
    %v823 = vadd.f32 %v337, %v821
    %v824 = vxor.u32 %v823, 2147483648
    %v825 = vmul.f32 %v824, 1.442695
    %v826 = vpow.pop %v825
    %v827 = vadd.f32 %v826, 1.0
    %v828 = vrcp.pop %v827
    %v829 = vmul.f32 1.0, %v828
    %v830 = vrot.slane %v337, 4
    %v832 = vadd.f32 %v830, %v821
    %v833 = vxor.u32 %v832, 2147483648
    %v834 = vmul.f32 %v833, 1.442695
    %v835 = vpow.pop %v834
    %v836 = vadd.f32 %v835, 1.0
    %v837 = vrcp.pop %v836
    %v838 = vmul.f32 1.0, %v837
    %v839 = vadd.f32 %v765, %v583
    %841 = vrot.lane.b32.xlu0 %v839, 32
    %v842 = vpop.permute.xlu0 %841
    %v844 = vmul.f32 %v829, %v842
    %845 = vrot.lane.b32.xlu0 %v337, 96
    %v846 = vpop.permute.xlu0 %845
    %v847 = vrot.slane %v846, 4
    %850 = vrot.lane.b32.xlu0 %v844, 32
    %v851 = vpop.permute.xlu0 %850
    %v853 = vadd.f32 %v847, %v851
    %v854 = vtanh.pop %v853
    %v855 = vsub.f32 1.0, %v838
    %v856 = vmul.f32 %v855, %v854
    %v857 = vmul.f32 %v838, %v618
    %v858 = vadd.f32 %v856, %v857
    %860 = vset.pattern.permute.xlu0 0
    %861 = vperm.xlu0 %860, %v199
    %v862 = vpop.permute.xlu0 %861
    %v864 = vmul.f32 %v862, %v858
    %v865 = vsub.f32 1.0, %v199
    %867 = vset.pattern.permute.xlu0 0
    %868 = vperm.xlu0 %867, %v865
    %v869 = vpop.permute.xlu0 %868
    %v871 = vmul.f32 %v869, %v618
    %v872 = vadd.f32 %v864, %v871
    %v873 = vmul.f32 %v862, %v872
    %s874 = scalar_lea.vmem [#allocation3], 24
    %875 = vst.msk [vmem:[%s874] sm:$0xf] %vm555, %v873
    %v877 = vsel %vm357, %v815, 0
    %879 = vmatprep.subr.mxu0 0.0
    %880 = vmatpush1.msra.mxu0 %v347
    %881 = vmatprep.subr.mxu0 0.0
    %882 = vmatpush1.msra.mxu0 %v348
    %883 = vmatprep.subr.mxu0 0.0
    %884 = vmatpush1.msra.mxu0 %v349
    %885 = vmatprep.subr.mxu0 0.0
    %886 = vmatpush1.msra.mxu0 %v350
    %887 = vmatprep.subr.mxu0 0.0
    %888 = vmatpush1.msra.mxu0 0.0
    %889 = vmatprep.subr.mxu0 0.0
    %890 = vmatpush1.msra.mxu0 0.0
    %891 = vmatprep.subr.mxu0 0.0
    %892 = vmatpush1.msra.mxu0 0.0
    %893 = vmatprep.subr.mxu0 0.0
    %894 = vmatpush1.msra.mxu0 0.0
    %895 = vmatprep.subr.mxu0 0.0
    %896 = vmatpush1.msra.mxu0 0.0
    %897 = vmatprep.subr.mxu0 0.0
    %898 = vmatpush1.msra.mxu0 0.0
    %899 = vmatprep.subr.mxu0 0.0
    %900 = vmatpush1.msra.mxu0 0.0
    %901 = vmatprep.subr.mxu0 0.0
    %902 = vmatpush1.msra.mxu0 0.0
    %903 = vmatprep.subr.mxu0 0.0
    %904 = vmatpush1.msra.mxu0 0.0
    %905 = vmatprep.subr.mxu0 0.0
    %906 = vmatpush1.msra.mxu0 0.0
    %907 = vmatprep.subr.mxu0 0.0
    %908 = vmatpush1.msra.mxu0 0.0
    %909 = vmatprep.subr.mxu0 0.0
    %910 = vmatpush1.msra.mxu0 0.0
    %911 = vmatprep.subr.mxu0 0.0
    %912 = vmatpush1.msra.mxu0 0.0
    %913 = vmatprep.subr.mxu0 0.0
    %914 = vmatpush1.msra.mxu0 0.0
    %915 = vmatprep.subr.mxu0 0.0
    %916 = vmatpush1.msra.mxu0 0.0
    %917 = vmatprep.subr.mxu0 0.0
    %918 = vmatpush1.msra.mxu0 0.0
    %919 = vmatprep.subr.mxu0 0.0
    %920 = vmatpush1.msra.mxu0 0.0
    %921 = vmatprep.subr.mxu0 0.0
    %922 = vmatpush1.msra.mxu0 0.0
    %923 = vmatprep.subr.mxu0 0.0
    %924 = vmatpush1.msra.mxu0 0.0
    %925 = vmatprep.subr.mxu0 0.0
    %926 = vmatpush1.msra.mxu0 0.0
    %927 = vmatprep.subr.mxu0 0.0
    %928 = vmatpush1.msra.mxu0 0.0
    %929 = vmatprep.subr.mxu0 0.0
    %930 = vmatpush1.msra.mxu0 0.0
    %931 = vmatprep.subr.mxu0 0.0
    %932 = vmatpush1.msra.mxu0 0.0
    %933 = vmatprep.subr.mxu0 0.0
    %934 = vmatpush1.msra.mxu0 0.0
    %935 = vmatprep.subr.mxu0 0.0
    %936 = vmatpush1.msra.mxu0 0.0
    %937 = vmatprep.subr.mxu0 0.0
    %938 = vmatpush1.msra.mxu0 0.0
    %939 = vmatprep.subr.mxu0 0.0
    %940 = vmatpush1.msra.mxu0 0.0
    %941 = vmatprep.subr.mxu0 0.0
    %942 = vmatpush1.msra.mxu0 0.0
    %943 = vmatprep.mubr.f32.mxu0 0.0
    %944 = vmatmul.mubr.f32.gmra.mrb[0].mxu0 %v877
    %v945 = vpop.f32.mrb[0].mxu0
    %v946 = vadd.f32 0.0, %v945
    %v947 = vpop.f32.mrb[0].mxu0
    %948 = vdwg.mxu0
    %v950 = vsel %vm357, %v872, 0
    %952 = vmatprep.subr.mxu0 0.0
    %953 = vmatpush1.msra.mxu0 %v351
    %954 = vmatprep.subr.mxu0 0.0
    %955 = vmatpush1.msra.mxu0 %v352
    %956 = vmatprep.subr.mxu0 0.0
    %957 = vmatpush1.msra.mxu0 %v353
    %958 = vmatprep.subr.mxu0 0.0
    %959 = vmatpush1.msra.mxu0 %v354
    %960 = vmatprep.subr.mxu0 0.0
    %961 = vmatpush1.msra.mxu0 0.0
    %962 = vmatprep.subr.mxu0 0.0
    %963 = vmatpush1.msra.mxu0 0.0
    %964 = vmatprep.subr.mxu0 0.0
    %965 = vmatpush1.msra.mxu0 0.0
    %966 = vmatprep.subr.mxu0 0.0
    %967 = vmatpush1.msra.mxu0 0.0
    %968 = vmatprep.subr.mxu0 0.0
    %969 = vmatpush1.msra.mxu0 0.0
    %970 = vmatprep.subr.mxu0 0.0
    %971 = vmatpush1.msra.mxu0 0.0
    %972 = vmatprep.subr.mxu0 0.0
    %973 = vmatpush1.msra.mxu0 0.0
    %974 = vmatprep.subr.mxu0 0.0
    %975 = vmatpush1.msra.mxu0 0.0
    %976 = vmatprep.subr.mxu0 0.0
    %977 = vmatpush1.msra.mxu0 0.0
    %978 = vmatprep.subr.mxu0 0.0
    %979 = vmatpush1.msra.mxu0 0.0
    %980 = vmatprep.subr.mxu0 0.0
    %981 = vmatpush1.msra.mxu0 0.0
    %982 = vmatprep.subr.mxu0 0.0
    %983 = vmatpush1.msra.mxu0 0.0
    %984 = vmatprep.subr.mxu0 0.0
    %985 = vmatpush1.msra.mxu0 0.0
    %986 = vmatprep.subr.mxu0 0.0
    %987 = vmatpush1.msra.mxu0 0.0
    %988 = vmatprep.subr.mxu0 0.0
    %989 = vmatpush1.msra.mxu0 0.0
    %990 = vmatprep.subr.mxu0 0.0
    %991 = vmatpush1.msra.mxu0 0.0
    %992 = vmatprep.subr.mxu0 0.0
    %993 = vmatpush1.msra.mxu0 0.0
    %994 = vmatprep.subr.mxu0 0.0
    %995 = vmatpush1.msra.mxu0 0.0
    %996 = vmatprep.subr.mxu0 0.0
    %997 = vmatpush1.msra.mxu0 0.0
    %998 = vmatprep.subr.mxu0 0.0
    %999 = vmatpush1.msra.mxu0 0.0
    %1000 = vmatprep.subr.mxu0 0.0
    %1001 = vmatpush1.msra.mxu0 0.0
    %1002 = vmatprep.subr.mxu0 0.0
    %1003 = vmatpush1.msra.mxu0 0.0
    %1004 = vmatprep.subr.mxu0 0.0
    %1005 = vmatpush1.msra.mxu0 0.0
    %1006 = vmatprep.subr.mxu0 0.0
    %1007 = vmatpush1.msra.mxu0 0.0
    %1008 = vmatprep.subr.mxu0 0.0
    %1009 = vmatpush1.msra.mxu0 0.0
    %1010 = vmatprep.subr.mxu0 0.0
    %1011 = vmatpush1.msra.mxu0 0.0
    %1012 = vmatprep.subr.mxu0 0.0
    %1013 = vmatpush1.msra.mxu0 0.0
    %1014 = vmatprep.subr.mxu0 0.0
    %1015 = vmatpush1.msra.mxu0 0.0
    %1016 = vmatprep.mubr.f32.mxu0 0.0
    %1017 = vmatmul.mubr.f32.gmra.mrb[0].mxu0 %v950
    %v1018 = vpop.f32.mrb[0].mxu0
    %v1019 = vadd.f32 0.0, %v1018
    %v1020 = vpop.f32.mrb[0].mxu0
    %1021 = vdwg.mxu0
    %v1022 = vadd.f32 %v333, %v946
    %v1023 = vxor.u32 %v1022, 2147483648
    %v1024 = vmul.f32 %v1023, 1.442695
    %v1025 = vpow.pop %v1024
    %v1026 = vadd.f32 %v1025, 1.0
    %v1027 = vrcp.pop %v1026
    %v1028 = vmul.f32 1.0, %v1027
    %v1029 = vadd.f32 %v946, %v514
    %1031 = vrot.lane.b32.xlu0 %v1029, 64
    %v1032 = vpop.permute.xlu0 %1031
    %v1034 = vmul.f32 %v1028, %v1032
    %1036 = vrot.lane.b32.xlu0 %v1034, 64
    %v1037 = vpop.permute.xlu0 %1036
    %v1039 = vadd.f32 %v333, %v1037
    %v1040 = vtanh.pop %v1039
    %v1041 = vsub.f32 1.0, %v1028
    %1043 = vrot.lane.b32.xlu0 %v1040, 96
    %v1044 = vpop.permute.xlu0 %1043
    %v1046 = vmul.f32 %v1041, %v1044
    %1047 = vrot.lane.b32.xlu0 %v815, 32
    %v1048 = vpop.permute.xlu0 %1047
    %v1050 = vmul.f32 %v1028, %v1048
    %v1051 = vadd.f32 %v1046, %v1050
    %1053 = vset.pattern.permute.xlu0 0
    %1054 = vperm.xlu0 %1053, %v195
    %v1055 = vpop.permute.xlu0 %1054
    %1058 = vrot.lane.b32.xlu0 %v1051, 96
    %v1059 = vpop.permute.xlu0 %1058
    %v1061 = vmul.f32 %v1055, %v1059
    %v1062 = vsub.f32 1.0, %v195
    %1064 = vset.pattern.permute.xlu0 0
    %1065 = vperm.xlu0 %1064, %v1062
    %v1066 = vpop.permute.xlu0 %1065
    %v1068 = vmul.f32 %v1066, %v815
    %v1069 = vadd.f32 %v1061, %v1068
    %v1070 = vmul.f32 %v1055, %v1069
    %s1071 = scalar_lea.vmem [#allocation2], 8
    %1072 = vst.msk [vmem:[%s1071] sm:$0xf] %vm555, %v1070
    %1074 = vrot.lane.b32.xlu0 %v1019, 96
    %v1075 = vpop.permute.xlu0 %1074
    %v1077 = vadd.f32 %v336, %v1075
    %v1078 = vxor.u32 %v1077, 2147483648
    %v1079 = vmul.f32 %v1078, 1.442695
    %v1080 = vpow.pop %v1079
    %v1081 = vadd.f32 %v1080, 1.0
    %v1082 = vrcp.pop %v1081
    %v1083 = vmul.f32 1.0, %v1082
    %v1084 = vrot.slane %v336, 4
    %v1086 = vadd.f32 %v1084, %v1075
    %v1087 = vxor.u32 %v1086, 2147483648
    %v1088 = vmul.f32 %v1087, 1.442695
    %v1089 = vpow.pop %v1088
    %v1090 = vadd.f32 %v1089, 1.0
    %v1091 = vrcp.pop %v1090
    %v1092 = vmul.f32 1.0, %v1091
    %v1093 = vadd.f32 %v1019, %v583
    %1095 = vrot.lane.b32.xlu0 %v1093, 32
    %v1096 = vpop.permute.xlu0 %1095
    %v1098 = vmul.f32 %v1083, %v1096
    %1099 = vrot.lane.b32.xlu0 %v336, 96
    %v1100 = vpop.permute.xlu0 %1099
    %v1101 = vrot.slane %v1100, 4
    %1104 = vrot.lane.b32.xlu0 %v1098, 32
    %v1105 = vpop.permute.xlu0 %1104
    %v1107 = vadd.f32 %v1101, %v1105
    %v1108 = vtanh.pop %v1107
    %v1109 = vsub.f32 1.0, %v1092
    %v1110 = vmul.f32 %v1109, %v1108
    %v1111 = vmul.f32 %v1092, %v872
    %v1112 = vadd.f32 %v1110, %v1111
    %1114 = vset.pattern.permute.xlu0 0
    %1115 = vperm.xlu0 %1114, %v198
    %v1116 = vpop.permute.xlu0 %1115
    %v1118 = vmul.f32 %v1116, %v1112
    %v1119 = vsub.f32 1.0, %v198
    %1121 = vset.pattern.permute.xlu0 0
    %1122 = vperm.xlu0 %1121, %v1119
    %v1123 = vpop.permute.xlu0 %1122
    %v1125 = vmul.f32 %v1123, %v872
    %v1126 = vadd.f32 %v1118, %v1125
    %v1127 = vmul.f32 %v1116, %v1126
    %s1128 = scalar_lea.vmem [#allocation3], 20
    %1129 = vst.msk [vmem:[%s1128] sm:$0xf] %vm555, %v1127
    %v1131 = vsel %vm357, %v1069, 0
    %1133 = vmatprep.subr.mxu0 0.0
    %1134 = vmatpush1.msra.mxu0 %v347
    %1135 = vmatprep.subr.mxu0 0.0
    %1136 = vmatpush1.msra.mxu0 %v348
    %1137 = vmatprep.subr.mxu0 0.0
    %1138 = vmatpush1.msra.mxu0 %v349
    %1139 = vmatprep.subr.mxu0 0.0
    %1140 = vmatpush1.msra.mxu0 %v350
    %1141 = vmatprep.subr.mxu0 0.0
    %1142 = vmatpush1.msra.mxu0 0.0
    %1143 = vmatprep.subr.mxu0 0.0
    %1144 = vmatpush1.msra.mxu0 0.0
    %1145 = vmatprep.subr.mxu0 0.0
    %1146 = vmatpush1.msra.mxu0 0.0
    %1147 = vmatprep.subr.mxu0 0.0
    %1148 = vmatpush1.msra.mxu0 0.0
    %1149 = vmatprep.subr.mxu0 0.0
    %1150 = vmatpush1.msra.mxu0 0.0
    %1151 = vmatprep.subr.mxu0 0.0
    %1152 = vmatpush1.msra.mxu0 0.0
    %1153 = vmatprep.subr.mxu0 0.0
    %1154 = vmatpush1.msra.mxu0 0.0
    %1155 = vmatprep.subr.mxu0 0.0
    %1156 = vmatpush1.msra.mxu0 0.0
    %1157 = vmatprep.subr.mxu0 0.0
    %1158 = vmatpush1.msra.mxu0 0.0
    %1159 = vmatprep.subr.mxu0 0.0
    %1160 = vmatpush1.msra.mxu0 0.0
    %1161 = vmatprep.subr.mxu0 0.0
    %1162 = vmatpush1.msra.mxu0 0.0
    %1163 = vmatprep.subr.mxu0 0.0
    %1164 = vmatpush1.msra.mxu0 0.0
    %1165 = vmatprep.subr.mxu0 0.0
    %1166 = vmatpush1.msra.mxu0 0.0
    %1167 = vmatprep.subr.mxu0 0.0
    %1168 = vmatpush1.msra.mxu0 0.0
    %1169 = vmatprep.subr.mxu0 0.0
    %1170 = vmatpush1.msra.mxu0 0.0
    %1171 = vmatprep.subr.mxu0 0.0
    %1172 = vmatpush1.msra.mxu0 0.0
    %1173 = vmatprep.subr.mxu0 0.0
    %1174 = vmatpush1.msra.mxu0 0.0
    %1175 = vmatprep.subr.mxu0 0.0
    %1176 = vmatpush1.msra.mxu0 0.0
    %1177 = vmatprep.subr.mxu0 0.0
    %1178 = vmatpush1.msra.mxu0 0.0
    %1179 = vmatprep.subr.mxu0 0.0
    %1180 = vmatpush1.msra.mxu0 0.0
    %1181 = vmatprep.subr.mxu0 0.0
    %1182 = vmatpush1.msra.mxu0 0.0
    %1183 = vmatprep.subr.mxu0 0.0
    %1184 = vmatpush1.msra.mxu0 0.0
    %1185 = vmatprep.subr.mxu0 0.0
    %1186 = vmatpush1.msra.mxu0 0.0
    %1187 = vmatprep.subr.mxu0 0.0
    %1188 = vmatpush1.msra.mxu0 0.0
    %1189 = vmatprep.subr.mxu0 0.0
    %1190 = vmatpush1.msra.mxu0 0.0
    %1191 = vmatprep.subr.mxu0 0.0
    %1192 = vmatpush1.msra.mxu0 0.0
    %1193 = vmatprep.subr.mxu0 0.0
    %1194 = vmatpush1.msra.mxu0 0.0
    %1195 = vmatprep.subr.mxu0 0.0
    %1196 = vmatpush1.msra.mxu0 0.0
    %1197 = vmatprep.mubr.f32.mxu0 0.0
    %1198 = vmatmul.mubr.f32.gmra.mrb[0].mxu0 %v1131
    %v1199 = vpop.f32.mrb[0].mxu0
    %v1200 = vadd.f32 0.0, %v1199
    %v1201 = vpop.f32.mrb[0].mxu0
    %1202 = vdwg.mxu0
    %v1204 = vsel %vm357, %v1126, 0
    %1206 = vmatprep.subr.mxu0 0.0
    %1207 = vmatpush1.msra.mxu0 %v351
    %1208 = vmatprep.subr.mxu0 0.0
    %1209 = vmatpush1.msra.mxu0 %v352
    %1210 = vmatprep.subr.mxu0 0.0
    %1211 = vmatpush1.msra.mxu0 %v353
    %1212 = vmatprep.subr.mxu0 0.0
    %1213 = vmatpush1.msra.mxu0 %v354
    %1214 = vmatprep.subr.mxu0 0.0
    %1215 = vmatpush1.msra.mxu0 0.0
    %1216 = vmatprep.subr.mxu0 0.0
    %1217 = vmatpush1.msra.mxu0 0.0
    %1218 = vmatprep.subr.mxu0 0.0
    %1219 = vmatpush1.msra.mxu0 0.0
    %1220 = vmatprep.subr.mxu0 0.0
    %1221 = vmatpush1.msra.mxu0 0.0
    %1222 = vmatprep.subr.mxu0 0.0
    %1223 = vmatpush1.msra.mxu0 0.0
    %1224 = vmatprep.subr.mxu0 0.0
    %1225 = vmatpush1.msra.mxu0 0.0
    %1226 = vmatprep.subr.mxu0 0.0
    %1227 = vmatpush1.msra.mxu0 0.0
    %1228 = vmatprep.subr.mxu0 0.0
    %1229 = vmatpush1.msra.mxu0 0.0
    %1230 = vmatprep.subr.mxu0 0.0
    %1231 = vmatpush1.msra.mxu0 0.0
    %1232 = vmatprep.subr.mxu0 0.0
    %1233 = vmatpush1.msra.mxu0 0.0
    %1234 = vmatprep.subr.mxu0 0.0
    %1235 = vmatpush1.msra.mxu0 0.0
    %1236 = vmatprep.subr.mxu0 0.0
    %1237 = vmatpush1.msra.mxu0 0.0
    %1238 = vmatprep.subr.mxu0 0.0
    %1239 = vmatpush1.msra.mxu0 0.0
    %1240 = vmatprep.subr.mxu0 0.0
    %1241 = vmatpush1.msra.mxu0 0.0
    %1242 = vmatprep.subr.mxu0 0.0
    %1243 = vmatpush1.msra.mxu0 0.0
    %1244 = vmatprep.subr.mxu0 0.0
    %1245 = vmatpush1.msra.mxu0 0.0
    %1246 = vmatprep.subr.mxu0 0.0
    %1247 = vmatpush1.msra.mxu0 0.0
    %1248 = vmatprep.subr.mxu0 0.0
    %1249 = vmatpush1.msra.mxu0 0.0
    %1250 = vmatprep.subr.mxu0 0.0
    %1251 = vmatpush1.msra.mxu0 0.0
    %1252 = vmatprep.subr.mxu0 0.0
    %1253 = vmatpush1.msra.mxu0 0.0
    %1254 = vmatprep.subr.mxu0 0.0
    %1255 = vmatpush1.msra.mxu0 0.0
    %1256 = vmatprep.subr.mxu0 0.0
    %1257 = vmatpush1.msra.mxu0 0.0
    %1258 = vmatprep.subr.mxu0 0.0
    %1259 = vmatpush1.msra.mxu0 0.0
    %1260 = vmatprep.subr.mxu0 0.0
    %1261 = vmatpush1.msra.mxu0 0.0
    %1262 = vmatprep.subr.mxu0 0.0
    %1263 = vmatpush1.msra.mxu0 0.0
    %1264 = vmatprep.subr.mxu0 0.0
    %1265 = vmatpush1.msra.mxu0 0.0
    %1266 = vmatprep.subr.mxu0 0.0
    %1267 = vmatpush1.msra.mxu0 0.0
    %1268 = vmatprep.subr.mxu0 0.0
    %1269 = vmatpush1.msra.mxu0 0.0
    %1270 = vmatprep.mubr.f32.mxu0 0.0
    %1271 = vmatmul.mubr.f32.gmra.mrb[0].mxu0 %v1204
    %v1272 = vpop.f32.mrb[0].mxu0
    %v1273 = vadd.f32 0.0, %v1272
    %v1274 = vpop.f32.mrb[0].mxu0
    %1275 = vdwg.mxu0
    %v1276 = vadd.f32 %v334, %v1200
    %v1277 = vxor.u32 %v1276, 2147483648
    %v1278 = vmul.f32 %v1277, 1.442695
    %v1279 = vpow.pop %v1278
    %v1280 = vadd.f32 %v1279, 1.0
    %v1281 = vrcp.pop %v1280
    %v1282 = vmul.f32 1.0, %v1281
    %v1283 = vadd.f32 %v1200, %v514
    %1285 = vrot.lane.b32.xlu0 %v1283, 64
    %v1286 = vpop.permute.xlu0 %1285
    %v1288 = vmul.f32 %v1282, %v1286
    %1290 = vrot.lane.b32.xlu0 %v1288, 64
    %v1291 = vpop.permute.xlu0 %1290
    %v1293 = vadd.f32 %v334, %v1291
    %v1294 = vtanh.pop %v1293
    %v1295 = vsub.f32 1.0, %v1282
    %1297 = vrot.lane.b32.xlu0 %v1294, 96
    %v1298 = vpop.permute.xlu0 %1297
    %v1300 = vmul.f32 %v1295, %v1298
    %1301 = vrot.lane.b32.xlu0 %v1069, 32
    %v1302 = vpop.permute.xlu0 %1301
    %v1304 = vmul.f32 %v1282, %v1302
    %v1305 = vadd.f32 %v1300, %v1304
    %1307 = vset.pattern.permute.xlu0 0
    %1308 = vperm.xlu0 %1307, %v196
    %v1309 = vpop.permute.xlu0 %1308
    %1312 = vrot.lane.b32.xlu0 %v1305, 96
    %v1313 = vpop.permute.xlu0 %1312
    %v1315 = vmul.f32 %v1309, %v1313
    %v1316 = vsub.f32 1.0, %v196
    %1318 = vset.pattern.permute.xlu0 0
    %1319 = vperm.xlu0 %1318, %v1316
    %v1320 = vpop.permute.xlu0 %1319
    %v1322 = vmul.f32 %v1320, %v1069
    %v1323 = vadd.f32 %v1315, %v1322
    %v1324 = vmul.f32 %v1309, %v1323
    %s1325 = scalar_lea.vmem [#allocation2], 12
    %1326 = vst.msk [vmem:[%s1325] sm:$0xf] %vm555, %v1324
    %1328 = vrot.lane.b32.xlu0 %v1273, 96
    %v1329 = vpop.permute.xlu0 %1328
    %v1331 = vadd.f32 %v335, %v1329
    %v1332 = vxor.u32 %v1331, 2147483648
    %v1333 = vmul.f32 %v1332, 1.442695
    %v1334 = vpow.pop %v1333
    %v1335 = vadd.f32 %v1334, 1.0
    %v1336 = vrcp.pop %v1335
    %v1337 = vmul.f32 1.0, %v1336
    %v1338 = vrot.slane %v335, 4
    %v1340 = vadd.f32 %v1338, %v1329
    %v1341 = vxor.u32 %v1340, 2147483648
    %v1342 = vmul.f32 %v1341, 1.442695
    %v1343 = vpow.pop %v1342
    %v1344 = vadd.f32 %v1343, 1.0
    %v1345 = vrcp.pop %v1344
    %v1346 = vmul.f32 1.0, %v1345
    %v1347 = vadd.f32 %v1273, %v583
    %1349 = vrot.lane.b32.xlu0 %v1347, 32
    %v1350 = vpop.permute.xlu0 %1349
    %v1352 = vmul.f32 %v1337, %v1350
    %1353 = vrot.lane.b32.xlu0 %v335, 96
    %v1354 = vpop.permute.xlu0 %1353
    %v1355 = vrot.slane %v1354, 4
    %1358 = vrot.lane.b32.xlu0 %v1352, 32
    %v1359 = vpop.permute.xlu0 %1358
    %v1361 = vadd.f32 %v1355, %v1359
    %v1362 = vtanh.pop %v1361
    %v1363 = vsub.f32 1.0, %v1346
    %v1364 = vmul.f32 %v1363, %v1362
    %v1365 = vmul.f32 %v1346, %v1126
    %v1366 = vadd.f32 %v1364, %v1365
    %1368 = vset.pattern.permute.xlu0 0
    %1369 = vperm.xlu0 %1368, %v197
    %v1370 = vpop.permute.xlu0 %1369
    %v1372 = vmul.f32 %v1370, %v1366
    %v1373 = vsub.f32 1.0, %v197
    %1375 = vset.pattern.permute.xlu0 0
    %1376 = vperm.xlu0 %1375, %v1373
    %v1377 = vpop.permute.xlu0 %1376
    %v1379 = vmul.f32 %v1377, %v1126
    %v1380 = vadd.f32 %v1372, %v1379
    %v1381 = vmul.f32 %v1370, %v1380
    %s1382 = scalar_lea.vmem [#allocation3], 16
    %1383 = vst.msk [vmem:[%s1382] sm:$0xf] %vm555, %v1381
    %v1385 = vsel %vm357, %v1323, 0
    %1387 = vmatprep.subr.mxu0 0.0
    %1388 = vmatpush1.msra.mxu0 %v347
    %1389 = vmatprep.subr.mxu0 0.0
    %1390 = vmatpush1.msra.mxu0 %v348
    %1391 = vmatprep.subr.mxu0 0.0
    %1392 = vmatpush1.msra.mxu0 %v349
    %1393 = vmatprep.subr.mxu0 0.0
    %1394 = vmatpush1.msra.mxu0 %v350
    %1395 = vmatprep.subr.mxu0 0.0
    %1396 = vmatpush1.msra.mxu0 0.0
    %1397 = vmatprep.subr.mxu0 0.0
    %1398 = vmatpush1.msra.mxu0 0.0
    %1399 = vmatprep.subr.mxu0 0.0
    %1400 = vmatpush1.msra.mxu0 0.0
    %1401 = vmatprep.subr.mxu0 0.0
    %1402 = vmatpush1.msra.mxu0 0.0
    %1403 = vmatprep.subr.mxu0 0.0
    %1404 = vmatpush1.msra.mxu0 0.0
    %1405 = vmatprep.subr.mxu0 0.0
    %1406 = vmatpush1.msra.mxu0 0.0
    %1407 = vmatprep.subr.mxu0 0.0
    %1408 = vmatpush1.msra.mxu0 0.0
    %1409 = vmatprep.subr.mxu0 0.0
    %1410 = vmatpush1.msra.mxu0 0.0
    %1411 = vmatprep.subr.mxu0 0.0
    %1412 = vmatpush1.msra.mxu0 0.0
    %1413 = vmatprep.subr.mxu0 0.0
    %1414 = vmatpush1.msra.mxu0 0.0
    %1415 = vmatprep.subr.mxu0 0.0
    %1416 = vmatpush1.msra.mxu0 0.0
    %1417 = vmatprep.subr.mxu0 0.0
    %1418 = vmatpush1.msra.mxu0 0.0
    %1419 = vmatprep.subr.mxu0 0.0
    %1420 = vmatpush1.msra.mxu0 0.0
    %1421 = vmatprep.subr.mxu0 0.0
    %1422 = vmatpush1.msra.mxu0 0.0
    %1423 = vmatprep.subr.mxu0 0.0
    %1424 = vmatpush1.msra.mxu0 0.0
    %1425 = vmatprep.subr.mxu0 0.0
    %1426 = vmatpush1.msra.mxu0 0.0
    %1427 = vmatprep.subr.mxu0 0.0
    %1428 = vmatpush1.msra.mxu0 0.0
    %1429 = vmatprep.subr.mxu0 0.0
    %1430 = vmatpush1.msra.mxu0 0.0
    %1431 = vmatprep.subr.mxu0 0.0
    %1432 = vmatpush1.msra.mxu0 0.0
    %1433 = vmatprep.subr.mxu0 0.0
    %1434 = vmatpush1.msra.mxu0 0.0
    %1435 = vmatprep.subr.mxu0 0.0
    %1436 = vmatpush1.msra.mxu0 0.0
    %1437 = vmatprep.subr.mxu0 0.0
    %1438 = vmatpush1.msra.mxu0 0.0
    %1439 = vmatprep.subr.mxu0 0.0
    %1440 = vmatpush1.msra.mxu0 0.0
    %1441 = vmatprep.subr.mxu0 0.0
    %1442 = vmatpush1.msra.mxu0 0.0
    %1443 = vmatprep.subr.mxu0 0.0
    %1444 = vmatpush1.msra.mxu0 0.0
    %1445 = vmatprep.subr.mxu0 0.0
    %1446 = vmatpush1.msra.mxu0 0.0
    %1447 = vmatprep.subr.mxu0 0.0
    %1448 = vmatpush1.msra.mxu0 0.0
    %1449 = vmatprep.subr.mxu0 0.0
    %1450 = vmatpush1.msra.mxu0 0.0
    %1451 = vmatprep.mubr.f32.mxu0 0.0
    %1452 = vmatmul.mubr.f32.gmra.mrb[0].mxu0 %v1385
    %v1453 = vpop.f32.mrb[0].mxu0
    %v1454 = vadd.f32 0.0, %v1453
    %v1455 = vpop.f32.mrb[0].mxu0
    %1456 = vdwg.mxu0
    %v1458 = vsel %vm357, %v1380, 0
    %1460 = vmatprep.subr.mxu0 0.0
    %1461 = vmatpush1.msra.mxu0 %v351
    %1462 = vmatprep.subr.mxu0 0.0
    %1463 = vmatpush1.msra.mxu0 %v352
    %1464 = vmatprep.subr.mxu0 0.0
    %1465 = vmatpush1.msra.mxu0 %v353
    %1466 = vmatprep.subr.mxu0 0.0
    %1467 = vmatpush1.msra.mxu0 %v354
    %1468 = vmatprep.subr.mxu0 0.0
    %1469 = vmatpush1.msra.mxu0 0.0
    %1470 = vmatprep.subr.mxu0 0.0
    %1471 = vmatpush1.msra.mxu0 0.0
    %1472 = vmatprep.subr.mxu0 0.0
    %1473 = vmatpush1.msra.mxu0 0.0
    %1474 = vmatprep.subr.mxu0 0.0
    %1475 = vmatpush1.msra.mxu0 0.0
    %1476 = vmatprep.subr.mxu0 0.0
    %1477 = vmatpush1.msra.mxu0 0.0
    %1478 = vmatprep.subr.mxu0 0.0
    %1479 = vmatpush1.msra.mxu0 0.0
    %1480 = vmatprep.subr.mxu0 0.0
    %1481 = vmatpush1.msra.mxu0 0.0
    %1482 = vmatprep.subr.mxu0 0.0
    %1483 = vmatpush1.msra.mxu0 0.0
    %1484 = vmatprep.subr.mxu0 0.0
    %1485 = vmatpush1.msra.mxu0 0.0
    %1486 = vmatprep.subr.mxu0 0.0
    %1487 = vmatpush1.msra.mxu0 0.0
    %1488 = vmatprep.subr.mxu0 0.0
    %1489 = vmatpush1.msra.mxu0 0.0
    %1490 = vmatprep.subr.mxu0 0.0
    %1491 = vmatpush1.msra.mxu0 0.0
    %1492 = vmatprep.subr.mxu0 0.0
    %1493 = vmatpush1.msra.mxu0 0.0
    %1494 = vmatprep.subr.mxu0 0.0
    %1495 = vmatpush1.msra.mxu0 0.0
    %1496 = vmatprep.subr.mxu0 0.0
    %1497 = vmatpush1.msra.mxu0 0.0
    %1498 = vmatprep.subr.mxu0 0.0
    %1499 = vmatpush1.msra.mxu0 0.0
    %1500 = vmatprep.subr.mxu0 0.0
    %1501 = vmatpush1.msra.mxu0 0.0
    %1502 = vmatprep.subr.mxu0 0.0
    %1503 = vmatpush1.msra.mxu0 0.0
    %1504 = vmatprep.subr.mxu0 0.0
    %1505 = vmatpush1.msra.mxu0 0.0
    %1506 = vmatprep.subr.mxu0 0.0
    %1507 = vmatpush1.msra.mxu0 0.0
    %1508 = vmatprep.subr.mxu0 0.0
    %1509 = vmatpush1.msra.mxu0 0.0
    %1510 = vmatprep.subr.mxu0 0.0
    %1511 = vmatpush1.msra.mxu0 0.0
    %1512 = vmatprep.subr.mxu0 0.0
    %1513 = vmatpush1.msra.mxu0 0.0
    %1514 = vmatprep.subr.mxu0 0.0
    %1515 = vmatpush1.msra.mxu0 0.0
    %1516 = vmatprep.subr.mxu0 0.0
    %1517 = vmatpush1.msra.mxu0 0.0
    %1518 = vmatprep.subr.mxu0 0.0
    %1519 = vmatpush1.msra.mxu0 0.0
    %1520 = vmatprep.subr.mxu0 0.0
    %1521 = vmatpush1.msra.mxu0 0.0
    %1522 = vmatprep.subr.mxu0 0.0
    %1523 = vmatpush1.msra.mxu0 0.0
    %1524 = vmatprep.mubr.f32.mxu0 0.0
    %1525 = vmatmul.mubr.f32.gmra.mrb[0].mxu0 %v1458
    %v1526 = vpop.f32.mrb[0].mxu0
    %v1527 = vadd.f32 0.0, %v1526
    %v1528 = vpop.f32.mrb[0].mxu0
    %1529 = vdwg.mxu0
    %v1530 = vadd.f32 %v335, %v1454
    %v1531 = vxor.u32 %v1530, 2147483648
    %v1532 = vmul.f32 %v1531, 1.442695
    %v1533 = vpow.pop %v1532
    %v1534 = vadd.f32 %v1533, 1.0
    %v1535 = vrcp.pop %v1534
    %v1536 = vmul.f32 1.0, %v1535
    %v1537 = vadd.f32 %v1454, %v514
    %1539 = vrot.lane.b32.xlu0 %v1537, 64
    %v1540 = vpop.permute.xlu0 %1539
    %v1542 = vmul.f32 %v1536, %v1540
    %1544 = vrot.lane.b32.xlu0 %v1542, 64
    %v1545 = vpop.permute.xlu0 %1544
    %v1547 = vadd.f32 %v335, %v1545
    %v1548 = vtanh.pop %v1547
    %v1549 = vsub.f32 1.0, %v1536
    %1551 = vrot.lane.b32.xlu0 %v1548, 96
    %v1552 = vpop.permute.xlu0 %1551
    %v1554 = vmul.f32 %v1549, %v1552
    %1555 = vrot.lane.b32.xlu0 %v1323, 32
    %v1556 = vpop.permute.xlu0 %1555
    %v1558 = vmul.f32 %v1536, %v1556
    %v1559 = vadd.f32 %v1554, %v1558
    %1561 = vrot.lane.b32.xlu0 %v1559, 96
    %v1562 = vpop.permute.xlu0 %1561
    %v1564 = vmul.f32 %v1370, %v1562
    %v1565 = vmul.f32 %v1377, %v1323
    %v1566 = vadd.f32 %v1564, %v1565
    %v1567 = vmul.f32 %v1370, %v1566
    %s1568 = scalar_lea.vmem [#allocation2], 16
    %1569 = vst.msk [vmem:[%s1568] sm:$0xf] %vm555, %v1567
    %1571 = vrot.lane.b32.xlu0 %v1527, 96
    %v1572 = vpop.permute.xlu0 %1571
    %v1574 = vadd.f32 %v334, %v1572
    %v1575 = vxor.u32 %v1574, 2147483648
    %v1576 = vmul.f32 %v1575, 1.442695
    %v1577 = vpow.pop %v1576
    %v1578 = vadd.f32 %v1577, 1.0
    %v1579 = vrcp.pop %v1578
    %v1580 = vmul.f32 1.0, %v1579
    %v1581 = vrot.slane %v334, 4
    %v1583 = vadd.f32 %v1581, %v1572
    %v1584 = vxor.u32 %v1583, 2147483648
    %v1585 = vmul.f32 %v1584, 1.442695
    %v1586 = vpow.pop %v1585
    %v1587 = vadd.f32 %v1586, 1.0
    %v1588 = vrcp.pop %v1587
    %v1589 = vmul.f32 1.0, %v1588
    %v1590 = vadd.f32 %v1527, %v583
    %1592 = vrot.lane.b32.xlu0 %v1590, 32
    %v1593 = vpop.permute.xlu0 %1592
    %v1595 = vmul.f32 %v1580, %v1593
    %1596 = vrot.lane.b32.xlu0 %v334, 96
    %v1597 = vpop.permute.xlu0 %1596
    %v1598 = vrot.slane %v1597, 4
    %1601 = vrot.lane.b32.xlu0 %v1595, 32
    %v1602 = vpop.permute.xlu0 %1601
    %v1604 = vadd.f32 %v1598, %v1602
    %v1605 = vtanh.pop %v1604
    %v1606 = vsub.f32 1.0, %v1589
    %v1607 = vmul.f32 %v1606, %v1605
    %v1608 = vmul.f32 %v1589, %v1380
    %v1609 = vadd.f32 %v1607, %v1608
    %v1610 = vmul.f32 %v1309, %v1609
    %v1611 = vmul.f32 %v1320, %v1380
    %v1612 = vadd.f32 %v1610, %v1611
    %v1613 = vmul.f32 %v1309, %v1612
    %s1614 = scalar_lea.vmem [#allocation3], 12
    %1615 = vst.msk [vmem:[%s1614] sm:$0xf] %vm555, %v1613
    %v1617 = vsel %vm357, %v1566, 0
    %1619 = vmatprep.subr.mxu0 0.0
    %1620 = vmatpush1.msra.mxu0 %v347
    %1621 = vmatprep.subr.mxu0 0.0
    %1622 = vmatpush1.msra.mxu0 %v348
    %1623 = vmatprep.subr.mxu0 0.0
    %1624 = vmatpush1.msra.mxu0 %v349
    %1625 = vmatprep.subr.mxu0 0.0
    %1626 = vmatpush1.msra.mxu0 %v350
    %1627 = vmatprep.subr.mxu0 0.0
    %1628 = vmatpush1.msra.mxu0 0.0
    %1629 = vmatprep.subr.mxu0 0.0
    %1630 = vmatpush1.msra.mxu0 0.0
    %1631 = vmatprep.subr.mxu0 0.0
    %1632 = vmatpush1.msra.mxu0 0.0
    %1633 = vmatprep.subr.mxu0 0.0
    %1634 = vmatpush1.msra.mxu0 0.0
    %1635 = vmatprep.subr.mxu0 0.0
    %1636 = vmatpush1.msra.mxu0 0.0
    %1637 = vmatprep.subr.mxu0 0.0
    %1638 = vmatpush1.msra.mxu0 0.0
    %1639 = vmatprep.subr.mxu0 0.0
    %1640 = vmatpush1.msra.mxu0 0.0
    %1641 = vmatprep.subr.mxu0 0.0
    %1642 = vmatpush1.msra.mxu0 0.0
    %1643 = vmatprep.subr.mxu0 0.0
    %1644 = vmatpush1.msra.mxu0 0.0
    %1645 = vmatprep.subr.mxu0 0.0
    %1646 = vmatpush1.msra.mxu0 0.0
    %1647 = vmatprep.subr.mxu0 0.0
    %1648 = vmatpush1.msra.mxu0 0.0
    %1649 = vmatprep.subr.mxu0 0.0
    %1650 = vmatpush1.msra.mxu0 0.0
    %1651 = vmatprep.subr.mxu0 0.0
    %1652 = vmatpush1.msra.mxu0 0.0
    %1653 = vmatprep.subr.mxu0 0.0
    %1654 = vmatpush1.msra.mxu0 0.0
    %1655 = vmatprep.subr.mxu0 0.0
    %1656 = vmatpush1.msra.mxu0 0.0
    %1657 = vmatprep.subr.mxu0 0.0
    %1658 = vmatpush1.msra.mxu0 0.0
    %1659 = vmatprep.subr.mxu0 0.0
    %1660 = vmatpush1.msra.mxu0 0.0
    %1661 = vmatprep.subr.mxu0 0.0
    %1662 = vmatpush1.msra.mxu0 0.0
    %1663 = vmatprep.subr.mxu0 0.0
    %1664 = vmatpush1.msra.mxu0 0.0
    %1665 = vmatprep.subr.mxu0 0.0
    %1666 = vmatpush1.msra.mxu0 0.0
    %1667 = vmatprep.subr.mxu0 0.0
    %1668 = vmatpush1.msra.mxu0 0.0
    %1669 = vmatprep.subr.mxu0 0.0
    %1670 = vmatpush1.msra.mxu0 0.0
    %1671 = vmatprep.subr.mxu0 0.0
    %1672 = vmatpush1.msra.mxu0 0.0
    %1673 = vmatprep.subr.mxu0 0.0
    %1674 = vmatpush1.msra.mxu0 0.0
    %1675 = vmatprep.subr.mxu0 0.0
    %1676 = vmatpush1.msra.mxu0 0.0
    %1677 = vmatprep.subr.mxu0 0.0
    %1678 = vmatpush1.msra.mxu0 0.0
    %1679 = vmatprep.subr.mxu0 0.0
    %1680 = vmatpush1.msra.mxu0 0.0
    %1681 = vmatprep.subr.mxu0 0.0
    %1682 = vmatpush1.msra.mxu0 0.0
    %1683 = vmatprep.mubr.f32.mxu0 0.0
    %1684 = vmatmul.mubr.f32.gmra.mrb[0].mxu0 %v1617
    %v1685 = vpop.f32.mrb[0].mxu0
    %v1686 = vadd.f32 0.0, %v1685
    %v1687 = vpop.f32.mrb[0].mxu0
    %1688 = vdwg.mxu0
    %v1690 = vsel %vm357, %v1612, 0
    %1692 = vmatprep.subr.mxu0 0.0
    %1693 = vmatpush1.msra.mxu0 %v351
    %1694 = vmatprep.subr.mxu0 0.0
    %1695 = vmatpush1.msra.mxu0 %v352
    %1696 = vmatprep.subr.mxu0 0.0
    %1697 = vmatpush1.msra.mxu0 %v353
    %1698 = vmatprep.subr.mxu0 0.0
    %1699 = vmatpush1.msra.mxu0 %v354
    %1700 = vmatprep.subr.mxu0 0.0
    %1701 = vmatpush1.msra.mxu0 0.0
    %1702 = vmatprep.subr.mxu0 0.0
    %1703 = vmatpush1.msra.mxu0 0.0
    %1704 = vmatprep.subr.mxu0 0.0
    %1705 = vmatpush1.msra.mxu0 0.0
    %1706 = vmatprep.subr.mxu0 0.0
    %1707 = vmatpush1.msra.mxu0 0.0
    %1708 = vmatprep.subr.mxu0 0.0
    %1709 = vmatpush1.msra.mxu0 0.0
    %1710 = vmatprep.subr.mxu0 0.0
    %1711 = vmatpush1.msra.mxu0 0.0
    %1712 = vmatprep.subr.mxu0 0.0
    %1713 = vmatpush1.msra.mxu0 0.0
    %1714 = vmatprep.subr.mxu0 0.0
    %1715 = vmatpush1.msra.mxu0 0.0
    %1716 = vmatprep.subr.mxu0 0.0
    %1717 = vmatpush1.msra.mxu0 0.0
    %1718 = vmatprep.subr.mxu0 0.0
    %1719 = vmatpush1.msra.mxu0 0.0
    %1720 = vmatprep.subr.mxu0 0.0
    %1721 = vmatpush1.msra.mxu0 0.0
    %1722 = vmatprep.subr.mxu0 0.0
    %1723 = vmatpush1.msra.mxu0 0.0
    %1724 = vmatprep.subr.mxu0 0.0
    %1725 = vmatpush1.msra.mxu0 0.0
    %1726 = vmatprep.subr.mxu0 0.0
    %1727 = vmatpush1.msra.mxu0 0.0
    %1728 = vmatprep.subr.mxu0 0.0
    %1729 = vmatpush1.msra.mxu0 0.0
    %1730 = vmatprep.subr.mxu0 0.0
    %1731 = vmatpush1.msra.mxu0 0.0
    %1732 = vmatprep.subr.mxu0 0.0
    %1733 = vmatpush1.msra.mxu0 0.0
    %1734 = vmatprep.subr.mxu0 0.0
    %1735 = vmatpush1.msra.mxu0 0.0
    %1736 = vmatprep.subr.mxu0 0.0
    %1737 = vmatpush1.msra.mxu0 0.0
    %1738 = vmatprep.subr.mxu0 0.0
    %1739 = vmatpush1.msra.mxu0 0.0
    %1740 = vmatprep.subr.mxu0 0.0
    %1741 = vmatpush1.msra.mxu0 0.0
    %1742 = vmatprep.subr.mxu0 0.0
    %1743 = vmatpush1.msra.mxu0 0.0
    %1744 = vmatprep.subr.mxu0 0.0
    %1745 = vmatpush1.msra.mxu0 0.0
    %1746 = vmatprep.subr.mxu0 0.0
    %1747 = vmatpush1.msra.mxu0 0.0
    %1748 = vmatprep.subr.mxu0 0.0
    %1749 = vmatpush1.msra.mxu0 0.0
    %1750 = vmatprep.subr.mxu0 0.0
    %1751 = vmatpush1.msra.mxu0 0.0
    %1752 = vmatprep.subr.mxu0 0.0
    %1753 = vmatpush1.msra.mxu0 0.0
    %1754 = vmatprep.subr.mxu0 0.0
    %1755 = vmatpush1.msra.mxu0 0.0
    %1756 = vmatprep.mubr.f32.mxu0 0.0
    %1757 = vmatmul.mubr.f32.gmra.mrb[0].mxu0 %v1690
    %v1758 = vpop.f32.mrb[0].mxu0
    %v1759 = vadd.f32 0.0, %v1758
    %v1760 = vpop.f32.mrb[0].mxu0
    %1761 = vdwg.mxu0
    %v1762 = vadd.f32 %v336, %v1686
    %v1763 = vxor.u32 %v1762, 2147483648
    %v1764 = vmul.f32 %v1763, 1.442695
    %v1765 = vpow.pop %v1764
    %v1766 = vadd.f32 %v1765, 1.0
    %v1767 = vrcp.pop %v1766
    %v1768 = vmul.f32 1.0, %v1767
    %v1769 = vadd.f32 %v1686, %v514
    %1771 = vrot.lane.b32.xlu0 %v1769, 64
    %v1772 = vpop.permute.xlu0 %1771
    %v1774 = vmul.f32 %v1768, %v1772
    %1776 = vrot.lane.b32.xlu0 %v1774, 64
    %v1777 = vpop.permute.xlu0 %1776
    %v1779 = vadd.f32 %v336, %v1777
    %v1780 = vtanh.pop %v1779
    %v1781 = vsub.f32 1.0, %v1768
    %1783 = vrot.lane.b32.xlu0 %v1780, 96
    %v1784 = vpop.permute.xlu0 %1783
    %v1786 = vmul.f32 %v1781, %v1784
    %1787 = vrot.lane.b32.xlu0 %v1566, 32
    %v1788 = vpop.permute.xlu0 %1787
    %v1790 = vmul.f32 %v1768, %v1788
    %v1791 = vadd.f32 %v1786, %v1790
    %1793 = vrot.lane.b32.xlu0 %v1791, 96
    %v1794 = vpop.permute.xlu0 %1793
    %v1796 = vmul.f32 %v1116, %v1794
    %v1797 = vmul.f32 %v1123, %v1566
    %v1798 = vadd.f32 %v1796, %v1797
    %v1799 = vmul.f32 %v1116, %v1798
    %s1800 = scalar_lea.vmem [#allocation2], 20
    %1801 = vst.msk [vmem:[%s1800] sm:$0xf] %vm555, %v1799
    %1803 = vrot.lane.b32.xlu0 %v1759, 96
    %v1804 = vpop.permute.xlu0 %1803
    %v1806 = vadd.f32 %v333, %v1804
    %v1807 = vxor.u32 %v1806, 2147483648
    %v1808 = vmul.f32 %v1807, 1.442695
    %v1809 = vpow.pop %v1808
    %v1810 = vadd.f32 %v1809, 1.0
    %v1811 = vrcp.pop %v1810
    %v1812 = vmul.f32 1.0, %v1811
    %v1813 = vrot.slane %v333, 4
    %v1815 = vadd.f32 %v1813, %v1804
    %v1816 = vxor.u32 %v1815, 2147483648
    %v1817 = vmul.f32 %v1816, 1.442695
    %v1818 = vpow.pop %v1817
    %v1819 = vadd.f32 %v1818, 1.0
    %v1820 = vrcp.pop %v1819
    %v1821 = vmul.f32 1.0, %v1820
    %v1822 = vadd.f32 %v1759, %v583
    %1824 = vrot.lane.b32.xlu0 %v1822, 32
    %v1825 = vpop.permute.xlu0 %1824
    %v1827 = vmul.f32 %v1812, %v1825
    %1828 = vrot.lane.b32.xlu0 %v333, 96
    %v1829 = vpop.permute.xlu0 %1828
    %v1830 = vrot.slane %v1829, 4
    %1833 = vrot.lane.b32.xlu0 %v1827, 32
    %v1834 = vpop.permute.xlu0 %1833
    %v1836 = vadd.f32 %v1830, %v1834
    %v1837 = vtanh.pop %v1836
    %v1838 = vsub.f32 1.0, %v1821
    %v1839 = vmul.f32 %v1838, %v1837
    %v1840 = vmul.f32 %v1821, %v1612
    %v1841 = vadd.f32 %v1839, %v1840
    %v1842 = vmul.f32 %v1055, %v1841
    %v1843 = vmul.f32 %v1066, %v1612
    %v1844 = vadd.f32 %v1842, %v1843
    %v1845 = vmul.f32 %v1055, %v1844
    %s1846 = scalar_lea.vmem [#allocation3], 8
    %1847 = vst.msk [vmem:[%s1846] sm:$0xf] %vm555, %v1845
    %v1849 = vsel %vm357, %v1798, 0
    %1851 = vmatprep.subr.mxu0 0.0
    %1852 = vmatpush1.msra.mxu0 %v347
    %1853 = vmatprep.subr.mxu0 0.0
    %1854 = vmatpush1.msra.mxu0 %v348
    %1855 = vmatprep.subr.mxu0 0.0
    %1856 = vmatpush1.msra.mxu0 %v349
    %1857 = vmatprep.subr.mxu0 0.0
    %1858 = vmatpush1.msra.mxu0 %v350
    %1859 = vmatprep.subr.mxu0 0.0
    %1860 = vmatpush1.msra.mxu0 0.0
    %1861 = vmatprep.subr.mxu0 0.0
    %1862 = vmatpush1.msra.mxu0 0.0
    %1863 = vmatprep.subr.mxu0 0.0
    %1864 = vmatpush1.msra.mxu0 0.0
    %1865 = vmatprep.subr.mxu0 0.0
    %1866 = vmatpush1.msra.mxu0 0.0
    %1867 = vmatprep.subr.mxu0 0.0
    %1868 = vmatpush1.msra.mxu0 0.0
    %1869 = vmatprep.subr.mxu0 0.0
    %1870 = vmatpush1.msra.mxu0 0.0
    %1871 = vmatprep.subr.mxu0 0.0
    %1872 = vmatpush1.msra.mxu0 0.0
    %1873 = vmatprep.subr.mxu0 0.0
    %1874 = vmatpush1.msra.mxu0 0.0
    %1875 = vmatprep.subr.mxu0 0.0
    %1876 = vmatpush1.msra.mxu0 0.0
    %1877 = vmatprep.subr.mxu0 0.0
    %1878 = vmatpush1.msra.mxu0 0.0
    %1879 = vmatprep.subr.mxu0 0.0
    %1880 = vmatpush1.msra.mxu0 0.0
    %1881 = vmatprep.subr.mxu0 0.0
    %1882 = vmatpush1.msra.mxu0 0.0
    %1883 = vmatprep.subr.mxu0 0.0
    %1884 = vmatpush1.msra.mxu0 0.0
    %1885 = vmatprep.subr.mxu0 0.0
    %1886 = vmatpush1.msra.mxu0 0.0
    %1887 = vmatprep.subr.mxu0 0.0
    %1888 = vmatpush1.msra.mxu0 0.0
    %1889 = vmatprep.subr.mxu0 0.0
    %1890 = vmatpush1.msra.mxu0 0.0
    %1891 = vmatprep.subr.mxu0 0.0
    %1892 = vmatpush1.msra.mxu0 0.0
    %1893 = vmatprep.subr.mxu0 0.0
    %1894 = vmatpush1.msra.mxu0 0.0
    %1895 = vmatprep.subr.mxu0 0.0
    %1896 = vmatpush1.msra.mxu0 0.0
    %1897 = vmatprep.subr.mxu0 0.0
    %1898 = vmatpush1.msra.mxu0 0.0
    %1899 = vmatprep.subr.mxu0 0.0
    %1900 = vmatpush1.msra.mxu0 0.0
    %1901 = vmatprep.subr.mxu0 0.0
    %1902 = vmatpush1.msra.mxu0 0.0
    %1903 = vmatprep.subr.mxu0 0.0
    %1904 = vmatpush1.msra.mxu0 0.0
    %1905 = vmatprep.subr.mxu0 0.0
    %1906 = vmatpush1.msra.mxu0 0.0
    %1907 = vmatprep.subr.mxu0 0.0
    %1908 = vmatpush1.msra.mxu0 0.0
    %1909 = vmatprep.subr.mxu0 0.0
    %1910 = vmatpush1.msra.mxu0 0.0
    %1911 = vmatprep.subr.mxu0 0.0
    %1912 = vmatpush1.msra.mxu0 0.0
    %1913 = vmatprep.subr.mxu0 0.0
    %1914 = vmatpush1.msra.mxu0 0.0
    %1915 = vmatprep.mubr.f32.mxu0 0.0
    %1916 = vmatmul.mubr.f32.gmra.mrb[0].mxu0 %v1849
    %v1917 = vpop.f32.mrb[0].mxu0
    %v1918 = vadd.f32 0.0, %v1917
    %v1919 = vpop.f32.mrb[0].mxu0
    %1920 = vdwg.mxu0
    %v1922 = vsel %vm357, %v1844, 0
    %1924 = vmatprep.subr.mxu0 0.0
    %1925 = vmatpush1.msra.mxu0 %v351
    %1926 = vmatprep.subr.mxu0 0.0
    %1927 = vmatpush1.msra.mxu0 %v352
    %1928 = vmatprep.subr.mxu0 0.0
    %1929 = vmatpush1.msra.mxu0 %v353
    %1930 = vmatprep.subr.mxu0 0.0
    %1931 = vmatpush1.msra.mxu0 %v354
    %1932 = vmatprep.subr.mxu0 0.0
    %1933 = vmatpush1.msra.mxu0 0.0
    %1934 = vmatprep.subr.mxu0 0.0
    %1935 = vmatpush1.msra.mxu0 0.0
    %1936 = vmatprep.subr.mxu0 0.0
    %1937 = vmatpush1.msra.mxu0 0.0
    %1938 = vmatprep.subr.mxu0 0.0
    %1939 = vmatpush1.msra.mxu0 0.0
    %1940 = vmatprep.subr.mxu0 0.0
    %1941 = vmatpush1.msra.mxu0 0.0
    %1942 = vmatprep.subr.mxu0 0.0
    %1943 = vmatpush1.msra.mxu0 0.0
    %1944 = vmatprep.subr.mxu0 0.0
    %1945 = vmatpush1.msra.mxu0 0.0
    %1946 = vmatprep.subr.mxu0 0.0
    %1947 = vmatpush1.msra.mxu0 0.0
    %1948 = vmatprep.subr.mxu0 0.0
    %1949 = vmatpush1.msra.mxu0 0.0
    %1950 = vmatprep.subr.mxu0 0.0
    %1951 = vmatpush1.msra.mxu0 0.0
    %1952 = vmatprep.subr.mxu0 0.0
    %1953 = vmatpush1.msra.mxu0 0.0
    %1954 = vmatprep.subr.mxu0 0.0
    %1955 = vmatpush1.msra.mxu0 0.0
    %1956 = vmatprep.subr.mxu0 0.0
    %1957 = vmatpush1.msra.mxu0 0.0
    %1958 = vmatprep.subr.mxu0 0.0
    %1959 = vmatpush1.msra.mxu0 0.0
    %1960 = vmatprep.subr.mxu0 0.0
    %1961 = vmatpush1.msra.mxu0 0.0
    %1962 = vmatprep.subr.mxu0 0.0
    %1963 = vmatpush1.msra.mxu0 0.0
    %1964 = vmatprep.subr.mxu0 0.0
    %1965 = vmatpush1.msra.mxu0 0.0
    %1966 = vmatprep.subr.mxu0 0.0
    %1967 = vmatpush1.msra.mxu0 0.0
    %1968 = vmatprep.subr.mxu0 0.0
    %1969 = vmatpush1.msra.mxu0 0.0
    %1970 = vmatprep.subr.mxu0 0.0
    %1971 = vmatpush1.msra.mxu0 0.0
    %1972 = vmatprep.subr.mxu0 0.0
    %1973 = vmatpush1.msra.mxu0 0.0
    %1974 = vmatprep.subr.mxu0 0.0
    %1975 = vmatpush1.msra.mxu0 0.0
    %1976 = vmatprep.subr.mxu0 0.0
    %1977 = vmatpush1.msra.mxu0 0.0
    %1978 = vmatprep.subr.mxu0 0.0
    %1979 = vmatpush1.msra.mxu0 0.0
    %1980 = vmatprep.subr.mxu0 0.0
    %1981 = vmatpush1.msra.mxu0 0.0
    %1982 = vmatprep.subr.mxu0 0.0
    %1983 = vmatpush1.msra.mxu0 0.0
    %1984 = vmatprep.subr.mxu0 0.0
    %1985 = vmatpush1.msra.mxu0 0.0
    %1986 = vmatprep.subr.mxu0 0.0
    %1987 = vmatpush1.msra.mxu0 0.0
    %1988 = vmatprep.mubr.f32.mxu0 0.0
    %1989 = vmatmul.mubr.f32.gmra.mrb[0].mxu0 %v1922
    %v1990 = vpop.f32.mrb[0].mxu0
    %v1991 = vadd.f32 0.0, %v1990
    %v1992 = vpop.f32.mrb[0].mxu0
    %1993 = vdwg.mxu0
    %v1994 = vadd.f32 %v337, %v1918
    %v1995 = vxor.u32 %v1994, 2147483648
    %v1996 = vmul.f32 %v1995, 1.442695
    %v1997 = vpow.pop %v1996
    %v1998 = vadd.f32 %v1997, 1.0
    %v1999 = vrcp.pop %v1998
    %v2000 = vmul.f32 1.0, %v1999
    %v2001 = vadd.f32 %v1918, %v514
    %2003 = vrot.lane.b32.xlu0 %v2001, 64
    %v2004 = vpop.permute.xlu0 %2003
    %v2006 = vmul.f32 %v2000, %v2004
    %2008 = vrot.lane.b32.xlu0 %v2006, 64
    %v2009 = vpop.permute.xlu0 %2008
    %v2011 = vadd.f32 %v337, %v2009
    %v2012 = vtanh.pop %v2011
    %v2013 = vsub.f32 1.0, %v2000
    %2015 = vrot.lane.b32.xlu0 %v2012, 96
    %v2016 = vpop.permute.xlu0 %2015
    %v2018 = vmul.f32 %v2013, %v2016
    %2019 = vrot.lane.b32.xlu0 %v1798, 32
    %v2020 = vpop.permute.xlu0 %2019
    %v2022 = vmul.f32 %v2000, %v2020
    %v2023 = vadd.f32 %v2018, %v2022
    %2025 = vrot.lane.b32.xlu0 %v2023, 96
    %v2026 = vpop.permute.xlu0 %2025
    %v2028 = vmul.f32 %v862, %v2026
    %v2029 = vmul.f32 %v869, %v1798
    %v2030 = vadd.f32 %v2028, %v2029
    %v2031 = vmul.f32 %v862, %v2030
    %s2032 = scalar_lea.vmem [#allocation2], 24
    %2033 = vst.msk [vmem:[%s2032] sm:$0xf] %vm555, %v2031
    %2035 = vrot.lane.b32.xlu0 %v1991, 96
    %v2036 = vpop.permute.xlu0 %2035
    %v2038 = vadd.f32 %v332, %v2036
    %v2039 = vxor.u32 %v2038, 2147483648
    %v2040 = vmul.f32 %v2039, 1.442695
    %v2041 = vpow.pop %v2040
    %v2042 = vadd.f32 %v2041, 1.0
    %v2043 = vrcp.pop %v2042
    %v2044 = vmul.f32 1.0, %v2043
    %v2045 = vrot.slane %v332, 4
    %v2047 = vadd.f32 %v2045, %v2036
    %v2048 = vxor.u32 %v2047, 2147483648
    %v2049 = vmul.f32 %v2048, 1.442695
    %v2050 = vpow.pop %v2049
    %v2051 = vadd.f32 %v2050, 1.0
    %v2052 = vrcp.pop %v2051
    %v2053 = vmul.f32 1.0, %v2052
    %v2054 = vadd.f32 %v1991, %v583
    %2056 = vrot.lane.b32.xlu0 %v2054, 32
    %v2057 = vpop.permute.xlu0 %2056
    %v2059 = vmul.f32 %v2044, %v2057
    %2060 = vrot.lane.b32.xlu0 %v332, 96
    %v2061 = vpop.permute.xlu0 %2060
    %v2062 = vrot.slane %v2061, 4
    %2065 = vrot.lane.b32.xlu0 %v2059, 32
    %v2066 = vpop.permute.xlu0 %2065
    %v2068 = vadd.f32 %v2062, %v2066
    %v2069 = vtanh.pop %v2068
    %v2070 = vsub.f32 1.0, %v2053
    %v2071 = vmul.f32 %v2070, %v2069
    %v2072 = vmul.f32 %v2053, %v1844
    %v2073 = vadd.f32 %v2071, %v2072
    %v2074 = vmul.f32 %v801, %v2073
    %v2075 = vmul.f32 %v812, %v1844
    %v2076 = vadd.f32 %v2074, %v2075
    %v2077 = vmul.f32 %v801, %v2076
    %s2078 = scalar_lea.vmem [#allocation3], 4
    %2079 = vst.msk [vmem:[%s2078] sm:$0xf] %vm555, %v2077
    %v2081 = vsel %vm357, %v2030, 0
    %2083 = vmatprep.subr.mxu0 0.0
    %2084 = vmatpush1.msra.mxu0 %v347
    %2085 = vmatprep.subr.mxu0 0.0
    %2086 = vmatpush1.msra.mxu0 %v348
    %2087 = vmatprep.subr.mxu0 0.0
    %2088 = vmatpush1.msra.mxu0 %v349
    %2089 = vmatprep.subr.mxu0 0.0
    %2090 = vmatpush1.msra.mxu0 %v350
    %2091 = vmatprep.subr.mxu0 0.0
    %2092 = vmatpush1.msra.mxu0 0.0
    %2093 = vmatprep.subr.mxu0 0.0
    %2094 = vmatpush1.msra.mxu0 0.0
    %2095 = vmatprep.subr.mxu0 0.0
    %2096 = vmatpush1.msra.mxu0 0.0
    %2097 = vmatprep.subr.mxu0 0.0
    %2098 = vmatpush1.msra.mxu0 0.0
    %2099 = vmatprep.subr.mxu0 0.0
    %2100 = vmatpush1.msra.mxu0 0.0
    %2101 = vmatprep.subr.mxu0 0.0
    %2102 = vmatpush1.msra.mxu0 0.0
    %2103 = vmatprep.subr.mxu0 0.0
    %2104 = vmatpush1.msra.mxu0 0.0
    %2105 = vmatprep.subr.mxu0 0.0
    %2106 = vmatpush1.msra.mxu0 0.0
    %2107 = vmatprep.subr.mxu0 0.0
    %2108 = vmatpush1.msra.mxu0 0.0
    %2109 = vmatprep.subr.mxu0 0.0
    %2110 = vmatpush1.msra.mxu0 0.0
    %2111 = vmatprep.subr.mxu0 0.0
    %2112 = vmatpush1.msra.mxu0 0.0
    %2113 = vmatprep.subr.mxu0 0.0
    %2114 = vmatpush1.msra.mxu0 0.0
    %2115 = vmatprep.subr.mxu0 0.0
    %2116 = vmatpush1.msra.mxu0 0.0
    %2117 = vmatprep.subr.mxu0 0.0
    %2118 = vmatpush1.msra.mxu0 0.0
    %2119 = vmatprep.subr.mxu0 0.0
    %2120 = vmatpush1.msra.mxu0 0.0
    %2121 = vmatprep.subr.mxu0 0.0
    %2122 = vmatpush1.msra.mxu0 0.0
    %2123 = vmatprep.subr.mxu0 0.0
    %2124 = vmatpush1.msra.mxu0 0.0
    %2125 = vmatprep.subr.mxu0 0.0
    %2126 = vmatpush1.msra.mxu0 0.0
    %2127 = vmatprep.subr.mxu0 0.0
    %2128 = vmatpush1.msra.mxu0 0.0
    %2129 = vmatprep.subr.mxu0 0.0
    %2130 = vmatpush1.msra.mxu0 0.0
    %2131 = vmatprep.subr.mxu0 0.0
    %2132 = vmatpush1.msra.mxu0 0.0
    %2133 = vmatprep.subr.mxu0 0.0
    %2134 = vmatpush1.msra.mxu0 0.0
    %2135 = vmatprep.subr.mxu0 0.0
    %2136 = vmatpush1.msra.mxu0 0.0
    %2137 = vmatprep.subr.mxu0 0.0
    %2138 = vmatpush1.msra.mxu0 0.0
    %2139 = vmatprep.subr.mxu0 0.0
    %2140 = vmatpush1.msra.mxu0 0.0
    %2141 = vmatprep.subr.mxu0 0.0
    %2142 = vmatpush1.msra.mxu0 0.0
    %2143 = vmatprep.subr.mxu0 0.0
    %2144 = vmatpush1.msra.mxu0 0.0
    %2145 = vmatprep.subr.mxu0 0.0
    %2146 = vmatpush1.msra.mxu0 0.0
    %2147 = vmatprep.mubr.f32.mxu0 0.0
    %2148 = vmatmul.mubr.f32.gmra.mrb[0].mxu0 %v2081
    %v2149 = vpop.f32.mrb[0].mxu0
    %v2150 = vadd.f32 0.0, %v2149
    %v2151 = vpop.f32.mrb[0].mxu0
    %2152 = vdwg.mxu0
    %v2154 = vsel %vm357, %v2076, 0
    %2156 = vmatprep.subr.mxu0 0.0
    %2157 = vmatpush1.msra.mxu0 %v351
    %2158 = vmatprep.subr.mxu0 0.0
    %2159 = vmatpush1.msra.mxu0 %v352
    %2160 = vmatprep.subr.mxu0 0.0
    %2161 = vmatpush1.msra.mxu0 %v353
    %2162 = vmatprep.subr.mxu0 0.0
    %2163 = vmatpush1.msra.mxu0 %v354
    %2164 = vmatprep.subr.mxu0 0.0
    %2165 = vmatpush1.msra.mxu0 0.0
    %2166 = vmatprep.subr.mxu0 0.0
    %2167 = vmatpush1.msra.mxu0 0.0
    %2168 = vmatprep.subr.mxu0 0.0
    %2169 = vmatpush1.msra.mxu0 0.0
    %2170 = vmatprep.subr.mxu0 0.0
    %2171 = vmatpush1.msra.mxu0 0.0
    %2172 = vmatprep.subr.mxu0 0.0
    %2173 = vmatpush1.msra.mxu0 0.0
    %2174 = vmatprep.subr.mxu0 0.0
    %2175 = vmatpush1.msra.mxu0 0.0
    %2176 = vmatprep.subr.mxu0 0.0
    %2177 = vmatpush1.msra.mxu0 0.0
    %2178 = vmatprep.subr.mxu0 0.0
    %2179 = vmatpush1.msra.mxu0 0.0
    %2180 = vmatprep.subr.mxu0 0.0
    %2181 = vmatpush1.msra.mxu0 0.0
    %2182 = vmatprep.subr.mxu0 0.0
    %2183 = vmatpush1.msra.mxu0 0.0
    %2184 = vmatprep.subr.mxu0 0.0
    %2185 = vmatpush1.msra.mxu0 0.0
    %2186 = vmatprep.subr.mxu0 0.0
    %2187 = vmatpush1.msra.mxu0 0.0
    %2188 = vmatprep.subr.mxu0 0.0
    %2189 = vmatpush1.msra.mxu0 0.0
    %2190 = vmatprep.subr.mxu0 0.0
    %2191 = vmatpush1.msra.mxu0 0.0
    %2192 = vmatprep.subr.mxu0 0.0
    %2193 = vmatpush1.msra.mxu0 0.0
    %2194 = vmatprep.subr.mxu0 0.0
    %2195 = vmatpush1.msra.mxu0 0.0
    %2196 = vmatprep.subr.mxu0 0.0
    %2197 = vmatpush1.msra.mxu0 0.0
    %2198 = vmatprep.subr.mxu0 0.0
    %2199 = vmatpush1.msra.mxu0 0.0
    %2200 = vmatprep.subr.mxu0 0.0
    %2201 = vmatpush1.msra.mxu0 0.0
    %2202 = vmatprep.subr.mxu0 0.0
    %2203 = vmatpush1.msra.mxu0 0.0
    %2204 = vmatprep.subr.mxu0 0.0
    %2205 = vmatpush1.msra.mxu0 0.0
    %2206 = vmatprep.subr.mxu0 0.0
    %2207 = vmatpush1.msra.mxu0 0.0
    %2208 = vmatprep.subr.mxu0 0.0
    %2209 = vmatpush1.msra.mxu0 0.0
    %2210 = vmatprep.subr.mxu0 0.0
    %2211 = vmatpush1.msra.mxu0 0.0
    %2212 = vmatprep.subr.mxu0 0.0
    %2213 = vmatpush1.msra.mxu0 0.0
    %2214 = vmatprep.subr.mxu0 0.0
    %2215 = vmatpush1.msra.mxu0 0.0
    %2216 = vmatprep.subr.mxu0 0.0
    %2217 = vmatpush1.msra.mxu0 0.0
    %2218 = vmatprep.subr.mxu0 0.0
    %2219 = vmatpush1.msra.mxu0 0.0
    %2220 = vmatprep.mubr.f32.mxu0 0.0
    %2221 = vmatmul.mubr.f32.gmra.mrb[0].mxu0 %v2154
    %v2222 = vpop.f32.mrb[0].mxu0
    %v2223 = vadd.f32 0.0, %v2222
    %v2224 = vpop.f32.mrb[0].mxu0
    %2225 = vdwg.mxu0
    %v2226 = vadd.f32 %v338, %v2150
    %v2227 = vxor.u32 %v2226, 2147483648
    %v2228 = vmul.f32 %v2227, 1.442695
    %v2229 = vpow.pop %v2228
    %v2230 = vadd.f32 %v2229, 1.0
    %v2231 = vrcp.pop %v2230
    %v2232 = vmul.f32 1.0, %v2231
    %v2233 = vadd.f32 %v2150, %v514
    %2235 = vrot.lane.b32.xlu0 %v2233, 64
    %v2236 = vpop.permute.xlu0 %2235
    %v2238 = vmul.f32 %v2232, %v2236
    %2240 = vrot.lane.b32.xlu0 %v2238, 64
    %v2241 = vpop.permute.xlu0 %2240
    %v2243 = vadd.f32 %v338, %v2241
    %v2244 = vtanh.pop %v2243
    %v2245 = vsub.f32 1.0, %v2232
    %2247 = vrot.lane.b32.xlu0 %v2244, 96
    %v2248 = vpop.permute.xlu0 %2247
    %v2250 = vmul.f32 %v2245, %v2248
    %2251 = vrot.lane.b32.xlu0 %v2030, 32
    %v2252 = vpop.permute.xlu0 %2251
    %v2254 = vmul.f32 %v2232, %v2252
    %v2255 = vadd.f32 %v2250, %v2254
    %2257 = vrot.lane.b32.xlu0 %v2255, 96
    %v2258 = vpop.permute.xlu0 %2257
    %v2260 = vmul.f32 %v608, %v2258
    %v2261 = vmul.f32 %v615, %v2030
    %v2262 = vadd.f32 %v2260, %v2261
    %v2263 = vmul.f32 %v608, %v2262
    %s2264 = scalar_lea.vmem [#allocation2], 28
    %2265 = vst.msk [vmem:[%s2264] sm:$0xf] %vm555, %v2263
    %2267 = vrot.lane.b32.xlu0 %v2223, 96
    %v2268 = vpop.permute.xlu0 %2267
    %v2270 = vadd.f32 %v331, %v2268
    %v2271 = vxor.u32 %v2270, 2147483648
    %v2272 = vmul.f32 %v2271, 1.442695
    %v2273 = vpow.pop %v2272
    %v2274 = vadd.f32 %v2273, 1.0
    %v2275 = vrcp.pop %v2274
    %v2276 = vmul.f32 1.0, %v2275
    %v2277 = vrot.slane %v331, 4
    %v2279 = vadd.f32 %v2277, %v2268
    %v2280 = vxor.u32 %v2279, 2147483648
    %v2281 = vmul.f32 %v2280, 1.442695
    %v2282 = vpow.pop %v2281
    %v2283 = vadd.f32 %v2282, 1.0
    %v2284 = vrcp.pop %v2283
    %v2285 = vmul.f32 1.0, %v2284
    %v2286 = vadd.f32 %v2223, %v583
    %2288 = vrot.lane.b32.xlu0 %v2286, 32
    %v2289 = vpop.permute.xlu0 %2288
    %v2291 = vmul.f32 %v2276, %v2289
    %2292 = vrot.lane.b32.xlu0 %v331, 96
    %v2293 = vpop.permute.xlu0 %2292
    %v2294 = vrot.slane %v2293, 4
    %2297 = vrot.lane.b32.xlu0 %v2291, 32
    %v2298 = vpop.permute.xlu0 %2297
    %v2300 = vadd.f32 %v2294, %v2298
    %v2301 = vtanh.pop %v2300
    %v2302 = vsub.f32 1.0, %v2285
    %v2303 = vmul.f32 %v2302, %v2301
    %v2304 = vmul.f32 %v2285, %v2076
    %v2305 = vadd.f32 %v2303, %v2304
    %v2306 = vmul.f32 %v539, %v2305
    %v2307 = vmul.f32 %v550, %v2076
    %v2308 = vadd.f32 %v2306, %v2307
    %v2309 = vmul.f32 %v539, %v2308
    %2310 = vst.msk [vmem:[#allocation3] sm:$0xf] %vm555, %v2309
    %v2311 = vld [vmem:[#allocation2] sm:$0xf]
    %v2312 = vld [vmem:[#allocation2 + $0x4] sm:$0xf]
    %v2313 = vld [vmem:[#allocation2 + $0x8] sm:$0xf]
    %v2314 = vld [vmem:[#allocation2 + $0xc] sm:$0xf]
    %v2315 = vld [vmem:[#allocation2 + $0x10] sm:$0xf]
    %v2316 = vld [vmem:[#allocation2 + $0x14] sm:$0xf]
    %v2317 = vld [vmem:[#allocation2 + $0x18] sm:$0xf]
    %v2318 = vld [vmem:[#allocation2 + $0x1c] sm:$0xf]
    %v2319 = vld [vmem:[#allocation3] sm:$0xf]
    %v2320 = vld [vmem:[#allocation3 + $0x4] sm:$0xf]
    %v2321 = vld [vmem:[#allocation3 + $0x8] sm:$0xf]
    %v2322 = vld [vmem:[#allocation3 + $0xc] sm:$0xf]
    %v2323 = vld [vmem:[#allocation3 + $0x10] sm:$0xf]
    %v2324 = vld [vmem:[#allocation3 + $0x14] sm:$0xf]
    %v2325 = vld [vmem:[#allocation3 + $0x18] sm:$0xf]
    %v2326 = vld [vmem:[#allocation3 + $0x1c] sm:$0xf]
    %v2327 = vld [vmem:[%s8] sm:$0xff]
    %v2328 = vld [vmem:[%s8 + $0x8] sm:$0xff]
    %v2329 = vld [vmem:[%s8 + $0x10] sm:$0xff]
    %v2330 = vld [vmem:[%s8 + $0x18] sm:$0xff]
    %v2331 = vld [vmem:[%s8 + $0x20] sm:$0xff]
    %v2332 = vld [vmem:[%s8 + $0x28] sm:$0xff]
    %v2333 = vld [vmem:[%s8 + $0x30] sm:$0xff]
    %v2334 = vld [vmem:[%s8 + $0x38] sm:$0xff]
    %v2335 = vld [vmem:[%s8 + $0x40] sm:$0xff]
    %v2336 = vld [vmem:[%s8 + $0x48] sm:$0xff]
    %v2337 = vld [vmem:[%s8 + $0x50] sm:$0xff]
    %v2338 = vld [vmem:[%s8 + $0x58] sm:$0xff]
    %v2339 = vld [vmem:[%s8 + $0x60] sm:$0xff]
    %v2340 = vld [vmem:[%s8 + $0x68] sm:$0xff]
    %v2341 = vld [vmem:[%s8 + $0x70] sm:$0xff]
    %v2342 = vld [vmem:[%s8 + $0x78] sm:$0xff]
    %v2343 = vld [vmem:[#allocation13] sm:$0x3]
    %v2352 = vcombine.low %v2319, %v2320
    %v2353 = vcombine.low %v2321, %v2322
    %v2354 = vcombine.low %v2323, %v2324
    %v2355 = vcombine.low %v2325, %v2326
    %v2356 = vsel %vm357, %v2352, 0
    %v2358 = vsel %vm357, %v2353, 0
    %v2360 = vsel %vm357, %v2354, 0
    %v2362 = vsel %vm357, %v2355, 0
    %2364 = vmatprep.subr.mxu0 %v2336
    %2365 = vmatpush1.msra.mxu0 %v2335
    %2366 = vmatprep.subr.mxu0 %v2338
    %2367 = vmatpush1.msra.mxu0 %v2337
    %2368 = vmatprep.subr.mxu0 %v2340
    %2369 = vmatpush1.msra.mxu0 %v2339
    %2370 = vmatprep.subr.mxu0 %v2342
    %2371 = vmatpush1.msra.mxu0 %v2341
    %2372 = vmatprep.subr.mxu0 0.0
    %2373 = vmatpush1.msra.mxu0 0.0
    %2374 = vmatprep.subr.mxu0 0.0
    %2375 = vmatpush1.msra.mxu0 0.0
    %2376 = vmatprep.subr.mxu0 0.0
    %2377 = vmatpush1.msra.mxu0 0.0
    %2378 = vmatprep.subr.mxu0 0.0
    %2379 = vmatpush1.msra.mxu0 0.0
    %2380 = vmatprep.subr.mxu0 0.0
    %2381 = vmatpush1.msra.mxu0 0.0
    %2382 = vmatprep.subr.mxu0 0.0
    %2383 = vmatpush1.msra.mxu0 0.0
    %2384 = vmatprep.subr.mxu0 0.0
    %2385 = vmatpush1.msra.mxu0 0.0
    %2386 = vmatprep.subr.mxu0 0.0
    %2387 = vmatpush1.msra.mxu0 0.0
    %2388 = vmatprep.subr.mxu0 0.0
    %2389 = vmatpush1.msra.mxu0 0.0
    %2390 = vmatprep.subr.mxu0 0.0
    %2391 = vmatpush1.msra.mxu0 0.0
    %2392 = vmatprep.subr.mxu0 0.0
    %2393 = vmatpush1.msra.mxu0 0.0
    %2394 = vmatprep.subr.mxu0 0.0
    %2395 = vmatpush1.msra.mxu0 0.0
    %2396 = vmatprep.subr.mxu0 0.0
    %2397 = vmatpush1.msra.mxu0 0.0
    %2398 = vmatprep.subr.mxu0 0.0
    %2399 = vmatpush1.msra.mxu0 0.0
    %2400 = vmatprep.subr.mxu0 0.0
    %2401 = vmatpush1.msra.mxu0 0.0
    %2402 = vmatprep.subr.mxu0 0.0
    %2403 = vmatpush1.msra.mxu0 0.0
    %2404 = vmatprep.subr.mxu0 0.0
    %2405 = vmatpush1.msra.mxu0 0.0
    %2406 = vmatprep.subr.mxu0 0.0
    %2407 = vmatpush1.msra.mxu0 0.0
    %2408 = vmatprep.subr.mxu0 0.0
    %2409 = vmatpush1.msra.mxu0 0.0
    %2410 = vmatprep.subr.mxu0 0.0
    %2411 = vmatpush1.msra.mxu0 0.0
    %2412 = vmatprep.subr.mxu0 0.0
    %2413 = vmatpush1.msra.mxu0 0.0
    %2414 = vmatprep.subr.mxu0 0.0
    %2415 = vmatpush1.msra.mxu0 0.0
    %2416 = vmatprep.subr.mxu0 0.0
    %2417 = vmatpush1.msra.mxu0 0.0
    %2418 = vmatprep.subr.mxu0 0.0
    %2419 = vmatpush1.msra.mxu0 0.0
    %2420 = vmatprep.subr.mxu0 0.0
    %2421 = vmatpush1.msra.mxu0 0.0
    %2422 = vmatprep.subr.mxu0 0.0
    %2423 = vmatpush1.msra.mxu0 0.0
    %2424 = vmatprep.subr.mxu0 0.0
    %2425 = vmatpush1.msra.mxu0 0.0
    %2426 = vmatprep.subr.mxu0 0.0
    %2427 = vmatpush1.msra.mxu0 0.0
    %2428 = vmatprep.mubr.f32.mxu0 0.0
    %2429 = vmatmul.mubr.f32.gmra.mrb[0].mxu0 %v2356
    %v2430 = vpop.f32.mrb[0].mxu0
    %v2431 = vadd.f32 0.0, %v2430
    %v2432 = vpop.f32.mrb[0].mxu0
    %v2433 = vadd.f32 0.0, %v2432
    %2434 = vmatprep.mubr.f32.mxu0 0.0
    %2435 = vmatmul.mubr.f32.gmra.mrb[0].mxu0 %v2358
    %v2436 = vpop.f32.mrb[0].mxu0
    %v2437 = vadd.f32 0.0, %v2436
    %v2438 = vpop.f32.mrb[0].mxu0
    %v2439 = vadd.f32 0.0, %v2438
    %2440 = vmatprep.mubr.f32.mxu0 0.0
    %2441 = vmatmul.mubr.f32.gmra.mrb[0].mxu0 %v2360
    %v2442 = vpop.f32.mrb[0].mxu0
    %v2443 = vadd.f32 0.0, %v2442
    %v2444 = vpop.f32.mrb[0].mxu0
    %v2445 = vadd.f32 0.0, %v2444
    %2446 = vmatprep.mubr.f32.mxu0 0.0
    %2447 = vmatmul.mubr.f32.gmra.mrb[0].mxu0 %v2362
    %v2448 = vpop.f32.mrb[0].mxu0
    %v2449 = vadd.f32 0.0, %v2448
    %v2450 = vpop.f32.mrb[0].mxu0
    %v2451 = vadd.f32 0.0, %v2450
    %2452 = vdwg.mxu0
    %v2461 = vcombine.low %v2311, %v2312
    %v2462 = vcombine.low %v2313, %v2314
    %v2463 = vcombine.low %v2315, %v2316
    %v2464 = vcombine.low %v2317, %v2318
    %v2465 = vsel %vm357, %v2461, 0
    %v2467 = vsel %vm357, %v2462, 0
    %v2469 = vsel %vm357, %v2463, 0
    %v2471 = vsel %vm357, %v2464, 0
    %2473 = vmatprep.subr.mxu0 %v2328
    %2474 = vmatpush1.msra.mxu0 %v2327
    %2475 = vmatprep.subr.mxu0 %v2330
    %2476 = vmatpush1.msra.mxu0 %v2329
    %2477 = vmatprep.subr.mxu0 %v2332
    %2478 = vmatpush1.msra.mxu0 %v2331
    %2479 = vmatprep.subr.mxu0 %v2334
    %2480 = vmatpush1.msra.mxu0 %v2333
    %2481 = vmatprep.subr.mxu0 0.0
    %2482 = vmatpush1.msra.mxu0 0.0
    %2483 = vmatprep.subr.mxu0 0.0
    %2484 = vmatpush1.msra.mxu0 0.0
    %2485 = vmatprep.subr.mxu0 0.0
    %2486 = vmatpush1.msra.mxu0 0.0
    %2487 = vmatprep.subr.mxu0 0.0
    %2488 = vmatpush1.msra.mxu0 0.0
    %2489 = vmatprep.subr.mxu0 0.0
    %2490 = vmatpush1.msra.mxu0 0.0
    %2491 = vmatprep.subr.mxu0 0.0
    %2492 = vmatpush1.msra.mxu0 0.0
    %2493 = vmatprep.subr.mxu0 0.0
    %2494 = vmatpush1.msra.mxu0 0.0
    %2495 = vmatprep.subr.mxu0 0.0
    %2496 = vmatpush1.msra.mxu0 0.0
    %2497 = vmatprep.subr.mxu0 0.0
    %2498 = vmatpush1.msra.mxu0 0.0
    %2499 = vmatprep.subr.mxu0 0.0
    %2500 = vmatpush1.msra.mxu0 0.0
    %2501 = vmatprep.subr.mxu0 0.0
    %2502 = vmatpush1.msra.mxu0 0.0
    %2503 = vmatprep.subr.mxu0 0.0
    %2504 = vmatpush1.msra.mxu0 0.0
    %2505 = vmatprep.subr.mxu0 0.0
    %2506 = vmatpush1.msra.mxu0 0.0
    %2507 = vmatprep.subr.mxu0 0.0
    %2508 = vmatpush1.msra.mxu0 0.0
    %2509 = vmatprep.subr.mxu0 0.0
    %2510 = vmatpush1.msra.mxu0 0.0
    %2511 = vmatprep.subr.mxu0 0.0
    %2512 = vmatpush1.msra.mxu0 0.0
    %2513 = vmatprep.subr.mxu0 0.0
    %2514 = vmatpush1.msra.mxu0 0.0
    %2515 = vmatprep.subr.mxu0 0.0
    %2516 = vmatpush1.msra.mxu0 0.0
    %2517 = vmatprep.subr.mxu0 0.0
    %2518 = vmatpush1.msra.mxu0 0.0
    %2519 = vmatprep.subr.mxu0 0.0
    %2520 = vmatpush1.msra.mxu0 0.0
    %2521 = vmatprep.subr.mxu0 0.0
    %2522 = vmatpush1.msra.mxu0 0.0
    %2523 = vmatprep.subr.mxu0 0.0
    %2524 = vmatpush1.msra.mxu0 0.0
    %2525 = vmatprep.subr.mxu0 0.0
    %2526 = vmatpush1.msra.mxu0 0.0
    %2527 = vmatprep.subr.mxu0 0.0
    %2528 = vmatpush1.msra.mxu0 0.0
    %2529 = vmatprep.subr.mxu0 0.0
    %2530 = vmatpush1.msra.mxu0 0.0
    %2531 = vmatprep.subr.mxu0 0.0
    %2532 = vmatpush1.msra.mxu0 0.0
    %2533 = vmatprep.subr.mxu0 0.0
    %2534 = vmatpush1.msra.mxu0 0.0
    %2535 = vmatprep.subr.mxu0 0.0
    %2536 = vmatpush1.msra.mxu0 0.0
    %2537 = vmatprep.mubr.f32.mxu0 0.0
    %2538 = vmatmul.mubr.f32.gmra.mrb[0].mxu0 %v2465
    %v2539 = vpop.f32.mrb[0].mxu0
    %v2540 = vadd.f32 %v2431, %v2539
    %v2541 = vpop.f32.mrb[0].mxu0
    %v2542 = vadd.f32 %v2433, %v2541
    %2543 = vmatprep.mubr.f32.mxu0 0.0
    %2544 = vmatmul.mubr.f32.gmra.mrb[0].mxu0 %v2467
    %v2545 = vpop.f32.mrb[0].mxu0
    %v2546 = vadd.f32 %v2437, %v2545
    %v2547 = vpop.f32.mrb[0].mxu0
    %v2548 = vadd.f32 %v2439, %v2547
    %2549 = vmatprep.mubr.f32.mxu0 0.0
    %2550 = vmatmul.mubr.f32.gmra.mrb[0].mxu0 %v2469
    %v2551 = vpop.f32.mrb[0].mxu0
    %v2552 = vadd.f32 %v2443, %v2551
    %v2553 = vpop.f32.mrb[0].mxu0
    %v2554 = vadd.f32 %v2445, %v2553
    %2555 = vmatprep.mubr.f32.mxu0 0.0
    %2556 = vmatmul.mubr.f32.gmra.mrb[0].mxu0 %v2471
    %v2557 = vpop.f32.mrb[0].mxu0
    %v2558 = vadd.f32 %v2449, %v2557
    %v2559 = vpop.f32.mrb[0].mxu0
    %v2560 = vadd.f32 %v2451, %v2559
    %2561 = vdwg.mxu0
    %v2563 = vlaneseq
    %v2564 = vshrl.u32 %v2563, 7
    %v2565 = vsub.s32 0, %v2564
    %v2566 = vrot.slane %v2343, %v2565
    %v2567 = vlaneseq
    %v2568 = vshrl.u32 %v2567, 7
    %v2569 = vsub.s32 1, %v2568
    %v2570 = vrot.slane %v2343, %v2569
    %v2573 = vadd.f32 %v2540, %v2566
    %v2574 = vadd.f32 %v2542, %v2570
    %v2575 = vadd.f32 %v2546, %v2566
    %v2576 = vadd.f32 %v2548, %v2570
    %v2577 = vadd.f32 %v2552, %v2566
    %v2578 = vadd.f32 %v2554, %v2570
    %v2579 = vadd.f32 %v2558, %v2566
    %v2580 = vadd.f32 %v2560, %v2570
    %v2589 = vcombine.low %v2573, %v2574
    %v2590 = vcombine.high %v2573, %v2574
    %v2591 = vcombine.low %v2575, %v2576
    %v2592 = vcombine.high %v2575, %v2576
    %v2593 = vcombine.low %v2577, %v2578
    %v2594 = vcombine.high %v2577, %v2578
    %v2595 = vcombine.low %v2579, %v2580
    %v2596 = vcombine.high %v2579, %v2580
    %v2605 = vld [vmem:[#allocation15] sm:$0xff]
    %v2606 = vld [vmem:[#allocation15 + $0x8] sm:$0xff]
    %v2607 = vld [vmem:[#allocation15 + $0x10] sm:$0xff]
    %v2608 = vld [vmem:[#allocation15 + $0x18] sm:$0xff]
    %v2609 = vld [vmem:[#allocation16] sm:$0xff]
    %v2610 = vld [vmem:[#allocation16 + $0x8] sm:$0xff]
    %v2611 = vld [vmem:[#allocation16 + $0x10] sm:$0xff]
    %v2612 = vld [vmem:[#allocation16 + $0x18] sm:$0xff]
    %v2613 = vld [vmem:[#allocation18] sm:$0x1]
    %v2614 = vld [vmem:[#allocation19] sm:$0x1]
    %2615 = vmatprep.subr.mxu0 0.0
    %2616 = vmatpush1.msra.mxu0 %v2605
    %2617 = vmatprep.subr.mxu0 0.0
    %2618 = vmatpush1.msra.mxu0 %v2606
    %2619 = vmatprep.subr.mxu0 0.0
    %2620 = vmatpush1.msra.mxu0 %v2607
    %2621 = vmatprep.subr.mxu0 0.0
    %2622 = vmatpush1.msra.mxu0 %v2608
    %2623 = vmatprep.subr.mxu0 0.0
    %2624 = vmatpush1.msra.mxu0 0.0
    %2625 = vmatprep.subr.mxu0 0.0
    %2626 = vmatpush1.msra.mxu0 0.0
    %2627 = vmatprep.subr.mxu0 0.0
    %2628 = vmatpush1.msra.mxu0 0.0
    %2629 = vmatprep.subr.mxu0 0.0
    %2630 = vmatpush1.msra.mxu0 0.0
    %2631 = vmatprep.subr.mxu0 0.0
    %2632 = vmatpush1.msra.mxu0 0.0
    %2633 = vmatprep.subr.mxu0 0.0
    %2634 = vmatpush1.msra.mxu0 0.0
    %2635 = vmatprep.subr.mxu0 0.0
    %2636 = vmatpush1.msra.mxu0 0.0
    %2637 = vmatprep.subr.mxu0 0.0
    %2638 = vmatpush1.msra.mxu0 0.0
    %2639 = vmatprep.subr.mxu0 0.0
    %2640 = vmatpush1.msra.mxu0 0.0
    %2641 = vmatprep.subr.mxu0 0.0
    %2642 = vmatpush1.msra.mxu0 0.0
    %2643 = vmatprep.subr.mxu0 0.0
    %2644 = vmatpush1.msra.mxu0 0.0
    %2645 = vmatprep.subr.mxu0 0.0
    %2646 = vmatpush1.msra.mxu0 0.0
    %2647 = vmatprep.subr.mxu0 0.0
    %2648 = vmatpush1.msra.mxu0 0.0
    %2649 = vmatprep.subr.mxu0 0.0
    %2650 = vmatpush1.msra.mxu0 0.0
    %2651 = vmatprep.subr.mxu0 0.0
    %2652 = vmatpush1.msra.mxu0 0.0
    %2653 = vmatprep.subr.mxu0 0.0
    %2654 = vmatpush1.msra.mxu0 0.0
    %2655 = vmatprep.subr.mxu0 0.0
    %2656 = vmatpush1.msra.mxu0 0.0
    %2657 = vmatprep.subr.mxu0 0.0
    %2658 = vmatpush1.msra.mxu0 0.0
    %2659 = vmatprep.subr.mxu0 0.0
    %2660 = vmatpush1.msra.mxu0 0.0
    %2661 = vmatprep.subr.mxu0 0.0
    %2662 = vmatpush1.msra.mxu0 0.0
    %2663 = vmatprep.subr.mxu0 0.0
    %2664 = vmatpush1.msra.mxu0 0.0
    %2665 = vmatprep.subr.mxu0 0.0
    %2666 = vmatpush1.msra.mxu0 0.0
    %2667 = vmatprep.subr.mxu0 0.0
    %2668 = vmatpush1.msra.mxu0 0.0
    %2669 = vmatprep.subr.mxu0 0.0
    %2670 = vmatpush1.msra.mxu0 0.0
    %2671 = vmatprep.subr.mxu0 0.0
    %2672 = vmatpush1.msra.mxu0 0.0
    %2673 = vmatprep.subr.mxu0 0.0
    %2674 = vmatpush1.msra.mxu0 0.0
    %2675 = vmatprep.subr.mxu0 0.0
    %2676 = vmatpush1.msra.mxu0 0.0
    %2677 = vmatprep.subr.mxu0 0.0
    %2678 = vmatpush1.msra.mxu0 0.0
    %2679 = vmatprep.mubr.f32.mxu0 0.0
    %2680 = vmatmul.mubr.f32.gmra.mrb[0].mxu0 %v359
    %v2681 = vpop.f32.mrb[0].mxu0
    %v2682 = vadd.f32 0.0, %v2681
    %v2683 = vpop.f32.mrb[0].mxu0
    %2684 = vdwg.mxu0
    %2685 = vmatprep.subr.mxu0 0.0
    %2686 = vmatpush1.msra.mxu0 %v2609
    %2687 = vmatprep.subr.mxu0 0.0
    %2688 = vmatpush1.msra.mxu0 %v2610
    %2689 = vmatprep.subr.mxu0 0.0
    %2690 = vmatpush1.msra.mxu0 %v2611
    %2691 = vmatprep.subr.mxu0 0.0
    %2692 = vmatpush1.msra.mxu0 %v2612
    %2693 = vmatprep.subr.mxu0 0.0
    %2694 = vmatpush1.msra.mxu0 0.0
    %2695 = vmatprep.subr.mxu0 0.0
    %2696 = vmatpush1.msra.mxu0 0.0
    %2697 = vmatprep.subr.mxu0 0.0
    %2698 = vmatpush1.msra.mxu0 0.0
    %2699 = vmatprep.subr.mxu0 0.0
    %2700 = vmatpush1.msra.mxu0 0.0
    %2701 = vmatprep.subr.mxu0 0.0
    %2702 = vmatpush1.msra.mxu0 0.0
    %2703 = vmatprep.subr.mxu0 0.0
    %2704 = vmatpush1.msra.mxu0 0.0
    %2705 = vmatprep.subr.mxu0 0.0
    %2706 = vmatpush1.msra.mxu0 0.0
    %2707 = vmatprep.subr.mxu0 0.0
    %2708 = vmatpush1.msra.mxu0 0.0
    %2709 = vmatprep.subr.mxu0 0.0
    %2710 = vmatpush1.msra.mxu0 0.0
    %2711 = vmatprep.subr.mxu0 0.0
    %2712 = vmatpush1.msra.mxu0 0.0
    %2713 = vmatprep.subr.mxu0 0.0
    %2714 = vmatpush1.msra.mxu0 0.0
    %2715 = vmatprep.subr.mxu0 0.0
    %2716 = vmatpush1.msra.mxu0 0.0
    %2717 = vmatprep.subr.mxu0 0.0
    %2718 = vmatpush1.msra.mxu0 0.0
    %2719 = vmatprep.subr.mxu0 0.0
    %2720 = vmatpush1.msra.mxu0 0.0
    %2721 = vmatprep.subr.mxu0 0.0
    %2722 = vmatpush1.msra.mxu0 0.0
    %2723 = vmatprep.subr.mxu0 0.0
    %2724 = vmatpush1.msra.mxu0 0.0
    %2725 = vmatprep.subr.mxu0 0.0
    %2726 = vmatpush1.msra.mxu0 0.0
    %2727 = vmatprep.subr.mxu0 0.0
    %2728 = vmatpush1.msra.mxu0 0.0
    %2729 = vmatprep.subr.mxu0 0.0
    %2730 = vmatpush1.msra.mxu0 0.0
    %2731 = vmatprep.subr.mxu0 0.0
    %2732 = vmatpush1.msra.mxu0 0.0
    %2733 = vmatprep.subr.mxu0 0.0
    %2734 = vmatpush1.msra.mxu0 0.0
    %2735 = vmatprep.subr.mxu0 0.0
    %2736 = vmatpush1.msra.mxu0 0.0
    %2737 = vmatprep.subr.mxu0 0.0
    %2738 = vmatpush1.msra.mxu0 0.0
    %2739 = vmatprep.subr.mxu0 0.0
    %2740 = vmatpush1.msra.mxu0 0.0
    %2741 = vmatprep.subr.mxu0 0.0
    %2742 = vmatpush1.msra.mxu0 0.0
    %2743 = vmatprep.subr.mxu0 0.0
    %2744 = vmatpush1.msra.mxu0 0.0
    %2745 = vmatprep.subr.mxu0 0.0
    %2746 = vmatpush1.msra.mxu0 0.0
    %2747 = vmatprep.subr.mxu0 0.0
    %2748 = vmatpush1.msra.mxu0 0.0
    %2749 = vmatprep.mubr.f32.mxu0 0.0
    %2750 = vmatmul.mubr.f32.gmra.mrb[0].mxu0 %v359
    %v2751 = vpop.f32.mrb[0].mxu0
    %v2752 = vadd.f32 0.0, %v2751
    %v2753 = vpop.f32.mrb[0].mxu0
    %2754 = vdwg.mxu0
    %v2755 = vadd.f32 %v2589, %v2682
    %v2756 = vxor.u32 %v2755, 2147483648
    %v2757 = vmul.f32 %v2756, 1.442695
    %v2758 = vpow.pop %v2757
    %v2759 = vadd.f32 %v2758, 1.0
    %v2760 = vrcp.pop %v2759
    %v2761 = vmul.f32 1.0, %v2760
    %v2763 = vlaneseq
    %v2764 = vshrl.u32 %v2763, 7
    %v2765 = vsub.s32 0, %v2764
    %v2766 = vrot.slane %v2613, %v2765
    %2767 = vrot.lane.b32.xlu0 %v2766, 64
    %v2768 = vpop.permute.xlu0 %2767
    %v2770 = vadd.f32 %v2682, %v2768
    %2772 = vrot.lane.b32.xlu0 %v2770, 64
    %v2773 = vpop.permute.xlu0 %2772
    %v2775 = vmul.f32 %v2761, %v2773
    %2777 = vrot.lane.b32.xlu0 %v2775, 64
    %v2778 = vpop.permute.xlu0 %2777
    %v2780 = vadd.f32 %v2589, %v2778
    %v2781 = vtanh.pop %v2780
    %v2782 = vsub.f32 1.0, %v2761
    %2784 = vrot.lane.b32.xlu0 %v2781, 96
    %v2785 = vpop.permute.xlu0 %2784
    %v2787 = vmul.f32 %v2782, %v2785
    %v2788 = vmul.f32 %v2761, 0.0
    %v2789 = vadd.f32 %v2787, %v2788
    %2791 = vrot.lane.b32.xlu0 %v2789, 96
    %v2792 = vpop.permute.xlu0 %2791
    %v2794 = vmul.f32 %v539, %v2792
    %v2795 = vadd.f32 %v2794, %v552
    %v2796 = vmul.f32 %v539, %v2795
    %2797 = vst.msk [vmem:[#allocation4] sm:$0xf] %vm555, %v2796
    %2799 = vrot.lane.b32.xlu0 %v2752, 96
    %v2800 = vpop.permute.xlu0 %2799
    %v2802 = vadd.f32 %v2596, %v2800
    %v2803 = vxor.u32 %v2802, 2147483648
    %v2804 = vmul.f32 %v2803, 1.442695
    %v2805 = vpow.pop %v2804
    %v2806 = vadd.f32 %v2805, 1.0
    %v2807 = vrcp.pop %v2806
    %v2808 = vmul.f32 1.0, %v2807
    %v2809 = vrot.slane %v2596, 4
    %v2811 = vadd.f32 %v2809, %v2800
    %v2812 = vxor.u32 %v2811, 2147483648
    %v2813 = vmul.f32 %v2812, 1.442695
    %v2814 = vpow.pop %v2813
    %v2815 = vadd.f32 %v2814, 1.0
    %v2816 = vrcp.pop %v2815
    %v2817 = vmul.f32 1.0, %v2816
    %v2819 = vlaneseq
    %v2820 = vshrl.u32 %v2819, 7
    %v2821 = vsub.s32 0, %v2820
    %v2822 = vrot.slane %v2614, %v2821
    %2823 = vrot.lane.b32.xlu0 %v2822, 64
    %v2824 = vpop.permute.xlu0 %2823
    %v2826 = vadd.f32 %v2752, %v2824
    %2828 = vrot.lane.b32.xlu0 %v2826, 32
    %v2829 = vpop.permute.xlu0 %2828
    %v2831 = vmul.f32 %v2808, %v2829
    %2832 = vrot.lane.b32.xlu0 %v2596, 96
    %v2833 = vpop.permute.xlu0 %2832
    %v2834 = vrot.slane %v2833, 4
    %2837 = vrot.lane.b32.xlu0 %v2831, 32
    %v2838 = vpop.permute.xlu0 %2837
    %v2840 = vadd.f32 %v2834, %v2838
    %v2841 = vtanh.pop %v2840
    %v2842 = vsub.f32 1.0, %v2817
    %v2843 = vmul.f32 %v2842, %v2841
    %v2844 = vmul.f32 %v2817, 0.0
    %v2845 = vadd.f32 %v2843, %v2844
    %v2846 = vmul.f32 %v608, %v2845
    %v2847 = vadd.f32 %v2846, %v617
    %v2848 = vmul.f32 %v608, %v2847
    %s2849 = scalar_lea.vmem [#allocation5], 28
    %2850 = vst.msk [vmem:[%s2849] sm:$0xf] %vm555, %v2848
    %v2852 = vsel %vm357, %v2795, 0
    %2854 = vmatprep.subr.mxu0 0.0
    %2855 = vmatpush1.msra.mxu0 %v2605
    %2856 = vmatprep.subr.mxu0 0.0
    %2857 = vmatpush1.msra.mxu0 %v2606
    %2858 = vmatprep.subr.mxu0 0.0
    %2859 = vmatpush1.msra.mxu0 %v2607
    %2860 = vmatprep.subr.mxu0 0.0
    %2861 = vmatpush1.msra.mxu0 %v2608
    %2862 = vmatprep.subr.mxu0 0.0
    %2863 = vmatpush1.msra.mxu0 0.0
    %2864 = vmatprep.subr.mxu0 0.0
    %2865 = vmatpush1.msra.mxu0 0.0
    %2866 = vmatprep.subr.mxu0 0.0
    %2867 = vmatpush1.msra.mxu0 0.0
    %2868 = vmatprep.subr.mxu0 0.0
    %2869 = vmatpush1.msra.mxu0 0.0
    %2870 = vmatprep.subr.mxu0 0.0
    %2871 = vmatpush1.msra.mxu0 0.0
    %2872 = vmatprep.subr.mxu0 0.0
    %2873 = vmatpush1.msra.mxu0 0.0
    %2874 = vmatprep.subr.mxu0 0.0
    %2875 = vmatpush1.msra.mxu0 0.0
    %2876 = vmatprep.subr.mxu0 0.0
    %2877 = vmatpush1.msra.mxu0 0.0
    %2878 = vmatprep.subr.mxu0 0.0
    %2879 = vmatpush1.msra.mxu0 0.0
    %2880 = vmatprep.subr.mxu0 0.0
    %2881 = vmatpush1.msra.mxu0 0.0
    %2882 = vmatprep.subr.mxu0 0.0
    %2883 = vmatpush1.msra.mxu0 0.0
    %2884 = vmatprep.subr.mxu0 0.0
    %2885 = vmatpush1.msra.mxu0 0.0
    %2886 = vmatprep.subr.mxu0 0.0
    %2887 = vmatpush1.msra.mxu0 0.0
    %2888 = vmatprep.subr.mxu0 0.0
    %2889 = vmatpush1.msra.mxu0 0.0
    %2890 = vmatprep.subr.mxu0 0.0
    %2891 = vmatpush1.msra.mxu0 0.0
    %2892 = vmatprep.subr.mxu0 0.0
    %2893 = vmatpush1.msra.mxu0 0.0
    %2894 = vmatprep.subr.mxu0 0.0
    %2895 = vmatpush1.msra.mxu0 0.0
    %2896 = vmatprep.subr.mxu0 0.0
    %2897 = vmatpush1.msra.mxu0 0.0
    %2898 = vmatprep.subr.mxu0 0.0
    %2899 = vmatpush1.msra.mxu0 0.0
    %2900 = vmatprep.subr.mxu0 0.0
    %2901 = vmatpush1.msra.mxu0 0.0
    %2902 = vmatprep.subr.mxu0 0.0
    %2903 = vmatpush1.msra.mxu0 0.0
    %2904 = vmatprep.subr.mxu0 0.0
    %2905 = vmatpush1.msra.mxu0 0.0
    %2906 = vmatprep.subr.mxu0 0.0
    %2907 = vmatpush1.msra.mxu0 0.0
    %2908 = vmatprep.subr.mxu0 0.0
    %2909 = vmatpush1.msra.mxu0 0.0
    %2910 = vmatprep.subr.mxu0 0.0
    %2911 = vmatpush1.msra.mxu0 0.0
    %2912 = vmatprep.subr.mxu0 0.0
    %2913 = vmatpush1.msra.mxu0 0.0
    %2914 = vmatprep.subr.mxu0 0.0
    %2915 = vmatpush1.msra.mxu0 0.0
    %2916 = vmatprep.subr.mxu0 0.0
    %2917 = vmatpush1.msra.mxu0 0.0
    %2918 = vmatprep.mubr.f32.mxu0 0.0
    %2919 = vmatmul.mubr.f32.gmra.mrb[0].mxu0 %v2852
    %v2920 = vpop.f32.mrb[0].mxu0
    %v2921 = vadd.f32 0.0, %v2920
    %v2922 = vpop.f32.mrb[0].mxu0
    %2923 = vdwg.mxu0
    %v2925 = vsel %vm357, %v2847, 0
    %2927 = vmatprep.subr.mxu0 0.0
    %2928 = vmatpush1.msra.mxu0 %v2609
    %2929 = vmatprep.subr.mxu0 0.0
    %2930 = vmatpush1.msra.mxu0 %v2610
    %2931 = vmatprep.subr.mxu0 0.0
    %2932 = vmatpush1.msra.mxu0 %v2611
    %2933 = vmatprep.subr.mxu0 0.0
    %2934 = vmatpush1.msra.mxu0 %v2612
    %2935 = vmatprep.subr.mxu0 0.0
    %2936 = vmatpush1.msra.mxu0 0.0
    %2937 = vmatprep.subr.mxu0 0.0
    %2938 = vmatpush1.msra.mxu0 0.0
    %2939 = vmatprep.subr.mxu0 0.0
    %2940 = vmatpush1.msra.mxu0 0.0
    %2941 = vmatprep.subr.mxu0 0.0
    %2942 = vmatpush1.msra.mxu0 0.0
    %2943 = vmatprep.subr.mxu0 0.0
    %2944 = vmatpush1.msra.mxu0 0.0
    %2945 = vmatprep.subr.mxu0 0.0
    %2946 = vmatpush1.msra.mxu0 0.0
    %2947 = vmatprep.subr.mxu0 0.0
    %2948 = vmatpush1.msra.mxu0 0.0
    %2949 = vmatprep.subr.mxu0 0.0
    %2950 = vmatpush1.msra.mxu0 0.0
    %2951 = vmatprep.subr.mxu0 0.0
    %2952 = vmatpush1.msra.mxu0 0.0
    %2953 = vmatprep.subr.mxu0 0.0
    %2954 = vmatpush1.msra.mxu0 0.0
    %2955 = vmatprep.subr.mxu0 0.0
    %2956 = vmatpush1.msra.mxu0 0.0
    %2957 = vmatprep.subr.mxu0 0.0
    %2958 = vmatpush1.msra.mxu0 0.0
    %2959 = vmatprep.subr.mxu0 0.0
    %2960 = vmatpush1.msra.mxu0 0.0
    %2961 = vmatprep.subr.mxu0 0.0
    %2962 = vmatpush1.msra.mxu0 0.0
    %2963 = vmatprep.subr.mxu0 0.0
    %2964 = vmatpush1.msra.mxu0 0.0
    %2965 = vmatprep.subr.mxu0 0.0
    %2966 = vmatpush1.msra.mxu0 0.0
    %2967 = vmatprep.subr.mxu0 0.0
    %2968 = vmatpush1.msra.mxu0 0.0
    %2969 = vmatprep.subr.mxu0 0.0
    %2970 = vmatpush1.msra.mxu0 0.0
    %2971 = vmatprep.subr.mxu0 0.0
    %2972 = vmatpush1.msra.mxu0 0.0
    %2973 = vmatprep.subr.mxu0 0.0
    %2974 = vmatpush1.msra.mxu0 0.0
    %2975 = vmatprep.subr.mxu0 0.0
    %2976 = vmatpush1.msra.mxu0 0.0
    %2977 = vmatprep.subr.mxu0 0.0
    %2978 = vmatpush1.msra.mxu0 0.0
    %2979 = vmatprep.subr.mxu0 0.0
    %2980 = vmatpush1.msra.mxu0 0.0
    %2981 = vmatprep.subr.mxu0 0.0
    %2982 = vmatpush1.msra.mxu0 0.0
    %2983 = vmatprep.subr.mxu0 0.0
    %2984 = vmatpush1.msra.mxu0 0.0
    %2985 = vmatprep.subr.mxu0 0.0
    %2986 = vmatpush1.msra.mxu0 0.0
    %2987 = vmatprep.subr.mxu0 0.0
    %2988 = vmatpush1.msra.mxu0 0.0
    %2989 = vmatprep.subr.mxu0 0.0
    %2990 = vmatpush1.msra.mxu0 0.0
    %2991 = vmatprep.mubr.f32.mxu0 0.0
    %2992 = vmatmul.mubr.f32.gmra.mrb[0].mxu0 %v2925
    %v2993 = vpop.f32.mrb[0].mxu0
    %v2994 = vadd.f32 0.0, %v2993
    %v2995 = vpop.f32.mrb[0].mxu0
    %2996 = vdwg.mxu0
    %v2997 = vadd.f32 %v2590, %v2921
    %v2998 = vxor.u32 %v2997, 2147483648
    %v2999 = vmul.f32 %v2998, 1.442695
    %v3000 = vpow.pop %v2999
    %v3001 = vadd.f32 %v3000, 1.0
    %v3002 = vrcp.pop %v3001
    %v3003 = vmul.f32 1.0, %v3002
    %v3004 = vadd.f32 %v2921, %v2768
    %3006 = vrot.lane.b32.xlu0 %v3004, 64
    %v3007 = vpop.permute.xlu0 %3006
    %v3009 = vmul.f32 %v3003, %v3007
    %3011 = vrot.lane.b32.xlu0 %v3009, 64
    %v3012 = vpop.permute.xlu0 %3011
    %v3014 = vadd.f32 %v2590, %v3012
    %v3015 = vtanh.pop %v3014
    %v3016 = vsub.f32 1.0, %v3003
    %3018 = vrot.lane.b32.xlu0 %v3015, 96
    %v3019 = vpop.permute.xlu0 %3018
    %v3021 = vmul.f32 %v3016, %v3019
    %3022 = vrot.lane.b32.xlu0 %v2795, 32
    %v3023 = vpop.permute.xlu0 %3022
    %v3025 = vmul.f32 %v3003, %v3023
    %v3026 = vadd.f32 %v3021, %v3025
    %3028 = vrot.lane.b32.xlu0 %v3026, 96
    %v3029 = vpop.permute.xlu0 %3028
    %v3031 = vmul.f32 %v801, %v3029
    %v3032 = vmul.f32 %v812, %v2795
    %v3033 = vadd.f32 %v3031, %v3032
    %v3034 = vmul.f32 %v801, %v3033
    %s3035 = scalar_lea.vmem [#allocation4], 4
    %3036 = vst.msk [vmem:[%s3035] sm:$0xf] %vm555, %v3034
    %3038 = vrot.lane.b32.xlu0 %v2994, 96
    %v3039 = vpop.permute.xlu0 %3038
    %v3041 = vadd.f32 %v2595, %v3039
    %v3042 = vxor.u32 %v3041, 2147483648
    %v3043 = vmul.f32 %v3042, 1.442695
    %v3044 = vpow.pop %v3043
    %v3045 = vadd.f32 %v3044, 1.0
    %v3046 = vrcp.pop %v3045
    %v3047 = vmul.f32 1.0, %v3046
    %v3048 = vrot.slane %v2595, 4
    %v3050 = vadd.f32 %v3048, %v3039
    %v3051 = vxor.u32 %v3050, 2147483648
    %v3052 = vmul.f32 %v3051, 1.442695
    %v3053 = vpow.pop %v3052
    %v3054 = vadd.f32 %v3053, 1.0
    %v3055 = vrcp.pop %v3054
    %v3056 = vmul.f32 1.0, %v3055
    %v3057 = vadd.f32 %v2994, %v2824
    %3059 = vrot.lane.b32.xlu0 %v3057, 32
    %v3060 = vpop.permute.xlu0 %3059
    %v3062 = vmul.f32 %v3047, %v3060
    %3063 = vrot.lane.b32.xlu0 %v2595, 96
    %v3064 = vpop.permute.xlu0 %3063
    %v3065 = vrot.slane %v3064, 4
    %3068 = vrot.lane.b32.xlu0 %v3062, 32
    %v3069 = vpop.permute.xlu0 %3068
    %v3071 = vadd.f32 %v3065, %v3069
    %v3072 = vtanh.pop %v3071
    %v3073 = vsub.f32 1.0, %v3056
    %v3074 = vmul.f32 %v3073, %v3072
    %v3075 = vmul.f32 %v3056, %v2847
    %v3076 = vadd.f32 %v3074, %v3075
    %v3077 = vmul.f32 %v862, %v3076
    %v3078 = vmul.f32 %v869, %v2847
    %v3079 = vadd.f32 %v3077, %v3078
    %v3080 = vmul.f32 %v862, %v3079
    %s3081 = scalar_lea.vmem [#allocation5], 24
    %3082 = vst.msk [vmem:[%s3081] sm:$0xf] %vm555, %v3080
    %v3084 = vsel %vm357, %v3033, 0
    %3086 = vmatprep.subr.mxu0 0.0
    %3087 = vmatpush1.msra.mxu0 %v2605
    %3088 = vmatprep.subr.mxu0 0.0
    %3089 = vmatpush1.msra.mxu0 %v2606
    %3090 = vmatprep.subr.mxu0 0.0
    %3091 = vmatpush1.msra.mxu0 %v2607
    %3092 = vmatprep.subr.mxu0 0.0
    %3093 = vmatpush1.msra.mxu0 %v2608
    %3094 = vmatprep.subr.mxu0 0.0
    %3095 = vmatpush1.msra.mxu0 0.0
    %3096 = vmatprep.subr.mxu0 0.0
    %3097 = vmatpush1.msra.mxu0 0.0
    %3098 = vmatprep.subr.mxu0 0.0
    %3099 = vmatpush1.msra.mxu0 0.0
    %3100 = vmatprep.subr.mxu0 0.0
    %3101 = vmatpush1.msra.mxu0 0.0
    %3102 = vmatprep.subr.mxu0 0.0
    %3103 = vmatpush1.msra.mxu0 0.0
    %3104 = vmatprep.subr.mxu0 0.0
    %3105 = vmatpush1.msra.mxu0 0.0
    %3106 = vmatprep.subr.mxu0 0.0
    %3107 = vmatpush1.msra.mxu0 0.0
    %3108 = vmatprep.subr.mxu0 0.0
    %3109 = vmatpush1.msra.mxu0 0.0
    %3110 = vmatprep.subr.mxu0 0.0
    %3111 = vmatpush1.msra.mxu0 0.0
    %3112 = vmatprep.subr.mxu0 0.0
    %3113 = vmatpush1.msra.mxu0 0.0
    %3114 = vmatprep.subr.mxu0 0.0
    %3115 = vmatpush1.msra.mxu0 0.0
    %3116 = vmatprep.subr.mxu0 0.0
    %3117 = vmatpush1.msra.mxu0 0.0
    %3118 = vmatprep.subr.mxu0 0.0
    %3119 = vmatpush1.msra.mxu0 0.0
    %3120 = vmatprep.subr.mxu0 0.0
    %3121 = vmatpush1.msra.mxu0 0.0
    %3122 = vmatprep.subr.mxu0 0.0
    %3123 = vmatpush1.msra.mxu0 0.0
    %3124 = vmatprep.subr.mxu0 0.0
    %3125 = vmatpush1.msra.mxu0 0.0
    %3126 = vmatprep.subr.mxu0 0.0
    %3127 = vmatpush1.msra.mxu0 0.0
    %3128 = vmatprep.subr.mxu0 0.0
    %3129 = vmatpush1.msra.mxu0 0.0
    %3130 = vmatprep.subr.mxu0 0.0
    %3131 = vmatpush1.msra.mxu0 0.0
    %3132 = vmatprep.subr.mxu0 0.0
    %3133 = vmatpush1.msra.mxu0 0.0
    %3134 = vmatprep.subr.mxu0 0.0
    %3135 = vmatpush1.msra.mxu0 0.0
    %3136 = vmatprep.subr.mxu0 0.0
    %3137 = vmatpush1.msra.mxu0 0.0
    %3138 = vmatprep.subr.mxu0 0.0
    %3139 = vmatpush1.msra.mxu0 0.0
    %3140 = vmatprep.subr.mxu0 0.0
    %3141 = vmatpush1.msra.mxu0 0.0
    %3142 = vmatprep.subr.mxu0 0.0
    %3143 = vmatpush1.msra.mxu0 0.0
    %3144 = vmatprep.subr.mxu0 0.0
    %3145 = vmatpush1.msra.mxu0 0.0
    %3146 = vmatprep.subr.mxu0 0.0
    %3147 = vmatpush1.msra.mxu0 0.0
    %3148 = vmatprep.subr.mxu0 0.0
    %3149 = vmatpush1.msra.mxu0 0.0
    %3150 = vmatprep.mubr.f32.mxu0 0.0
    %3151 = vmatmul.mubr.f32.gmra.mrb[0].mxu0 %v3084
    %v3152 = vpop.f32.mrb[0].mxu0
    %v3153 = vadd.f32 0.0, %v3152
    %v3154 = vpop.f32.mrb[0].mxu0
    %3155 = vdwg.mxu0
    %v3157 = vsel %vm357, %v3079, 0
    %3159 = vmatprep.subr.mxu0 0.0
    %3160 = vmatpush1.msra.mxu0 %v2609
    %3161 = vmatprep.subr.mxu0 0.0
    %3162 = vmatpush1.msra.mxu0 %v2610
    %3163 = vmatprep.subr.mxu0 0.0
    %3164 = vmatpush1.msra.mxu0 %v2611
    %3165 = vmatprep.subr.mxu0 0.0
    %3166 = vmatpush1.msra.mxu0 %v2612
    %3167 = vmatprep.subr.mxu0 0.0
    %3168 = vmatpush1.msra.mxu0 0.0
    %3169 = vmatprep.subr.mxu0 0.0
    %3170 = vmatpush1.msra.mxu0 0.0
    %3171 = vmatprep.subr.mxu0 0.0
    %3172 = vmatpush1.msra.mxu0 0.0
    %3173 = vmatprep.subr.mxu0 0.0
    %3174 = vmatpush1.msra.mxu0 0.0
    %3175 = vmatprep.subr.mxu0 0.0
    %3176 = vmatpush1.msra.mxu0 0.0
    %3177 = vmatprep.subr.mxu0 0.0
    %3178 = vmatpush1.msra.mxu0 0.0
    %3179 = vmatprep.subr.mxu0 0.0
    %3180 = vmatpush1.msra.mxu0 0.0
    %3181 = vmatprep.subr.mxu0 0.0
    %3182 = vmatpush1.msra.mxu0 0.0
    %3183 = vmatprep.subr.mxu0 0.0
    %3184 = vmatpush1.msra.mxu0 0.0
    %3185 = vmatprep.subr.mxu0 0.0
    %3186 = vmatpush1.msra.mxu0 0.0
    %3187 = vmatprep.subr.mxu0 0.0
    %3188 = vmatpush1.msra.mxu0 0.0
    %3189 = vmatprep.subr.mxu0 0.0
    %3190 = vmatpush1.msra.mxu0 0.0
    %3191 = vmatprep.subr.mxu0 0.0
    %3192 = vmatpush1.msra.mxu0 0.0
    %3193 = vmatprep.subr.mxu0 0.0
    %3194 = vmatpush1.msra.mxu0 0.0
    %3195 = vmatprep.subr.mxu0 0.0
    %3196 = vmatpush1.msra.mxu0 0.0
    %3197 = vmatprep.subr.mxu0 0.0
    %3198 = vmatpush1.msra.mxu0 0.0
    %3199 = vmatprep.subr.mxu0 0.0
    %3200 = vmatpush1.msra.mxu0 0.0
    %3201 = vmatprep.subr.mxu0 0.0
    %3202 = vmatpush1.msra.mxu0 0.0
    %3203 = vmatprep.subr.mxu0 0.0
    %3204 = vmatpush1.msra.mxu0 0.0
    %3205 = vmatprep.subr.mxu0 0.0
    %3206 = vmatpush1.msra.mxu0 0.0
    %3207 = vmatprep.subr.mxu0 0.0
    %3208 = vmatpush1.msra.mxu0 0.0
    %3209 = vmatprep.subr.mxu0 0.0
    %3210 = vmatpush1.msra.mxu0 0.0
    %3211 = vmatprep.subr.mxu0 0.0
    %3212 = vmatpush1.msra.mxu0 0.0
    %3213 = vmatprep.subr.mxu0 0.0
    %3214 = vmatpush1.msra.mxu0 0.0
    %3215 = vmatprep.subr.mxu0 0.0
    %3216 = vmatpush1.msra.mxu0 0.0
    %3217 = vmatprep.subr.mxu0 0.0
    %3218 = vmatpush1.msra.mxu0 0.0
    %3219 = vmatprep.subr.mxu0 0.0
    %3220 = vmatpush1.msra.mxu0 0.0
    %3221 = vmatprep.subr.mxu0 0.0
    %3222 = vmatpush1.msra.mxu0 0.0
    %3223 = vmatprep.mubr.f32.mxu0 0.0
    %3224 = vmatmul.mubr.f32.gmra.mrb[0].mxu0 %v3157
    %v3225 = vpop.f32.mrb[0].mxu0
    %v3226 = vadd.f32 0.0, %v3225
    %v3227 = vpop.f32.mrb[0].mxu0
    %3228 = vdwg.mxu0
    %v3229 = vadd.f32 %v2591, %v3153
    %v3230 = vxor.u32 %v3229, 2147483648
    %v3231 = vmul.f32 %v3230, 1.442695
    %v3232 = vpow.pop %v3231
    %v3233 = vadd.f32 %v3232, 1.0
    %v3234 = vrcp.pop %v3233
    %v3235 = vmul.f32 1.0, %v3234
    %v3236 = vadd.f32 %v3153, %v2768
    %3238 = vrot.lane.b32.xlu0 %v3236, 64
    %v3239 = vpop.permute.xlu0 %3238
    %v3241 = vmul.f32 %v3235, %v3239
    %3243 = vrot.lane.b32.xlu0 %v3241, 64
    %v3244 = vpop.permute.xlu0 %3243
    %v3246 = vadd.f32 %v2591, %v3244
    %v3247 = vtanh.pop %v3246
    %v3248 = vsub.f32 1.0, %v3235
    %3250 = vrot.lane.b32.xlu0 %v3247, 96
    %v3251 = vpop.permute.xlu0 %3250
    %v3253 = vmul.f32 %v3248, %v3251
    %3254 = vrot.lane.b32.xlu0 %v3033, 32
    %v3255 = vpop.permute.xlu0 %3254
    %v3257 = vmul.f32 %v3235, %v3255
    %v3258 = vadd.f32 %v3253, %v3257
    %3260 = vrot.lane.b32.xlu0 %v3258, 96
    %v3261 = vpop.permute.xlu0 %3260
    %v3263 = vmul.f32 %v1055, %v3261
    %v3264 = vmul.f32 %v1066, %v3033
    %v3265 = vadd.f32 %v3263, %v3264
    %v3266 = vmul.f32 %v1055, %v3265
    %s3267 = scalar_lea.vmem [#allocation4], 8
    %3268 = vst.msk [vmem:[%s3267] sm:$0xf] %vm555, %v3266
    %3270 = vrot.lane.b32.xlu0 %v3226, 96
    %v3271 = vpop.permute.xlu0 %3270
    %v3273 = vadd.f32 %v2594, %v3271
    %v3274 = vxor.u32 %v3273, 2147483648
    %v3275 = vmul.f32 %v3274, 1.442695
    %v3276 = vpow.pop %v3275
    %v3277 = vadd.f32 %v3276, 1.0
    %v3278 = vrcp.pop %v3277
    %v3279 = vmul.f32 1.0, %v3278
    %v3280 = vrot.slane %v2594, 4
    %v3282 = vadd.f32 %v3280, %v3271
    %v3283 = vxor.u32 %v3282, 2147483648
    %v3284 = vmul.f32 %v3283, 1.442695
    %v3285 = vpow.pop %v3284
    %v3286 = vadd.f32 %v3285, 1.0
    %v3287 = vrcp.pop %v3286
    %v3288 = vmul.f32 1.0, %v3287
    %v3289 = vadd.f32 %v3226, %v2824
    %3291 = vrot.lane.b32.xlu0 %v3289, 32
    %v3292 = vpop.permute.xlu0 %3291
    %v3294 = vmul.f32 %v3279, %v3292
    %3295 = vrot.lane.b32.xlu0 %v2594, 96
    %v3296 = vpop.permute.xlu0 %3295
    %v3297 = vrot.slane %v3296, 4
    %3300 = vrot.lane.b32.xlu0 %v3294, 32
    %v3301 = vpop.permute.xlu0 %3300
    %v3303 = vadd.f32 %v3297, %v3301
    %v3304 = vtanh.pop %v3303
    %v3305 = vsub.f32 1.0, %v3288
    %v3306 = vmul.f32 %v3305, %v3304
    %v3307 = vmul.f32 %v3288, %v3079
    %v3308 = vadd.f32 %v3306, %v3307
    %v3309 = vmul.f32 %v1116, %v3308
    %v3310 = vmul.f32 %v1123, %v3079
    %v3311 = vadd.f32 %v3309, %v3310
    %v3312 = vmul.f32 %v1116, %v3311
    %s3313 = scalar_lea.vmem [#allocation5], 20
    %3314 = vst.msk [vmem:[%s3313] sm:$0xf] %vm555, %v3312
    %v3316 = vsel %vm357, %v3265, 0
    %3318 = vmatprep.subr.mxu0 0.0
    %3319 = vmatpush1.msra.mxu0 %v2605
    %3320 = vmatprep.subr.mxu0 0.0
    %3321 = vmatpush1.msra.mxu0 %v2606
    %3322 = vmatprep.subr.mxu0 0.0
    %3323 = vmatpush1.msra.mxu0 %v2607
    %3324 = vmatprep.subr.mxu0 0.0
    %3325 = vmatpush1.msra.mxu0 %v2608
    %3326 = vmatprep.subr.mxu0 0.0
    %3327 = vmatpush1.msra.mxu0 0.0
    %3328 = vmatprep.subr.mxu0 0.0
    %3329 = vmatpush1.msra.mxu0 0.0
    %3330 = vmatprep.subr.mxu0 0.0
    %3331 = vmatpush1.msra.mxu0 0.0
    %3332 = vmatprep.subr.mxu0 0.0
    %3333 = vmatpush1.msra.mxu0 0.0
    %3334 = vmatprep.subr.mxu0 0.0
    %3335 = vmatpush1.msra.mxu0 0.0
    %3336 = vmatprep.subr.mxu0 0.0
    %3337 = vmatpush1.msra.mxu0 0.0
    %3338 = vmatprep.subr.mxu0 0.0
    %3339 = vmatpush1.msra.mxu0 0.0
    %3340 = vmatprep.subr.mxu0 0.0
    %3341 = vmatpush1.msra.mxu0 0.0
    %3342 = vmatprep.subr.mxu0 0.0
    %3343 = vmatpush1.msra.mxu0 0.0
    %3344 = vmatprep.subr.mxu0 0.0
    %3345 = vmatpush1.msra.mxu0 0.0
    %3346 = vmatprep.subr.mxu0 0.0
    %3347 = vmatpush1.msra.mxu0 0.0
    %3348 = vmatprep.subr.mxu0 0.0
    %3349 = vmatpush1.msra.mxu0 0.0
    %3350 = vmatprep.subr.mxu0 0.0
    %3351 = vmatpush1.msra.mxu0 0.0
    %3352 = vmatprep.subr.mxu0 0.0
    %3353 = vmatpush1.msra.mxu0 0.0
    %3354 = vmatprep.subr.mxu0 0.0
    %3355 = vmatpush1.msra.mxu0 0.0
    %3356 = vmatprep.subr.mxu0 0.0
    %3357 = vmatpush1.msra.mxu0 0.0
    %3358 = vmatprep.subr.mxu0 0.0
    %3359 = vmatpush1.msra.mxu0 0.0
    %3360 = vmatprep.subr.mxu0 0.0
    %3361 = vmatpush1.msra.mxu0 0.0
    %3362 = vmatprep.subr.mxu0 0.0
    %3363 = vmatpush1.msra.mxu0 0.0
    %3364 = vmatprep.subr.mxu0 0.0
    %3365 = vmatpush1.msra.mxu0 0.0
    %3366 = vmatprep.subr.mxu0 0.0
    %3367 = vmatpush1.msra.mxu0 0.0
    %3368 = vmatprep.subr.mxu0 0.0
    %3369 = vmatpush1.msra.mxu0 0.0
    %3370 = vmatprep.subr.mxu0 0.0
    %3371 = vmatpush1.msra.mxu0 0.0
    %3372 = vmatprep.subr.mxu0 0.0
    %3373 = vmatpush1.msra.mxu0 0.0
    %3374 = vmatprep.subr.mxu0 0.0
    %3375 = vmatpush1.msra.mxu0 0.0
    %3376 = vmatprep.subr.mxu0 0.0
    %3377 = vmatpush1.msra.mxu0 0.0
    %3378 = vmatprep.subr.mxu0 0.0
    %3379 = vmatpush1.msra.mxu0 0.0
    %3380 = vmatprep.subr.mxu0 0.0
    %3381 = vmatpush1.msra.mxu0 0.0
    %3382 = vmatprep.mubr.f32.mxu0 0.0
    %3383 = vmatmul.mubr.f32.gmra.mrb[0].mxu0 %v3316
    %v3384 = vpop.f32.mrb[0].mxu0
    %v3385 = vadd.f32 0.0, %v3384
    %v3386 = vpop.f32.mrb[0].mxu0
    %3387 = vdwg.mxu0
    %v3389 = vsel %vm357, %v3311, 0
    %3391 = vmatprep.subr.mxu0 0.0
    %3392 = vmatpush1.msra.mxu0 %v2609
    %3393 = vmatprep.subr.mxu0 0.0
    %3394 = vmatpush1.msra.mxu0 %v2610
    %3395 = vmatprep.subr.mxu0 0.0
    %3396 = vmatpush1.msra.mxu0 %v2611
    %3397 = vmatprep.subr.mxu0 0.0
    %3398 = vmatpush1.msra.mxu0 %v2612
    %3399 = vmatprep.subr.mxu0 0.0
    %3400 = vmatpush1.msra.mxu0 0.0
    %3401 = vmatprep.subr.mxu0 0.0
    %3402 = vmatpush1.msra.mxu0 0.0
    %3403 = vmatprep.subr.mxu0 0.0
    %3404 = vmatpush1.msra.mxu0 0.0
    %3405 = vmatprep.subr.mxu0 0.0
    %3406 = vmatpush1.msra.mxu0 0.0
    %3407 = vmatprep.subr.mxu0 0.0
    %3408 = vmatpush1.msra.mxu0 0.0
    %3409 = vmatprep.subr.mxu0 0.0
    %3410 = vmatpush1.msra.mxu0 0.0
    %3411 = vmatprep.subr.mxu0 0.0
    %3412 = vmatpush1.msra.mxu0 0.0
    %3413 = vmatprep.subr.mxu0 0.0
    %3414 = vmatpush1.msra.mxu0 0.0
    %3415 = vmatprep.subr.mxu0 0.0
    %3416 = vmatpush1.msra.mxu0 0.0
    %3417 = vmatprep.subr.mxu0 0.0
    %3418 = vmatpush1.msra.mxu0 0.0
    %3419 = vmatprep.subr.mxu0 0.0
    %3420 = vmatpush1.msra.mxu0 0.0
    %3421 = vmatprep.subr.mxu0 0.0
    %3422 = vmatpush1.msra.mxu0 0.0
    %3423 = vmatprep.subr.mxu0 0.0
    %3424 = vmatpush1.msra.mxu0 0.0
    %3425 = vmatprep.subr.mxu0 0.0
    %3426 = vmatpush1.msra.mxu0 0.0
    %3427 = vmatprep.subr.mxu0 0.0
    %3428 = vmatpush1.msra.mxu0 0.0
    %3429 = vmatprep.subr.mxu0 0.0
    %3430 = vmatpush1.msra.mxu0 0.0
    %3431 = vmatprep.subr.mxu0 0.0
    %3432 = vmatpush1.msra.mxu0 0.0
    %3433 = vmatprep.subr.mxu0 0.0
    %3434 = vmatpush1.msra.mxu0 0.0
    %3435 = vmatprep.subr.mxu0 0.0
    %3436 = vmatpush1.msra.mxu0 0.0
    %3437 = vmatprep.subr.mxu0 0.0
    %3438 = vmatpush1.msra.mxu0 0.0
    %3439 = vmatprep.subr.mxu0 0.0
    %3440 = vmatpush1.msra.mxu0 0.0
    %3441 = vmatprep.subr.mxu0 0.0
    %3442 = vmatpush1.msra.mxu0 0.0
    %3443 = vmatprep.subr.mxu0 0.0
    %3444 = vmatpush1.msra.mxu0 0.0
    %3445 = vmatprep.subr.mxu0 0.0
    %3446 = vmatpush1.msra.mxu0 0.0
    %3447 = vmatprep.subr.mxu0 0.0
    %3448 = vmatpush1.msra.mxu0 0.0
    %3449 = vmatprep.subr.mxu0 0.0
    %3450 = vmatpush1.msra.mxu0 0.0
    %3451 = vmatprep.subr.mxu0 0.0
    %3452 = vmatpush1.msra.mxu0 0.0
    %3453 = vmatprep.subr.mxu0 0.0
    %3454 = vmatpush1.msra.mxu0 0.0
    %3455 = vmatprep.mubr.f32.mxu0 0.0
    %3456 = vmatmul.mubr.f32.gmra.mrb[0].mxu0 %v3389
    %v3457 = vpop.f32.mrb[0].mxu0
    %v3458 = vadd.f32 0.0, %v3457
    %v3459 = vpop.f32.mrb[0].mxu0
    %3460 = vdwg.mxu0
    %v3461 = vadd.f32 %v2592, %v3385
    %v3462 = vxor.u32 %v3461, 2147483648
    %v3463 = vmul.f32 %v3462, 1.442695
    %v3464 = vpow.pop %v3463
    %v3465 = vadd.f32 %v3464, 1.0
    %v3466 = vrcp.pop %v3465
    %v3467 = vmul.f32 1.0, %v3466
    %v3468 = vadd.f32 %v3385, %v2768
    %3470 = vrot.lane.b32.xlu0 %v3468, 64
    %v3471 = vpop.permute.xlu0 %3470
    %v3473 = vmul.f32 %v3467, %v3471
    %3475 = vrot.lane.b32.xlu0 %v3473, 64
    %v3476 = vpop.permute.xlu0 %3475
    %v3478 = vadd.f32 %v2592, %v3476
    %v3479 = vtanh.pop %v3478
    %v3480 = vsub.f32 1.0, %v3467
    %3482 = vrot.lane.b32.xlu0 %v3479, 96
    %v3483 = vpop.permute.xlu0 %3482
    %v3485 = vmul.f32 %v3480, %v3483
    %3486 = vrot.lane.b32.xlu0 %v3265, 32
    %v3487 = vpop.permute.xlu0 %3486
    %v3489 = vmul.f32 %v3467, %v3487
    %v3490 = vadd.f32 %v3485, %v3489
    %3492 = vrot.lane.b32.xlu0 %v3490, 96
    %v3493 = vpop.permute.xlu0 %3492
    %v3495 = vmul.f32 %v1309, %v3493
    %v3496 = vmul.f32 %v1320, %v3265
    %v3497 = vadd.f32 %v3495, %v3496
    %v3498 = vmul.f32 %v1309, %v3497
    %s3499 = scalar_lea.vmem [#allocation4], 12
    %3500 = vst.msk [vmem:[%s3499] sm:$0xf] %vm555, %v3498
    %3502 = vrot.lane.b32.xlu0 %v3458, 96
    %v3503 = vpop.permute.xlu0 %3502
    %v3505 = vadd.f32 %v2593, %v3503
    %v3506 = vxor.u32 %v3505, 2147483648
    %v3507 = vmul.f32 %v3506, 1.442695
    %v3508 = vpow.pop %v3507
    %v3509 = vadd.f32 %v3508, 1.0
    %v3510 = vrcp.pop %v3509
    %v3511 = vmul.f32 1.0, %v3510
    %v3512 = vrot.slane %v2593, 4
    %v3514 = vadd.f32 %v3512, %v3503
    %v3515 = vxor.u32 %v3514, 2147483648
    %v3516 = vmul.f32 %v3515, 1.442695
    %v3517 = vpow.pop %v3516
    %v3518 = vadd.f32 %v3517, 1.0
    %v3519 = vrcp.pop %v3518
    %v3520 = vmul.f32 1.0, %v3519
    %v3521 = vadd.f32 %v3458, %v2824
    %3523 = vrot.lane.b32.xlu0 %v3521, 32
    %v3524 = vpop.permute.xlu0 %3523
    %v3526 = vmul.f32 %v3511, %v3524
    %3527 = vrot.lane.b32.xlu0 %v2593, 96
    %v3528 = vpop.permute.xlu0 %3527
    %v3529 = vrot.slane %v3528, 4
    %3532 = vrot.lane.b32.xlu0 %v3526, 32
    %v3533 = vpop.permute.xlu0 %3532
    %v3535 = vadd.f32 %v3529, %v3533
    %v3536 = vtanh.pop %v3535
    %v3537 = vsub.f32 1.0, %v3520
    %v3538 = vmul.f32 %v3537, %v3536
    %v3539 = vmul.f32 %v3520, %v3311
    %v3540 = vadd.f32 %v3538, %v3539
    %v3541 = vmul.f32 %v1370, %v3540
    %v3542 = vmul.f32 %v1377, %v3311
    %v3543 = vadd.f32 %v3541, %v3542
    %v3544 = vmul.f32 %v1370, %v3543
    %s3545 = scalar_lea.vmem [#allocation5], 16
    %3546 = vst.msk [vmem:[%s3545] sm:$0xf] %vm555, %v3544
    %v3548 = vsel %vm357, %v3497, 0
    %3550 = vmatprep.subr.mxu0 0.0
    %3551 = vmatpush1.msra.mxu0 %v2605
    %3552 = vmatprep.subr.mxu0 0.0
    %3553 = vmatpush1.msra.mxu0 %v2606
    %3554 = vmatprep.subr.mxu0 0.0
    %3555 = vmatpush1.msra.mxu0 %v2607
    %3556 = vmatprep.subr.mxu0 0.0
    %3557 = vmatpush1.msra.mxu0 %v2608
    %3558 = vmatprep.subr.mxu0 0.0
    %3559 = vmatpush1.msra.mxu0 0.0
    %3560 = vmatprep.subr.mxu0 0.0
    %3561 = vmatpush1.msra.mxu0 0.0
    %3562 = vmatprep.subr.mxu0 0.0
    %3563 = vmatpush1.msra.mxu0 0.0
    %3564 = vmatprep.subr.mxu0 0.0
    %3565 = vmatpush1.msra.mxu0 0.0
    %3566 = vmatprep.subr.mxu0 0.0
    %3567 = vmatpush1.msra.mxu0 0.0
    %3568 = vmatprep.subr.mxu0 0.0
    %3569 = vmatpush1.msra.mxu0 0.0
    %3570 = vmatprep.subr.mxu0 0.0
    %3571 = vmatpush1.msra.mxu0 0.0
    %3572 = vmatprep.subr.mxu0 0.0
    %3573 = vmatpush1.msra.mxu0 0.0
    %3574 = vmatprep.subr.mxu0 0.0
    %3575 = vmatpush1.msra.mxu0 0.0
    %3576 = vmatprep.subr.mxu0 0.0
    %3577 = vmatpush1.msra.mxu0 0.0
    %3578 = vmatprep.subr.mxu0 0.0
    %3579 = vmatpush1.msra.mxu0 0.0
    %3580 = vmatprep.subr.mxu0 0.0
    %3581 = vmatpush1.msra.mxu0 0.0
    %3582 = vmatprep.subr.mxu0 0.0
    %3583 = vmatpush1.msra.mxu0 0.0
    %3584 = vmatprep.subr.mxu0 0.0
    %3585 = vmatpush1.msra.mxu0 0.0
    %3586 = vmatprep.subr.mxu0 0.0
    %3587 = vmatpush1.msra.mxu0 0.0
    %3588 = vmatprep.subr.mxu0 0.0
    %3589 = vmatpush1.msra.mxu0 0.0
    %3590 = vmatprep.subr.mxu0 0.0
    %3591 = vmatpush1.msra.mxu0 0.0
    %3592 = vmatprep.subr.mxu0 0.0
    %3593 = vmatpush1.msra.mxu0 0.0
    %3594 = vmatprep.subr.mxu0 0.0
    %3595 = vmatpush1.msra.mxu0 0.0
    %3596 = vmatprep.subr.mxu0 0.0
    %3597 = vmatpush1.msra.mxu0 0.0
    %3598 = vmatprep.subr.mxu0 0.0
    %3599 = vmatpush1.msra.mxu0 0.0
    %3600 = vmatprep.subr.mxu0 0.0
    %3601 = vmatpush1.msra.mxu0 0.0
    %3602 = vmatprep.subr.mxu0 0.0
    %3603 = vmatpush1.msra.mxu0 0.0
    %3604 = vmatprep.subr.mxu0 0.0
    %3605 = vmatpush1.msra.mxu0 0.0
    %3606 = vmatprep.subr.mxu0 0.0
    %3607 = vmatpush1.msra.mxu0 0.0
    %3608 = vmatprep.subr.mxu0 0.0
    %3609 = vmatpush1.msra.mxu0 0.0
    %3610 = vmatprep.subr.mxu0 0.0
    %3611 = vmatpush1.msra.mxu0 0.0
    %3612 = vmatprep.subr.mxu0 0.0
    %3613 = vmatpush1.msra.mxu0 0.0
    %3614 = vmatprep.mubr.f32.mxu0 0.0
    %3615 = vmatmul.mubr.f32.gmra.mrb[0].mxu0 %v3548
    %v3616 = vpop.f32.mrb[0].mxu0
    %v3617 = vadd.f32 0.0, %v3616
    %v3618 = vpop.f32.mrb[0].mxu0
    %3619 = vdwg.mxu0
    %v3621 = vsel %vm357, %v3543, 0
    %3623 = vmatprep.subr.mxu0 0.0
    %3624 = vmatpush1.msra.mxu0 %v2609
    %3625 = vmatprep.subr.mxu0 0.0
    %3626 = vmatpush1.msra.mxu0 %v2610
    %3627 = vmatprep.subr.mxu0 0.0
    %3628 = vmatpush1.msra.mxu0 %v2611
    %3629 = vmatprep.subr.mxu0 0.0
    %3630 = vmatpush1.msra.mxu0 %v2612
    %3631 = vmatprep.subr.mxu0 0.0
    %3632 = vmatpush1.msra.mxu0 0.0
    %3633 = vmatprep.subr.mxu0 0.0
    %3634 = vmatpush1.msra.mxu0 0.0
    %3635 = vmatprep.subr.mxu0 0.0
    %3636 = vmatpush1.msra.mxu0 0.0
    %3637 = vmatprep.subr.mxu0 0.0
    %3638 = vmatpush1.msra.mxu0 0.0
    %3639 = vmatprep.subr.mxu0 0.0
    %3640 = vmatpush1.msra.mxu0 0.0
    %3641 = vmatprep.subr.mxu0 0.0
    %3642 = vmatpush1.msra.mxu0 0.0
    %3643 = vmatprep.subr.mxu0 0.0
    %3644 = vmatpush1.msra.mxu0 0.0
    %3645 = vmatprep.subr.mxu0 0.0
    %3646 = vmatpush1.msra.mxu0 0.0
    %3647 = vmatprep.subr.mxu0 0.0
    %3648 = vmatpush1.msra.mxu0 0.0
    %3649 = vmatprep.subr.mxu0 0.0
    %3650 = vmatpush1.msra.mxu0 0.0
    %3651 = vmatprep.subr.mxu0 0.0
    %3652 = vmatpush1.msra.mxu0 0.0
    %3653 = vmatprep.subr.mxu0 0.0
    %3654 = vmatpush1.msra.mxu0 0.0
    %3655 = vmatprep.subr.mxu0 0.0
    %3656 = vmatpush1.msra.mxu0 0.0
    %3657 = vmatprep.subr.mxu0 0.0
    %3658 = vmatpush1.msra.mxu0 0.0
    %3659 = vmatprep.subr.mxu0 0.0
    %3660 = vmatpush1.msra.mxu0 0.0
    %3661 = vmatprep.subr.mxu0 0.0
    %3662 = vmatpush1.msra.mxu0 0.0
    %3663 = vmatprep.subr.mxu0 0.0
    %3664 = vmatpush1.msra.mxu0 0.0
    %3665 = vmatprep.subr.mxu0 0.0
    %3666 = vmatpush1.msra.mxu0 0.0
    %3667 = vmatprep.subr.mxu0 0.0
    %3668 = vmatpush1.msra.mxu0 0.0
    %3669 = vmatprep.subr.mxu0 0.0
    %3670 = vmatpush1.msra.mxu0 0.0
    %3671 = vmatprep.subr.mxu0 0.0
    %3672 = vmatpush1.msra.mxu0 0.0
    %3673 = vmatprep.subr.mxu0 0.0
    %3674 = vmatpush1.msra.mxu0 0.0
    %3675 = vmatprep.subr.mxu0 0.0
    %3676 = vmatpush1.msra.mxu0 0.0
    %3677 = vmatprep.subr.mxu0 0.0
    %3678 = vmatpush1.msra.mxu0 0.0
    %3679 = vmatprep.subr.mxu0 0.0
    %3680 = vmatpush1.msra.mxu0 0.0
    %3681 = vmatprep.subr.mxu0 0.0
    %3682 = vmatpush1.msra.mxu0 0.0
    %3683 = vmatprep.subr.mxu0 0.0
    %3684 = vmatpush1.msra.mxu0 0.0
    %3685 = vmatprep.subr.mxu0 0.0
    %3686 = vmatpush1.msra.mxu0 0.0
    %3687 = vmatprep.mubr.f32.mxu0 0.0
    %3688 = vmatmul.mubr.f32.gmra.mrb[0].mxu0 %v3621
    %v3689 = vpop.f32.mrb[0].mxu0
    %v3690 = vadd.f32 0.0, %v3689
    %v3691 = vpop.f32.mrb[0].mxu0
    %3692 = vdwg.mxu0
    %v3693 = vadd.f32 %v2593, %v3617
    %v3694 = vxor.u32 %v3693, 2147483648
    %v3695 = vmul.f32 %v3694, 1.442695
    %v3696 = vpow.pop %v3695
    %v3697 = vadd.f32 %v3696, 1.0
    %v3698 = vrcp.pop %v3697
    %v3699 = vmul.f32 1.0, %v3698
    %v3700 = vadd.f32 %v3617, %v2768
    %3702 = vrot.lane.b32.xlu0 %v3700, 64
    %v3703 = vpop.permute.xlu0 %3702
    %v3705 = vmul.f32 %v3699, %v3703
    %3707 = vrot.lane.b32.xlu0 %v3705, 64
    %v3708 = vpop.permute.xlu0 %3707
    %v3710 = vadd.f32 %v2593, %v3708
    %v3711 = vtanh.pop %v3710
    %v3712 = vsub.f32 1.0, %v3699
    %3714 = vrot.lane.b32.xlu0 %v3711, 96
    %v3715 = vpop.permute.xlu0 %3714
    %v3717 = vmul.f32 %v3712, %v3715
    %3718 = vrot.lane.b32.xlu0 %v3497, 32
    %v3719 = vpop.permute.xlu0 %3718
    %v3721 = vmul.f32 %v3699, %v3719
    %v3722 = vadd.f32 %v3717, %v3721
    %3724 = vrot.lane.b32.xlu0 %v3722, 96
    %v3725 = vpop.permute.xlu0 %3724
    %v3727 = vmul.f32 %v1370, %v3725
    %v3728 = vmul.f32 %v1377, %v3497
    %v3729 = vadd.f32 %v3727, %v3728
    %v3730 = vmul.f32 %v1370, %v3729
    %s3731 = scalar_lea.vmem [#allocation4], 16
    %3732 = vst.msk [vmem:[%s3731] sm:$0xf] %vm555, %v3730
    %3734 = vrot.lane.b32.xlu0 %v3690, 96
    %v3735 = vpop.permute.xlu0 %3734
    %v3737 = vadd.f32 %v2592, %v3735
    %v3738 = vxor.u32 %v3737, 2147483648
    %v3739 = vmul.f32 %v3738, 1.442695
    %v3740 = vpow.pop %v3739
    %v3741 = vadd.f32 %v3740, 1.0
    %v3742 = vrcp.pop %v3741
    %v3743 = vmul.f32 1.0, %v3742
    %v3744 = vrot.slane %v2592, 4
    %v3746 = vadd.f32 %v3744, %v3735
    %v3747 = vxor.u32 %v3746, 2147483648
    %v3748 = vmul.f32 %v3747, 1.442695
    %v3749 = vpow.pop %v3748
    %v3750 = vadd.f32 %v3749, 1.0
    %v3751 = vrcp.pop %v3750
    %v3752 = vmul.f32 1.0, %v3751
    %v3753 = vadd.f32 %v3690, %v2824
    %3755 = vrot.lane.b32.xlu0 %v3753, 32
    %v3756 = vpop.permute.xlu0 %3755
    %v3758 = vmul.f32 %v3743, %v3756
    %3759 = vrot.lane.b32.xlu0 %v2592, 96
    %v3760 = vpop.permute.xlu0 %3759
    %v3761 = vrot.slane %v3760, 4
    %3764 = vrot.lane.b32.xlu0 %v3758, 32
    %v3765 = vpop.permute.xlu0 %3764
    %v3767 = vadd.f32 %v3761, %v3765
    %v3768 = vtanh.pop %v3767
    %v3769 = vsub.f32 1.0, %v3752
    %v3770 = vmul.f32 %v3769, %v3768
    %v3771 = vmul.f32 %v3752, %v3543
    %v3772 = vadd.f32 %v3770, %v3771
    %v3773 = vmul.f32 %v1309, %v3772
    %v3774 = vmul.f32 %v1320, %v3543
    %v3775 = vadd.f32 %v3773, %v3774
    %v3776 = vmul.f32 %v1309, %v3775
    %s3777 = scalar_lea.vmem [#allocation5], 12
    %3778 = vst.msk [vmem:[%s3777] sm:$0xf] %vm555, %v3776
    %v3780 = vsel %vm357, %v3729, 0
    %3782 = vmatprep.subr.mxu0 0.0
    %3783 = vmatpush1.msra.mxu0 %v2605
    %3784 = vmatprep.subr.mxu0 0.0
    %3785 = vmatpush1.msra.mxu0 %v2606
    %3786 = vmatprep.subr.mxu0 0.0
    %3787 = vmatpush1.msra.mxu0 %v2607
    %3788 = vmatprep.subr.mxu0 0.0
    %3789 = vmatpush1.msra.mxu0 %v2608
    %3790 = vmatprep.subr.mxu0 0.0
    %3791 = vmatpush1.msra.mxu0 0.0
    %3792 = vmatprep.subr.mxu0 0.0
    %3793 = vmatpush1.msra.mxu0 0.0
    %3794 = vmatprep.subr.mxu0 0.0
    %3795 = vmatpush1.msra.mxu0 0.0
    %3796 = vmatprep.subr.mxu0 0.0
    %3797 = vmatpush1.msra.mxu0 0.0
    %3798 = vmatprep.subr.mxu0 0.0
    %3799 = vmatpush1.msra.mxu0 0.0
    %3800 = vmatprep.subr.mxu0 0.0
    %3801 = vmatpush1.msra.mxu0 0.0
    %3802 = vmatprep.subr.mxu0 0.0
    %3803 = vmatpush1.msra.mxu0 0.0
    %3804 = vmatprep.subr.mxu0 0.0
    %3805 = vmatpush1.msra.mxu0 0.0
    %3806 = vmatprep.subr.mxu0 0.0
    %3807 = vmatpush1.msra.mxu0 0.0
    %3808 = vmatprep.subr.mxu0 0.0
    %3809 = vmatpush1.msra.mxu0 0.0
    %3810 = vmatprep.subr.mxu0 0.0
    %3811 = vmatpush1.msra.mxu0 0.0
    %3812 = vmatprep.subr.mxu0 0.0
    %3813 = vmatpush1.msra.mxu0 0.0
    %3814 = vmatprep.subr.mxu0 0.0
    %3815 = vmatpush1.msra.mxu0 0.0
    %3816 = vmatprep.subr.mxu0 0.0
    %3817 = vmatpush1.msra.mxu0 0.0
    %3818 = vmatprep.subr.mxu0 0.0
    %3819 = vmatpush1.msra.mxu0 0.0
    %3820 = vmatprep.subr.mxu0 0.0
    %3821 = vmatpush1.msra.mxu0 0.0
    %3822 = vmatprep.subr.mxu0 0.0
    %3823 = vmatpush1.msra.mxu0 0.0
    %3824 = vmatprep.subr.mxu0 0.0
    %3825 = vmatpush1.msra.mxu0 0.0
    %3826 = vmatprep.subr.mxu0 0.0
    %3827 = vmatpush1.msra.mxu0 0.0
    %3828 = vmatprep.subr.mxu0 0.0
    %3829 = vmatpush1.msra.mxu0 0.0
    %3830 = vmatprep.subr.mxu0 0.0
    %3831 = vmatpush1.msra.mxu0 0.0
    %3832 = vmatprep.subr.mxu0 0.0
    %3833 = vmatpush1.msra.mxu0 0.0
    %3834 = vmatprep.subr.mxu0 0.0
    %3835 = vmatpush1.msra.mxu0 0.0
    %3836 = vmatprep.subr.mxu0 0.0
    %3837 = vmatpush1.msra.mxu0 0.0
    %3838 = vmatprep.subr.mxu0 0.0
    %3839 = vmatpush1.msra.mxu0 0.0
    %3840 = vmatprep.subr.mxu0 0.0
    %3841 = vmatpush1.msra.mxu0 0.0
    %3842 = vmatprep.subr.mxu0 0.0
    %3843 = vmatpush1.msra.mxu0 0.0
    %3844 = vmatprep.subr.mxu0 0.0
    %3845 = vmatpush1.msra.mxu0 0.0
    %3846 = vmatprep.mubr.f32.mxu0 0.0
    %3847 = vmatmul.mubr.f32.gmra.mrb[0].mxu0 %v3780
    %v3848 = vpop.f32.mrb[0].mxu0
    %v3849 = vadd.f32 0.0, %v3848
    %v3850 = vpop.f32.mrb[0].mxu0
    %3851 = vdwg.mxu0
    %v3853 = vsel %vm357, %v3775, 0
    %3855 = vmatprep.subr.mxu0 0.0
    %3856 = vmatpush1.msra.mxu0 %v2609
    %3857 = vmatprep.subr.mxu0 0.0
    %3858 = vmatpush1.msra.mxu0 %v2610
    %3859 = vmatprep.subr.mxu0 0.0
    %3860 = vmatpush1.msra.mxu0 %v2611
    %3861 = vmatprep.subr.mxu0 0.0
    %3862 = vmatpush1.msra.mxu0 %v2612
    %3863 = vmatprep.subr.mxu0 0.0
    %3864 = vmatpush1.msra.mxu0 0.0
    %3865 = vmatprep.subr.mxu0 0.0
    %3866 = vmatpush1.msra.mxu0 0.0
    %3867 = vmatprep.subr.mxu0 0.0
    %3868 = vmatpush1.msra.mxu0 0.0
    %3869 = vmatprep.subr.mxu0 0.0
    %3870 = vmatpush1.msra.mxu0 0.0
    %3871 = vmatprep.subr.mxu0 0.0
    %3872 = vmatpush1.msra.mxu0 0.0
    %3873 = vmatprep.subr.mxu0 0.0
    %3874 = vmatpush1.msra.mxu0 0.0
    %3875 = vmatprep.subr.mxu0 0.0
    %3876 = vmatpush1.msra.mxu0 0.0
    %3877 = vmatprep.subr.mxu0 0.0
    %3878 = vmatpush1.msra.mxu0 0.0
    %3879 = vmatprep.subr.mxu0 0.0
    %3880 = vmatpush1.msra.mxu0 0.0
    %3881 = vmatprep.subr.mxu0 0.0
    %3882 = vmatpush1.msra.mxu0 0.0
    %3883 = vmatprep.subr.mxu0 0.0
    %3884 = vmatpush1.msra.mxu0 0.0
    %3885 = vmatprep.subr.mxu0 0.0
    %3886 = vmatpush1.msra.mxu0 0.0
    %3887 = vmatprep.subr.mxu0 0.0
    %3888 = vmatpush1.msra.mxu0 0.0
    %3889 = vmatprep.subr.mxu0 0.0
    %3890 = vmatpush1.msra.mxu0 0.0
    %3891 = vmatprep.subr.mxu0 0.0
    %3892 = vmatpush1.msra.mxu0 0.0
    %3893 = vmatprep.subr.mxu0 0.0
    %3894 = vmatpush1.msra.mxu0 0.0
    %3895 = vmatprep.subr.mxu0 0.0
    %3896 = vmatpush1.msra.mxu0 0.0
    %3897 = vmatprep.subr.mxu0 0.0
    %3898 = vmatpush1.msra.mxu0 0.0
    %3899 = vmatprep.subr.mxu0 0.0
    %3900 = vmatpush1.msra.mxu0 0.0
    %3901 = vmatprep.subr.mxu0 0.0
    %3902 = vmatpush1.msra.mxu0 0.0
    %3903 = vmatprep.subr.mxu0 0.0
    %3904 = vmatpush1.msra.mxu0 0.0
    %3905 = vmatprep.subr.mxu0 0.0
    %3906 = vmatpush1.msra.mxu0 0.0
    %3907 = vmatprep.subr.mxu0 0.0
    %3908 = vmatpush1.msra.mxu0 0.0
    %3909 = vmatprep.subr.mxu0 0.0
    %3910 = vmatpush1.msra.mxu0 0.0
    %3911 = vmatprep.subr.mxu0 0.0
    %3912 = vmatpush1.msra.mxu0 0.0
    %3913 = vmatprep.subr.mxu0 0.0
    %3914 = vmatpush1.msra.mxu0 0.0
    %3915 = vmatprep.subr.mxu0 0.0
    %3916 = vmatpush1.msra.mxu0 0.0
    %3917 = vmatprep.subr.mxu0 0.0
    %3918 = vmatpush1.msra.mxu0 0.0
    %3919 = vmatprep.mubr.f32.mxu0 0.0
    %3920 = vmatmul.mubr.f32.gmra.mrb[0].mxu0 %v3853
    %v3921 = vpop.f32.mrb[0].mxu0
    %v3922 = vadd.f32 0.0, %v3921
    %v3923 = vpop.f32.mrb[0].mxu0
    %3924 = vdwg.mxu0
    %v3925 = vadd.f32 %v2594, %v3849
    %v3926 = vxor.u32 %v3925, 2147483648
    %v3927 = vmul.f32 %v3926, 1.442695
    %v3928 = vpow.pop %v3927
    %v3929 = vadd.f32 %v3928, 1.0
    %v3930 = vrcp.pop %v3929
    %v3931 = vmul.f32 1.0, %v3930
    %v3932 = vadd.f32 %v3849, %v2768
    %3934 = vrot.lane.b32.xlu0 %v3932, 64
    %v3935 = vpop.permute.xlu0 %3934
    %v3937 = vmul.f32 %v3931, %v3935
    %3939 = vrot.lane.b32.xlu0 %v3937, 64
    %v3940 = vpop.permute.xlu0 %3939
    %v3942 = vadd.f32 %v2594, %v3940
    %v3943 = vtanh.pop %v3942
    %v3944 = vsub.f32 1.0, %v3931
    %3946 = vrot.lane.b32.xlu0 %v3943, 96
    %v3947 = vpop.permute.xlu0 %3946
    %v3949 = vmul.f32 %v3944, %v3947
    %3950 = vrot.lane.b32.xlu0 %v3729, 32
    %v3951 = vpop.permute.xlu0 %3950
    %v3953 = vmul.f32 %v3931, %v3951
    %v3954 = vadd.f32 %v3949, %v3953
    %3956 = vrot.lane.b32.xlu0 %v3954, 96
    %v3957 = vpop.permute.xlu0 %3956
    %v3959 = vmul.f32 %v1116, %v3957
    %v3960 = vmul.f32 %v1123, %v3729
    %v3961 = vadd.f32 %v3959, %v3960
    %v3962 = vmul.f32 %v1116, %v3961
    %s3963 = scalar_lea.vmem [#allocation4], 20
    %3964 = vst.msk [vmem:[%s3963] sm:$0xf] %vm555, %v3962
    %3966 = vrot.lane.b32.xlu0 %v3922, 96
    %v3967 = vpop.permute.xlu0 %3966
    %v3969 = vadd.f32 %v2591, %v3967
    %v3970 = vxor.u32 %v3969, 2147483648
    %v3971 = vmul.f32 %v3970, 1.442695
    %v3972 = vpow.pop %v3971
    %v3973 = vadd.f32 %v3972, 1.0
    %v3974 = vrcp.pop %v3973
    %v3975 = vmul.f32 1.0, %v3974
    %v3976 = vrot.slane %v2591, 4
    %v3978 = vadd.f32 %v3976, %v3967
    %v3979 = vxor.u32 %v3978, 2147483648
    %v3980 = vmul.f32 %v3979, 1.442695
    %v3981 = vpow.pop %v3980
    %v3982 = vadd.f32 %v3981, 1.0
    %v3983 = vrcp.pop %v3982
    %v3984 = vmul.f32 1.0, %v3983
    %v3985 = vadd.f32 %v3922, %v2824
    %3987 = vrot.lane.b32.xlu0 %v3985, 32
    %v3988 = vpop.permute.xlu0 %3987
    %v3990 = vmul.f32 %v3975, %v3988
    %3991 = vrot.lane.b32.xlu0 %v2591, 96
    %v3992 = vpop.permute.xlu0 %3991
    %v3993 = vrot.slane %v3992, 4
    %3996 = vrot.lane.b32.xlu0 %v3990, 32
    %v3997 = vpop.permute.xlu0 %3996
    %v3999 = vadd.f32 %v3993, %v3997
    %v4000 = vtanh.pop %v3999
    %v4001 = vsub.f32 1.0, %v3984
    %v4002 = vmul.f32 %v4001, %v4000
    %v4003 = vmul.f32 %v3984, %v3775
    %v4004 = vadd.f32 %v4002, %v4003
    %v4005 = vmul.f32 %v1055, %v4004
    %v4006 = vmul.f32 %v1066, %v3775
    %v4007 = vadd.f32 %v4005, %v4006
    %v4008 = vmul.f32 %v1055, %v4007
    %s4009 = scalar_lea.vmem [#allocation5], 8
    %4010 = vst.msk [vmem:[%s4009] sm:$0xf] %vm555, %v4008
    %v4012 = vsel %vm357, %v3961, 0
    %4014 = vmatprep.subr.mxu0 0.0
    %4015 = vmatpush1.msra.mxu0 %v2605
    %4016 = vmatprep.subr.mxu0 0.0
    %4017 = vmatpush1.msra.mxu0 %v2606
    %4018 = vmatprep.subr.mxu0 0.0
    %4019 = vmatpush1.msra.mxu0 %v2607
    %4020 = vmatprep.subr.mxu0 0.0
    %4021 = vmatpush1.msra.mxu0 %v2608
    %4022 = vmatprep.subr.mxu0 0.0
    %4023 = vmatpush1.msra.mxu0 0.0
    %4024 = vmatprep.subr.mxu0 0.0
    %4025 = vmatpush1.msra.mxu0 0.0
    %4026 = vmatprep.subr.mxu0 0.0
    %4027 = vmatpush1.msra.mxu0 0.0
    %4028 = vmatprep.subr.mxu0 0.0
    %4029 = vmatpush1.msra.mxu0 0.0
    %4030 = vmatprep.subr.mxu0 0.0
    %4031 = vmatpush1.msra.mxu0 0.0
    %4032 = vmatprep.subr.mxu0 0.0
    %4033 = vmatpush1.msra.mxu0 0.0
    %4034 = vmatprep.subr.mxu0 0.0
    %4035 = vmatpush1.msra.mxu0 0.0
    %4036 = vmatprep.subr.mxu0 0.0
    %4037 = vmatpush1.msra.mxu0 0.0
    %4038 = vmatprep.subr.mxu0 0.0
    %4039 = vmatpush1.msra.mxu0 0.0
    %4040 = vmatprep.subr.mxu0 0.0
    %4041 = vmatpush1.msra.mxu0 0.0
    %4042 = vmatprep.subr.mxu0 0.0
    %4043 = vmatpush1.msra.mxu0 0.0
    %4044 = vmatprep.subr.mxu0 0.0
    %4045 = vmatpush1.msra.mxu0 0.0
    %4046 = vmatprep.subr.mxu0 0.0
    %4047 = vmatpush1.msra.mxu0 0.0
    %4048 = vmatprep.subr.mxu0 0.0
    %4049 = vmatpush1.msra.mxu0 0.0
    %4050 = vmatprep.subr.mxu0 0.0
    %4051 = vmatpush1.msra.mxu0 0.0
    %4052 = vmatprep.subr.mxu0 0.0
    %4053 = vmatpush1.msra.mxu0 0.0
    %4054 = vmatprep.subr.mxu0 0.0
    %4055 = vmatpush1.msra.mxu0 0.0
    %4056 = vmatprep.subr.mxu0 0.0
    %4057 = vmatpush1.msra.mxu0 0.0
    %4058 = vmatprep.subr.mxu0 0.0
    %4059 = vmatpush1.msra.mxu0 0.0
    %4060 = vmatprep.subr.mxu0 0.0
    %4061 = vmatpush1.msra.mxu0 0.0
    %4062 = vmatprep.subr.mxu0 0.0
    %4063 = vmatpush1.msra.mxu0 0.0
    %4064 = vmatprep.subr.mxu0 0.0
    %4065 = vmatpush1.msra.mxu0 0.0
    %4066 = vmatprep.subr.mxu0 0.0
    %4067 = vmatpush1.msra.mxu0 0.0
    %4068 = vmatprep.subr.mxu0 0.0
    %4069 = vmatpush1.msra.mxu0 0.0
    %4070 = vmatprep.subr.mxu0 0.0
    %4071 = vmatpush1.msra.mxu0 0.0
    %4072 = vmatprep.subr.mxu0 0.0
    %4073 = vmatpush1.msra.mxu0 0.0
    %4074 = vmatprep.subr.mxu0 0.0
    %4075 = vmatpush1.msra.mxu0 0.0
    %4076 = vmatprep.subr.mxu0 0.0
    %4077 = vmatpush1.msra.mxu0 0.0
    %4078 = vmatprep.mubr.f32.mxu0 0.0
    %4079 = vmatmul.mubr.f32.gmra.mrb[0].mxu0 %v4012
    %v4080 = vpop.f32.mrb[0].mxu0
    %v4081 = vadd.f32 0.0, %v4080
    %v4082 = vpop.f32.mrb[0].mxu0
    %4083 = vdwg.mxu0
    %v4085 = vsel %vm357, %v4007, 0
    %4087 = vmatprep.subr.mxu0 0.0
    %4088 = vmatpush1.msra.mxu0 %v2609
    %4089 = vmatprep.subr.mxu0 0.0
    %4090 = vmatpush1.msra.mxu0 %v2610
    %4091 = vmatprep.subr.mxu0 0.0
    %4092 = vmatpush1.msra.mxu0 %v2611
    %4093 = vmatprep.subr.mxu0 0.0
    %4094 = vmatpush1.msra.mxu0 %v2612
    %4095 = vmatprep.subr.mxu0 0.0
    %4096 = vmatpush1.msra.mxu0 0.0
    %4097 = vmatprep.subr.mxu0 0.0
    %4098 = vmatpush1.msra.mxu0 0.0
    %4099 = vmatprep.subr.mxu0 0.0
    %4100 = vmatpush1.msra.mxu0 0.0
    %4101 = vmatprep.subr.mxu0 0.0
    %4102 = vmatpush1.msra.mxu0 0.0
    %4103 = vmatprep.subr.mxu0 0.0
    %4104 = vmatpush1.msra.mxu0 0.0
    %4105 = vmatprep.subr.mxu0 0.0
    %4106 = vmatpush1.msra.mxu0 0.0
    %4107 = vmatprep.subr.mxu0 0.0
    %4108 = vmatpush1.msra.mxu0 0.0
    %4109 = vmatprep.subr.mxu0 0.0
    %4110 = vmatpush1.msra.mxu0 0.0
    %4111 = vmatprep.subr.mxu0 0.0
    %4112 = vmatpush1.msra.mxu0 0.0
    %4113 = vmatprep.subr.mxu0 0.0
    %4114 = vmatpush1.msra.mxu0 0.0
    %4115 = vmatprep.subr.mxu0 0.0
    %4116 = vmatpush1.msra.mxu0 0.0
    %4117 = vmatprep.subr.mxu0 0.0
    %4118 = vmatpush1.msra.mxu0 0.0
    %4119 = vmatprep.subr.mxu0 0.0
    %4120 = vmatpush1.msra.mxu0 0.0
    %4121 = vmatprep.subr.mxu0 0.0
    %4122 = vmatpush1.msra.mxu0 0.0
    %4123 = vmatprep.subr.mxu0 0.0
    %4124 = vmatpush1.msra.mxu0 0.0
    %4125 = vmatprep.subr.mxu0 0.0
    %4126 = vmatpush1.msra.mxu0 0.0
    %4127 = vmatprep.subr.mxu0 0.0
    %4128 = vmatpush1.msra.mxu0 0.0
    %4129 = vmatprep.subr.mxu0 0.0
    %4130 = vmatpush1.msra.mxu0 0.0
    %4131 = vmatprep.subr.mxu0 0.0
    %4132 = vmatpush1.msra.mxu0 0.0
    %4133 = vmatprep.subr.mxu0 0.0
    %4134 = vmatpush1.msra.mxu0 0.0
    %4135 = vmatprep.subr.mxu0 0.0
    %4136 = vmatpush1.msra.mxu0 0.0
    %4137 = vmatprep.subr.mxu0 0.0
    %4138 = vmatpush1.msra.mxu0 0.0
    %4139 = vmatprep.subr.mxu0 0.0
    %4140 = vmatpush1.msra.mxu0 0.0
    %4141 = vmatprep.subr.mxu0 0.0
    %4142 = vmatpush1.msra.mxu0 0.0
    %4143 = vmatprep.subr.mxu0 0.0
    %4144 = vmatpush1.msra.mxu0 0.0
    %4145 = vmatprep.subr.mxu0 0.0
    %4146 = vmatpush1.msra.mxu0 0.0
    %4147 = vmatprep.subr.mxu0 0.0
    %4148 = vmatpush1.msra.mxu0 0.0
    %4149 = vmatprep.subr.mxu0 0.0
    %4150 = vmatpush1.msra.mxu0 0.0
    %4151 = vmatprep.mubr.f32.mxu0 0.0
    %4152 = vmatmul.mubr.f32.gmra.mrb[0].mxu0 %v4085
    %v4153 = vpop.f32.mrb[0].mxu0
    %v4154 = vadd.f32 0.0, %v4153
    %v4155 = vpop.f32.mrb[0].mxu0
    %4156 = vdwg.mxu0
    %v4157 = vadd.f32 %v2595, %v4081
    %v4158 = vxor.u32 %v4157, 2147483648
    %v4159 = vmul.f32 %v4158, 1.442695
    %v4160 = vpow.pop %v4159
    %v4161 = vadd.f32 %v4160, 1.0
    %v4162 = vrcp.pop %v4161
    %v4163 = vmul.f32 1.0, %v4162
    %v4164 = vadd.f32 %v4081, %v2768
    %4166 = vrot.lane.b32.xlu0 %v4164, 64
    %v4167 = vpop.permute.xlu0 %4166
    %v4169 = vmul.f32 %v4163, %v4167
    %4171 = vrot.lane.b32.xlu0 %v4169, 64
    %v4172 = vpop.permute.xlu0 %4171
    %v4174 = vadd.f32 %v2595, %v4172
    %v4175 = vtanh.pop %v4174
    %v4176 = vsub.f32 1.0, %v4163
    %4178 = vrot.lane.b32.xlu0 %v4175, 96
    %v4179 = vpop.permute.xlu0 %4178
    %v4181 = vmul.f32 %v4176, %v4179
    %4182 = vrot.lane.b32.xlu0 %v3961, 32
    %v4183 = vpop.permute.xlu0 %4182
    %v4185 = vmul.f32 %v4163, %v4183
    %v4186 = vadd.f32 %v4181, %v4185
    %4188 = vrot.lane.b32.xlu0 %v4186, 96
    %v4189 = vpop.permute.xlu0 %4188
    %v4191 = vmul.f32 %v862, %v4189
    %v4192 = vmul.f32 %v869, %v3961
    %v4193 = vadd.f32 %v4191, %v4192
    %v4194 = vmul.f32 %v862, %v4193
    %s4195 = scalar_lea.vmem [#allocation4], 24
    %4196 = vst.msk [vmem:[%s4195] sm:$0xf] %vm555, %v4194
    %4198 = vrot.lane.b32.xlu0 %v4154, 96
    %v4199 = vpop.permute.xlu0 %4198
    %v4201 = vadd.f32 %v2590, %v4199
    %v4202 = vxor.u32 %v4201, 2147483648
    %v4203 = vmul.f32 %v4202, 1.442695
    %v4204 = vpow.pop %v4203
    %v4205 = vadd.f32 %v4204, 1.0
    %v4206 = vrcp.pop %v4205
    %v4207 = vmul.f32 1.0, %v4206
    %v4208 = vrot.slane %v2590, 4
    %v4210 = vadd.f32 %v4208, %v4199
    %v4211 = vxor.u32 %v4210, 2147483648
    %v4212 = vmul.f32 %v4211, 1.442695
    %v4213 = vpow.pop %v4212
    %v4214 = vadd.f32 %v4213, 1.0
    %v4215 = vrcp.pop %v4214
    %v4216 = vmul.f32 1.0, %v4215
    %v4217 = vadd.f32 %v4154, %v2824
    %4219 = vrot.lane.b32.xlu0 %v4217, 32
    %v4220 = vpop.permute.xlu0 %4219
    %v4222 = vmul.f32 %v4207, %v4220
    %4223 = vrot.lane.b32.xlu0 %v2590, 96
    %v4224 = vpop.permute.xlu0 %4223
    %v4225 = vrot.slane %v4224, 4
    %4228 = vrot.lane.b32.xlu0 %v4222, 32
    %v4229 = vpop.permute.xlu0 %4228
    %v4231 = vadd.f32 %v4225, %v4229
    %v4232 = vtanh.pop %v4231
    %v4233 = vsub.f32 1.0, %v4216
    %v4234 = vmul.f32 %v4233, %v4232
    %v4235 = vmul.f32 %v4216, %v4007
    %v4236 = vadd.f32 %v4234, %v4235
    %v4237 = vmul.f32 %v801, %v4236
    %v4238 = vmul.f32 %v812, %v4007
    %v4239 = vadd.f32 %v4237, %v4238
    %v4240 = vmul.f32 %v801, %v4239
    %s4241 = scalar_lea.vmem [#allocation5], 4
    %4242 = vst.msk [vmem:[%s4241] sm:$0xf] %vm555, %v4240
    %v4244 = vsel %vm357, %v4193, 0
    %4246 = vmatprep.subr.mxu0 0.0
    %4247 = vmatpush1.msra.mxu0 %v2605
    %4248 = vmatprep.subr.mxu0 0.0
    %4249 = vmatpush1.msra.mxu0 %v2606
    %4250 = vmatprep.subr.mxu0 0.0
    %4251 = vmatpush1.msra.mxu0 %v2607
    %4252 = vmatprep.subr.mxu0 0.0
    %4253 = vmatpush1.msra.mxu0 %v2608
    %4254 = vmatprep.subr.mxu0 0.0
    %4255 = vmatpush1.msra.mxu0 0.0
    %4256 = vmatprep.subr.mxu0 0.0
    %4257 = vmatpush1.msra.mxu0 0.0
    %4258 = vmatprep.subr.mxu0 0.0
    %4259 = vmatpush1.msra.mxu0 0.0
    %4260 = vmatprep.subr.mxu0 0.0
    %4261 = vmatpush1.msra.mxu0 0.0
    %4262 = vmatprep.subr.mxu0 0.0
    %4263 = vmatpush1.msra.mxu0 0.0
    %4264 = vmatprep.subr.mxu0 0.0
    %4265 = vmatpush1.msra.mxu0 0.0
    %4266 = vmatprep.subr.mxu0 0.0
    %4267 = vmatpush1.msra.mxu0 0.0
    %4268 = vmatprep.subr.mxu0 0.0
    %4269 = vmatpush1.msra.mxu0 0.0
    %4270 = vmatprep.subr.mxu0 0.0
    %4271 = vmatpush1.msra.mxu0 0.0
    %4272 = vmatprep.subr.mxu0 0.0
    %4273 = vmatpush1.msra.mxu0 0.0
    %4274 = vmatprep.subr.mxu0 0.0
    %4275 = vmatpush1.msra.mxu0 0.0
    %4276 = vmatprep.subr.mxu0 0.0
    %4277 = vmatpush1.msra.mxu0 0.0
    %4278 = vmatprep.subr.mxu0 0.0
    %4279 = vmatpush1.msra.mxu0 0.0
    %4280 = vmatprep.subr.mxu0 0.0
    %4281 = vmatpush1.msra.mxu0 0.0
    %4282 = vmatprep.subr.mxu0 0.0
    %4283 = vmatpush1.msra.mxu0 0.0
    %4284 = vmatprep.subr.mxu0 0.0
    %4285 = vmatpush1.msra.mxu0 0.0
    %4286 = vmatprep.subr.mxu0 0.0
    %4287 = vmatpush1.msra.mxu0 0.0
    %4288 = vmatprep.subr.mxu0 0.0
    %4289 = vmatpush1.msra.mxu0 0.0
    %4290 = vmatprep.subr.mxu0 0.0
    %4291 = vmatpush1.msra.mxu0 0.0
    %4292 = vmatprep.subr.mxu0 0.0
    %4293 = vmatpush1.msra.mxu0 0.0
    %4294 = vmatprep.subr.mxu0 0.0
    %4295 = vmatpush1.msra.mxu0 0.0
    %4296 = vmatprep.subr.mxu0 0.0
    %4297 = vmatpush1.msra.mxu0 0.0
    %4298 = vmatprep.subr.mxu0 0.0
    %4299 = vmatpush1.msra.mxu0 0.0
    %4300 = vmatprep.subr.mxu0 0.0
    %4301 = vmatpush1.msra.mxu0 0.0
    %4302 = vmatprep.subr.mxu0 0.0
    %4303 = vmatpush1.msra.mxu0 0.0
    %4304 = vmatprep.subr.mxu0 0.0
    %4305 = vmatpush1.msra.mxu0 0.0
    %4306 = vmatprep.subr.mxu0 0.0
    %4307 = vmatpush1.msra.mxu0 0.0
    %4308 = vmatprep.subr.mxu0 0.0
    %4309 = vmatpush1.msra.mxu0 0.0
    %4310 = vmatprep.mubr.f32.mxu0 0.0
    %4311 = vmatmul.mubr.f32.gmra.mrb[0].mxu0 %v4244
    %v4312 = vpop.f32.mrb[0].mxu0
    %v4313 = vadd.f32 0.0, %v4312
    %v4314 = vpop.f32.mrb[0].mxu0
    %4315 = vdwg.mxu0
    %v4317 = vsel %vm357, %v4239, 0
    %4319 = vmatprep.subr.mxu0 0.0
    %4320 = vmatpush1.msra.mxu0 %v2609
    %4321 = vmatprep.subr.mxu0 0.0
    %4322 = vmatpush1.msra.mxu0 %v2610
    %4323 = vmatprep.subr.mxu0 0.0
    %4324 = vmatpush1.msra.mxu0 %v2611
    %4325 = vmatprep.subr.mxu0 0.0
    %4326 = vmatpush1.msra.mxu0 %v2612
    %4327 = vmatprep.subr.mxu0 0.0
    %4328 = vmatpush1.msra.mxu0 0.0
    %4329 = vmatprep.subr.mxu0 0.0
    %4330 = vmatpush1.msra.mxu0 0.0
    %4331 = vmatprep.subr.mxu0 0.0
    %4332 = vmatpush1.msra.mxu0 0.0
    %4333 = vmatprep.subr.mxu0 0.0
    %4334 = vmatpush1.msra.mxu0 0.0
    %4335 = vmatprep.subr.mxu0 0.0
    %4336 = vmatpush1.msra.mxu0 0.0
    %4337 = vmatprep.subr.mxu0 0.0
    %4338 = vmatpush1.msra.mxu0 0.0
    %4339 = vmatprep.subr.mxu0 0.0
    %4340 = vmatpush1.msra.mxu0 0.0
    %4341 = vmatprep.subr.mxu0 0.0
    %4342 = vmatpush1.msra.mxu0 0.0
    %4343 = vmatprep.subr.mxu0 0.0
    %4344 = vmatpush1.msra.mxu0 0.0
    %4345 = vmatprep.subr.mxu0 0.0
    %4346 = vmatpush1.msra.mxu0 0.0
    %4347 = vmatprep.subr.mxu0 0.0
    %4348 = vmatpush1.msra.mxu0 0.0
    %4349 = vmatprep.subr.mxu0 0.0
    %4350 = vmatpush1.msra.mxu0 0.0
    %4351 = vmatprep.subr.mxu0 0.0
    %4352 = vmatpush1.msra.mxu0 0.0
    %4353 = vmatprep.subr.mxu0 0.0
    %4354 = vmatpush1.msra.mxu0 0.0
    %4355 = vmatprep.subr.mxu0 0.0
    %4356 = vmatpush1.msra.mxu0 0.0
    %4357 = vmatprep.subr.mxu0 0.0
    %4358 = vmatpush1.msra.mxu0 0.0
    %4359 = vmatprep.subr.mxu0 0.0
    %4360 = vmatpush1.msra.mxu0 0.0
    %4361 = vmatprep.subr.mxu0 0.0
    %4362 = vmatpush1.msra.mxu0 0.0
    %4363 = vmatprep.subr.mxu0 0.0
    %4364 = vmatpush1.msra.mxu0 0.0
    %4365 = vmatprep.subr.mxu0 0.0
    %4366 = vmatpush1.msra.mxu0 0.0
    %4367 = vmatprep.subr.mxu0 0.0
    %4368 = vmatpush1.msra.mxu0 0.0
    %4369 = vmatprep.subr.mxu0 0.0
    %4370 = vmatpush1.msra.mxu0 0.0
    %4371 = vmatprep.subr.mxu0 0.0
    %4372 = vmatpush1.msra.mxu0 0.0
    %4373 = vmatprep.subr.mxu0 0.0
    %4374 = vmatpush1.msra.mxu0 0.0
    %4375 = vmatprep.subr.mxu0 0.0
    %4376 = vmatpush1.msra.mxu0 0.0
    %4377 = vmatprep.subr.mxu0 0.0
    %4378 = vmatpush1.msra.mxu0 0.0
    %4379 = vmatprep.subr.mxu0 0.0
    %4380 = vmatpush1.msra.mxu0 0.0
    %4381 = vmatprep.subr.mxu0 0.0
    %4382 = vmatpush1.msra.mxu0 0.0
    %4383 = vmatprep.mubr.f32.mxu0 0.0
    %4384 = vmatmul.mubr.f32.gmra.mrb[0].mxu0 %v4317
    %v4385 = vpop.f32.mrb[0].mxu0
    %v4386 = vadd.f32 0.0, %v4385
    %v4387 = vpop.f32.mrb[0].mxu0
    %4388 = vdwg.mxu0
    %v4389 = vadd.f32 %v2596, %v4313
    %v4390 = vxor.u32 %v4389, 2147483648
    %v4391 = vmul.f32 %v4390, 1.442695
    %v4392 = vpow.pop %v4391
    %v4393 = vadd.f32 %v4392, 1.0
    %v4394 = vrcp.pop %v4393
    %v4395 = vmul.f32 1.0, %v4394
    %v4396 = vadd.f32 %v4313, %v2768
    %4398 = vrot.lane.b32.xlu0 %v4396, 64
    %v4399 = vpop.permute.xlu0 %4398
    %v4401 = vmul.f32 %v4395, %v4399
    %4403 = vrot.lane.b32.xlu0 %v4401, 64
    %v4404 = vpop.permute.xlu0 %4403
    %v4406 = vadd.f32 %v2596, %v4404
    %v4407 = vtanh.pop %v4406
    %v4408 = vsub.f32 1.0, %v4395
    %4410 = vrot.lane.b32.xlu0 %v4407, 96
    %v4411 = vpop.permute.xlu0 %4410
    %v4413 = vmul.f32 %v4408, %v4411
    %4414 = vrot.lane.b32.xlu0 %v4193, 32
    %v4415 = vpop.permute.xlu0 %4414
    %v4417 = vmul.f32 %v4395, %v4415
    %v4418 = vadd.f32 %v4413, %v4417
    %4420 = vrot.lane.b32.xlu0 %v4418, 96
    %v4421 = vpop.permute.xlu0 %4420
    %v4423 = vmul.f32 %v608, %v4421
    %v4424 = vmul.f32 %v615, %v4193
    %v4425 = vadd.f32 %v4423, %v4424
    %v4426 = vmul.f32 %v608, %v4425
    %s4427 = scalar_lea.vmem [#allocation4], 28
    %4428 = vst.msk [vmem:[%s4427] sm:$0xf] %vm555, %v4426
    %4430 = vrot.lane.b32.xlu0 %v4386, 96
    %v4431 = vpop.permute.xlu0 %4430
    %v4433 = vadd.f32 %v2589, %v4431
    %v4434 = vxor.u32 %v4433, 2147483648
    %v4435 = vmul.f32 %v4434, 1.442695
    %v4436 = vpow.pop %v4435
    %v4437 = vadd.f32 %v4436, 1.0
    %v4438 = vrcp.pop %v4437
    %v4439 = vmul.f32 1.0, %v4438
    %v4440 = vrot.slane %v2589, 4
    %v4442 = vadd.f32 %v4440, %v4431
    %v4443 = vxor.u32 %v4442, 2147483648
    %v4444 = vmul.f32 %v4443, 1.442695
    %v4445 = vpow.pop %v4444
    %v4446 = vadd.f32 %v4445, 1.0
    %v4447 = vrcp.pop %v4446
    %v4448 = vmul.f32 1.0, %v4447
    %v4449 = vadd.f32 %v4386, %v2824
    %4451 = vrot.lane.b32.xlu0 %v4449, 32
    %v4452 = vpop.permute.xlu0 %4451
    %v4454 = vmul.f32 %v4439, %v4452
    %4455 = vrot.lane.b32.xlu0 %v2589, 96
    %v4456 = vpop.permute.xlu0 %4455
    %v4457 = vrot.slane %v4456, 4
    %4460 = vrot.lane.b32.xlu0 %v4454, 32
    %v4461 = vpop.permute.xlu0 %4460
    %v4463 = vadd.f32 %v4457, %v4461
    %v4464 = vtanh.pop %v4463
    %v4465 = vsub.f32 1.0, %v4448
    %v4466 = vmul.f32 %v4465, %v4464
    %v4467 = vmul.f32 %v4448, %v4239
    %v4468 = vadd.f32 %v4466, %v4467
    %v4469 = vmul.f32 %v539, %v4468
    %v4470 = vmul.f32 %v550, %v4239
    %v4471 = vadd.f32 %v4469, %v4470
    %v4472 = vmul.f32 %v539, %v4471
    %4473 = vst.msk [vmem:[#allocation5] sm:$0xf] %vm555, %v4472
    %v4474 = vld [vmem:[#allocation4] sm:$0xf]
    %v4475 = vld [vmem:[#allocation4 + $0x4] sm:$0xf]
    %v4476 = vld [vmem:[#allocation4 + $0x8] sm:$0xf]
    %v4477 = vld [vmem:[#allocation4 + $0xc] sm:$0xf]
    %v4478 = vld [vmem:[#allocation4 + $0x10] sm:$0xf]
    %v4479 = vld [vmem:[#allocation4 + $0x14] sm:$0xf]
    %v4480 = vld [vmem:[#allocation4 + $0x18] sm:$0xf]
    %v4481 = vld [vmem:[#allocation4 + $0x1c] sm:$0xf]
    %v4482 = vld [vmem:[#allocation5] sm:$0xf]
    %v4483 = vld [vmem:[#allocation5 + $0x4] sm:$0xf]
    %v4484 = vld [vmem:[#allocation5 + $0x8] sm:$0xf]
    %v4485 = vld [vmem:[#allocation5 + $0xc] sm:$0xf]
    %v4486 = vld [vmem:[#allocation5 + $0x10] sm:$0xf]
    %v4487 = vld [vmem:[#allocation5 + $0x14] sm:$0xf]
    %v4488 = vld [vmem:[#allocation5 + $0x18] sm:$0xf]
    %v4489 = vld [vmem:[#allocation5 + $0x1c] sm:$0xf]
    %v4490 = vld [vmem:[#allocation21] sm:$0x1]
    %v4491 = vld [vmem:[#allocation22] sm:$0x1]
    %s4492 = sld [smem:[#allocation6]]
    %v4494 = vlaneseq
    %v4495 = vshrl.u32 %v4494, 7
    %v4496 = vsub.s32 0, %v4495
    %v4497 = vrot.slane %v4490, %v4496
    %v4499 = vmul.f32 %v4474, %v4497
    %v4500 = vmul.f32 %v4475, %v4497
    %v4501 = vmul.f32 %v4476, %v4497
    %v4502 = vmul.f32 %v4477, %v4497
    %v4503 = vmul.f32 %v4478, %v4497
    %v4504 = vmul.f32 %v4479, %v4497
    %v4505 = vmul.f32 %v4480, %v4497
    %v4506 = vmul.f32 %v4481, %v4497
    %v4507 = vsel %vm555, %v4499, 0.0
    %4508 = vadd.xlane.f32.xlu0 %v4507
    %v4509 = vpop.xlane.xlu0 %4508
    %v4510 = vsel %vm555, %v4500, 0.0
    %4511 = vadd.xlane.f32.xlu0 %v4510
    %v4512 = vpop.xlane.xlu0 %4511
    %v4513 = vsel %vm555, %v4501, 0.0
    %4514 = vadd.xlane.f32.xlu0 %v4513
    %v4515 = vpop.xlane.xlu0 %4514
    %v4516 = vsel %vm555, %v4502, 0.0
    %4517 = vadd.xlane.f32.xlu0 %v4516
    %v4518 = vpop.xlane.xlu0 %4517
    %v4519 = vsel %vm555, %v4503, 0.0
    %4520 = vadd.xlane.f32.xlu0 %v4519
    %v4521 = vpop.xlane.xlu0 %4520
    %v4522 = vsel %vm555, %v4504, 0.0
    %4523 = vadd.xlane.f32.xlu0 %v4522
    %v4524 = vpop.xlane.xlu0 %4523
    %v4525 = vsel %vm555, %v4505, 0.0
    %4526 = vadd.xlane.f32.xlu0 %v4525
    %v4527 = vpop.xlane.xlu0 %4526
    %v4528 = vsel %vm555, %v4506, 0.0
    %4529 = vadd.xlane.f32.xlu0 %v4528
    %v4530 = vpop.xlane.xlu0 %4529
    %v4532 = vlaneseq
    %v4533 = vshrl.u32 %v4532, 7
    %v4534 = vsub.s32 0, %v4533
    %v4535 = vrot.slane %v4491, %v4534
    %v4537 = vmul.f32 %v4482, %v4535
    %v4538 = vmul.f32 %v4483, %v4535
    %v4539 = vmul.f32 %v4484, %v4535
    %v4540 = vmul.f32 %v4485, %v4535
    %v4541 = vmul.f32 %v4486, %v4535
    %v4542 = vmul.f32 %v4487, %v4535
    %v4543 = vmul.f32 %v4488, %v4535
    %v4544 = vmul.f32 %v4489, %v4535
    %v4545 = vsel %vm555, %v4537, 0.0
    %4546 = vadd.xlane.f32.xlu0 %v4545
    %v4547 = vpop.xlane.xlu0 %4546
    %v4548 = vsel %vm555, %v4538, 0.0
    %4549 = vadd.xlane.f32.xlu0 %v4548
    %v4550 = vpop.xlane.xlu0 %4549
    %v4551 = vsel %vm555, %v4539, 0.0
    %4552 = vadd.xlane.f32.xlu0 %v4551
    %v4553 = vpop.xlane.xlu0 %4552
    %v4554 = vsel %vm555, %v4540, 0.0
    %4555 = vadd.xlane.f32.xlu0 %v4554
    %v4556 = vpop.xlane.xlu0 %4555
    %v4557 = vsel %vm555, %v4541, 0.0
    %4558 = vadd.xlane.f32.xlu0 %v4557
    %v4559 = vpop.xlane.xlu0 %4558
    %v4560 = vsel %vm555, %v4542, 0.0
    %4561 = vadd.xlane.f32.xlu0 %v4560
    %v4562 = vpop.xlane.xlu0 %4561
    %v4563 = vsel %vm555, %v4543, 0.0
    %4564 = vadd.xlane.f32.xlu0 %v4563
    %v4565 = vpop.xlane.xlu0 %4564
    %v4566 = vsel %vm555, %v4544, 0.0
    %4567 = vadd.xlane.f32.xlu0 %v4566
    %v4568 = vpop.xlane.xlu0 %4567
    %v4569 = vadd.f32 %v4509, %v4547
    %v4570 = vadd.f32 %v4512, %v4550
    %v4571 = vadd.f32 %v4515, %v4553
    %v4572 = vadd.f32 %v4518, %v4556
    %v4573 = vadd.f32 %v4521, %v4559
    %v4574 = vadd.f32 %v4524, %v4562
    %v4575 = vadd.f32 %v4527, %v4565
    %v4576 = vadd.f32 %v4530, %v4568
    %v4577 = vstv %s4492
    %v4578 = vadd.f32 %v4569, %v4577
    %v4579 = vadd.f32 %v4570, %v4577
    %v4580 = vadd.f32 %v4571, %v4577
    %v4581 = vadd.f32 %v4572, %v4577
    %v4582 = vadd.f32 %v4573, %v4577
    %v4583 = vadd.f32 %v4574, %v4577
    %v4584 = vadd.f32 %v4575, %v4577
    %v4585 = vadd.f32 %v4576, %v4577
    %vm4586 = vcmask 1043456
    %v4587 = vsel %vm4586, %v4578, -inf
    %v4588 = vrot.slane %v4587, 4
    %v4589 = vmax.f32 %v4587, %v4588
    %v4590 = vrot.slane %v4589, 2
    %v4591 = vmax.f32 %v4589, %v4590
    %v4592 = vrot.slane %v4591, 1
    %v4593 = vmax.f32 %v4591, %v4592
    %v4594 = vsel %vm4586, %v4579, -inf
    %v4595 = vrot.slane %v4594, 4
    %v4596 = vmax.f32 %v4594, %v4595
    %v4597 = vrot.slane %v4596, 2
    %v4598 = vmax.f32 %v4596, %v4597
    %v4599 = vrot.slane %v4598, 1
    %v4600 = vmax.f32 %v4598, %v4599
    %v4601 = vsel %vm4586, %v4580, -inf
    %v4602 = vrot.slane %v4601, 4
    %v4603 = vmax.f32 %v4601, %v4602
    %v4604 = vrot.slane %v4603, 2
    %v4605 = vmax.f32 %v4603, %v4604
    %v4606 = vrot.slane %v4605, 1
    %v4607 = vmax.f32 %v4605, %v4606
    %v4608 = vsel %vm4586, %v4581, -inf
    %v4609 = vrot.slane %v4608, 4
    %v4610 = vmax.f32 %v4608, %v4609
    %v4611 = vrot.slane %v4610, 2
    %v4612 = vmax.f32 %v4610, %v4611
    %v4613 = vrot.slane %v4612, 1
    %v4614 = vmax.f32 %v4612, %v4613
    %v4615 = vsel %vm4586, %v4582, -inf
    %v4616 = vrot.slane %v4615, 4
    %v4617 = vmax.f32 %v4615, %v4616
    %v4618 = vrot.slane %v4617, 2
    %v4619 = vmax.f32 %v4617, %v4618
    %v4620 = vrot.slane %v4619, 1
    %v4621 = vmax.f32 %v4619, %v4620
    %v4622 = vsel %vm4586, %v4583, -inf
    %v4623 = vrot.slane %v4622, 4
    %v4624 = vmax.f32 %v4622, %v4623
    %v4625 = vrot.slane %v4624, 2
    %v4626 = vmax.f32 %v4624, %v4625
    %v4627 = vrot.slane %v4626, 1
    %v4628 = vmax.f32 %v4626, %v4627
    %v4629 = vsel %vm4586, %v4584, -inf
    %v4630 = vrot.slane %v4629, 4
    %v4631 = vmax.f32 %v4629, %v4630
    %v4632 = vrot.slane %v4631, 2
    %v4633 = vmax.f32 %v4631, %v4632
    %v4634 = vrot.slane %v4633, 1
    %v4635 = vmax.f32 %v4633, %v4634
    %v4636 = vsel %vm4586, %v4585, -inf
    %v4637 = vrot.slane %v4636, 4
    %v4638 = vmax.f32 %v4636, %v4637
    %v4639 = vrot.slane %v4638, 2
    %v4640 = vmax.f32 %v4638, %v4639
    %v4641 = vrot.slane %v4640, 1
    %v4642 = vmax.f32 %v4640, %v4641
    %v4643 = vsub.f32 %v4578, %v4593
    %v4644 = vsub.f32 %v4579, %v4600
    %v4645 = vsub.f32 %v4580, %v4607
    %v4646 = vsub.f32 %v4581, %v4614
    %v4647 = vsub.f32 %v4582, %v4621
    %v4648 = vsub.f32 %v4583, %v4628
    %v4649 = vsub.f32 %v4584, %v4635
    %v4650 = vsub.f32 %v4585, %v4642
    %v4651 = vmul.f32 %v4643, 1.442695
    %v4652 = vpow.pop %v4651
    %v4653 = vmul.f32 %v4644, 1.442695
    %v4654 = vpow.pop %v4653
    %v4655 = vmul.f32 %v4645, 1.442695
    %v4656 = vpow.pop %v4655
    %v4657 = vmul.f32 %v4646, 1.442695
    %v4658 = vpow.pop %v4657
    %v4659 = vmul.f32 %v4647, 1.442695
    %v4660 = vpow.pop %v4659
    %v4661 = vmul.f32 %v4648, 1.442695
    %v4662 = vpow.pop %v4661
    %v4663 = vmul.f32 %v4649, 1.442695
    %v4664 = vpow.pop %v4663
    %v4665 = vmul.f32 %v4650, 1.442695
    %v4666 = vpow.pop %v4665
    %v4667 = vsel %vm4586, %v4652, 0.0
    %v4668 = vrot.slane %v4667, 4
    %v4669 = vadd.f32 %v4667, %v4668
    %v4670 = vrot.slane %v4669, 2
    %v4671 = vadd.f32 %v4669, %v4670
    %v4672 = vrot.slane %v4671, 1
    %v4673 = vadd.f32 %v4671, %v4672
    %v4674 = vsel %vm4586, %v4654, 0.0
    %v4675 = vrot.slane %v4674, 4
    %v4676 = vadd.f32 %v4674, %v4675
    %v4677 = vrot.slane %v4676, 2
    %v4678 = vadd.f32 %v4676, %v4677
    %v4679 = vrot.slane %v4678, 1
    %v4680 = vadd.f32 %v4678, %v4679
    %v4681 = vsel %vm4586, %v4656, 0.0
    %v4682 = vrot.slane %v4681, 4
    %v4683 = vadd.f32 %v4681, %v4682
    %v4684 = vrot.slane %v4683, 2
    %v4685 = vadd.f32 %v4683, %v4684
    %v4686 = vrot.slane %v4685, 1
    %v4687 = vadd.f32 %v4685, %v4686
    %v4688 = vsel %vm4586, %v4658, 0.0
    %v4689 = vrot.slane %v4688, 4
    %v4690 = vadd.f32 %v4688, %v4689
    %v4691 = vrot.slane %v4690, 2
    %v4692 = vadd.f32 %v4690, %v4691
    %v4693 = vrot.slane %v4692, 1
    %v4694 = vadd.f32 %v4692, %v4693
    %v4695 = vsel %vm4586, %v4660, 0.0
    %v4696 = vrot.slane %v4695, 4
    %v4697 = vadd.f32 %v4695, %v4696
    %v4698 = vrot.slane %v4697, 2
    %v4699 = vadd.f32 %v4697, %v4698
    %v4700 = vrot.slane %v4699, 1
    %v4701 = vadd.f32 %v4699, %v4700
    %v4702 = vsel %vm4586, %v4662, 0.0
    %v4703 = vrot.slane %v4702, 4
    %v4704 = vadd.f32 %v4702, %v4703
    %v4705 = vrot.slane %v4704, 2
    %v4706 = vadd.f32 %v4704, %v4705
    %v4707 = vrot.slane %v4706, 1
    %v4708 = vadd.f32 %v4706, %v4707
    %v4709 = vsel %vm4586, %v4664, 0.0
    %v4710 = vrot.slane %v4709, 4
    %v4711 = vadd.f32 %v4709, %v4710
    %v4712 = vrot.slane %v4711, 2
    %v4713 = vadd.f32 %v4711, %v4712
    %v4714 = vrot.slane %v4713, 1
    %v4715 = vadd.f32 %v4713, %v4714
    %v4716 = vsel %vm4586, %v4666, 0.0
    %v4717 = vrot.slane %v4716, 4
    %v4718 = vadd.f32 %v4716, %v4717
    %v4719 = vrot.slane %v4718, 2
    %v4720 = vadd.f32 %v4718, %v4719
    %v4721 = vrot.slane %v4720, 1
    %v4722 = vadd.f32 %v4720, %v4721
    %v4723 = vrcp.pop %v4673
    %v4724 = vrcp.pop %v4680
    %v4725 = vrcp.pop %v4687
    %v4726 = vrcp.pop %v4694
    %v4727 = vrcp.pop %v4701
    %v4728 = vrcp.pop %v4708
    %v4729 = vrcp.pop %v4715
    %v4730 = vrcp.pop %v4722
    %v4731 = vmul.f32 %v4652, %v4723
    %v4732 = vmul.f32 %v4654, %v4724
    %v4733 = vmul.f32 %v4656, %v4725
    %v4734 = vmul.f32 %v4658, %v4726
    %v4735 = vmul.f32 %v4660, %v4727
    %v4736 = vmul.f32 %v4662, %v4728
    %v4737 = vmul.f32 %v4664, %v4729
    %v4738 = vmul.f32 %v4666, %v4730
    %v4739 = vmul.f32 %v4474, %v4731
    %v4740 = vmul.f32 %v4475, %v4732
    %v4741 = vmul.f32 %v4476, %v4733
    %v4742 = vmul.f32 %v4477, %v4734
    %v4743 = vmul.f32 %v4478, %v4735
    %v4744 = vmul.f32 %v4479, %v4736
    %v4745 = vmul.f32 %v4480, %v4737
    %v4746 = vmul.f32 %v4481, %v4738
    %v4747 = vsel %vm555, %v4739, 0.0
    %v4748 = vsel %vm555, %v4740, 0.0
    %v4749 = vadd.f32 %v4747, %v4748
    %v4750 = vsel %vm555, %v4741, 0.0
    %v4751 = vadd.f32 %v4749, %v4750
    %v4752 = vsel %vm555, %v4742, 0.0
    %v4753 = vadd.f32 %v4751, %v4752
    %v4754 = vsel %vm555, %v4743, 0.0
    %v4755 = vadd.f32 %v4753, %v4754
    %v4756 = vsel %vm555, %v4744, 0.0
    %v4757 = vadd.f32 %v4755, %v4756
    %v4758 = vsel %vm555, %v4745, 0.0
    %v4759 = vadd.f32 %v4757, %v4758
    %v4760 = vsel %vm555, %v4746, 0.0
    %v4761 = vadd.f32 %v4759, %v4760
    %v4762 = vmul.f32 %v4482, %v4731
    %v4763 = vmul.f32 %v4483, %v4732
    %v4764 = vmul.f32 %v4484, %v4733
    %v4765 = vmul.f32 %v4485, %v4734
    %v4766 = vmul.f32 %v4486, %v4735
    %v4767 = vmul.f32 %v4487, %v4736
    %v4768 = vmul.f32 %v4488, %v4737
    %v4769 = vmul.f32 %v4489, %v4738
    %v4770 = vsel %vm555, %v4762, 0.0
    %v4771 = vsel %vm555, %v4763, 0.0
    %v4772 = vadd.f32 %v4770, %v4771
    %v4773 = vsel %vm555, %v4764, 0.0
    %v4774 = vadd.f32 %v4772, %v4773
    %v4775 = vsel %vm555, %v4765, 0.0
    %v4776 = vadd.f32 %v4774, %v4775
    %v4777 = vsel %vm555, %v4766, 0.0
    %v4778 = vadd.f32 %v4776, %v4777
    %v4779 = vsel %vm555, %v4767, 0.0
    %v4780 = vadd.f32 %v4778, %v4779
    %v4781 = vsel %vm555, %v4768, 0.0
    %v4782 = vadd.f32 %v4780, %v4781
    %v4783 = vsel %vm555, %v4769, 0.0
    %v4784 = vadd.f32 %v4782, %v4783
    %v4785 = vld [vmem:[%s17] sm:$0xff]
    %v4786 = vld [vmem:[%s17 + $0x8] sm:$0xff]
    %v4787 = vld [vmem:[%s17 + $0x10] sm:$0xff]
    %v4788 = vld [vmem:[%s17 + $0x18] sm:$0xff]
    %v4789 = vld [vmem:[%s18] sm:$0xff]
    %v4790 = vld [vmem:[%s18 + $0x8] sm:$0xff]
    %v4791 = vld [vmem:[%s18 + $0x10] sm:$0xff]
    %v4792 = vld [vmem:[%s18 + $0x18] sm:$0xff]
    %v4794 = vsel %vm357, %v4784, 0
    %4796 = vmatprep.subr.mxu0 0.0
    %4797 = vmatpush1.msra.mxu0 %v4789
    %4798 = vmatprep.subr.mxu0 0.0
    %4799 = vmatpush1.msra.mxu0 %v4790
    %4800 = vmatprep.subr.mxu0 0.0
    %4801 = vmatpush1.msra.mxu0 %v4791
    %4802 = vmatprep.subr.mxu0 0.0
    %4803 = vmatpush1.msra.mxu0 %v4792
    %4804 = vmatprep.subr.mxu0 0.0
    %4805 = vmatpush1.msra.mxu0 0.0
    %4806 = vmatprep.subr.mxu0 0.0
    %4807 = vmatpush1.msra.mxu0 0.0
    %4808 = vmatprep.subr.mxu0 0.0
    %4809 = vmatpush1.msra.mxu0 0.0
    %4810 = vmatprep.subr.mxu0 0.0
    %4811 = vmatpush1.msra.mxu0 0.0
    %4812 = vmatprep.subr.mxu0 0.0
    %4813 = vmatpush1.msra.mxu0 0.0
    %4814 = vmatprep.subr.mxu0 0.0
    %4815 = vmatpush1.msra.mxu0 0.0
    %4816 = vmatprep.subr.mxu0 0.0
    %4817 = vmatpush1.msra.mxu0 0.0
    %4818 = vmatprep.subr.mxu0 0.0
    %4819 = vmatpush1.msra.mxu0 0.0
    %4820 = vmatprep.subr.mxu0 0.0
    %4821 = vmatpush1.msra.mxu0 0.0
    %4822 = vmatprep.subr.mxu0 0.0
    %4823 = vmatpush1.msra.mxu0 0.0
    %4824 = vmatprep.subr.mxu0 0.0
    %4825 = vmatpush1.msra.mxu0 0.0
    %4826 = vmatprep.subr.mxu0 0.0
    %4827 = vmatpush1.msra.mxu0 0.0
    %4828 = vmatprep.subr.mxu0 0.0
    %4829 = vmatpush1.msra.mxu0 0.0
    %4830 = vmatprep.subr.mxu0 0.0
    %4831 = vmatpush1.msra.mxu0 0.0
    %4832 = vmatprep.subr.mxu0 0.0
    %4833 = vmatpush1.msra.mxu0 0.0
    %4834 = vmatprep.subr.mxu0 0.0
    %4835 = vmatpush1.msra.mxu0 0.0
    %4836 = vmatprep.subr.mxu0 0.0
    %4837 = vmatpush1.msra.mxu0 0.0
    %4838 = vmatprep.subr.mxu0 0.0
    %4839 = vmatpush1.msra.mxu0 0.0
    %4840 = vmatprep.subr.mxu0 0.0
    %4841 = vmatpush1.msra.mxu0 0.0
    %4842 = vmatprep.subr.mxu0 0.0
    %4843 = vmatpush1.msra.mxu0 0.0
    %4844 = vmatprep.subr.mxu0 0.0
    %4845 = vmatpush1.msra.mxu0 0.0
    %4846 = vmatprep.subr.mxu0 0.0
    %4847 = vmatpush1.msra.mxu0 0.0
    %4848 = vmatprep.subr.mxu0 0.0
    %4849 = vmatpush1.msra.mxu0 0.0
    %4850 = vmatprep.subr.mxu0 0.0
    %4851 = vmatpush1.msra.mxu0 0.0
    %4852 = vmatprep.subr.mxu0 0.0
    %4853 = vmatpush1.msra.mxu0 0.0
    %4854 = vmatprep.subr.mxu0 0.0
    %4855 = vmatpush1.msra.mxu0 0.0
    %4856 = vmatprep.subr.mxu0 0.0
    %4857 = vmatpush1.msra.mxu0 0.0
    %4858 = vmatprep.subr.mxu0 0.0
    %4859 = vmatpush1.msra.mxu0 0.0
    %4860 = vmatprep.mubr.f32.mxu0 0.0
    %4861 = vmatmul.mubr.f32.gmra.mrb[0].mxu0 %v4794
    %v4862 = vpop.f32.mrb[0].mxu0
    %v4863 = vadd.f32 0.0, %v4862
    %v4864 = vpop.f32.mrb[0].mxu0
    %4865 = vdwg.mxu0
    %v4867 = vsel %vm357, %v4761, 0
    %4869 = vmatprep.subr.mxu0 0.0
    %4870 = vmatpush1.msra.mxu0 %v4785
    %4871 = vmatprep.subr.mxu0 0.0
    %4872 = vmatpush1.msra.mxu0 %v4786
    %4873 = vmatprep.subr.mxu0 0.0
    %4874 = vmatpush1.msra.mxu0 %v4787
    %4875 = vmatprep.subr.mxu0 0.0
    %4876 = vmatpush1.msra.mxu0 %v4788
    %4877 = vmatprep.subr.mxu0 0.0
    %4878 = vmatpush1.msra.mxu0 0.0
    %4879 = vmatprep.subr.mxu0 0.0
    %4880 = vmatpush1.msra.mxu0 0.0
    %4881 = vmatprep.subr.mxu0 0.0
    %4882 = vmatpush1.msra.mxu0 0.0
    %4883 = vmatprep.subr.mxu0 0.0
    %4884 = vmatpush1.msra.mxu0 0.0
    %4885 = vmatprep.subr.mxu0 0.0
    %4886 = vmatpush1.msra.mxu0 0.0
    %4887 = vmatprep.subr.mxu0 0.0
    %4888 = vmatpush1.msra.mxu0 0.0
    %4889 = vmatprep.subr.mxu0 0.0
    %4890 = vmatpush1.msra.mxu0 0.0
    %4891 = vmatprep.subr.mxu0 0.0
    %4892 = vmatpush1.msra.mxu0 0.0
    %4893 = vmatprep.subr.mxu0 0.0
    %4894 = vmatpush1.msra.mxu0 0.0
    %4895 = vmatprep.subr.mxu0 0.0
    %4896 = vmatpush1.msra.mxu0 0.0
    %4897 = vmatprep.subr.mxu0 0.0
    %4898 = vmatpush1.msra.mxu0 0.0
    %4899 = vmatprep.subr.mxu0 0.0
    %4900 = vmatpush1.msra.mxu0 0.0
    %4901 = vmatprep.subr.mxu0 0.0
    %4902 = vmatpush1.msra.mxu0 0.0
    %4903 = vmatprep.subr.mxu0 0.0
    %4904 = vmatpush1.msra.mxu0 0.0
    %4905 = vmatprep.subr.mxu0 0.0
    %4906 = vmatpush1.msra.mxu0 0.0
    %4907 = vmatprep.subr.mxu0 0.0
    %4908 = vmatpush1.msra.mxu0 0.0
    %4909 = vmatprep.subr.mxu0 0.0
    %4910 = vmatpush1.msra.mxu0 0.0
    %4911 = vmatprep.subr.mxu0 0.0
    %4912 = vmatpush1.msra.mxu0 0.0
    %4913 = vmatprep.subr.mxu0 0.0
    %4914 = vmatpush1.msra.mxu0 0.0
    %4915 = vmatprep.subr.mxu0 0.0
    %4916 = vmatpush1.msra.mxu0 0.0
    %4917 = vmatprep.subr.mxu0 0.0
    %4918 = vmatpush1.msra.mxu0 0.0
    %4919 = vmatprep.subr.mxu0 0.0
    %4920 = vmatpush1.msra.mxu0 0.0
    %4921 = vmatprep.subr.mxu0 0.0
    %4922 = vmatpush1.msra.mxu0 0.0
    %4923 = vmatprep.subr.mxu0 0.0
    %4924 = vmatpush1.msra.mxu0 0.0
    %4925 = vmatprep.subr.mxu0 0.0
    %4926 = vmatpush1.msra.mxu0 0.0
    %4927 = vmatprep.subr.mxu0 0.0
    %4928 = vmatpush1.msra.mxu0 0.0
    %4929 = vmatprep.subr.mxu0 0.0
    %4930 = vmatpush1.msra.mxu0 0.0
    %4931 = vmatprep.subr.mxu0 0.0
    %4932 = vmatpush1.msra.mxu0 0.0
    %4933 = vmatprep.mubr.f32.mxu0 0.0
    %4934 = vmatmul.mubr.f32.gmra.mrb[0].mxu0 %v4867
    %v4935 = vpop.f32.mrb[0].mxu0
    %v4936 = vadd.f32 %v4863, %v4935
    %v4937 = vpop.f32.mrb[0].mxu0
    %4938 = vdwg.mxu0
    %v4939 = vld [vmem:[%s19] sm:$0x1]
    %v4941 = vlaneseq
    %v4942 = vshrl.u32 %v4941, 7
    %v4943 = vsub.s32 0, %v4942
    %v4944 = vrot.slane %v4939, %v4943
    %v4946 = vadd.f32 %v4936, %v4944
    %vm4947 = vcmp.gt.f32.partialorder %v4946, 0.0
    %v4948 = vmul.f32 %v4946, 1.442695
    %v4949 = vpow.pop %v4948
    %v4950 = vsub.f32 %v4949, 1.0
    %v4951 = vsel %vm4947, %v4946, %v4950
    %v4952 = vld [vmem:[%s20] sm:$0xff]
    %v4953 = vld [vmem:[%s20 + $0x8] sm:$0xff]
    %v4954 = vld [vmem:[%s21] sm:$0x1]
    %v4956 = vlaneseq
    %v4957 = vshrl.u32 %v4956, 7
    %v4958 = vsub.s32 0, %v4957
    %v4959 = vrot.slane %v4954, %v4958
    %v4962 = vsel %vm221, %v4951, 0
    %4964 = vmatprep.subr.mxu0 0.0
    %4965 = vmatpush1.msra.mxu0 %v4952
    %4966 = vmatprep.subr.mxu0 0.0
    %4967 = vmatpush1.msra.mxu0 %v4953
    %4968 = vmatprep.subr.mxu0 0.0
    %4969 = vmatpush1.msra.mxu0 0.0
    %4970 = vmatprep.subr.mxu0 0.0
    %4971 = vmatpush1.msra.mxu0 0.0
    %4972 = vmatprep.subr.mxu0 0.0
    %4973 = vmatpush1.msra.mxu0 0.0
    %4974 = vmatprep.subr.mxu0 0.0
    %4975 = vmatpush1.msra.mxu0 0.0
    %4976 = vmatprep.subr.mxu0 0.0
    %4977 = vmatpush1.msra.mxu0 0.0
    %4978 = vmatprep.subr.mxu0 0.0
    %4979 = vmatpush1.msra.mxu0 0.0
    %4980 = vmatprep.subr.mxu0 0.0
    %4981 = vmatpush1.msra.mxu0 0.0
    %4982 = vmatprep.subr.mxu0 0.0
    %4983 = vmatpush1.msra.mxu0 0.0
    %4984 = vmatprep.subr.mxu0 0.0
    %4985 = vmatpush1.msra.mxu0 0.0
    %4986 = vmatprep.subr.mxu0 0.0
    %4987 = vmatpush1.msra.mxu0 0.0
    %4988 = vmatprep.subr.mxu0 0.0
    %4989 = vmatpush1.msra.mxu0 0.0
    %4990 = vmatprep.subr.mxu0 0.0
    %4991 = vmatpush1.msra.mxu0 0.0
    %4992 = vmatprep.subr.mxu0 0.0
    %4993 = vmatpush1.msra.mxu0 0.0
    %4994 = vmatprep.subr.mxu0 0.0
    %4995 = vmatpush1.msra.mxu0 0.0
    %4996 = vmatprep.subr.mxu0 0.0
    %4997 = vmatpush1.msra.mxu0 0.0
    %4998 = vmatprep.subr.mxu0 0.0
    %4999 = vmatpush1.msra.mxu0 0.0
    %5000 = vmatprep.subr.mxu0 0.0
    %5001 = vmatpush1.msra.mxu0 0.0
    %5002 = vmatprep.subr.mxu0 0.0
    %5003 = vmatpush1.msra.mxu0 0.0
    %5004 = vmatprep.subr.mxu0 0.0
    %5005 = vmatpush1.msra.mxu0 0.0
    %5006 = vmatprep.subr.mxu0 0.0
    %5007 = vmatpush1.msra.mxu0 0.0
    %5008 = vmatprep.subr.mxu0 0.0
    %5009 = vmatpush1.msra.mxu0 0.0
    %5010 = vmatprep.subr.mxu0 0.0
    %5011 = vmatpush1.msra.mxu0 0.0
    %5012 = vmatprep.subr.mxu0 0.0
    %5013 = vmatpush1.msra.mxu0 0.0
    %5014 = vmatprep.subr.mxu0 0.0
    %5015 = vmatpush1.msra.mxu0 0.0
    %5016 = vmatprep.subr.mxu0 0.0
    %5017 = vmatpush1.msra.mxu0 0.0
    %5018 = vmatprep.subr.mxu0 0.0
    %5019 = vmatpush1.msra.mxu0 0.0
    %5020 = vmatprep.subr.mxu0 0.0
    %5021 = vmatpush1.msra.mxu0 0.0
    %5022 = vmatprep.subr.mxu0 0.0
    %5023 = vmatpush1.msra.mxu0 0.0
    %5024 = vmatprep.subr.mxu0 0.0
    %5025 = vmatpush1.msra.mxu0 0.0
    %5026 = vmatprep.subr.mxu0 0.0
    %5027 = vmatpush1.msra.mxu0 0.0
    %5028 = vmatprep.mubr.f32.mxu0 0.0
    %5029 = vmatmul.mubr.f32.gmra.mrb[0].mxu0 %v4962
    %v5030 = vpop.f32.mrb[0].mxu0
    %v5031 = vadd.f32 %v4959, %v5030
    %v5032 = vpop.f32.mrb[0].mxu0
    %5033 = vdwg.mxu0
    %vm5034 = vcmask 35840
    %v5035 = vsel %vm5034, %v5031, -inf
    %5036 = vmax.xlane.f32.xlu0 %v5035
    %v5037 = vpop.xlane.xlu0 %5036
    %v5038 = vsub.f32 %v5031, %v5037
    %v5039 = vmul.f32 %v5038, 1.442695
    %v5040 = vpow.pop %v5039
    %v5041 = vsel %vm5034, %v5040, 0.0
    %5042 = vadd.xlane.f32.xlu0 %v5041
    %v5043 = vpop.xlane.xlu0 %5042
    %v5044 = vlog2.pop %v5043
    %v5045 = vmul.f32 %v5044, 0.6931472
    %v5046 = vadd.f32 %v5037, %v5045
    %v5047 = vsub.f32 %v5031, %v5046
    %5048 = vst.msk [vmem:[#allocation24] sm:$0xf] %vm5034, %v5047
    // Predicated region
    $region130: #{tpu_custom_call.1} parent=1 // pred_check
      _
    $region131: #{tpu_custom_call.1} parent=1 // pred_check_branch
      %5050 = sbr.rel (0) target = $region133
    $region132: #{tpu_custom_call.1} parent=1 // pred_region
      %s5052 = ssub.s32 64, 64
      %5053 = vsyncadd [#allocation9], %s5052
      %s5055 = sshll.u32 [#allocation24], 4
      %s5056 = int_to_ptr.vmem [resolvable:$true] %s5055
      %5058 = dma.vmem_to_hbm [thread:$0]  %s5056, 64, %s22, [#allocation9]
    $region133: #{tpu_custom_call.1} parent=1 // pred_fallthru
      _
    // Predicated region
    $region134: #{tpu_custom_call.1} parent=1 // pred_check
      _
    $region135: #{tpu_custom_call.1} parent=1 // pred_check_branch
      %5060 = sbr.rel (0) target = $region137
    $region136: #{tpu_custom_call.1} parent=1 // pred_region
      %5061 = dma.done [#allocation9], 64
    $region137: #{tpu_custom_call.1} parent=1 // pred_fallthru
      _
    %5062 = vsyncpa [#allocation8], 1
    %5063 = vsyncpa [#allocation11], 1
    %5064 = vsyncpa [#allocation14], 1
    %5065 = vsyncpa [#allocation17], 1
    %5066 = vsyncpa [#allocation20], 1
    %5067 = vsyncpa [#allocation23], 1
    %5068 = vsyncpa [#allocation9], 1

</llo_original>
